<compile_context>
chip_gen: v5e
topology: v5e:2x2
jax: 0.10.0
libtpu: 0.0.40
codegen_flags: <defaults>
</compile_context>

<pallas_src>
import jax
import jax.numpy as jnp
from jax.experimental import pallas as pl
from jax.experimental.pallas import tpu as pltpu

STRD = {'down_temp': (2, 1, 1), 'down_spat': (1, 2, 2),
        'down_spatemp': (2, 2, 2), 'stable': (1, 1, 1)}

_VMEM_LIMIT = 32 * 1024 * 1024   # explicit scoped-VMEM budget (safe on v5e/v6e/v7x)
_MAX_ROW_TILE = 512              # 512-row tiles keep DMA/compute pipelined & VMEM small


def _row_block(m, max_tile=_MAX_ROW_TILE):
    """Pick an (M_padded, row_tile) pair: tile is a multiple of 8 and divides M_padded."""
    mp = ((m + 7) // 8) * 8
    if mp <= max_tile:
        return mp, mp
    mp = ((mp + max_tile - 1) // max_tile) * max_tile
    return mp, max_tile


def _compiler_params():
    return pltpu.CompilerParams(dimension_semantics=("parallel",),
                                vmem_limit_bytes=_VMEM_LIMIT)


# ----------------------------- Pallas kernels -----------------------------

def _bn_relu_kernel(x_ref, s_ref, b_ref, o_ref):
    # y = relu(x * scale + bias); scale/bias broadcast over rows (f32 math).
    o_ref[...] = jnp.maximum(x_ref[...] * s_ref[...] + b_ref[...], 0.0)


def _pw_conv_kernel(x_ref, s_ref, b_ref, w_ref, o_ref):
    # fused BN + ReLU + 1x1x1 conv: f32 elementwise, bf16 MXU operands, f32 accumulate
    a = jnp.maximum(x_ref[...] * s_ref[...] + b_ref[...], 0.0)
    o_ref[...] = jnp.dot(a.astype(jnp.bfloat16), w_ref[...],
                         preferred_element_type=jnp.float32)


def _pw_conv_res_kernel(x_ref, s_ref, b_ref, w_ref, r_ref, o_ref):
    # same as above with a fused residual add in the epilogue
    a = jnp.maximum(x_ref[...] * s_ref[...] + b_ref[...], 0.0)
    o_ref[...] = r_ref[...] + jnp.dot(a.astype(jnp.bfloat16), w_ref[...],
                                      preferred_element_type=jnp.float32)


def _grouped_dot(a_ref, b_ref, groups):
    # all groups inside one grid step -> one lane-dense (tm, G*cout_g) result
    parts = [jnp.dot(a_ref[g], b_ref[g], preferred_element_type=jnp.float32)
             for g in range(groups)]
    return parts[0] if groups == 1 else jnp.concatenate(parts, axis=-1)


def _make_grouped_conv_kernel(groups, mode):
    if mode == "out_bn":          # conv1: conv -> BN -> ReLU fused as epilogue
        def kernel(a_ref, b_ref, s_ref, bi_ref, o_ref):
            acc = _grouped_dot(a_ref, b_ref, groups)
            o_ref[...] = jnp.maximum(acc * s_ref[...] + bi_ref[...], 0.0)
    elif mode == "residual":      # MF_UNIT tail: conv output + residual
        def kernel(a_ref, b_ref, r_ref, o_ref):
            o_ref[...] = r_ref[...] + _grouped_dot(a_ref, b_ref, groups)
    else:
        def kernel(a_ref, b_ref, o_ref):
            o_ref[...] = _grouped_dot(a_ref, b_ref, groups)
    return kernel


def _make_maxpool_kernel(ho, wo):
    # window(2ho..2ho+2, 2wo..2wo+2) decomposed over even/odd parity slabs:
    # every tap is a unit-stride view of one of the four slabs.
    def kernel(ee_ref, eo_ref, oe_ref, oo_ref, o_ref):
        r = ee_ref[0:ho, 0:wo, :]
        for tap in (eo_ref[0:ho, 0:wo, :], ee_ref[0:ho, 1:wo + 1, :],
                    oe_ref[0:ho, 0:wo, :], oo_ref[0:ho, 0:wo, :],
                    oe_ref[0:ho, 1:wo + 1, :],
                    ee_ref[1:ho + 1, 0:wo, :], eo_ref[1:ho + 1, 0:wo, :],
                    ee_ref[1:ho + 1, 1:wo + 1, :]):
            r = jnp.maximum(r, tap)
        o_ref[...] = r
    return kernel


# ----------------------------- Pallas wrappers -----------------------------

def bn_relu(x, scale, bias):
    """Row-tiled inference BatchNorm + ReLU on an NDHWC tensor (lane-dense view)."""
    n, d, h, w, c = x.shape
    rows, lanes = n * d, h * w * c
    x2 = x.reshape(rows, lanes).astype(jnp.float32)
    s = jnp.tile(scale.astype(jnp.float32), h * w).reshape(1, lanes)
    b = jnp.tile(bias.astype(jnp.float32), h * w).reshape(1, lanes)
    rp, tr = _row_block(rows)
    if rp != rows:
        x2 = jnp.pad(x2, ((0, rp - rows), (0, 0)))
    out = pl.pallas_call(
        _bn_relu_kernel,
        out_shape=jax.ShapeDtypeStruct((rp, lanes), jnp.float32),
        grid=(rp // tr,),
        in_specs=[pl.BlockSpec((tr, lanes), lambda i: (i, 0)),
                  pl.BlockSpec((1, lanes), lambda i: (0, 0)),
                  pl.BlockSpec((1, lanes), lambda i: (0, 0))],
        out_specs=pl.BlockSpec((tr, lanes), lambda i: (i, 0)),
        compiler_params=_compiler_params(),
    )(x2, s, b)
    return out[:rows].reshape(x.shape)


def fused_bn_relu_conv1x1(x, scale, bias, w, stride=(1, 1, 1), residual=None):
    """BN + ReLU + 1x1x1 Conv3d (groups=1, no padding) as one Pallas kernel.
    The stride of a 1x1x1 conv commutes with elementwise BN+ReLU, so the input is
    decimated first.  `residual` (shape of the conv output) is added in the epilogue."""
    st, sh, sw = stride
    xd = x[:, ::st, ::sh, ::sw, :]
    n, do, ho, wo, cin = xd.shape
    cout = w.shape[-1]
    m = n * do * ho * wo
    a = xd.reshape(m, cin).astype(jnp.float32)
    mp, tm = _row_block(m)
    if mp != m:
        a = jnp.pad(a, ((0, mp - m), (0, 0)))
    wm = w.reshape(cin, cout).astype(jnp.bfloat16)
    s = scale.reshape(1, cin).astype(jnp.float32)
    b = bias.reshape(1, cin).astype(jnp.float32)

    cost = pl.CostEstimate(flops=2 * mp * cin * cout, transcendentals=0,
                           bytes_accessed=4 * mp * cin + 2 * cin * cout + 4 * mp * cout)
    common = dict(
        out_shape=jax.ShapeDtypeStruct((mp, cout), jnp.float32),
        grid=(mp // tm,),
        out_specs=pl.BlockSpec((tm, cout), lambda i: (i, 0)),
        compiler_params=_compiler_params(),
        cost_estimate=cost,
    )
    x_spec = pl.BlockSpec((tm, cin), lambda i: (i, 0))
    sb_spec = pl.BlockSpec((1, cin), lambda i: (0, 0))
    w_spec = pl.BlockSpec((cin, cout), lambda i: (0, 0))

    if residual is None:
        out = pl.pallas_call(_pw_conv_kernel,
                             in_specs=[x_spec, sb_spec, sb_spec, w_spec],
                             **common)(a, s, b, wm)
    else:
        r = residual.reshape(m, cout).astype(jnp.float32)
        if mp != m:
            r = jnp.pad(r, ((0, mp - m), (0, 0)))
        r_spec = pl.BlockSpec((tm, cout), lambda i: (i, 0))
        out = pl.pallas_call(_pw_conv_res_kernel,
                             in_specs=[x_spec, sb_spec, sb_spec, w_spec, r_spec],
                             **common)(a, s, b, wm, r)
    return out[:m].reshape(n, do, ho, wo, cout)


def grouped_conv3d(x, w, stride, pad, residual=None, out_scale=None, out_bias=None):
    """Grouped 3D convolution (no bias) on an NDHWC tensor.
    im2col is XLA glue; the per-tile matmul runs on the MXU with bf16 operands and
    f32 accumulation, all groups per grid step, lane-dense (tm, G*cout_g) stores.
    Optional fused epilogues: residual add, or BN+ReLU (used by conv1)."""
    n, d, h, w_sp, cin = x.shape
    g, kt, kh, kw, cin_g, cout_g = w.shape
    st, sh, sw = stride
    pt, ph, pw_ = pad
    xp = jnp.pad(x, ((0, 0), (pt, pt), (ph, ph), (pw_, pw_), (0, 0)))
    do = (d + 2 * pt - kt) // st + 1
    ho = (h + 2 * ph - kh) // sh + 1
    wo = (w_sp + 2 * pw_ - kw) // sw + 1

    # im2col (glue): one strided slice per kernel tap.
    wins = []
    for dt in range(kt):
        for dh in range(kh):
            for dw in range(kw):
                wins.append(xp[:, dt:dt + do * st:st,
                               dh:dh + ho * sh:sh,
                               dw:dw + wo * sw:sw, :])
    k = kt * kh * kw
    m = n * do * ho * wo
    kc = k * cin_g
    cout = g * cout_g
    p = jnp.stack(wins, axis=0).reshape(k, n, do, ho, wo, g, cin_g)
    # contraction ordering = (kernel-tap, cin_g) in both operands; bf16 MXU operands
    a = jnp.transpose(p, (5, 1, 2, 3, 4, 0, 6)).reshape(g, m, kc).astype(jnp.bfloat16)
    bmat = w.reshape(g, kc, cout_g).astype(jnp.bfloat16)

    mp, tm = _row_block(m)
    if mp != m:
        a = jnp.pad(a, ((0, 0), (0, mp - m), (0, 0)))

    cost = pl.CostEstimate(
        flops=2 * mp * kc * cout, transcendentals=0,
        bytes_accessed=2 * g * mp * kc + 2 * g * kc * cout_g + 4 * mp * cout)
    common = dict(
        out_shape=jax.ShapeDtypeStruct((mp, cout), jnp.float32),
        grid=(mp // tm,),
        out_specs=pl.BlockSpec((tm, cout), lambda i: (i, 0)),
        compiler_params=_compiler_params(),
        cost_estimate=cost,
    )
    a_spec = pl.BlockSpec((g, tm, kc), lambda i: (0, i, 0))
    b_spec = pl.BlockSpec((g, kc, cout_g), lambda i: (0, 0, 0))

    if out_scale is not None:
        s = out_scale.reshape(1, cout).astype(jnp.float32)
        bb = out_bias.reshape(1, cout).astype(jnp.float32)
        sb_spec = pl.BlockSpec((1, cout), lambda i: (0, 0))
        out = pl.pallas_call(_make_grouped_conv_kernel(g, "out_bn"),
                             in_specs=[a_spec, b_spec, sb_spec, sb_spec],
                             **common)(a, bmat, s, bb)
    elif residual is not None:
        r = residual.reshape(m, cout).astype(jnp.float32)
        if mp != m:
            r = jnp.pad(r, ((0, mp - m), (0, 0)))
        r_spec = pl.BlockSpec((tm, cout), lambda i: (i, 0))
        out = pl.pallas_call(_make_grouped_conv_kernel(g, "residual"),
                             in_specs=[a_spec, b_spec, r_spec],
                             **common)(a, bmat, r)
    else:
        out = pl.pallas_call(_make_grouped_conv_kernel(g, "plain"),
                             in_specs=[a_spec, b_spec],
                             **common)(a, bmat)
    # group-major channel layout matches PyTorch grouped conv output ordering
    return out[:m].reshape(n, do, ho, wo, cout)


def maxpool_1x3x3_s122(x):
    """MaxPool3d(kernel=(1,3,3), stride=(1,2,2), padding=(0,1,1)) as a Pallas kernel
    over even/odd parity slabs (no 9x stacked window tensor in HBM)."""
    n, d, h, w, c = x.shape
    assert h % 2 == 0 and w % 2 == 0
    ho, wo = h // 2, w // 2
    xp = jnp.pad(x, ((0, 0), (0, 0), (1, 1), (1, 1), (0, 0)),
                 constant_values=-jnp.inf)
    nd = n * d
    slabs = [xp[:, :, 0::2, 0::2, :], xp[:, :, 0::2, 1::2, :],
             xp[:, :, 1::2, 0::2, :], xp[:, :, 1::2, 1::2, :]]
    slabs = [s.reshape(nd, ho + 1, wo + 1, c) for s in slabs]
    in_spec = pl.BlockSpec((None, ho + 1, wo + 1, c), lambda i: (i, 0, 0, 0))
    out = pl.pallas_call(
        _make_maxpool_kernel(ho, wo),
        out_shape=jax.ShapeDtypeStruct((nd, ho, wo, c), jnp.float32),
        grid=(nd,),
        in_specs=[in_spec] * 4,
        out_specs=pl.BlockSpec((None, ho, wo, c), lambda i: (i, 0, 0, 0)),
        compiler_params=_compiler_params(),
    )(*slabs)
    return out.reshape(n, d, ho, wo, c)


# ----------------------------- parameter init -----------------------------

class KeyGen:
    def __init__(self, seed):
        self._key = jax.random.PRNGKey(seed)

    def __call__(self):
        self._key, sub = jax.random.split(self._key)
        return sub


def init_bn(kg, c):
    gamma = 1.0 + 0.1 * jax.random.normal(kg(), (c,), jnp.float32)
    beta = 0.1 * jax.random.normal(kg(), (c,), jnp.float32)
    mean = 0.1 * jax.random.normal(kg(), (c,), jnp.float32)
    var = jnp.ones((c,), jnp.float32)
    scale = gamma * jax.lax.rsqrt(var + 1e-5)
    bias = beta - mean * scale
    return scale, bias


def init_conv_w(kg, cin, cout, kernel, groups):
    kt, kh, kw = kernel
    cin_g, cout_g = cin // groups, cout // groups
    fan_in = cin_g * kt * kh * kw
    std = (2.0 / (fan_in + cout_g)) ** 0.5  # xavier-like
    return std * jax.random.normal(
        kg(), (groups, kt, kh, kw, cin_g, cout_g), jnp.float32)


def init_bn_ac_conv(kg, num_in, num_filter, kernel=(1, 1, 1), pad=(0, 0, 0),
                    stride=(1, 1, 1), g=1):
    scale, bias = init_bn(kg, num_in)
    w = init_conv_w(kg, num_in, num_filter, kernel, g)
    return dict(scale=scale, bias=bias, w=w, stride=stride, pad=pad)


def bn_ac_conv_fwd(p, x, residual=None):
    kt, kh, kw = p['w'].shape[1:4]
    if (kt, kh, kw) == (1, 1, 1):
        assert p['pad'] == (0, 0, 0)
        return fused_bn_relu_conv1x1(x, p['scale'], p['bias'], p['w'],
                                     p['stride'], residual=residual)
    h = bn_relu(x, p['scale'], p['bias'])
    return grouped_conv3d(h, p['w'], p['stride'], p['pad'], residual=residual)


def init_mf_unit(kg, num_in, num_mid, num_out, g, stride, first_block):
    num_ix = num_mid // 4
    p = dict(
        conv_i1=init_bn_ac_conv(kg, num_in, num_ix, (1, 1, 1), (0, 0, 0), (1, 1, 1), 1),
        conv_i2=init_bn_ac_conv(kg, num_ix, num_in, (1, 1, 1), (0, 0, 0), (1, 1, 1), 1),
        conv_m1=init_bn_ac_conv(kg, num_in, num_mid, (3, 3, 3), (1, 1, 1), stride, g),
    )
    if first_block:
        p['conv_m2'] = init_bn_ac_conv(kg, num_mid, num_out, (1, 1, 1), (0, 0, 0), (1, 1, 1), 1)
        p['conv_w1'] = init_bn_ac_conv(kg, num_in, num_out, (1, 1, 1), (0, 0, 0), stride, 1)
    else:
        p['conv_m2'] = init_bn_ac_conv(kg, num_mid, num_out, (1, 3, 3), (0, 1, 1), (1, 1, 1), g)
    return p


def mf_unit_fwd(p, x):
    # reference: h=i1(x); x_in=x+i2(h); h=m1(x_in); h=m2(h); (+w1(x) if first); h+x
    h = bn_ac_conv_fwd(p['conv_i1'], x)
    x_in = bn_ac_conv_fwd(p['conv_i2'], h, residual=x)            # fused residual add
    h = bn_ac_conv_fwd(p['conv_m1'], x_in)
    if 'conv_w1' in p:
        h = bn_ac_conv_fwd(p['conv_m2'], h)
        return bn_ac_conv_fwd(p['conv_w1'], x, residual=h)        # conv_w1(x) + h fused
    return bn_ac_conv_fwd(p['conv_m2'], h, residual=x)            # conv_m2(...) + x fused


def init_modality_block(kg, mod_name, input_channels, g, k_sec,
                        conv_num_mid, conv_num_out):
    params = {}
    # conv1 = Conv3d((3,5,5), pad (1,2,2), stride down_spat, no bias) -> BN -> ReLU
    w = init_conv_w(kg, input_channels, conv_num_out[0], (3, 5, 5), 1)
    scale, bias = init_bn(kg, conv_num_out[0])
    params['conv1'] = dict(w=w, scale=scale, bias=bias)
    params['blocks'] = {}
    for block_id, (key, value) in enumerate(k_sec.items()):
        units = []
        for i in range(1, value + 1):
            if i == 1:
                if block_id == 0:
                    stride = STRD['stable'] if mod_name == 'Flow' else STRD['down_temp']
                else:
                    stride = STRD['down_spat']
                num_in = conv_num_out[block_id]
                fb = True
            else:
                stride = STRD['stable']
                num_in = conv_num_out[block_id + 1]
                fb = False
            num_mid = conv_num_mid[block_id]
            num_out = conv_num_out[block_id + 1]
            units.append(init_mf_unit(kg, num_in, num_mid, num_out, g, stride, fb))
        params['blocks']['conv{}'.format(key)] = units
    return params


def modality_block_fwd(params, x):
    c1 = params['conv1']
    # conv1 with its BatchNorm+ReLU fused as the matmul epilogue
    h = grouped_conv3d(x, c1['w'], STRD['down_spat'], (1, 2, 2),
                       out_scale=c1['scale'], out_bias=c1['bias'])
    h1 = maxpool_1x3x3_s122(h)
    outs = [h1]
    h_cur = h1
    for name in params['blocks']:
        for unit in params['blocks'][name]:
            h_cur = mf_unit_fwd(unit, h_cur)
        outs.append(h_cur)
    return outs  # [h1, h2, h3, h4, h5]


# --------------------------------- main ------------------------------------

if __name__ == "__main__":
    # Small config consistent with Modality_Block's constructor arguments.
    # conv3 gets two MF units so the non-first-block (1x3x3 grouped) path is exercised.
    k_sec = {2: 1, 3: 2, 4: 1, 5: 1}
    conv_num_mid = [8, 8, 16, 16]
    conv_num_out = [4, 8, 8, 16, 16]
    groups = 2

    kg = KeyGen(1)
    params = init_modality_block(kg, 'RGB', 3, groups, k_sec,
                                 conv_num_mid, conv_num_out)

    # NDHWC input (equivalent to PyTorch NCDHW (2, 3, 4, 16, 16))
    x = jax.random.normal(jax.random.PRNGKey(0), (2, 4, 16, 16, 3), jnp.float32)

    fwd = jax.jit(lambda inp: modality_block_fwd(params, inp))
    outs = jax.block_until_ready(fwd(x))

    expected = [(2, 4, 4, 4, 4), (2, 2, 4, 4, 8), (2, 2, 2, 2, 8),
                (2, 2, 1, 1, 16), (2, 2, 1, 1, 16)]
    assert [tuple(o.shape) for o in outs] == expected, \
        [tuple(o.shape) for o in outs]
    assert all(bool(jnp.all(jnp.isfinite(o))) for o in outs)
    print("KERNEL_OK")
</pallas_src>

<mosaic_0001>
module attributes {stable_mosaic.version = 11 : i64} {
  func.func @kernel(%arg0: i32, %arg1: memref<1x512x225xbf16, #tpu.memory_space<vmem>>, %arg2: memref<1x225x4xbf16, #tpu.memory_space<vmem>>, %arg3: memref<1x4xf32, #tpu.memory_space<vmem>>, %arg4: memref<1x4xf32, #tpu.memory_space<vmem>>, %arg5: memref<512x4xf32, #tpu.memory_space<vmem>>) attributes {dimension_semantics = [#tpu.dimension_semantics<parallel>], iteration_bounds = array<i64: 1>, scalar_prefetch = 0 : i64, scratch_operands = 0 : i64, tpu.core_type = #tpu.core_type<tc>, window_params = [{transform_indices = @transform_0, window_bounds = array<i64: 1, 512, 225>}, {pipeline_mode = #tpu.pipeline_mode<synchronous>, transform_indices = @transform_1, window_bounds = array<i64: 1, 225, 4>}, {pipeline_mode = #tpu.pipeline_mode<synchronous>, transform_indices = @transform_2, window_bounds = array<i64: 1, 4>}, {pipeline_mode = #tpu.pipeline_mode<synchronous>, transform_indices = @transform_3, window_bounds = array<i64: 1, 4>}, {transform_indices = @transform_4, window_bounds = array<i64: 512, 4>}]} {
    %c0 = arith.constant 0 : index
    %c0_0 = arith.constant 0 : index
    %c0_1 = arith.constant 0 : index
    %0 = vector.load %arg1[%c0, %c0_0, %c0_1] : memref<1x512x225xbf16, #tpu.memory_space<vmem>>, vector<1x512x225xbf16>
    %1 = vector.shape_cast %0 : vector<1x512x225xbf16> to vector<512x225xbf16>
    %c0_2 = arith.constant 0 : index
    %c0_3 = arith.constant 0 : index
    %c0_4 = arith.constant 0 : index
    %2 = vector.load %arg2[%c0_2, %c0_3, %c0_4] : memref<1x225x4xbf16, #tpu.memory_space<vmem>>, vector<1x225x4xbf16>
    %3 = vector.shape_cast %2 : vector<1x225x4xbf16> to vector<225x4xbf16>
    %cst = arith.constant dense<0.000000e+00> : vector<512x4xf32>
    %4 = tpu.matmul %1, %3, %cst {dimension_numbers = #tpu.dot_dimension_numbers<[1], [0], [0], [1], [0, 0, 1, 1], [], []>} : vector<512x225xbf16>, vector<225x4xbf16>, vector<512x4xf32> -> vector<512x4xf32>
    %c0_5 = arith.constant 0 : index
    %c0_6 = arith.constant 0 : index
    %5 = vector.load %arg3[%c0_5, %c0_6] : memref<1x4xf32, #tpu.memory_space<vmem>>, vector<1x4xf32>
    %6 = vector.broadcast %5 : vector<1x4xf32> to vector<512x4xf32>
    %7 = arith.mulf %4, %6 : vector<512x4xf32>
    %c0_7 = arith.constant 0 : index
    %c0_8 = arith.constant 0 : index
    %8 = vector.load %arg4[%c0_7, %c0_8] : memref<1x4xf32, #tpu.memory_space<vmem>>, vector<1x4xf32>
    %9 = vector.broadcast %8 : vector<1x4xf32> to vector<512x4xf32>
    %10 = arith.addf %7, %9 : vector<512x4xf32>
    %cst_9 = arith.constant 0.000000e+00 : f32
    %11 = vector.broadcast %cst_9 : f32 to vector<512x4xf32>
    %12 = arith.maximumf %10, %11 : vector<512x4xf32>
    %c0_10 = arith.constant 0 : index
    %c0_11 = arith.constant 0 : index
    %13 = vector.load %arg5[%c0_10, %c0_11] : memref<512x4xf32, #tpu.memory_space<vmem>>, vector<512x4xf32>
    tpu.vector_store %arg5[%c0_10, %c0_11], %12 {strides = array<i32>} : memref<512x4xf32, #tpu.memory_space<vmem>>, vector<512x4xf32>,
    return
  }
  func.func @transform_0(%arg0: i32) -> (i32, i32, i32) {
    %c0_i32 = arith.constant 0 : i32
    %c0_i32_0 = arith.constant 0 : i32
    %c0_i32_1 = arith.constant 0 : i32
    return %c0_i32, %arg0, %c0_i32_0 : i32, i32, i32
  }
  func.func @transform_1(%arg0: i32) -> (i32, i32, i32) {
    %c0_i32 = arith.constant 0 : i32
    %c0_i32_0 = arith.constant 0 : i32
    %c0_i32_1 = arith.constant 0 : i32
    %c0_i32_2 = arith.constant 0 : i32
    return %c0_i32, %c0_i32_0, %c0_i32_1 : i32, i32, i32
  }
  func.func @transform_2(%arg0: i32) -> (i32, i32) {
    %c0_i32 = arith.constant 0 : i32
    %c0_i32_0 = arith.constant 0 : i32
    %c0_i32_1 = arith.constant 0 : i32
    return %c0_i32, %c0_i32_0 : i32, i32
  }
  func.func @transform_3(%arg0: i32) -> (i32, i32) {
    %c0_i32 = arith.constant 0 : i32
    %c0_i32_0 = arith.constant 0 : i32
    %c0_i32_1 = arith.constant 0 : i32
    return %c0_i32, %c0_i32_0 : i32, i32
  }
  func.func @transform_4(%arg0: i32) -> (i32, i32) {
    %c0_i32 = arith.constant 0 : i32
    %c0_i32_0 = arith.constant 0 : i32
    return %arg0, %c0_i32 : i32, i32
  }
}

module attributes {stable_mosaic.version = 11 : i64} {
  func.func @kernel(%arg0: i32, %arg1: memref<1x5x5x4xf32, #tpu.memory_space<vmem>>, %arg2: memref<1x5x5x4xf32, #tpu.memory_space<vmem>>, %arg3: memref<1x5x5x4xf32, #tpu.memory_space<vmem>>, %arg4: memref<1x5x5x4xf32, #tpu.memory_space<vmem>>, %arg5: memref<1x4x4x4xf32, #tpu.memory_space<vmem>>) attributes {dimension_semantics = [#tpu.dimension_semantics<parallel>], iteration_bounds = array<i64: 8>, scalar_prefetch = 0 : i64, scratch_operands = 0 : i64, tpu.core_type = #tpu.core_type<tc>, window_params = [{transform_indices = @transform_0, window_bounds = array<i64: 1, 5, 5, 4>}, {transform_indices = @transform_1, window_bounds = array<i64: 1, 5, 5, 4>}, {transform_indices = @transform_2, window_bounds = array<i64: 1, 5, 5, 4>}, {transform_indices = @transform_3, window_bounds = array<i64: 1, 5, 5, 4>}, {transform_indices = @transform_4, window_bounds = array<i64: 1, 4, 4, 4>}]} {
    %c0 = arith.constant 0 : index
    %c0_0 = arith.constant 0 : index
    %c0_1 = arith.constant 0 : index
    %c0_2 = arith.constant 0 : index
    %0 = vector.load %arg1[%c0, %c0_0, %c0_1, %c0_2] : memref<1x5x5x4xf32, #tpu.memory_space<vmem>>, vector<1x4x4x4xf32>
    %1 = vector.shape_cast %0 : vector<1x4x4x4xf32> to vector<4x4x4xf32>
    %c0_3 = arith.constant 0 : index
    %c0_4 = arith.constant 0 : index
    %c0_5 = arith.constant 0 : index
    %c0_6 = arith.constant 0 : index
    %2 = vector.load %arg2[%c0_3, %c0_4, %c0_5, %c0_6] : memref<1x5x5x4xf32, #tpu.memory_space<vmem>>, vector<1x4x4x4xf32>
    %3 = vector.shape_cast %2 : vector<1x4x4x4xf32> to vector<4x4x4xf32>
    %c0_7 = arith.constant 0 : index
    %c0_8 = arith.constant 0 : index
    %c1 = arith.constant 1 : index
    %c0_9 = arith.constant 0 : index
    %4 = vector.load %arg1[%c0_7, %c0_8, %c1, %c0_9] : memref<1x5x5x4xf32, #tpu.memory_space<vmem>>, vector<1x4x4x4xf32>
    %5 = vector.shape_cast %4 : vector<1x4x4x4xf32> to vector<4x4x4xf32>
    %c0_10 = arith.constant 0 : index
    %c0_11 = arith.constant 0 : index
    %c0_12 = arith.constant 0 : index
    %c0_13 = arith.constant 0 : index
    %6 = vector.load %arg3[%c0_10, %c0_11, %c0_12, %c0_13] : memref<1x5x5x4xf32, #tpu.memory_space<vmem>>, vector<1x4x4x4xf32>
    %7 = vector.shape_cast %6 : vector<1x4x4x4xf32> to vector<4x4x4xf32>
    %c0_14 = arith.constant 0 : index
    %c0_15 = arith.constant 0 : index
    %c0_16 = arith.constant 0 : index
    %c0_17 = arith.constant 0 : index
    %8 = vector.load %arg4[%c0_14, %c0_15, %c0_16, %c0_17] : memref<1x5x5x4xf32, #tpu.memory_space<vmem>>, vector<1x4x4x4xf32>
    %9 = vector.shape_cast %8 : vector<1x4x4x4xf32> to vector<4x4x4xf32>
    %c0_18 = arith.constant 0 : index
    %c0_19 = arith.constant 0 : index
    %c1_20 = arith.constant 1 : index
    %c0_21 = arith.constant 0 : index
    %10 = vector.load %arg3[%c0_18, %c0_19, %c1_20, %c0_21] : memref<1x5x5x4xf32, #tpu.memory_space<vmem>>, vector<1x4x4x4xf32>
    %11 = vector.shape_cast %10 : vector<1x4x4x4xf32> to vector<4x4x4xf32>
    %c0_22 = arith.constant 0 : index
    %c1_23 = arith.constant 1 : index
    %c0_24 = arith.constant 0 : index
    %c0_25 = arith.constant 0 : index
    %12 = vector.load %arg1[%c0_22, %c1_23, %c0_24, %c0_25] : memref<1x5x5x4xf32, #tpu.memory_space<vmem>>, vector<1x4x4x4xf32>
    %13 = vector.shape_cast %12 : vector<1x4x4x4xf32> to vector<4x4x4xf32>
    %c0_26 = arith.constant 0 : index
    %c1_27 = arith.constant 1 : index
    %c0_28 = arith.constant 0 : index
    %c0_29 = arith.constant 0 : index
    %14 = vector.load %arg2[%c0_26, %c1_27, %c0_28, %c0_29] : memref<1x5x5x4xf32, #tpu.memory_space<vmem>>, vector<1x4x4x4xf32>
    %15 = vector.shape_cast %14 : vector<1x4x4x4xf32> to vector<4x4x4xf32>
    %c0_30 = arith.constant 0 : index
    %c1_31 = arith.constant 1 : index
    %c1_32 = arith.constant 1 : index
    %c0_33 = arith.constant 0 : index
    %16 = vector.load %arg1[%c0_30, %c1_31, %c1_32, %c0_33] : memref<1x5x5x4xf32, #tpu.memory_space<vmem>>, vector<1x4x4x4xf32>
    %17 = vector.shape_cast %16 : vector<1x4x4x4xf32> to vector<4x4x4xf32>
    %18 = arith.maximumf %1, %3 : vector<4x4x4xf32>
    %19 = arith.maximumf %18, %5 : vector<4x4x4xf32>
    %20 = arith.maximumf %19, %7 : vector<4x4x4xf32>
    %21 = arith.maximumf %20, %9 : vector<4x4x4xf32>
    %22 = arith.maximumf %21, %11 : vector<4x4x4xf32>
    %23 = arith.maximumf %22, %13 : vector<4x4x4xf32>
    %24 = arith.maximumf %23, %15 : vector<4x4x4xf32>
    %25 = arith.maximumf %24, %17 : vector<4x4x4xf32>
    %c0_34 = arith.constant 0 : index
    %c0_35 = arith.constant 0 : index
    %c0_36 = arith.constant 0 : index
    %c0_37 = arith.constant 0 : index
    %26 = vector.load %arg5[%c0_34, %c0_35, %c0_36, %c0_37] : memref<1x4x4x4xf32, #tpu.memory_space<vmem>>, vector<1x4x4x4xf32>
    %27 = vector.shape_cast %26 : vector<1x4x4x4xf32> to vector<4x4x4xf32>
    %28 = vector.shape_cast %25 : vector<4x4x4xf32> to vector<1x4x4x4xf32>
    tpu.vector_store %arg5[%c0_34, %c0_35, %c0_36, %c0_37], %28 {strides = array<i32>} : memref<1x4x4x4xf32, #tpu.memory_space<vmem>>, vector<1x4x4x4xf32>,
    return
  }
  func.func @transform_0(%arg0: i32) -> (i32, i32, i32, i32) {
    %c0_i32 = arith.constant 0 : i32
    %c0_i32_0 = arith.constant 0 : i32
    %c0_i32_1 = arith.constant 0 : i32
    %c0_i32_2 = arith.constant 0 : i32
    return %arg0, %c0_i32, %c0_i32_0, %c0_i32_1 : i32, i32, i32, i32
  }
  func.func @transform_1(%arg0: i32) -> (i32, i32, i32, i32) {
    %c0_i32 = arith.constant 0 : i32
    %c0_i32_0 = arith.constant 0 : i32
    %c0_i32_1 = arith.constant 0 : i32
    %c0_i32_2 = arith.constant 0 : i32
    return %arg0, %c0_i32, %c0_i32_0, %c0_i32_1 : i32, i32, i32, i32
  }
  func.func @transform_2(%arg0: i32) -> (i32, i32, i32, i32) {
    %c0_i32 = arith.constant 0 : i32
    %c0_i32_0 = arith.constant 0 : i32
    %c0_i32_1 = arith.constant 0 : i32
    %c0_i32_2 = arith.constant 0 : i32
    return %arg0, %c0_i32, %c0_i32_0, %c0_i32_1 : i32, i32, i32, i32
  }
  func.func @transform_3(%arg0: i32) -> (i32, i32, i32, i32) {
    %c0_i32 = arith.constant 0 : i32
    %c0_i32_0 = arith.constant 0 : i32
    %c0_i32_1 = arith.constant 0 : i32
    %c0_i32_2 = arith.constant 0 : i32
    return %arg0, %c0_i32, %c0_i32_0, %c0_i32_1 : i32, i32, i32, i32
  }
  func.func @transform_4(%arg0: i32) -> (i32, i32, i32, i32) {
    %c0_i32 = arith.constant 0 : i32
    %c0_i32_0 = arith.constant 0 : i32
    %c0_i32_1 = arith.constant 0 : i32
    %c0_i32_2 = arith.constant 0 : i32
    return %arg0, %c0_i32, %c0_i32_0, %c0_i32_1 : i32, i32, i32, i32
  }
}

module attributes {stable_mosaic.version = 11 : i64} {
  func.func @_pw_conv_kernel(%arg0: i32, %arg1: memref<128x4xf32, #tpu.memory_space<vmem>>, %arg2: memref<1x4xf32, #tpu.memory_space<vmem>>, %arg3: memref<1x4xf32, #tpu.memory_space<vmem>>, %arg4: memref<4x2xbf16, #tpu.memory_space<vmem>>, %arg5: memref<128x2xf32, #tpu.memory_space<vmem>>) attributes {dimension_semantics = [#tpu.dimension_semantics<parallel>], iteration_bounds = array<i64: 1>, scalar_prefetch = 0 : i64, scratch_operands = 0 : i64, tpu.core_type = #tpu.core_type<tc>, window_params = [{transform_indices = @transform_0, window_bounds = array<i64: 128, 4>}, {pipeline_mode = #tpu.pipeline_mode<synchronous>, transform_indices = @transform_1, window_bounds = array<i64: 1, 4>}, {pipeline_mode = #tpu.pipeline_mode<synchronous>, transform_indices = @transform_2, window_bounds = array<i64: 1, 4>}, {pipeline_mode = #tpu.pipeline_mode<synchronous>, transform_indices = @transform_3, window_bounds = array<i64: 4, 2>}, {transform_indices = @transform_4, window_bounds = array<i64: 128, 2>}]} {
    %c0 = arith.constant 0 : index
    %c0_0 = arith.constant 0 : index
    %0 = vector.load %arg1[%c0, %c0_0] : memref<128x4xf32, #tpu.memory_space<vmem>>, vector<128x4xf32>
    %c0_1 = arith.constant 0 : index
    %c0_2 = arith.constant 0 : index
    %1 = vector.load %arg2[%c0_1, %c0_2] : memref<1x4xf32, #tpu.memory_space<vmem>>, vector<1x4xf32>
    %2 = vector.broadcast %1 : vector<1x4xf32> to vector<128x4xf32>
    %3 = arith.mulf %0, %2 : vector<128x4xf32>
    %c0_3 = arith.constant 0 : index
    %c0_4 = arith.constant 0 : index
    %4 = vector.load %arg3[%c0_3, %c0_4] : memref<1x4xf32, #tpu.memory_space<vmem>>, vector<1x4xf32>
    %5 = vector.broadcast %4 : vector<1x4xf32> to vector<128x4xf32>
    %6 = arith.addf %3, %5 : vector<128x4xf32>
    %cst = arith.constant 0.000000e+00 : f32
    %7 = vector.broadcast %cst : f32 to vector<128x4xf32>
    %8 = arith.maximumf %6, %7 : vector<128x4xf32>
    %9 = arith.truncf %8 : vector<128x4xf32> to vector<128x4xbf16>
    %c0_5 = arith.constant 0 : index
    %c0_6 = arith.constant 0 : index
    %10 = vector.load %arg4[%c0_5, %c0_6] : memref<4x2xbf16, #tpu.memory_space<vmem>>, vector<4x2xbf16>
    %cst_7 = arith.constant dense<0.000000e+00> : vector<128x2xf32>
    %11 = tpu.matmul %9, %10, %cst_7 {dimension_numbers = #tpu.dot_dimension_numbers<[1], [0], [0], [1], [0, 0, 1, 1], [], []>} : vector<128x4xbf16>, vector<4x2xbf16>, vector<128x2xf32> -> vector<128x2xf32>
    %c0_8 = arith.constant 0 : index
    %c0_9 = arith.constant 0 : index
    %12 = vector.load %arg5[%c0_8, %c0_9] : memref<128x2xf32, #tpu.memory_space<vmem>>, vector<128x2xf32>
    tpu.vector_store %arg5[%c0_8, %c0_9], %11 {strides = array<i32>} : memref<128x2xf32, #tpu.memory_space<vmem>>, vector<128x2xf32>,
    return
  }
  func.func @transform_0(%arg0: i32) -> (i32, i32) {
    %c0_i32 = arith.constant 0 : i32
    %c0_i32_0 = arith.constant 0 : i32
    return %arg0, %c0_i32 : i32, i32
  }
  func.func @transform_1(%arg0: i32) -> (i32, i32) {
    %c0_i32 = arith.constant 0 : i32
    %c0_i32_0 = arith.constant 0 : i32
    %c0_i32_1 = arith.constant 0 : i32
    return %c0_i32, %c0_i32_0 : i32, i32
  }
  func.func @transform_2(%arg0: i32) -> (i32, i32) {
    %c0_i32 = arith.constant 0 : i32
    %c0_i32_0 = arith.constant 0 : i32
    %c0_i32_1 = arith.constant 0 : i32
    return %c0_i32, %c0_i32_0 : i32, i32
  }
  func.func @transform_3(%arg0: i32) -> (i32, i32) {
    %c0_i32 = arith.constant 0 : i32
    %c0_i32_0 = arith.constant 0 : i32
    %c0_i32_1 = arith.constant 0 : i32
    return %c0_i32, %c0_i32_0 : i32, i32
  }
  func.func @transform_4(%arg0: i32) -> (i32, i32) {
    %c0_i32 = arith.constant 0 : i32
    %c0_i32_0 = arith.constant 0 : i32
    return %arg0, %c0_i32 : i32, i32
  }
}

module attributes {stable_mosaic.version = 11 : i64} {
  func.func @_pw_conv_res_kernel(%arg0: i32, %arg1: memref<128x2xf32, #tpu.memory_space<vmem>>, %arg2: memref<1x2xf32, #tpu.memory_space<vmem>>, %arg3: memref<1x2xf32, #tpu.memory_space<vmem>>, %arg4: memref<2x4xbf16, #tpu.memory_space<vmem>>, %arg5: memref<128x4xf32, #tpu.memory_space<vmem>>, %arg6: memref<128x4xf32, #tpu.memory_space<vmem>>) attributes {dimension_semantics = [#tpu.dimension_semantics<parallel>], iteration_bounds = array<i64: 1>, scalar_prefetch = 0 : i64, scratch_operands = 0 : i64, tpu.core_type = #tpu.core_type<tc>, window_params = [{transform_indices = @transform_0, window_bounds = array<i64: 128, 2>}, {pipeline_mode = #tpu.pipeline_mode<synchronous>, transform_indices = @transform_1, window_bounds = array<i64: 1, 2>}, {pipeline_mode = #tpu.pipeline_mode<synchronous>, transform_indices = @transform_2, window_bounds = array<i64: 1, 2>}, {pipeline_mode = #tpu.pipeline_mode<synchronous>, transform_indices = @transform_3, window_bounds = array<i64: 2, 4>}, {transform_indices = @transform_4, window_bounds = array<i64: 128, 4>}, {transform_indices = @transform_5, window_bounds = array<i64: 128, 4>}]} {
    %c0 = arith.constant 0 : index
    %c0_0 = arith.constant 0 : index
    %0 = vector.load %arg1[%c0, %c0_0] : memref<128x2xf32, #tpu.memory_space<vmem>>, vector<128x2xf32>
    %c0_1 = arith.constant 0 : index
    %c0_2 = arith.constant 0 : index
    %1 = vector.load %arg2[%c0_1, %c0_2] : memref<1x2xf32, #tpu.memory_space<vmem>>, vector<1x2xf32>
    %2 = vector.broadcast %1 : vector<1x2xf32> to vector<128x2xf32>
    %3 = arith.mulf %0, %2 : vector<128x2xf32>
    %c0_3 = arith.constant 0 : index
    %c0_4 = arith.constant 0 : index
    %4 = vector.load %arg3[%c0_3, %c0_4] : memref<1x2xf32, #tpu.memory_space<vmem>>, vector<1x2xf32>
    %5 = vector.broadcast %4 : vector<1x2xf32> to vector<128x2xf32>
    %6 = arith.addf %3, %5 : vector<128x2xf32>
    %cst = arith.constant 0.000000e+00 : f32
    %7 = vector.broadcast %cst : f32 to vector<128x2xf32>
    %8 = arith.maximumf %6, %7 : vector<128x2xf32>
    %c0_5 = arith.constant 0 : index
    %c0_6 = arith.constant 0 : index
    %9 = vector.load %arg5[%c0_5, %c0_6] : memref<128x4xf32, #tpu.memory_space<vmem>>, vector<128x4xf32>
    %10 = arith.truncf %8 : vector<128x2xf32> to vector<128x2xbf16>
    %c0_7 = arith.constant 0 : index
    %c0_8 = arith.constant 0 : index
    %11 = vector.load %arg4[%c0_7, %c0_8] : memref<2x4xbf16, #tpu.memory_space<vmem>>, vector<2x4xbf16>
    %cst_9 = arith.constant dense<0.000000e+00> : vector<128x4xf32>
    %12 = tpu.matmul %10, %11, %cst_9 {dimension_numbers = #tpu.dot_dimension_numbers<[1], [0], [0], [1], [0, 0, 1, 1], [], []>} : vector<128x2xbf16>, vector<2x4xbf16>, vector<128x4xf32> -> vector<128x4xf32>
    %13 = arith.addf %9, %12 : vector<128x4xf32>
    %c0_10 = arith.constant 0 : index
    %c0_11 = arith.constant 0 : index
    %14 = vector.load %arg6[%c0_10, %c0_11] : memref<128x4xf32, #tpu.memory_space<vmem>>, vector<128x4xf32>
    tpu.vector_store %arg6[%c0_10, %c0_11], %13 {strides = array<i32>} : memref<128x4xf32, #tpu.memory_space<vmem>>, vector<128x4xf32>,
    return
  }
  func.func @transform_0(%arg0: i32) -> (i32, i32) {
    %c0_i32 = arith.constant 0 : i32
    %c0_i32_0 = arith.constant 0 : i32
    return %arg0, %c0_i32 : i32, i32
  }
  func.func @transform_1(%arg0: i32) -> (i32, i32) {
    %c0_i32 = arith.constant 0 : i32
    %c0_i32_0 = arith.constant 0 : i32
    %c0_i32_1 = arith.constant 0 : i32
    return %c0_i32, %c0_i32_0 : i32, i32
  }
  func.func @transform_2(%arg0: i32) -> (i32, i32) {
    %c0_i32 = arith.constant 0 : i32
    %c0_i32_0 = arith.constant 0 : i32
    %c0_i32_1 = arith.constant 0 : i32
    return %c0_i32, %c0_i32_0 : i32, i32
  }
  func.func @transform_3(%arg0: i32) -> (i32, i32) {
    %c0_i32 = arith.constant 0 : i32
    %c0_i32_0 = arith.constant 0 : i32
    %c0_i32_1 = arith.constant 0 : i32
    return %c0_i32, %c0_i32_0 : i32, i32
  }
  func.func @transform_4(%arg0: i32) -> (i32, i32) {
    %c0_i32 = arith.constant 0 : i32
    %c0_i32_0 = arith.constant 0 : i32
    return %arg0, %c0_i32 : i32, i32
  }
  func.func @transform_5(%arg0: i32) -> (i32, i32) {
    %c0_i32 = arith.constant 0 : i32
    %c0_i32_0 = arith.constant 0 : i32
    return %arg0, %c0_i32 : i32, i32
  }
}

module attributes {stable_mosaic.version = 11 : i64} {
  func.func @_bn_relu_kernel(%arg0: i32, %arg1: memref<8x64xf32, #tpu.memory_space<vmem>>, %arg2: memref<1x64xf32, #tpu.memory_space<vmem>>, %arg3: memref<1x64xf32, #tpu.memory_space<vmem>>, %arg4: memref<8x64xf32, #tpu.memory_space<vmem>>) attributes {dimension_semantics = [#tpu.dimension_semantics<parallel>], iteration_bounds = array<i64: 1>, scalar_prefetch = 0 : i64, scratch_operands = 0 : i64, tpu.core_type = #tpu.core_type<tc>, window_params = [{transform_indices = @transform_0, window_bounds = array<i64: 8, 64>}, {pipeline_mode = #tpu.pipeline_mode<synchronous>, transform_indices = @transform_1, window_bounds = array<i64: 1, 64>}, {pipeline_mode = #tpu.pipeline_mode<synchronous>, transform_indices = @transform_2, window_bounds = array<i64: 1, 64>}, {transform_indices = @transform_3, window_bounds = array<i64: 8, 64>}]} {
    %c0 = arith.constant 0 : index
    %c0_0 = arith.constant 0 : index
    %0 = vector.load %arg1[%c0, %c0_0] : memref<8x64xf32, #tpu.memory_space<vmem>>, vector<8x64xf32>
    %c0_1 = arith.constant 0 : index
    %c0_2 = arith.constant 0 : index
    %1 = vector.load %arg2[%c0_1, %c0_2] : memref<1x64xf32, #tpu.memory_space<vmem>>, vector<1x64xf32>
    %2 = vector.broadcast %1 : vector<1x64xf32> to vector<8x64xf32>
    %3 = arith.mulf %0, %2 : vector<8x64xf32>
    %c0_3 = arith.constant 0 : index
    %c0_4 = arith.constant 0 : index
    %4 = vector.load %arg3[%c0_3, %c0_4] : memref<1x64xf32, #tpu.memory_space<vmem>>, vector<1x64xf32>
    %5 = vector.broadcast %4 : vector<1x64xf32> to vector<8x64xf32>
    %6 = arith.addf %3, %5 : vector<8x64xf32>
    %cst = arith.constant 0.000000e+00 : f32
    %7 = vector.broadcast %cst : f32 to vector<8x64xf32>
    %8 = arith.maximumf %6, %7 : vector<8x64xf32>
    %c0_5 = arith.constant 0 : index
    %c0_6 = arith.constant 0 : index
    %9 = vector.load %arg4[%c0_5, %c0_6] : memref<8x64xf32, #tpu.memory_space<vmem>>, vector<8x64xf32>
    tpu.vector_store %arg4[%c0_5, %c0_6], %8 {strides = array<i32>} : memref<8x64xf32, #tpu.memory_space<vmem>>, vector<8x64xf32>,
    return
  }
  func.func @transform_0(%arg0: i32) -> (i32, i32) {
    %c0_i32 = arith.constant 0 : i32
    %c0_i32_0 = arith.constant 0 : i32
    return %arg0, %c0_i32 : i32, i32
  }
  func.func @transform_1(%arg0: i32) -> (i32, i32) {
    %c0_i32 = arith.constant 0 : i32
    %c0_i32_0 = arith.constant 0 : i32
    %c0_i32_1 = arith.constant 0 : i32
    return %c0_i32, %c0_i32_0 : i32, i32
  }
  func.func @transform_2(%arg0: i32) -> (i32, i32) {
    %c0_i32 = arith.constant 0 : i32
    %c0_i32_0 = arith.constant 0 : i32
    %c0_i32_1 = arith.constant 0 : i32
    return %c0_i32, %c0_i32_0 : i32, i32
  }
  func.func @transform_3(%arg0: i32) -> (i32, i32) {
    %c0_i32 = arith.constant 0 : i32
    %c0_i32_0 = arith.constant 0 : i32
    return %arg0, %c0_i32 : i32, i32
  }
}

module attributes {stable_mosaic.version = 11 : i64} {
  func.func @kernel(%arg0: i32, %arg1: memref<2x64x54xbf16, #tpu.memory_space<vmem>>, %arg2: memref<2x54x4xbf16, #tpu.memory_space<vmem>>, %arg3: memref<64x8xf32, #tpu.memory_space<vmem>>) attributes {dimension_semantics = [#tpu.dimension_semantics<parallel>], iteration_bounds = array<i64: 1>, scalar_prefetch = 0 : i64, scratch_operands = 0 : i64, tpu.core_type = #tpu.core_type<tc>, window_params = [{transform_indices = @transform_0, window_bounds = array<i64: 2, 64, 54>}, {pipeline_mode = #tpu.pipeline_mode<synchronous>, transform_indices = @transform_1, window_bounds = array<i64: 2, 54, 4>}, {transform_indices = @transform_2, window_bounds = array<i64: 64, 8>}]} {
    %c0 = arith.constant 0 : index
    %c0_0 = arith.constant 0 : index
    %c0_1 = arith.constant 0 : index
    %0 = vector.load %arg1[%c0, %c0_0, %c0_1] : memref<2x64x54xbf16, #tpu.memory_space<vmem>>, vector<1x64x54xbf16>
    %1 = vector.shape_cast %0 : vector<1x64x54xbf16> to vector<64x54xbf16>
    %c0_2 = arith.constant 0 : index
    %c0_3 = arith.constant 0 : index
    %c0_4 = arith.constant 0 : index
    %2 = vector.load %arg2[%c0_2, %c0_3, %c0_4] : memref<2x54x4xbf16, #tpu.memory_space<vmem>>, vector<1x54x4xbf16>
    %3 = vector.shape_cast %2 : vector<1x54x4xbf16> to vector<54x4xbf16>
    %cst = arith.constant dense<0.000000e+00> : vector<64x4xf32>
    %4 = tpu.matmul %1, %3, %cst {dimension_numbers = #tpu.dot_dimension_numbers<[1], [0], [0], [1], [0, 0, 1, 1], [], []>} : vector<64x54xbf16>, vector<54x4xbf16>, vector<64x4xf32> -> vector<64x4xf32>
    %c1 = arith.constant 1 : index
    %c0_5 = arith.constant 0 : index
    %c0_6 = arith.constant 0 : index
    %5 = vector.load %arg1[%c1, %c0_5, %c0_6] : memref<2x64x54xbf16, #tpu.memory_space<vmem>>, vector<1x64x54xbf16>
    %6 = vector.shape_cast %5 : vector<1x64x54xbf16> to vector<64x54xbf16>
    %c1_7 = arith.constant 1 : index
    %c0_8 = arith.constant 0 : index
    %c0_9 = arith.constant 0 : index
    %7 = vector.load %arg2[%c1_7, %c0_8, %c0_9] : memref<2x54x4xbf16, #tpu.memory_space<vmem>>, vector<1x54x4xbf16>
    %8 = vector.shape_cast %7 : vector<1x54x4xbf16> to vector<54x4xbf16>
    %cst_10 = arith.constant dense<0.000000e+00> : vector<64x4xf32>
    %9 = tpu.matmul %6, %8, %cst_10 {dimension_numbers = #tpu.dot_dimension_numbers<[1], [0], [0], [1], [0, 0, 1, 1], [], []>} : vector<64x54xbf16>, vector<54x4xbf16>, vector<64x4xf32> -> vector<64x4xf32>
    %10 = tpu.concatenate %4, %9 in 1 : vector<64x4xf32>, vector<64x4xf32> -> vector<64x8xf32>
    %c0_11 = arith.constant 0 : index
    %c0_12 = arith.constant 0 : index
    %11 = vector.load %arg3[%c0_11, %c0_12] : memref<64x8xf32, #tpu.memory_space<vmem>>, vector<64x8xf32>
    tpu.vector_store %arg3[%c0_11, %c0_12], %10 {strides = array<i32>} : memref<64x8xf32, #tpu.memory_space<vmem>>, vector<64x8xf32>,
    return
  }
  func.func @transform_0(%arg0: i32) -> (i32, i32, i32) {
    %c0_i32 = arith.constant 0 : i32
    %c0_i32_0 = arith.constant 0 : i32
    %c0_i32_1 = arith.constant 0 : i32
    return %c0_i32, %arg0, %c0_i32_0 : i32, i32, i32
  }
  func.func @transform_1(%arg0: i32) -> (i32, i32, i32) {
    %c0_i32 = arith.constant 0 : i32
    %c0_i32_0 = arith.constant 0 : i32
    %c0_i32_1 = arith.constant 0 : i32
    %c0_i32_2 = arith.constant 0 : i32
    return %c0_i32, %c0_i32_0, %c0_i32_1 : i32, i32, i32
  }
  func.func @transform_2(%arg0: i32) -> (i32, i32) {
    %c0_i32 = arith.constant 0 : i32
    %c0_i32_0 = arith.constant 0 : i32
    return %arg0, %c0_i32 : i32, i32
  }
}

module attributes {stable_mosaic.version = 11 : i64} {
  func.func @_pw_conv_kernel(%arg0: i32, %arg1: memref<64x8xf32, #tpu.memory_space<vmem>>, %arg2: memref<1x8xf32, #tpu.memory_space<vmem>>, %arg3: memref<1x8xf32, #tpu.memory_space<vmem>>, %arg4: memref<8x8xbf16, #tpu.memory_space<vmem>>, %arg5: memref<64x8xf32, #tpu.memory_space<vmem>>) attributes {dimension_semantics = [#tpu.dimension_semantics<parallel>], iteration_bounds = array<i64: 1>, scalar_prefetch = 0 : i64, scratch_operands = 0 : i64, tpu.core_type = #tpu.core_type<tc>, window_params = [{transform_indices = @transform_0, window_bounds = array<i64: 64, 8>}, {pipeline_mode = #tpu.pipeline_mode<synchronous>, transform_indices = @transform_1, window_bounds = array<i64: 1, 8>}, {pipeline_mode = #tpu.pipeline_mode<synchronous>, transform_indices = @transform_2, window_bounds = array<i64: 1, 8>}, {pipeline_mode = #tpu.pipeline_mode<synchronous>, transform_indices = @transform_3, window_bounds = array<i64: 8, 8>}, {transform_indices = @transform_4, window_bounds = array<i64: 64, 8>}]} {
    %c0 = arith.constant 0 : index
    %c0_0 = arith.constant 0 : index
    %0 = vector.load %arg1[%c0, %c0_0] : memref<64x8xf32, #tpu.memory_space<vmem>>, vector<64x8xf32>
    %c0_1 = arith.constant 0 : index
    %c0_2 = arith.constant 0 : index
    %1 = vector.load %arg2[%c0_1, %c0_2] : memref<1x8xf32, #tpu.memory_space<vmem>>, vector<1x8xf32>
    %2 = vector.broadcast %1 : vector<1x8xf32> to vector<64x8xf32>
    %3 = arith.mulf %0, %2 : vector<64x8xf32>
    %c0_3 = arith.constant 0 : index
    %c0_4 = arith.constant 0 : index
    %4 = vector.load %arg3[%c0_3, %c0_4] : memref<1x8xf32, #tpu.memory_space<vmem>>, vector<1x8xf32>
    %5 = vector.broadcast %4 : vector<1x8xf32> to vector<64x8xf32>
    %6 = arith.addf %3, %5 : vector<64x8xf32>
    %cst = arith.constant 0.000000e+00 : f32
    %7 = vector.broadcast %cst : f32 to vector<64x8xf32>
    %8 = arith.maximumf %6, %7 : vector<64x8xf32>
    %9 = arith.truncf %8 : vector<64x8xf32> to vector<64x8xbf16>
    %c0_5 = arith.constant 0 : index
    %c0_6 = arith.constant 0 : index
    %10 = vector.load %arg4[%c0_5, %c0_6] : memref<8x8xbf16, #tpu.memory_space<vmem>>, vector<8x8xbf16>
    %cst_7 = arith.constant dense<0.000000e+00> : vector<64x8xf32>
    %11 = tpu.matmul %9, %10, %cst_7 {dimension_numbers = #tpu.dot_dimension_numbers<[1], [0], [0], [1], [0, 0, 1, 1], [], []>} : vector<64x8xbf16>, vector<8x8xbf16>, vector<64x8xf32> -> vector<64x8xf32>
    %c0_8 = arith.constant 0 : index
    %c0_9 = arith.constant 0 : index
    %12 = vector.load %arg5[%c0_8, %c0_9] : memref<64x8xf32, #tpu.memory_space<vmem>>, vector<64x8xf32>
    tpu.vector_store %arg5[%c0_8, %c0_9], %11 {strides = array<i32>} : memref<64x8xf32, #tpu.memory_space<vmem>>, vector<64x8xf32>,
    return
  }
  func.func @transform_0(%arg0: i32) -> (i32, i32) {
    %c0_i32 = arith.constant 0 : i32
    %c0_i32_0 = arith.constant 0 : i32
    return %arg0, %c0_i32 : i32, i32
  }
  func.func @transform_1(%arg0: i32) -> (i32, i32) {
    %c0_i32 = arith.constant 0 : i32
    %c0_i32_0 = arith.constant 0 : i32
    %c0_i32_1 = arith.constant 0 : i32
    return %c0_i32, %c0_i32_0 : i32, i32
  }
  func.func @transform_2(%arg0: i32) -> (i32, i32) {
    %c0_i32 = arith.constant 0 : i32
    %c0_i32_0 = arith.constant 0 : i32
    %c0_i32_1 = arith.constant 0 : i32
    return %c0_i32, %c0_i32_0 : i32, i32
  }
  func.func @transform_3(%arg0: i32) -> (i32, i32) {
    %c0_i32 = arith.constant 0 : i32
    %c0_i32_0 = arith.constant 0 : i32
    %c0_i32_1 = arith.constant 0 : i32
    return %c0_i32, %c0_i32_0 : i32, i32
  }
  func.func @transform_4(%arg0: i32) -> (i32, i32) {
    %c0_i32 = arith.constant 0 : i32
    %c0_i32_0 = arith.constant 0 : i32
    return %arg0, %c0_i32 : i32, i32
  }
}

module attributes {stable_mosaic.version = 11 : i64} {
  func.func @_pw_conv_res_kernel(%arg0: i32, %arg1: memref<64x4xf32, #tpu.memory_space<vmem>>, %arg2: memref<1x4xf32, #tpu.memory_space<vmem>>, %arg3: memref<1x4xf32, #tpu.memory_space<vmem>>, %arg4: memref<4x8xbf16, #tpu.memory_space<vmem>>, %arg5: memref<64x8xf32, #tpu.memory_space<vmem>>, %arg6: memref<64x8xf32, #tpu.memory_space<vmem>>) attributes {dimension_semantics = [#tpu.dimension_semantics<parallel>], iteration_bounds = array<i64: 1>, scalar_prefetch = 0 : i64, scratch_operands = 0 : i64, tpu.core_type = #tpu.core_type<tc>, window_params = [{transform_indices = @transform_0, window_bounds = array<i64: 64, 4>}, {pipeline_mode = #tpu.pipeline_mode<synchronous>, transform_indices = @transform_1, window_bounds = array<i64: 1, 4>}, {pipeline_mode = #tpu.pipeline_mode<synchronous>, transform_indices = @transform_2, window_bounds = array<i64: 1, 4>}, {pipeline_mode = #tpu.pipeline_mode<synchronous>, transform_indices = @transform_3, window_bounds = array<i64: 4, 8>}, {transform_indices = @transform_4, window_bounds = array<i64: 64, 8>}, {transform_indices = @transform_5, window_bounds = array<i64: 64, 8>}]} {
    %c0 = arith.constant 0 : index
    %c0_0 = arith.constant 0 : index
    %0 = vector.load %arg1[%c0, %c0_0] : memref<64x4xf32, #tpu.memory_space<vmem>>, vector<64x4xf32>
    %c0_1 = arith.constant 0 : index
    %c0_2 = arith.constant 0 : index
    %1 = vector.load %arg2[%c0_1, %c0_2] : memref<1x4xf32, #tpu.memory_space<vmem>>, vector<1x4xf32>
    %2 = vector.broadcast %1 : vector<1x4xf32> to vector<64x4xf32>
    %3 = arith.mulf %0, %2 : vector<64x4xf32>
    %c0_3 = arith.constant 0 : index
    %c0_4 = arith.constant 0 : index
    %4 = vector.load %arg3[%c0_3, %c0_4] : memref<1x4xf32, #tpu.memory_space<vmem>>, vector<1x4xf32>
    %5 = vector.broadcast %4 : vector<1x4xf32> to vector<64x4xf32>
    %6 = arith.addf %3, %5 : vector<64x4xf32>
    %cst = arith.constant 0.000000e+00 : f32
    %7 = vector.broadcast %cst : f32 to vector<64x4xf32>
    %8 = arith.maximumf %6, %7 : vector<64x4xf32>
    %c0_5 = arith.constant 0 : index
    %c0_6 = arith.constant 0 : index
    %9 = vector.load %arg5[%c0_5, %c0_6] : memref<64x8xf32, #tpu.memory_space<vmem>>, vector<64x8xf32>
    %10 = arith.truncf %8 : vector<64x4xf32> to vector<64x4xbf16>
    %c0_7 = arith.constant 0 : index
    %c0_8 = arith.constant 0 : index
    %11 = vector.load %arg4[%c0_7, %c0_8] : memref<4x8xbf16, #tpu.memory_space<vmem>>, vector<4x8xbf16>
    %cst_9 = arith.constant dense<0.000000e+00> : vector<64x8xf32>
    %12 = tpu.matmul %10, %11, %cst_9 {dimension_numbers = #tpu.dot_dimension_numbers<[1], [0], [0], [1], [0, 0, 1, 1], [], []>} : vector<64x4xbf16>, vector<4x8xbf16>, vector<64x8xf32> -> vector<64x8xf32>
    %13 = arith.addf %9, %12 : vector<64x8xf32>
    %c0_10 = arith.constant 0 : index
    %c0_11 = arith.constant 0 : index
    %14 = vector.load %arg6[%c0_10, %c0_11] : memref<64x8xf32, #tpu.memory_space<vmem>>, vector<64x8xf32>
    tpu.vector_store %arg6[%c0_10, %c0_11], %13 {strides = array<i32>} : memref<64x8xf32, #tpu.memory_space<vmem>>, vector<64x8xf32>,
    return
  }
  func.func @transform_0(%arg0: i32) -> (i32, i32) {
    %c0_i32 = arith.constant 0 : i32
    %c0_i32_0 = arith.constant 0 : i32
    return %arg0, %c0_i32 : i32, i32
  }
  func.func @transform_1(%arg0: i32) -> (i32, i32) {
    %c0_i32 = arith.constant 0 : i32
    %c0_i32_0 = arith.constant 0 : i32
    %c0_i32_1 = arith.constant 0 : i32
    return %c0_i32, %c0_i32_0 : i32, i32
  }
  func.func @transform_2(%arg0: i32) -> (i32, i32) {
    %c0_i32 = arith.constant 0 : i32
    %c0_i32_0 = arith.constant 0 : i32
    %c0_i32_1 = arith.constant 0 : i32
    return %c0_i32, %c0_i32_0 : i32, i32
  }
  func.func @transform_3(%arg0: i32) -> (i32, i32) {
    %c0_i32 = arith.constant 0 : i32
    %c0_i32_0 = arith.constant 0 : i32
    %c0_i32_1 = arith.constant 0 : i32
    return %c0_i32, %c0_i32_0 : i32, i32
  }
  func.func @transform_4(%arg0: i32) -> (i32, i32) {
    %c0_i32 = arith.constant 0 : i32
    %c0_i32_0 = arith.constant 0 : i32
    return %arg0, %c0_i32 : i32, i32
  }
  func.func @transform_5(%arg0: i32) -> (i32, i32) {
    %c0_i32 = arith.constant 0 : i32
    %c0_i32_0 = arith.constant 0 : i32
    return %arg0, %c0_i32 : i32, i32
  }
}

module attributes {stable_mosaic.version = 11 : i64} {
  func.func @_pw_conv_kernel(%arg0: i32, %arg1: memref<64x8xf32, #tpu.memory_space<vmem>>, %arg2: memref<1x8xf32, #tpu.memory_space<vmem>>, %arg3: memref<1x8xf32, #tpu.memory_space<vmem>>, %arg4: memref<8x2xbf16, #tpu.memory_space<vmem>>, %arg5: memref<64x2xf32, #tpu.memory_space<vmem>>) attributes {dimension_semantics = [#tpu.dimension_semantics<parallel>], iteration_bounds = array<i64: 1>, scalar_prefetch = 0 : i64, scratch_operands = 0 : i64, tpu.core_type = #tpu.core_type<tc>, window_params = [{transform_indices = @transform_0, window_bounds = array<i64: 64, 8>}, {pipeline_mode = #tpu.pipeline_mode<synchronous>, transform_indices = @transform_1, window_bounds = array<i64: 1, 8>}, {pipeline_mode = #tpu.pipeline_mode<synchronous>, transform_indices = @transform_2, window_bounds = array<i64: 1, 8>}, {pipeline_mode = #tpu.pipeline_mode<synchronous>, transform_indices = @transform_3, window_bounds = array<i64: 8, 2>}, {transform_indices = @transform_4, window_bounds = array<i64: 64, 2>}]} {
    %c0 = arith.constant 0 : index
    %c0_0 = arith.constant 0 : index
    %0 = vector.load %arg1[%c0, %c0_0] : memref<64x8xf32, #tpu.memory_space<vmem>>, vector<64x8xf32>
    %c0_1 = arith.constant 0 : index
    %c0_2 = arith.constant 0 : index
    %1 = vector.load %arg2[%c0_1, %c0_2] : memref<1x8xf32, #tpu.memory_space<vmem>>, vector<1x8xf32>
    %2 = vector.broadcast %1 : vector<1x8xf32> to vector<64x8xf32>
    %3 = arith.mulf %0, %2 : vector<64x8xf32>
    %c0_3 = arith.constant 0 : index
    %c0_4 = arith.constant 0 : index
    %4 = vector.load %arg3[%c0_3, %c0_4] : memref<1x8xf32, #tpu.memory_space<vmem>>, vector<1x8xf32>
    %5 = vector.broadcast %4 : vector<1x8xf32> to vector<64x8xf32>
    %6 = arith.addf %3, %5 : vector<64x8xf32>
    %cst = arith.constant 0.000000e+00 : f32
    %7 = vector.broadcast %cst : f32 to vector<64x8xf32>
    %8 = arith.maximumf %6, %7 : vector<64x8xf32>
    %9 = arith.truncf %8 : vector<64x8xf32> to vector<64x8xbf16>
    %c0_5 = arith.constant 0 : index
    %c0_6 = arith.constant 0 : index
    %10 = vector.load %arg4[%c0_5, %c0_6] : memref<8x2xbf16, #tpu.memory_space<vmem>>, vector<8x2xbf16>
    %cst_7 = arith.constant dense<0.000000e+00> : vector<64x2xf32>
    %11 = tpu.matmul %9, %10, %cst_7 {dimension_numbers = #tpu.dot_dimension_numbers<[1], [0], [0], [1], [0, 0, 1, 1], [], []>} : vector<64x8xbf16>, vector<8x2xbf16>, vector<64x2xf32> -> vector<64x2xf32>
    %c0_8 = arith.constant 0 : index
    %c0_9 = arith.constant 0 : index
    %12 = vector.load %arg5[%c0_8, %c0_9] : memref<64x2xf32, #tpu.memory_space<vmem>>, vector<64x2xf32>
    tpu.vector_store %arg5[%c0_8, %c0_9], %11 {strides = array<i32>} : memref<64x2xf32, #tpu.memory_space<vmem>>, vector<64x2xf32>,
    return
  }
  func.func @transform_0(%arg0: i32) -> (i32, i32) {
    %c0_i32 = arith.constant 0 : i32
    %c0_i32_0 = arith.constant 0 : i32
    return %arg0, %c0_i32 : i32, i32
  }
  func.func @transform_1(%arg0: i32) -> (i32, i32) {
    %c0_i32 = arith.constant 0 : i32
    %c0_i32_0 = arith.constant 0 : i32
    %c0_i32_1 = arith.constant 0 : i32
    return %c0_i32, %c0_i32_0 : i32, i32
  }
  func.func @transform_2(%arg0: i32) -> (i32, i32) {
    %c0_i32 = arith.constant 0 : i32
    %c0_i32_0 = arith.constant 0 : i32
    %c0_i32_1 = arith.constant 0 : i32
    return %c0_i32, %c0_i32_0 : i32, i32
  }
  func.func @transform_3(%arg0: i32) -> (i32, i32) {
    %c0_i32 = arith.constant 0 : i32
    %c0_i32_0 = arith.constant 0 : i32
    %c0_i32_1 = arith.constant 0 : i32
    return %c0_i32, %c0_i32_0 : i32, i32
  }
  func.func @transform_4(%arg0: i32) -> (i32, i32) {
    %c0_i32 = arith.constant 0 : i32
    %c0_i32_0 = arith.constant 0 : i32
    return %arg0, %c0_i32 : i32, i32
  }
}

module attributes {stable_mosaic.version = 11 : i64} {
  func.func @_pw_conv_res_kernel(%arg0: i32, %arg1: memref<64x2xf32, #tpu.memory_space<vmem>>, %arg2: memref<1x2xf32, #tpu.memory_space<vmem>>, %arg3: memref<1x2xf32, #tpu.memory_space<vmem>>, %arg4: memref<2x8xbf16, #tpu.memory_space<vmem>>, %arg5: memref<64x8xf32, #tpu.memory_space<vmem>>, %arg6: memref<64x8xf32, #tpu.memory_space<vmem>>) attributes {dimension_semantics = [#tpu.dimension_semantics<parallel>], iteration_bounds = array<i64: 1>, scalar_prefetch = 0 : i64, scratch_operands = 0 : i64, tpu.core_type = #tpu.core_type<tc>, window_params = [{transform_indices = @transform_0, window_bounds = array<i64: 64, 2>}, {pipeline_mode = #tpu.pipeline_mode<synchronous>, transform_indices = @transform_1, window_bounds = array<i64: 1, 2>}, {pipeline_mode = #tpu.pipeline_mode<synchronous>, transform_indices = @transform_2, window_bounds = array<i64: 1, 2>}, {pipeline_mode = #tpu.pipeline_mode<synchronous>, transform_indices = @transform_3, window_bounds = array<i64: 2, 8>}, {transform_indices = @transform_4, window_bounds = array<i64: 64, 8>}, {transform_indices = @transform_5, window_bounds = array<i64: 64, 8>}]} {
    %c0 = arith.constant 0 : index
    %c0_0 = arith.constant 0 : index
    %0 = vector.load %arg1[%c0, %c0_0] : memref<64x2xf32, #tpu.memory_space<vmem>>, vector<64x2xf32>
    %c0_1 = arith.constant 0 : index
    %c0_2 = arith.constant 0 : index
    %1 = vector.load %arg2[%c0_1, %c0_2] : memref<1x2xf32, #tpu.memory_space<vmem>>, vector<1x2xf32>
    %2 = vector.broadcast %1 : vector<1x2xf32> to vector<64x2xf32>
    %3 = arith.mulf %0, %2 : vector<64x2xf32>
    %c0_3 = arith.constant 0 : index
    %c0_4 = arith.constant 0 : index
    %4 = vector.load %arg3[%c0_3, %c0_4] : memref<1x2xf32, #tpu.memory_space<vmem>>, vector<1x2xf32>
    %5 = vector.broadcast %4 : vector<1x2xf32> to vector<64x2xf32>
    %6 = arith.addf %3, %5 : vector<64x2xf32>
    %cst = arith.constant 0.000000e+00 : f32
    %7 = vector.broadcast %cst : f32 to vector<64x2xf32>
    %8 = arith.maximumf %6, %7 : vector<64x2xf32>
    %c0_5 = arith.constant 0 : index
    %c0_6 = arith.constant 0 : index
    %9 = vector.load %arg5[%c0_5, %c0_6] : memref<64x8xf32, #tpu.memory_space<vmem>>, vector<64x8xf32>
    %10 = arith.truncf %8 : vector<64x2xf32> to vector<64x2xbf16>
    %c0_7 = arith.constant 0 : index
    %c0_8 = arith.constant 0 : index
    %11 = vector.load %arg4[%c0_7, %c0_8] : memref<2x8xbf16, #tpu.memory_space<vmem>>, vector<2x8xbf16>
    %cst_9 = arith.constant dense<0.000000e+00> : vector<64x8xf32>
    %12 = tpu.matmul %10, %11, %cst_9 {dimension_numbers = #tpu.dot_dimension_numbers<[1], [0], [0], [1], [0, 0, 1, 1], [], []>} : vector<64x2xbf16>, vector<2x8xbf16>, vector<64x8xf32> -> vector<64x8xf32>
    %13 = arith.addf %9, %12 : vector<64x8xf32>
    %c0_10 = arith.constant 0 : index
    %c0_11 = arith.constant 0 : index
    %14 = vector.load %arg6[%c0_10, %c0_11] : memref<64x8xf32, #tpu.memory_space<vmem>>, vector<64x8xf32>
    tpu.vector_store %arg6[%c0_10, %c0_11], %13 {strides = array<i32>} : memref<64x8xf32, #tpu.memory_space<vmem>>, vector<64x8xf32>,
    return
  }
  func.func @transform_0(%arg0: i32) -> (i32, i32) {
    %c0_i32 = arith.constant 0 : i32
    %c0_i32_0 = arith.constant 0 : i32
    return %arg0, %c0_i32 : i32, i32
  }
  func.func @transform_1(%arg0: i32) -> (i32, i32) {
    %c0_i32 = arith.constant 0 : i32
    %c0_i32_0 = arith.constant 0 : i32
    %c0_i32_1 = arith.constant 0 : i32
    return %c0_i32, %c0_i32_0 : i32, i32
  }
  func.func @transform_2(%arg0: i32) -> (i32, i32) {
    %c0_i32 = arith.constant 0 : i32
    %c0_i32_0 = arith.constant 0 : i32
    %c0_i32_1 = arith.constant 0 : i32
    return %c0_i32, %c0_i32_0 : i32, i32
  }
  func.func @transform_3(%arg0: i32) -> (i32, i32) {
    %c0_i32 = arith.constant 0 : i32
    %c0_i32_0 = arith.constant 0 : i32
    %c0_i32_1 = arith.constant 0 : i32
    return %c0_i32, %c0_i32_0 : i32, i32
  }
  func.func @transform_4(%arg0: i32) -> (i32, i32) {
    %c0_i32 = arith.constant 0 : i32
    %c0_i32_0 = arith.constant 0 : i32
    return %arg0, %c0_i32 : i32, i32
  }
  func.func @transform_5(%arg0: i32) -> (i32, i32) {
    %c0_i32 = arith.constant 0 : i32
    %c0_i32_0 = arith.constant 0 : i32
    return %arg0, %c0_i32 : i32, i32
  }
}

module attributes {stable_mosaic.version = 11 : i64} {
  func.func @_bn_relu_kernel(%arg0: i32, %arg1: memref<8x128xf32, #tpu.memory_space<vmem>>, %arg2: memref<1x128xf32, #tpu.memory_space<vmem>>, %arg3: memref<1x128xf32, #tpu.memory_space<vmem>>, %arg4: memref<8x128xf32, #tpu.memory_space<vmem>>) attributes {dimension_semantics = [#tpu.dimension_semantics<parallel>], iteration_bounds = array<i64: 1>, scalar_prefetch = 0 : i64, scratch_operands = 0 : i64, tpu.core_type = #tpu.core_type<tc>, window_params = [{transform_indices = @transform_0, window_bounds = array<i64: 8, 128>}, {pipeline_mode = #tpu.pipeline_mode<synchronous>, transform_indices = @transform_1, window_bounds = array<i64: 1, 128>}, {pipeline_mode = #tpu.pipeline_mode<synchronous>, transform_indices = @transform_2, window_bounds = array<i64: 1, 128>}, {transform_indices = @transform_3, window_bounds = array<i64: 8, 128>}]} {
    %c0 = arith.constant 0 : index
    %c0_0 = arith.constant 0 : index
    %0 = vector.load %arg1[%c0, %c0_0] : memref<8x128xf32, #tpu.memory_space<vmem>>, vector<8x128xf32>
    %c0_1 = arith.constant 0 : index
    %c0_2 = arith.constant 0 : index
    %1 = vector.load %arg2[%c0_1, %c0_2] : memref<1x128xf32, #tpu.memory_space<vmem>>, vector<1x128xf32>
    %2 = vector.broadcast %1 : vector<1x128xf32> to vector<8x128xf32>
    %3 = arith.mulf %0, %2 : vector<8x128xf32>
    %c0_3 = arith.constant 0 : index
    %c0_4 = arith.constant 0 : index
    %4 = vector.load %arg3[%c0_3, %c0_4] : memref<1x128xf32, #tpu.memory_space<vmem>>, vector<1x128xf32>
    %5 = vector.broadcast %4 : vector<1x128xf32> to vector<8x128xf32>
    %6 = arith.addf %3, %5 : vector<8x128xf32>
    %cst = arith.constant 0.000000e+00 : f32
    %7 = vector.broadcast %cst : f32 to vector<8x128xf32>
    %8 = arith.maximumf %6, %7 : vector<8x128xf32>
    %c0_5 = arith.constant 0 : index
    %c0_6 = arith.constant 0 : index
    %9 = vector.load %arg4[%c0_5, %c0_6] : memref<8x128xf32, #tpu.memory_space<vmem>>, vector<8x128xf32>
    tpu.vector_store %arg4[%c0_5, %c0_6], %8 {strides = array<i32>} : memref<8x128xf32, #tpu.memory_space<vmem>>, vector<8x128xf32>,
    return
  }
  func.func @transform_0(%arg0: i32) -> (i32, i32) {
    %c0_i32 = arith.constant 0 : i32
    %c0_i32_0 = arith.constant 0 : i32
    return %arg0, %c0_i32 : i32, i32
  }
  func.func @transform_1(%arg0: i32) -> (i32, i32) {
    %c0_i32 = arith.constant 0 : i32
    %c0_i32_0 = arith.constant 0 : i32
    %c0_i32_1 = arith.constant 0 : i32
    return %c0_i32, %c0_i32_0 : i32, i32
  }
  func.func @transform_2(%arg0: i32) -> (i32, i32) {
    %c0_i32 = arith.constant 0 : i32
    %c0_i32_0 = arith.constant 0 : i32
    %c0_i32_1 = arith.constant 0 : i32
    return %c0_i32, %c0_i32_0 : i32, i32
  }
  func.func @transform_3(%arg0: i32) -> (i32, i32) {
    %c0_i32 = arith.constant 0 : i32
    %c0_i32_0 = arith.constant 0 : i32
    return %arg0, %c0_i32 : i32, i32
  }
}

module attributes {stable_mosaic.version = 11 : i64} {
  func.func @kernel(%arg0: i32, %arg1: memref<2x16x108xbf16, #tpu.memory_space<vmem>>, %arg2: memref<2x108x4xbf16, #tpu.memory_space<vmem>>, %arg3: memref<16x8xf32, #tpu.memory_space<vmem>>) attributes {dimension_semantics = [#tpu.dimension_semantics<parallel>], iteration_bounds = array<i64: 1>, scalar_prefetch = 0 : i64, scratch_operands = 0 : i64, tpu.core_type = #tpu.core_type<tc>, window_params = [{transform_indices = @transform_0, window_bounds = array<i64: 2, 16, 108>}, {pipeline_mode = #tpu.pipeline_mode<synchronous>, transform_indices = @transform_1, window_bounds = array<i64: 2, 108, 4>}, {transform_indices = @transform_2, window_bounds = array<i64: 16, 8>}]} {
    %c0 = arith.constant 0 : index
    %c0_0 = arith.constant 0 : index
    %c0_1 = arith.constant 0 : index
    %0 = vector.load %arg1[%c0, %c0_0, %c0_1] : memref<2x16x108xbf16, #tpu.memory_space<vmem>>, vector<1x16x108xbf16>
    %1 = vector.shape_cast %0 : vector<1x16x108xbf16> to vector<16x108xbf16>
    %c0_2 = arith.constant 0 : index
    %c0_3 = arith.constant 0 : index
    %c0_4 = arith.constant 0 : index
    %2 = vector.load %arg2[%c0_2, %c0_3, %c0_4] : memref<2x108x4xbf16, #tpu.memory_space<vmem>>, vector<1x108x4xbf16>
    %3 = vector.shape_cast %2 : vector<1x108x4xbf16> to vector<108x4xbf16>
    %cst = arith.constant dense<0.000000e+00> : vector<16x4xf32>
    %4 = tpu.matmul %1, %3, %cst {dimension_numbers = #tpu.dot_dimension_numbers<[1], [0], [0], [1], [0, 0, 1, 1], [], []>} : vector<16x108xbf16>, vector<108x4xbf16>, vector<16x4xf32> -> vector<16x4xf32>
    %c1 = arith.constant 1 : index
    %c0_5 = arith.constant 0 : index
    %c0_6 = arith.constant 0 : index
    %5 = vector.load %arg1[%c1, %c0_5, %c0_6] : memref<2x16x108xbf16, #tpu.memory_space<vmem>>, vector<1x16x108xbf16>
    %6 = vector.shape_cast %5 : vector<1x16x108xbf16> to vector<16x108xbf16>
    %c1_7 = arith.constant 1 : index
    %c0_8 = arith.constant 0 : index
    %c0_9 = arith.constant 0 : index
    %7 = vector.load %arg2[%c1_7, %c0_8, %c0_9] : memref<2x108x4xbf16, #tpu.memory_space<vmem>>, vector<1x108x4xbf16>
    %8 = vector.shape_cast %7 : vector<1x108x4xbf16> to vector<108x4xbf16>
    %cst_10 = arith.constant dense<0.000000e+00> : vector<16x4xf32>
    %9 = tpu.matmul %6, %8, %cst_10 {dimension_numbers = #tpu.dot_dimension_numbers<[1], [0], [0], [1], [0, 0, 1, 1], [], []>} : vector<16x108xbf16>, vector<108x4xbf16>, vector<16x4xf32> -> vector<16x4xf32>
    %10 = tpu.concatenate %4, %9 in 1 : vector<16x4xf32>, vector<16x4xf32> -> vector<16x8xf32>
    %c0_11 = arith.constant 0 : index
    %c0_12 = arith.constant 0 : index
    %11 = vector.load %arg3[%c0_11, %c0_12] : memref<16x8xf32, #tpu.memory_space<vmem>>, vector<16x8xf32>
    tpu.vector_store %arg3[%c0_11, %c0_12], %10 {strides = array<i32>} : memref<16x8xf32, #tpu.memory_space<vmem>>, vector<16x8xf32>,
    return
  }
  func.func @transform_0(%arg0: i32) -> (i32, i32, i32) {
    %c0_i32 = arith.constant 0 : i32
    %c0_i32_0 = arith.constant 0 : i32
    %c0_i32_1 = arith.constant 0 : i32
    return %c0_i32, %arg0, %c0_i32_0 : i32, i32, i32
  }
  func.func @transform_1(%arg0: i32) -> (i32, i32, i32) {
    %c0_i32 = arith.constant 0 : i32
    %c0_i32_0 = arith.constant 0 : i32
    %c0_i32_1 = arith.constant 0 : i32
    %c0_i32_2 = arith.constant 0 : i32
    return %c0_i32, %c0_i32_0, %c0_i32_1 : i32, i32, i32
  }
  func.func @transform_2(%arg0: i32) -> (i32, i32) {
    %c0_i32 = arith.constant 0 : i32
    %c0_i32_0 = arith.constant 0 : i32
    return %arg0, %c0_i32 : i32, i32
  }
}

module attributes {stable_mosaic.version = 11 : i64} {
  func.func @_pw_conv_kernel(%arg0: i32, %arg1: memref<16x8xf32, #tpu.memory_space<vmem>>, %arg2: memref<1x8xf32, #tpu.memory_space<vmem>>, %arg3: memref<1x8xf32, #tpu.memory_space<vmem>>, %arg4: memref<8x8xbf16, #tpu.memory_space<vmem>>, %arg5: memref<16x8xf32, #tpu.memory_space<vmem>>) attributes {dimension_semantics = [#tpu.dimension_semantics<parallel>], iteration_bounds = array<i64: 1>, scalar_prefetch = 0 : i64, scratch_operands = 0 : i64, tpu.core_type = #tpu.core_type<tc>, window_params = [{transform_indices = @transform_0, window_bounds = array<i64: 16, 8>}, {pipeline_mode = #tpu.pipeline_mode<synchronous>, transform_indices = @transform_1, window_bounds = array<i64: 1, 8>}, {pipeline_mode = #tpu.pipeline_mode<synchronous>, transform_indices = @transform_2, window_bounds = array<i64: 1, 8>}, {pipeline_mode = #tpu.pipeline_mode<synchronous>, transform_indices = @transform_3, window_bounds = array<i64: 8, 8>}, {transform_indices = @transform_4, window_bounds = array<i64: 16, 8>}]} {
    %c0 = arith.constant 0 : index
    %c0_0 = arith.constant 0 : index
    %0 = vector.load %arg1[%c0, %c0_0] : memref<16x8xf32, #tpu.memory_space<vmem>>, vector<16x8xf32>
    %c0_1 = arith.constant 0 : index
    %c0_2 = arith.constant 0 : index
    %1 = vector.load %arg2[%c0_1, %c0_2] : memref<1x8xf32, #tpu.memory_space<vmem>>, vector<1x8xf32>
    %2 = vector.broadcast %1 : vector<1x8xf32> to vector<16x8xf32>
    %3 = arith.mulf %0, %2 : vector<16x8xf32>
    %c0_3 = arith.constant 0 : index
    %c0_4 = arith.constant 0 : index
    %4 = vector.load %arg3[%c0_3, %c0_4] : memref<1x8xf32, #tpu.memory_space<vmem>>, vector<1x8xf32>
    %5 = vector.broadcast %4 : vector<1x8xf32> to vector<16x8xf32>
    %6 = arith.addf %3, %5 : vector<16x8xf32>
    %cst = arith.constant 0.000000e+00 : f32
    %7 = vector.broadcast %cst : f32 to vector<16x8xf32>
    %8 = arith.maximumf %6, %7 : vector<16x8xf32>
    %9 = arith.truncf %8 : vector<16x8xf32> to vector<16x8xbf16>
    %c0_5 = arith.constant 0 : index
    %c0_6 = arith.constant 0 : index
    %10 = vector.load %arg4[%c0_5, %c0_6] : memref<8x8xbf16, #tpu.memory_space<vmem>>, vector<8x8xbf16>
    %cst_7 = arith.constant dense<0.000000e+00> : vector<16x8xf32>
    %11 = tpu.matmul %9, %10, %cst_7 {dimension_numbers = #tpu.dot_dimension_numbers<[1], [0], [0], [1], [0, 0, 1, 1], [], []>} : vector<16x8xbf16>, vector<8x8xbf16>, vector<16x8xf32> -> vector<16x8xf32>
    %c0_8 = arith.constant 0 : index
    %c0_9 = arith.constant 0 : index
    %12 = vector.load %arg5[%c0_8, %c0_9] : memref<16x8xf32, #tpu.memory_space<vmem>>, vector<16x8xf32>
    tpu.vector_store %arg5[%c0_8, %c0_9], %11 {strides = array<i32>} : memref<16x8xf32, #tpu.memory_space<vmem>>, vector<16x8xf32>,
    return
  }
  func.func @transform_0(%arg0: i32) -> (i32, i32) {
    %c0_i32 = arith.constant 0 : i32
    %c0_i32_0 = arith.constant 0 : i32
    return %arg0, %c0_i32 : i32, i32
  }
  func.func @transform_1(%arg0: i32) -> (i32, i32) {
    %c0_i32 = arith.constant 0 : i32
    %c0_i32_0 = arith.constant 0 : i32
    %c0_i32_1 = arith.constant 0 : i32
    return %c0_i32, %c0_i32_0 : i32, i32
  }
  func.func @transform_2(%arg0: i32) -> (i32, i32) {
    %c0_i32 = arith.constant 0 : i32
    %c0_i32_0 = arith.constant 0 : i32
    %c0_i32_1 = arith.constant 0 : i32
    return %c0_i32, %c0_i32_0 : i32, i32
  }
  func.func @transform_3(%arg0: i32) -> (i32, i32) {
    %c0_i32 = arith.constant 0 : i32
    %c0_i32_0 = arith.constant 0 : i32
    %c0_i32_1 = arith.constant 0 : i32
    return %c0_i32, %c0_i32_0 : i32, i32
  }
  func.func @transform_4(%arg0: i32) -> (i32, i32) {
    %c0_i32 = arith.constant 0 : i32
    %c0_i32_0 = arith.constant 0 : i32
    return %arg0, %c0_i32 : i32, i32
  }
}

module attributes {stable_mosaic.version = 11 : i64} {
  func.func @_pw_conv_res_kernel(%arg0: i32, %arg1: memref<16x8xf32, #tpu.memory_space<vmem>>, %arg2: memref<1x8xf32, #tpu.memory_space<vmem>>, %arg3: memref<1x8xf32, #tpu.memory_space<vmem>>, %arg4: memref<8x8xbf16, #tpu.memory_space<vmem>>, %arg5: memref<16x8xf32, #tpu.memory_space<vmem>>, %arg6: memref<16x8xf32, #tpu.memory_space<vmem>>) attributes {dimension_semantics = [#tpu.dimension_semantics<parallel>], iteration_bounds = array<i64: 1>, scalar_prefetch = 0 : i64, scratch_operands = 0 : i64, tpu.core_type = #tpu.core_type<tc>, window_params = [{transform_indices = @transform_0, window_bounds = array<i64: 16, 8>}, {pipeline_mode = #tpu.pipeline_mode<synchronous>, transform_indices = @transform_1, window_bounds = array<i64: 1, 8>}, {pipeline_mode = #tpu.pipeline_mode<synchronous>, transform_indices = @transform_2, window_bounds = array<i64: 1, 8>}, {pipeline_mode = #tpu.pipeline_mode<synchronous>, transform_indices = @transform_3, window_bounds = array<i64: 8, 8>}, {transform_indices = @transform_4, window_bounds = array<i64: 16, 8>}, {transform_indices = @transform_5, window_bounds = array<i64: 16, 8>}]} {
    %c0 = arith.constant 0 : index
    %c0_0 = arith.constant 0 : index
    %0 = vector.load %arg1[%c0, %c0_0] : memref<16x8xf32, #tpu.memory_space<vmem>>, vector<16x8xf32>
    %c0_1 = arith.constant 0 : index
    %c0_2 = arith.constant 0 : index
    %1 = vector.load %arg2[%c0_1, %c0_2] : memref<1x8xf32, #tpu.memory_space<vmem>>, vector<1x8xf32>
    %2 = vector.broadcast %1 : vector<1x8xf32> to vector<16x8xf32>
    %3 = arith.mulf %0, %2 : vector<16x8xf32>
    %c0_3 = arith.constant 0 : index
    %c0_4 = arith.constant 0 : index
    %4 = vector.load %arg3[%c0_3, %c0_4] : memref<1x8xf32, #tpu.memory_space<vmem>>, vector<1x8xf32>
    %5 = vector.broadcast %4 : vector<1x8xf32> to vector<16x8xf32>
    %6 = arith.addf %3, %5 : vector<16x8xf32>
    %cst = arith.constant 0.000000e+00 : f32
    %7 = vector.broadcast %cst : f32 to vector<16x8xf32>
    %8 = arith.maximumf %6, %7 : vector<16x8xf32>
    %c0_5 = arith.constant 0 : index
    %c0_6 = arith.constant 0 : index
    %9 = vector.load %arg5[%c0_5, %c0_6] : memref<16x8xf32, #tpu.memory_space<vmem>>, vector<16x8xf32>
    %10 = arith.truncf %8 : vector<16x8xf32> to vector<16x8xbf16>
    %c0_7 = arith.constant 0 : index
    %c0_8 = arith.constant 0 : index
    %11 = vector.load %arg4[%c0_7, %c0_8] : memref<8x8xbf16, #tpu.memory_space<vmem>>, vector<8x8xbf16>
    %cst_9 = arith.constant dense<0.000000e+00> : vector<16x8xf32>
    %12 = tpu.matmul %10, %11, %cst_9 {dimension_numbers = #tpu.dot_dimension_numbers<[1], [0], [0], [1], [0, 0, 1, 1], [], []>} : vector<16x8xbf16>, vector<8x8xbf16>, vector<16x8xf32> -> vector<16x8xf32>
    %13 = arith.addf %9, %12 : vector<16x8xf32>
    %c0_10 = arith.constant 0 : index
    %c0_11 = arith.constant 0 : index
    %14 = vector.load %arg6[%c0_10, %c0_11] : memref<16x8xf32, #tpu.memory_space<vmem>>, vector<16x8xf32>
    tpu.vector_store %arg6[%c0_10, %c0_11], %13 {strides = array<i32>} : memref<16x8xf32, #tpu.memory_space<vmem>>, vector<16x8xf32>,
    return
  }
  func.func @transform_0(%arg0: i32) -> (i32, i32) {
    %c0_i32 = arith.constant 0 : i32
    %c0_i32_0 = arith.constant 0 : i32
    return %arg0, %c0_i32 : i32, i32
  }
  func.func @transform_1(%arg0: i32) -> (i32, i32) {
    %c0_i32 = arith.constant 0 : i32
    %c0_i32_0 = arith.constant 0 : i32
    %c0_i32_1 = arith.constant 0 : i32
    return %c0_i32, %c0_i32_0 : i32, i32
  }
  func.func @transform_2(%arg0: i32) -> (i32, i32) {
    %c0_i32 = arith.constant 0 : i32
    %c0_i32_0 = arith.constant 0 : i32
    %c0_i32_1 = arith.constant 0 : i32
    return %c0_i32, %c0_i32_0 : i32, i32
  }
  func.func @transform_3(%arg0: i32) -> (i32, i32) {
    %c0_i32 = arith.constant 0 : i32
    %c0_i32_0 = arith.constant 0 : i32
    %c0_i32_1 = arith.constant 0 : i32
    return %c0_i32, %c0_i32_0 : i32, i32
  }
  func.func @transform_4(%arg0: i32) -> (i32, i32) {
    %c0_i32 = arith.constant 0 : i32
    %c0_i32_0 = arith.constant 0 : i32
    return %arg0, %c0_i32 : i32, i32
  }
  func.func @transform_5(%arg0: i32) -> (i32, i32) {
    %c0_i32 = arith.constant 0 : i32
    %c0_i32_0 = arith.constant 0 : i32
    return %arg0, %c0_i32 : i32, i32
  }
}

module attributes {stable_mosaic.version = 11 : i64} {
  func.func @_pw_conv_kernel(%arg0: i32, %arg1: memref<16x8xf32, #tpu.memory_space<vmem>>, %arg2: memref<1x8xf32, #tpu.memory_space<vmem>>, %arg3: memref<1x8xf32, #tpu.memory_space<vmem>>, %arg4: memref<8x2xbf16, #tpu.memory_space<vmem>>, %arg5: memref<16x2xf32, #tpu.memory_space<vmem>>) attributes {dimension_semantics = [#tpu.dimension_semantics<parallel>], iteration_bounds = array<i64: 1>, scalar_prefetch = 0 : i64, scratch_operands = 0 : i64, tpu.core_type = #tpu.core_type<tc>, window_params = [{transform_indices = @transform_0, window_bounds = array<i64: 16, 8>}, {pipeline_mode = #tpu.pipeline_mode<synchronous>, transform_indices = @transform_1, window_bounds = array<i64: 1, 8>}, {pipeline_mode = #tpu.pipeline_mode<synchronous>, transform_indices = @transform_2, window_bounds = array<i64: 1, 8>}, {pipeline_mode = #tpu.pipeline_mode<synchronous>, transform_indices = @transform_3, window_bounds = array<i64: 8, 2>}, {transform_indices = @transform_4, window_bounds = array<i64: 16, 2>}]} {
    %c0 = arith.constant 0 : index
    %c0_0 = arith.constant 0 : index
    %0 = vector.load %arg1[%c0, %c0_0] : memref<16x8xf32, #tpu.memory_space<vmem>>, vector<16x8xf32>
    %c0_1 = arith.constant 0 : index
    %c0_2 = arith.constant 0 : index
    %1 = vector.load %arg2[%c0_1, %c0_2] : memref<1x8xf32, #tpu.memory_space<vmem>>, vector<1x8xf32>
    %2 = vector.broadcast %1 : vector<1x8xf32> to vector<16x8xf32>
    %3 = arith.mulf %0, %2 : vector<16x8xf32>
    %c0_3 = arith.constant 0 : index
    %c0_4 = arith.constant 0 : index
    %4 = vector.load %arg3[%c0_3, %c0_4] : memref<1x8xf32, #tpu.memory_space<vmem>>, vector<1x8xf32>
    %5 = vector.broadcast %4 : vector<1x8xf32> to vector<16x8xf32>
    %6 = arith.addf %3, %5 : vector<16x8xf32>
    %cst = arith.constant 0.000000e+00 : f32
    %7 = vector.broadcast %cst : f32 to vector<16x8xf32>
    %8 = arith.maximumf %6, %7 : vector<16x8xf32>
    %9 = arith.truncf %8 : vector<16x8xf32> to vector<16x8xbf16>
    %c0_5 = arith.constant 0 : index
    %c0_6 = arith.constant 0 : index
    %10 = vector.load %arg4[%c0_5, %c0_6] : memref<8x2xbf16, #tpu.memory_space<vmem>>, vector<8x2xbf16>
    %cst_7 = arith.constant dense<0.000000e+00> : vector<16x2xf32>
    %11 = tpu.matmul %9, %10, %cst_7 {dimension_numbers = #tpu.dot_dimension_numbers<[1], [0], [0], [1], [0, 0, 1, 1], [], []>} : vector<16x8xbf16>, vector<8x2xbf16>, vector<16x2xf32> -> vector<16x2xf32>
    %c0_8 = arith.constant 0 : index
    %c0_9 = arith.constant 0 : index
    %12 = vector.load %arg5[%c0_8, %c0_9] : memref<16x2xf32, #tpu.memory_space<vmem>>, vector<16x2xf32>
    tpu.vector_store %arg5[%c0_8, %c0_9], %11 {strides = array<i32>} : memref<16x2xf32, #tpu.memory_space<vmem>>, vector<16x2xf32>,
    return
  }
  func.func @transform_0(%arg0: i32) -> (i32, i32) {
    %c0_i32 = arith.constant 0 : i32
    %c0_i32_0 = arith.constant 0 : i32
    return %arg0, %c0_i32 : i32, i32
  }
  func.func @transform_1(%arg0: i32) -> (i32, i32) {
    %c0_i32 = arith.constant 0 : i32
    %c0_i32_0 = arith.constant 0 : i32
    %c0_i32_1 = arith.constant 0 : i32
    return %c0_i32, %c0_i32_0 : i32, i32
  }
  func.func @transform_2(%arg0: i32) -> (i32, i32) {
    %c0_i32 = arith.constant 0 : i32
    %c0_i32_0 = arith.constant 0 : i32
    %c0_i32_1 = arith.constant 0 : i32
    return %c0_i32, %c0_i32_0 : i32, i32
  }
  func.func @transform_3(%arg0: i32) -> (i32, i32) {
    %c0_i32 = arith.constant 0 : i32
    %c0_i32_0 = arith.constant 0 : i32
    %c0_i32_1 = arith.constant 0 : i32
    return %c0_i32, %c0_i32_0 : i32, i32
  }
  func.func @transform_4(%arg0: i32) -> (i32, i32) {
    %c0_i32 = arith.constant 0 : i32
    %c0_i32_0 = arith.constant 0 : i32
    return %arg0, %c0_i32 : i32, i32
  }
}

module attributes {stable_mosaic.version = 11 : i64} {
  func.func @_pw_conv_res_kernel(%arg0: i32, %arg1: memref<16x2xf32, #tpu.memory_space<vmem>>, %arg2: memref<1x2xf32, #tpu.memory_space<vmem>>, %arg3: memref<1x2xf32, #tpu.memory_space<vmem>>, %arg4: memref<2x8xbf16, #tpu.memory_space<vmem>>, %arg5: memref<16x8xf32, #tpu.memory_space<vmem>>, %arg6: memref<16x8xf32, #tpu.memory_space<vmem>>) attributes {dimension_semantics = [#tpu.dimension_semantics<parallel>], iteration_bounds = array<i64: 1>, scalar_prefetch = 0 : i64, scratch_operands = 0 : i64, tpu.core_type = #tpu.core_type<tc>, window_params = [{transform_indices = @transform_0, window_bounds = array<i64: 16, 2>}, {pipeline_mode = #tpu.pipeline_mode<synchronous>, transform_indices = @transform_1, window_bounds = array<i64: 1, 2>}, {pipeline_mode = #tpu.pipeline_mode<synchronous>, transform_indices = @transform_2, window_bounds = array<i64: 1, 2>}, {pipeline_mode = #tpu.pipeline_mode<synchronous>, transform_indices = @transform_3, window_bounds = array<i64: 2, 8>}, {transform_indices = @transform_4, window_bounds = array<i64: 16, 8>}, {transform_indices = @transform_5, window_bounds = array<i64: 16, 8>}]} {
    %c0 = arith.constant 0 : index
    %c0_0 = arith.constant 0 : index
    %0 = vector.load %arg1[%c0, %c0_0] : memref<16x2xf32, #tpu.memory_space<vmem>>, vector<16x2xf32>
    %c0_1 = arith.constant 0 : index
    %c0_2 = arith.constant 0 : index
    %1 = vector.load %arg2[%c0_1, %c0_2] : memref<1x2xf32, #tpu.memory_space<vmem>>, vector<1x2xf32>
    %2 = vector.broadcast %1 : vector<1x2xf32> to vector<16x2xf32>
    %3 = arith.mulf %0, %2 : vector<16x2xf32>
    %c0_3 = arith.constant 0 : index
    %c0_4 = arith.constant 0 : index
    %4 = vector.load %arg3[%c0_3, %c0_4] : memref<1x2xf32, #tpu.memory_space<vmem>>, vector<1x2xf32>
    %5 = vector.broadcast %4 : vector<1x2xf32> to vector<16x2xf32>
    %6 = arith.addf %3, %5 : vector<16x2xf32>
    %cst = arith.constant 0.000000e+00 : f32
    %7 = vector.broadcast %cst : f32 to vector<16x2xf32>
    %8 = arith.maximumf %6, %7 : vector<16x2xf32>
    %c0_5 = arith.constant 0 : index
    %c0_6 = arith.constant 0 : index
    %9 = vector.load %arg5[%c0_5, %c0_6] : memref<16x8xf32, #tpu.memory_space<vmem>>, vector<16x8xf32>
    %10 = arith.truncf %8 : vector<16x2xf32> to vector<16x2xbf16>
    %c0_7 = arith.constant 0 : index
    %c0_8 = arith.constant 0 : index
    %11 = vector.load %arg4[%c0_7, %c0_8] : memref<2x8xbf16, #tpu.memory_space<vmem>>, vector<2x8xbf16>
    %cst_9 = arith.constant dense<0.000000e+00> : vector<16x8xf32>
    %12 = tpu.matmul %10, %11, %cst_9 {dimension_numbers = #tpu.dot_dimension_numbers<[1], [0], [0], [1], [0, 0, 1, 1], [], []>} : vector<16x2xbf16>, vector<2x8xbf16>, vector<16x8xf32> -> vector<16x8xf32>
    %13 = arith.addf %9, %12 : vector<16x8xf32>
    %c0_10 = arith.constant 0 : index
    %c0_11 = arith.constant 0 : index
    %14 = vector.load %arg6[%c0_10, %c0_11] : memref<16x8xf32, #tpu.memory_space<vmem>>, vector<16x8xf32>
    tpu.vector_store %arg6[%c0_10, %c0_11], %13 {strides = array<i32>} : memref<16x8xf32, #tpu.memory_space<vmem>>, vector<16x8xf32>,
    return
  }
  func.func @transform_0(%arg0: i32) -> (i32, i32) {
    %c0_i32 = arith.constant 0 : i32
    %c0_i32_0 = arith.constant 0 : i32
    return %arg0, %c0_i32 : i32, i32
  }
  func.func @transform_1(%arg0: i32) -> (i32, i32) {
    %c0_i32 = arith.constant 0 : i32
    %c0_i32_0 = arith.constant 0 : i32
    %c0_i32_1 = arith.constant 0 : i32
    return %c0_i32, %c0_i32_0 : i32, i32
  }
  func.func @transform_2(%arg0: i32) -> (i32, i32) {
    %c0_i32 = arith.constant 0 : i32
    %c0_i32_0 = arith.constant 0 : i32
    %c0_i32_1 = arith.constant 0 : i32
    return %c0_i32, %c0_i32_0 : i32, i32
  }
  func.func @transform_3(%arg0: i32) -> (i32, i32) {
    %c0_i32 = arith.constant 0 : i32
    %c0_i32_0 = arith.constant 0 : i32
    %c0_i32_1 = arith.constant 0 : i32
    return %c0_i32, %c0_i32_0 : i32, i32
  }
  func.func @transform_4(%arg0: i32) -> (i32, i32) {
    %c0_i32 = arith.constant 0 : i32
    %c0_i32_0 = arith.constant 0 : i32
    return %arg0, %c0_i32 : i32, i32
  }
  func.func @transform_5(%arg0: i32) -> (i32, i32) {
    %c0_i32 = arith.constant 0 : i32
    %c0_i32_0 = arith.constant 0 : i32
    return %arg0, %c0_i32 : i32, i32
  }
}

module attributes {stable_mosaic.version = 11 : i64} {
  func.func @_bn_relu_kernel(%arg0: i32, %arg1: memref<8x32xf32, #tpu.memory_space<vmem>>, %arg2: memref<1x32xf32, #tpu.memory_space<vmem>>, %arg3: memref<1x32xf32, #tpu.memory_space<vmem>>, %arg4: memref<8x32xf32, #tpu.memory_space<vmem>>) attributes {dimension_semantics = [#tpu.dimension_semantics<parallel>], iteration_bounds = array<i64: 1>, scalar_prefetch = 0 : i64, scratch_operands = 0 : i64, tpu.core_type = #tpu.core_type<tc>, window_params = [{transform_indices = @transform_0, window_bounds = array<i64: 8, 32>}, {pipeline_mode = #tpu.pipeline_mode<synchronous>, transform_indices = @transform_1, window_bounds = array<i64: 1, 32>}, {pipeline_mode = #tpu.pipeline_mode<synchronous>, transform_indices = @transform_2, window_bounds = array<i64: 1, 32>}, {transform_indices = @transform_3, window_bounds = array<i64: 8, 32>}]} {
    %c0 = arith.constant 0 : index
    %c0_0 = arith.constant 0 : index
    %0 = vector.load %arg1[%c0, %c0_0] : memref<8x32xf32, #tpu.memory_space<vmem>>, vector<8x32xf32>
    %c0_1 = arith.constant 0 : index
    %c0_2 = arith.constant 0 : index
    %1 = vector.load %arg2[%c0_1, %c0_2] : memref<1x32xf32, #tpu.memory_space<vmem>>, vector<1x32xf32>
    %2 = vector.broadcast %1 : vector<1x32xf32> to vector<8x32xf32>
    %3 = arith.mulf %0, %2 : vector<8x32xf32>
    %c0_3 = arith.constant 0 : index
    %c0_4 = arith.constant 0 : index
    %4 = vector.load %arg3[%c0_3, %c0_4] : memref<1x32xf32, #tpu.memory_space<vmem>>, vector<1x32xf32>
    %5 = vector.broadcast %4 : vector<1x32xf32> to vector<8x32xf32>
    %6 = arith.addf %3, %5 : vector<8x32xf32>
    %cst = arith.constant 0.000000e+00 : f32
    %7 = vector.broadcast %cst : f32 to vector<8x32xf32>
    %8 = arith.maximumf %6, %7 : vector<8x32xf32>
    %c0_5 = arith.constant 0 : index
    %c0_6 = arith.constant 0 : index
    %9 = vector.load %arg4[%c0_5, %c0_6] : memref<8x32xf32, #tpu.memory_space<vmem>>, vector<8x32xf32>
    tpu.vector_store %arg4[%c0_5, %c0_6], %8 {strides = array<i32>} : memref<8x32xf32, #tpu.memory_space<vmem>>, vector<8x32xf32>,
    return
  }
  func.func @transform_0(%arg0: i32) -> (i32, i32) {
    %c0_i32 = arith.constant 0 : i32
    %c0_i32_0 = arith.constant 0 : i32
    return %arg0, %c0_i32 : i32, i32
  }
  func.func @transform_1(%arg0: i32) -> (i32, i32) {
    %c0_i32 = arith.constant 0 : i32
    %c0_i32_0 = arith.constant 0 : i32
    %c0_i32_1 = arith.constant 0 : i32
    return %c0_i32, %c0_i32_0 : i32, i32
  }
  func.func @transform_2(%arg0: i32) -> (i32, i32) {
    %c0_i32 = arith.constant 0 : i32
    %c0_i32_0 = arith.constant 0 : i32
    %c0_i32_1 = arith.constant 0 : i32
    return %c0_i32, %c0_i32_0 : i32, i32
  }
  func.func @transform_3(%arg0: i32) -> (i32, i32) {
    %c0_i32 = arith.constant 0 : i32
    %c0_i32_0 = arith.constant 0 : i32
    return %arg0, %c0_i32 : i32, i32
  }
}

module attributes {stable_mosaic.version = 11 : i64} {
  func.func @kernel(%arg0: i32, %arg1: memref<2x16x36xbf16, #tpu.memory_space<vmem>>, %arg2: memref<2x36x4xbf16, #tpu.memory_space<vmem>>, %arg3: memref<16x8xf32, #tpu.memory_space<vmem>>, %arg4: memref<16x8xf32, #tpu.memory_space<vmem>>) attributes {dimension_semantics = [#tpu.dimension_semantics<parallel>], iteration_bounds = array<i64: 1>, scalar_prefetch = 0 : i64, scratch_operands = 0 : i64, tpu.core_type = #tpu.core_type<tc>, window_params = [{transform_indices = @transform_0, window_bounds = array<i64: 2, 16, 36>}, {pipeline_mode = #tpu.pipeline_mode<synchronous>, transform_indices = @transform_1, window_bounds = array<i64: 2, 36, 4>}, {transform_indices = @transform_2, window_bounds = array<i64: 16, 8>}, {transform_indices = @transform_3, window_bounds = array<i64: 16, 8>}]} {
    %c0 = arith.constant 0 : index
    %c0_0 = arith.constant 0 : index
    %0 = vector.load %arg3[%c0, %c0_0] : memref<16x8xf32, #tpu.memory_space<vmem>>, vector<16x8xf32>
    %c0_1 = arith.constant 0 : index
    %c0_2 = arith.constant 0 : index
    %c0_3 = arith.constant 0 : index
    %1 = vector.load %arg1[%c0_1, %c0_2, %c0_3] : memref<2x16x36xbf16, #tpu.memory_space<vmem>>, vector<1x16x36xbf16>
    %2 = vector.shape_cast %1 : vector<1x16x36xbf16> to vector<16x36xbf16>
    %c0_4 = arith.constant 0 : index
    %c0_5 = arith.constant 0 : index
    %c0_6 = arith.constant 0 : index
    %3 = vector.load %arg2[%c0_4, %c0_5, %c0_6] : memref<2x36x4xbf16, #tpu.memory_space<vmem>>, vector<1x36x4xbf16>
    %4 = vector.shape_cast %3 : vector<1x36x4xbf16> to vector<36x4xbf16>
    %cst = arith.constant dense<0.000000e+00> : vector<16x4xf32>
    %5 = tpu.matmul %2, %4, %cst {dimension_numbers = #tpu.dot_dimension_numbers<[1], [0], [0], [1], [0, 0, 1, 1], [], []>} : vector<16x36xbf16>, vector<36x4xbf16>, vector<16x4xf32> -> vector<16x4xf32>
    %c1 = arith.constant 1 : index
    %c0_7 = arith.constant 0 : index
    %c0_8 = arith.constant 0 : index
    %6 = vector.load %arg1[%c1, %c0_7, %c0_8] : memref<2x16x36xbf16, #tpu.memory_space<vmem>>, vector<1x16x36xbf16>
    %7 = vector.shape_cast %6 : vector<1x16x36xbf16> to vector<16x36xbf16>
    %c1_9 = arith.constant 1 : index
    %c0_10 = arith.constant 0 : index
    %c0_11 = arith.constant 0 : index
    %8 = vector.load %arg2[%c1_9, %c0_10, %c0_11] : memref<2x36x4xbf16, #tpu.memory_space<vmem>>, vector<1x36x4xbf16>
    %9 = vector.shape_cast %8 : vector<1x36x4xbf16> to vector<36x4xbf16>
    %cst_12 = arith.constant dense<0.000000e+00> : vector<16x4xf32>
    %10 = tpu.matmul %7, %9, %cst_12 {dimension_numbers = #tpu.dot_dimension_numbers<[1], [0], [0], [1], [0, 0, 1, 1], [], []>} : vector<16x36xbf16>, vector<36x4xbf16>, vector<16x4xf32> -> vector<16x4xf32>
    %11 = tpu.concatenate %5, %10 in 1 : vector<16x4xf32>, vector<16x4xf32> -> vector<16x8xf32>
    %12 = arith.addf %0, %11 : vector<16x8xf32>
    %c0_13 = arith.constant 0 : index
    %c0_14 = arith.constant 0 : index
    %13 = vector.load %arg4[%c0_13, %c0_14] : memref<16x8xf32, #tpu.memory_space<vmem>>, vector<16x8xf32>
    tpu.vector_store %arg4[%c0_13, %c0_14], %12 {strides = array<i32>} : memref<16x8xf32, #tpu.memory_space<vmem>>, vector<16x8xf32>,
    return
  }
  func.func @transform_0(%arg0: i32) -> (i32, i32, i32) {
    %c0_i32 = arith.constant 0 : i32
    %c0_i32_0 = arith.constant 0 : i32
    %c0_i32_1 = arith.constant 0 : i32
    return %c0_i32, %arg0, %c0_i32_0 : i32, i32, i32
  }
  func.func @transform_1(%arg0: i32) -> (i32, i32, i32) {
    %c0_i32 = arith.constant 0 : i32
    %c0_i32_0 = arith.constant 0 : i32
    %c0_i32_1 = arith.constant 0 : i32
    %c0_i32_2 = arith.constant 0 : i32
    return %c0_i32, %c0_i32_0, %c0_i32_1 : i32, i32, i32
  }
  func.func @transform_2(%arg0: i32) -> (i32, i32) {
    %c0_i32 = arith.constant 0 : i32
    %c0_i32_0 = arith.constant 0 : i32
    return %arg0, %c0_i32 : i32, i32
  }
  func.func @transform_3(%arg0: i32) -> (i32, i32) {
    %c0_i32 = arith.constant 0 : i32
    %c0_i32_0 = arith.constant 0 : i32
    return %arg0, %c0_i32 : i32, i32
  }
}

module attributes {stable_mosaic.version = 11 : i64} {
  func.func @_pw_conv_kernel(%arg0: i32, %arg1: memref<16x8xf32, #tpu.memory_space<vmem>>, %arg2: memref<1x8xf32, #tpu.memory_space<vmem>>, %arg3: memref<1x8xf32, #tpu.memory_space<vmem>>, %arg4: memref<8x4xbf16, #tpu.memory_space<vmem>>, %arg5: memref<16x4xf32, #tpu.memory_space<vmem>>) attributes {dimension_semantics = [#tpu.dimension_semantics<parallel>], iteration_bounds = array<i64: 1>, scalar_prefetch = 0 : i64, scratch_operands = 0 : i64, tpu.core_type = #tpu.core_type<tc>, window_params = [{transform_indices = @transform_0, window_bounds = array<i64: 16, 8>}, {pipeline_mode = #tpu.pipeline_mode<synchronous>, transform_indices = @transform_1, window_bounds = array<i64: 1, 8>}, {pipeline_mode = #tpu.pipeline_mode<synchronous>, transform_indices = @transform_2, window_bounds = array<i64: 1, 8>}, {pipeline_mode = #tpu.pipeline_mode<synchronous>, transform_indices = @transform_3, window_bounds = array<i64: 8, 4>}, {transform_indices = @transform_4, window_bounds = array<i64: 16, 4>}]} {
    %c0 = arith.constant 0 : index
    %c0_0 = arith.constant 0 : index
    %0 = vector.load %arg1[%c0, %c0_0] : memref<16x8xf32, #tpu.memory_space<vmem>>, vector<16x8xf32>
    %c0_1 = arith.constant 0 : index
    %c0_2 = arith.constant 0 : index
    %1 = vector.load %arg2[%c0_1, %c0_2] : memref<1x8xf32, #tpu.memory_space<vmem>>, vector<1x8xf32>
    %2 = vector.broadcast %1 : vector<1x8xf32> to vector<16x8xf32>
    %3 = arith.mulf %0, %2 : vector<16x8xf32>
    %c0_3 = arith.constant 0 : index
    %c0_4 = arith.constant 0 : index
    %4 = vector.load %arg3[%c0_3, %c0_4] : memref<1x8xf32, #tpu.memory_space<vmem>>, vector<1x8xf32>
    %5 = vector.broadcast %4 : vector<1x8xf32> to vector<16x8xf32>
    %6 = arith.addf %3, %5 : vector<16x8xf32>
    %cst = arith.constant 0.000000e+00 : f32
    %7 = vector.broadcast %cst : f32 to vector<16x8xf32>
    %8 = arith.maximumf %6, %7 : vector<16x8xf32>
    %9 = arith.truncf %8 : vector<16x8xf32> to vector<16x8xbf16>
    %c0_5 = arith.constant 0 : index
    %c0_6 = arith.constant 0 : index
    %10 = vector.load %arg4[%c0_5, %c0_6] : memref<8x4xbf16, #tpu.memory_space<vmem>>, vector<8x4xbf16>
    %cst_7 = arith.constant dense<0.000000e+00> : vector<16x4xf32>
    %11 = tpu.matmul %9, %10, %cst_7 {dimension_numbers = #tpu.dot_dimension_numbers<[1], [0], [0], [1], [0, 0, 1, 1], [], []>} : vector<16x8xbf16>, vector<8x4xbf16>, vector<16x4xf32> -> vector<16x4xf32>
    %c0_8 = arith.constant 0 : index
    %c0_9 = arith.constant 0 : index
    %12 = vector.load %arg5[%c0_8, %c0_9] : memref<16x4xf32, #tpu.memory_space<vmem>>, vector<16x4xf32>
    tpu.vector_store %arg5[%c0_8, %c0_9], %11 {strides = array<i32>} : memref<16x4xf32, #tpu.memory_space<vmem>>, vector<16x4xf32>,
    return
  }
  func.func @transform_0(%arg0: i32) -> (i32, i32) {
    %c0_i32 = arith.constant 0 : i32
    %c0_i32_0 = arith.constant 0 : i32
    return %arg0, %c0_i32 : i32, i32
  }
  func.func @transform_1(%arg0: i32) -> (i32, i32) {
    %c0_i32 = arith.constant 0 : i32
    %c0_i32_0 = arith.constant 0 : i32
    %c0_i32_1 = arith.constant 0 : i32
    return %c0_i32, %c0_i32_0 : i32, i32
  }
  func.func @transform_2(%arg0: i32) -> (i32, i32) {
    %c0_i32 = arith.constant 0 : i32
    %c0_i32_0 = arith.constant 0 : i32
    %c0_i32_1 = arith.constant 0 : i32
    return %c0_i32, %c0_i32_0 : i32, i32
  }
  func.func @transform_3(%arg0: i32) -> (i32, i32) {
    %c0_i32 = arith.constant 0 : i32
    %c0_i32_0 = arith.constant 0 : i32
    %c0_i32_1 = arith.constant 0 : i32
    return %c0_i32, %c0_i32_0 : i32, i32
  }
  func.func @transform_4(%arg0: i32) -> (i32, i32) {
    %c0_i32 = arith.constant 0 : i32
    %c0_i32_0 = arith.constant 0 : i32
    return %arg0, %c0_i32 : i32, i32
  }
}

module attributes {stable_mosaic.version = 11 : i64} {
  func.func @_pw_conv_res_kernel(%arg0: i32, %arg1: memref<16x4xf32, #tpu.memory_space<vmem>>, %arg2: memref<1x4xf32, #tpu.memory_space<vmem>>, %arg3: memref<1x4xf32, #tpu.memory_space<vmem>>, %arg4: memref<4x8xbf16, #tpu.memory_space<vmem>>, %arg5: memref<16x8xf32, #tpu.memory_space<vmem>>, %arg6: memref<16x8xf32, #tpu.memory_space<vmem>>) attributes {dimension_semantics = [#tpu.dimension_semantics<parallel>], iteration_bounds = array<i64: 1>, scalar_prefetch = 0 : i64, scratch_operands = 0 : i64, tpu.core_type = #tpu.core_type<tc>, window_params = [{transform_indices = @transform_0, window_bounds = array<i64: 16, 4>}, {pipeline_mode = #tpu.pipeline_mode<synchronous>, transform_indices = @transform_1, window_bounds = array<i64: 1, 4>}, {pipeline_mode = #tpu.pipeline_mode<synchronous>, transform_indices = @transform_2, window_bounds = array<i64: 1, 4>}, {pipeline_mode = #tpu.pipeline_mode<synchronous>, transform_indices = @transform_3, window_bounds = array<i64: 4, 8>}, {transform_indices = @transform_4, window_bounds = array<i64: 16, 8>}, {transform_indices = @transform_5, window_bounds = array<i64: 16, 8>}]} {
    %c0 = arith.constant 0 : index
    %c0_0 = arith.constant 0 : index
    %0 = vector.load %arg1[%c0, %c0_0] : memref<16x4xf32, #tpu.memory_space<vmem>>, vector<16x4xf32>
    %c0_1 = arith.constant 0 : index
    %c0_2 = arith.constant 0 : index
    %1 = vector.load %arg2[%c0_1, %c0_2] : memref<1x4xf32, #tpu.memory_space<vmem>>, vector<1x4xf32>
    %2 = vector.broadcast %1 : vector<1x4xf32> to vector<16x4xf32>
    %3 = arith.mulf %0, %2 : vector<16x4xf32>
    %c0_3 = arith.constant 0 : index
    %c0_4 = arith.constant 0 : index
    %4 = vector.load %arg3[%c0_3, %c0_4] : memref<1x4xf32, #tpu.memory_space<vmem>>, vector<1x4xf32>
    %5 = vector.broadcast %4 : vector<1x4xf32> to vector<16x4xf32>
    %6 = arith.addf %3, %5 : vector<16x4xf32>
    %cst = arith.constant 0.000000e+00 : f32
    %7 = vector.broadcast %cst : f32 to vector<16x4xf32>
    %8 = arith.maximumf %6, %7 : vector<16x4xf32>
    %c0_5 = arith.constant 0 : index
    %c0_6 = arith.constant 0 : index
    %9 = vector.load %arg5[%c0_5, %c0_6] : memref<16x8xf32, #tpu.memory_space<vmem>>, vector<16x8xf32>
    %10 = arith.truncf %8 : vector<16x4xf32> to vector<16x4xbf16>
    %c0_7 = arith.constant 0 : index
    %c0_8 = arith.constant 0 : index
    %11 = vector.load %arg4[%c0_7, %c0_8] : memref<4x8xbf16, #tpu.memory_space<vmem>>, vector<4x8xbf16>
    %cst_9 = arith.constant dense<0.000000e+00> : vector<16x8xf32>
    %12 = tpu.matmul %10, %11, %cst_9 {dimension_numbers = #tpu.dot_dimension_numbers<[1], [0], [0], [1], [0, 0, 1, 1], [], []>} : vector<16x4xbf16>, vector<4x8xbf16>, vector<16x8xf32> -> vector<16x8xf32>
    %13 = arith.addf %9, %12 : vector<16x8xf32>
    %c0_10 = arith.constant 0 : index
    %c0_11 = arith.constant 0 : index
    %14 = vector.load %arg6[%c0_10, %c0_11] : memref<16x8xf32, #tpu.memory_space<vmem>>, vector<16x8xf32>
    tpu.vector_store %arg6[%c0_10, %c0_11], %13 {strides = array<i32>} : memref<16x8xf32, #tpu.memory_space<vmem>>, vector<16x8xf32>,
    return
  }
  func.func @transform_0(%arg0: i32) -> (i32, i32) {
    %c0_i32 = arith.constant 0 : i32
    %c0_i32_0 = arith.constant 0 : i32
    return %arg0, %c0_i32 : i32, i32
  }
  func.func @transform_1(%arg0: i32) -> (i32, i32) {
    %c0_i32 = arith.constant 0 : i32
    %c0_i32_0 = arith.constant 0 : i32
    %c0_i32_1 = arith.constant 0 : i32
    return %c0_i32, %c0_i32_0 : i32, i32
  }
  func.func @transform_2(%arg0: i32) -> (i32, i32) {
    %c0_i32 = arith.constant 0 : i32
    %c0_i32_0 = arith.constant 0 : i32
    %c0_i32_1 = arith.constant 0 : i32
    return %c0_i32, %c0_i32_0 : i32, i32
  }
  func.func @transform_3(%arg0: i32) -> (i32, i32) {
    %c0_i32 = arith.constant 0 : i32
    %c0_i32_0 = arith.constant 0 : i32
    %c0_i32_1 = arith.constant 0 : i32
    return %c0_i32, %c0_i32_0 : i32, i32
  }
  func.func @transform_4(%arg0: i32) -> (i32, i32) {
    %c0_i32 = arith.constant 0 : i32
    %c0_i32_0 = arith.constant 0 : i32
    return %arg0, %c0_i32 : i32, i32
  }
  func.func @transform_5(%arg0: i32) -> (i32, i32) {
    %c0_i32 = arith.constant 0 : i32
    %c0_i32_0 = arith.constant 0 : i32
    return %arg0, %c0_i32 : i32, i32
  }
}

module attributes {stable_mosaic.version = 11 : i64} {
  func.func @kernel(%arg0: i32, %arg1: memref<2x8x108xbf16, #tpu.memory_space<vmem>>, %arg2: memref<2x108x8xbf16, #tpu.memory_space<vmem>>, %arg3: memref<8x16xf32, #tpu.memory_space<vmem>>) attributes {dimension_semantics = [#tpu.dimension_semantics<parallel>], iteration_bounds = array<i64: 1>, scalar_prefetch = 0 : i64, scratch_operands = 0 : i64, tpu.core_type = #tpu.core_type<tc>, window_params = [{transform_indices = @transform_0, window_bounds = array<i64: 2, 8, 108>}, {pipeline_mode = #tpu.pipeline_mode<synchronous>, transform_indices = @transform_1, window_bounds = array<i64: 2, 108, 8>}, {transform_indices = @transform_2, window_bounds = array<i64: 8, 16>}]} {
    %c0 = arith.constant 0 : index
    %c0_0 = arith.constant 0 : index
    %c0_1 = arith.constant 0 : index
    %0 = vector.load %arg1[%c0, %c0_0, %c0_1] : memref<2x8x108xbf16, #tpu.memory_space<vmem>>, vector<1x8x108xbf16>
    %1 = vector.shape_cast %0 : vector<1x8x108xbf16> to vector<8x108xbf16>
    %c0_2 = arith.constant 0 : index
    %c0_3 = arith.constant 0 : index
    %c0_4 = arith.constant 0 : index
    %2 = vector.load %arg2[%c0_2, %c0_3, %c0_4] : memref<2x108x8xbf16, #tpu.memory_space<vmem>>, vector<1x108x8xbf16>
    %3 = vector.shape_cast %2 : vector<1x108x8xbf16> to vector<108x8xbf16>
    %cst = arith.constant dense<0.000000e+00> : vector<8x8xf32>
    %4 = tpu.matmul %1, %3, %cst {dimension_numbers = #tpu.dot_dimension_numbers<[1], [0], [0], [1], [0, 0, 1, 1], [], []>} : vector<8x108xbf16>, vector<108x8xbf16>, vector<8x8xf32> -> vector<8x8xf32>
    %c1 = arith.constant 1 : index
    %c0_5 = arith.constant 0 : index
    %c0_6 = arith.constant 0 : index
    %5 = vector.load %arg1[%c1, %c0_5, %c0_6] : memref<2x8x108xbf16, #tpu.memory_space<vmem>>, vector<1x8x108xbf16>
    %6 = vector.shape_cast %5 : vector<1x8x108xbf16> to vector<8x108xbf16>
    %c1_7 = arith.constant 1 : index
    %c0_8 = arith.constant 0 : index
    %c0_9 = arith.constant 0 : index
    %7 = vector.load %arg2[%c1_7, %c0_8, %c0_9] : memref<2x108x8xbf16, #tpu.memory_space<vmem>>, vector<1x108x8xbf16>
    %8 = vector.shape_cast %7 : vector<1x108x8xbf16> to vector<108x8xbf16>
    %cst_10 = arith.constant dense<0.000000e+00> : vector<8x8xf32>
    %9 = tpu.matmul %6, %8, %cst_10 {dimension_numbers = #tpu.dot_dimension_numbers<[1], [0], [0], [1], [0, 0, 1, 1], [], []>} : vector<8x108xbf16>, vector<108x8xbf16>, vector<8x8xf32> -> vector<8x8xf32>
    %10 = tpu.concatenate %4, %9 in 1 : vector<8x8xf32>, vector<8x8xf32> -> vector<8x16xf32>
    %c0_11 = arith.constant 0 : index
    %c0_12 = arith.constant 0 : index
    %11 = vector.load %arg3[%c0_11, %c0_12] : memref<8x16xf32, #tpu.memory_space<vmem>>, vector<8x16xf32>
    tpu.vector_store %arg3[%c0_11, %c0_12], %10 {strides = array<i32>} : memref<8x16xf32, #tpu.memory_space<vmem>>, vector<8x16xf32>,
    return
  }
  func.func @transform_0(%arg0: i32) -> (i32, i32, i32) {
    %c0_i32 = arith.constant 0 : i32
    %c0_i32_0 = arith.constant 0 : i32
    %c0_i32_1 = arith.constant 0 : i32
    return %c0_i32, %arg0, %c0_i32_0 : i32, i32, i32
  }
  func.func @transform_1(%arg0: i32) -> (i32, i32, i32) {
    %c0_i32 = arith.constant 0 : i32
    %c0_i32_0 = arith.constant 0 : i32
    %c0_i32_1 = arith.constant 0 : i32
    %c0_i32_2 = arith.constant 0 : i32
    return %c0_i32, %c0_i32_0, %c0_i32_1 : i32, i32, i32
  }
  func.func @transform_2(%arg0: i32) -> (i32, i32) {
    %c0_i32 = arith.constant 0 : i32
    %c0_i32_0 = arith.constant 0 : i32
    return %arg0, %c0_i32 : i32, i32
  }
}

module attributes {stable_mosaic.version = 11 : i64} {
  func.func @_pw_conv_kernel(%arg0: i32, %arg1: memref<8x16xf32, #tpu.memory_space<vmem>>, %arg2: memref<1x16xf32, #tpu.memory_space<vmem>>, %arg3: memref<1x16xf32, #tpu.memory_space<vmem>>, %arg4: memref<16x16xbf16, #tpu.memory_space<vmem>>, %arg5: memref<8x16xf32, #tpu.memory_space<vmem>>) attributes {dimension_semantics = [#tpu.dimension_semantics<parallel>], iteration_bounds = array<i64: 1>, scalar_prefetch = 0 : i64, scratch_operands = 0 : i64, tpu.core_type = #tpu.core_type<tc>, window_params = [{transform_indices = @transform_0, window_bounds = array<i64: 8, 16>}, {pipeline_mode = #tpu.pipeline_mode<synchronous>, transform_indices = @transform_1, window_bounds = array<i64: 1, 16>}, {pipeline_mode = #tpu.pipeline_mode<synchronous>, transform_indices = @transform_2, window_bounds = array<i64: 1, 16>}, {pipeline_mode = #tpu.pipeline_mode<synchronous>, transform_indices = @transform_3, window_bounds = array<i64: 16, 16>}, {transform_indices = @transform_4, window_bounds = array<i64: 8, 16>}]} {
    %c0 = arith.constant 0 : index
    %c0_0 = arith.constant 0 : index
    %0 = vector.load %arg1[%c0, %c0_0] : memref<8x16xf32, #tpu.memory_space<vmem>>, vector<8x16xf32>
    %c0_1 = arith.constant 0 : index
    %c0_2 = arith.constant 0 : index
    %1 = vector.load %arg2[%c0_1, %c0_2] : memref<1x16xf32, #tpu.memory_space<vmem>>, vector<1x16xf32>
    %2 = vector.broadcast %1 : vector<1x16xf32> to vector<8x16xf32>
    %3 = arith.mulf %0, %2 : vector<8x16xf32>
    %c0_3 = arith.constant 0 : index
    %c0_4 = arith.constant 0 : index
    %4 = vector.load %arg3[%c0_3, %c0_4] : memref<1x16xf32, #tpu.memory_space<vmem>>, vector<1x16xf32>
    %5 = vector.broadcast %4 : vector<1x16xf32> to vector<8x16xf32>
    %6 = arith.addf %3, %5 : vector<8x16xf32>
    %cst = arith.constant 0.000000e+00 : f32
    %7 = vector.broadcast %cst : f32 to vector<8x16xf32>
    %8 = arith.maximumf %6, %7 : vector<8x16xf32>
    %9 = arith.truncf %8 : vector<8x16xf32> to vector<8x16xbf16>
    %c0_5 = arith.constant 0 : index
    %c0_6 = arith.constant 0 : index
    %10 = vector.load %arg4[%c0_5, %c0_6] : memref<16x16xbf16, #tpu.memory_space<vmem>>, vector<16x16xbf16>
    %cst_7 = arith.constant dense<0.000000e+00> : vector<8x16xf32>
    %11 = tpu.matmul %9, %10, %cst_7 {dimension_numbers = #tpu.dot_dimension_numbers<[1], [0], [0], [1], [0, 0, 1, 1], [], []>} : vector<8x16xbf16>, vector<16x16xbf16>, vector<8x16xf32> -> vector<8x16xf32>
    %c0_8 = arith.constant 0 : index
    %c0_9 = arith.constant 0 : index
    %12 = vector.load %arg5[%c0_8, %c0_9] : memref<8x16xf32, #tpu.memory_space<vmem>>, vector<8x16xf32>
    tpu.vector_store %arg5[%c0_8, %c0_9], %11 {strides = array<i32>} : memref<8x16xf32, #tpu.memory_space<vmem>>, vector<8x16xf32>,
    return
  }
  func.func @transform_0(%arg0: i32) -> (i32, i32) {
    %c0_i32 = arith.constant 0 : i32
    %c0_i32_0 = arith.constant 0 : i32
    return %arg0, %c0_i32 : i32, i32
  }
  func.func @transform_1(%arg0: i32) -> (i32, i32) {
    %c0_i32 = arith.constant 0 : i32
    %c0_i32_0 = arith.constant 0 : i32
    %c0_i32_1 = arith.constant 0 : i32
    return %c0_i32, %c0_i32_0 : i32, i32
  }
  func.func @transform_2(%arg0: i32) -> (i32, i32) {
    %c0_i32 = arith.constant 0 : i32
    %c0_i32_0 = arith.constant 0 : i32
    %c0_i32_1 = arith.constant 0 : i32
    return %c0_i32, %c0_i32_0 : i32, i32
  }
  func.func @transform_3(%arg0: i32) -> (i32, i32) {
    %c0_i32 = arith.constant 0 : i32
    %c0_i32_0 = arith.constant 0 : i32
    %c0_i32_1 = arith.constant 0 : i32
    return %c0_i32, %c0_i32_0 : i32, i32
  }
  func.func @transform_4(%arg0: i32) -> (i32, i32) {
    %c0_i32 = arith.constant 0 : i32
    %c0_i32_0 = arith.constant 0 : i32
    return %arg0, %c0_i32 : i32, i32
  }
}

module attributes {stable_mosaic.version = 11 : i64} {
  func.func @_pw_conv_res_kernel(%arg0: i32, %arg1: memref<8x8xf32, #tpu.memory_space<vmem>>, %arg2: memref<1x8xf32, #tpu.memory_space<vmem>>, %arg3: memref<1x8xf32, #tpu.memory_space<vmem>>, %arg4: memref<8x16xbf16, #tpu.memory_space<vmem>>, %arg5: memref<8x16xf32, #tpu.memory_space<vmem>>, %arg6: memref<8x16xf32, #tpu.memory_space<vmem>>) attributes {dimension_semantics = [#tpu.dimension_semantics<parallel>], iteration_bounds = array<i64: 1>, scalar_prefetch = 0 : i64, scratch_operands = 0 : i64, tpu.core_type = #tpu.core_type<tc>, window_params = [{transform_indices = @transform_0, window_bounds = array<i64: 8, 8>}, {pipeline_mode = #tpu.pipeline_mode<synchronous>, transform_indices = @transform_1, window_bounds = array<i64: 1, 8>}, {pipeline_mode = #tpu.pipeline_mode<synchronous>, transform_indices = @transform_2, window_bounds = array<i64: 1, 8>}, {pipeline_mode = #tpu.pipeline_mode<synchronous>, transform_indices = @transform_3, window_bounds = array<i64: 8, 16>}, {transform_indices = @transform_4, window_bounds = array<i64: 8, 16>}, {transform_indices = @transform_5, window_bounds = array<i64: 8, 16>}]} {
    %c0 = arith.constant 0 : index
    %c0_0 = arith.constant 0 : index
    %0 = vector.load %arg1[%c0, %c0_0] : memref<8x8xf32, #tpu.memory_space<vmem>>, vector<8x8xf32>
    %c0_1 = arith.constant 0 : index
    %c0_2 = arith.constant 0 : index
    %1 = vector.load %arg2[%c0_1, %c0_2] : memref<1x8xf32, #tpu.memory_space<vmem>>, vector<1x8xf32>
    %2 = vector.broadcast %1 : vector<1x8xf32> to vector<8x8xf32>
    %3 = arith.mulf %0, %2 : vector<8x8xf32>
    %c0_3 = arith.constant 0 : index
    %c0_4 = arith.constant 0 : index
    %4 = vector.load %arg3[%c0_3, %c0_4] : memref<1x8xf32, #tpu.memory_space<vmem>>, vector<1x8xf32>
    %5 = vector.broadcast %4 : vector<1x8xf32> to vector<8x8xf32>
    %6 = arith.addf %3, %5 : vector<8x8xf32>
    %cst = arith.constant 0.000000e+00 : f32
    %7 = vector.broadcast %cst : f32 to vector<8x8xf32>
    %8 = arith.maximumf %6, %7 : vector<8x8xf32>
    %c0_5 = arith.constant 0 : index
    %c0_6 = arith.constant 0 : index
    %9 = vector.load %arg5[%c0_5, %c0_6] : memref<8x16xf32, #tpu.memory_space<vmem>>, vector<8x16xf32>
    %10 = arith.truncf %8 : vector<8x8xf32> to vector<8x8xbf16>
    %c0_7 = arith.constant 0 : index
    %c0_8 = arith.constant 0 : index
    %11 = vector.load %arg4[%c0_7, %c0_8] : memref<8x16xbf16, #tpu.memory_space<vmem>>, vector<8x16xbf16>
    %cst_9 = arith.constant dense<0.000000e+00> : vector<8x16xf32>
    %12 = tpu.matmul %10, %11, %cst_9 {dimension_numbers = #tpu.dot_dimension_numbers<[1], [0], [0], [1], [0, 0, 1, 1], [], []>} : vector<8x8xbf16>, vector<8x16xbf16>, vector<8x16xf32> -> vector<8x16xf32>
    %13 = arith.addf %9, %12 : vector<8x16xf32>
    %c0_10 = arith.constant 0 : index
    %c0_11 = arith.constant 0 : index
    %14 = vector.load %arg6[%c0_10, %c0_11] : memref<8x16xf32, #tpu.memory_space<vmem>>, vector<8x16xf32>
    tpu.vector_store %arg6[%c0_10, %c0_11], %13 {strides = array<i32>} : memref<8x16xf32, #tpu.memory_space<vmem>>, vector<8x16xf32>,
    return
  }
  func.func @transform_0(%arg0: i32) -> (i32, i32) {
    %c0_i32 = arith.constant 0 : i32
    %c0_i32_0 = arith.constant 0 : i32
    return %arg0, %c0_i32 : i32, i32
  }
  func.func @transform_1(%arg0: i32) -> (i32, i32) {
    %c0_i32 = arith.constant 0 : i32
    %c0_i32_0 = arith.constant 0 : i32
    %c0_i32_1 = arith.constant 0 : i32
    return %c0_i32, %c0_i32_0 : i32, i32
  }
  func.func @transform_2(%arg0: i32) -> (i32, i32) {
    %c0_i32 = arith.constant 0 : i32
    %c0_i32_0 = arith.constant 0 : i32
    %c0_i32_1 = arith.constant 0 : i32
    return %c0_i32, %c0_i32_0 : i32, i32
  }
  func.func @transform_3(%arg0: i32) -> (i32, i32) {
    %c0_i32 = arith.constant 0 : i32
    %c0_i32_0 = arith.constant 0 : i32
    %c0_i32_1 = arith.constant 0 : i32
    return %c0_i32, %c0_i32_0 : i32, i32
  }
  func.func @transform_4(%arg0: i32) -> (i32, i32) {
    %c0_i32 = arith.constant 0 : i32
    %c0_i32_0 = arith.constant 0 : i32
    return %arg0, %c0_i32 : i32, i32
  }
  func.func @transform_5(%arg0: i32) -> (i32, i32) {
    %c0_i32 = arith.constant 0 : i32
    %c0_i32_0 = arith.constant 0 : i32
    return %arg0, %c0_i32 : i32, i32
  }
}

module attributes {stable_mosaic.version = 11 : i64} {
  func.func @_pw_conv_kernel(%arg0: i32, %arg1: memref<8x16xf32, #tpu.memory_space<vmem>>, %arg2: memref<1x16xf32, #tpu.memory_space<vmem>>, %arg3: memref<1x16xf32, #tpu.memory_space<vmem>>, %arg4: memref<16x4xbf16, #tpu.memory_space<vmem>>, %arg5: memref<8x4xf32, #tpu.memory_space<vmem>>) attributes {dimension_semantics = [#tpu.dimension_semantics<parallel>], iteration_bounds = array<i64: 1>, scalar_prefetch = 0 : i64, scratch_operands = 0 : i64, tpu.core_type = #tpu.core_type<tc>, window_params = [{transform_indices = @transform_0, window_bounds = array<i64: 8, 16>}, {pipeline_mode = #tpu.pipeline_mode<synchronous>, transform_indices = @transform_1, window_bounds = array<i64: 1, 16>}, {pipeline_mode = #tpu.pipeline_mode<synchronous>, transform_indices = @transform_2, window_bounds = array<i64: 1, 16>}, {pipeline_mode = #tpu.pipeline_mode<synchronous>, transform_indices = @transform_3, window_bounds = array<i64: 16, 4>}, {transform_indices = @transform_4, window_bounds = array<i64: 8, 4>}]} {
    %c0 = arith.constant 0 : index
    %c0_0 = arith.constant 0 : index
    %0 = vector.load %arg1[%c0, %c0_0] : memref<8x16xf32, #tpu.memory_space<vmem>>, vector<8x16xf32>
    %c0_1 = arith.constant 0 : index
    %c0_2 = arith.constant 0 : index
    %1 = vector.load %arg2[%c0_1, %c0_2] : memref<1x16xf32, #tpu.memory_space<vmem>>, vector<1x16xf32>
    %2 = vector.broadcast %1 : vector<1x16xf32> to vector<8x16xf32>
    %3 = arith.mulf %0, %2 : vector<8x16xf32>
    %c0_3 = arith.constant 0 : index
    %c0_4 = arith.constant 0 : index
    %4 = vector.load %arg3[%c0_3, %c0_4] : memref<1x16xf32, #tpu.memory_space<vmem>>, vector<1x16xf32>
    %5 = vector.broadcast %4 : vector<1x16xf32> to vector<8x16xf32>
    %6 = arith.addf %3, %5 : vector<8x16xf32>
    %cst = arith.constant 0.000000e+00 : f32
    %7 = vector.broadcast %cst : f32 to vector<8x16xf32>
    %8 = arith.maximumf %6, %7 : vector<8x16xf32>
    %9 = arith.truncf %8 : vector<8x16xf32> to vector<8x16xbf16>
    %c0_5 = arith.constant 0 : index
    %c0_6 = arith.constant 0 : index
    %10 = vector.load %arg4[%c0_5, %c0_6] : memref<16x4xbf16, #tpu.memory_space<vmem>>, vector<16x4xbf16>
    %cst_7 = arith.constant dense<0.000000e+00> : vector<8x4xf32>
    %11 = tpu.matmul %9, %10, %cst_7 {dimension_numbers = #tpu.dot_dimension_numbers<[1], [0], [0], [1], [0, 0, 1, 1], [], []>} : vector<8x16xbf16>, vector<16x4xbf16>, vector<8x4xf32> -> vector<8x4xf32>
    %c0_8 = arith.constant 0 : index
    %c0_9 = arith.constant 0 : index
    %12 = vector.load %arg5[%c0_8, %c0_9] : memref<8x4xf32, #tpu.memory_space<vmem>>, vector<8x4xf32>
    tpu.vector_store %arg5[%c0_8, %c0_9], %11 {strides = array<i32>} : memref<8x4xf32, #tpu.memory_space<vmem>>, vector<8x4xf32>,
    return
  }
  func.func @transform_0(%arg0: i32) -> (i32, i32) {
    %c0_i32 = arith.constant 0 : i32
    %c0_i32_0 = arith.constant 0 : i32
    return %arg0, %c0_i32 : i32, i32
  }
  func.func @transform_1(%arg0: i32) -> (i32, i32) {
    %c0_i32 = arith.constant 0 : i32
    %c0_i32_0 = arith.constant 0 : i32
    %c0_i32_1 = arith.constant 0 : i32
    return %c0_i32, %c0_i32_0 : i32, i32
  }
  func.func @transform_2(%arg0: i32) -> (i32, i32) {
    %c0_i32 = arith.constant 0 : i32
    %c0_i32_0 = arith.constant 0 : i32
    %c0_i32_1 = arith.constant 0 : i32
    return %c0_i32, %c0_i32_0 : i32, i32
  }
  func.func @transform_3(%arg0: i32) -> (i32, i32) {
    %c0_i32 = arith.constant 0 : i32
    %c0_i32_0 = arith.constant 0 : i32
    %c0_i32_1 = arith.constant 0 : i32
    return %c0_i32, %c0_i32_0 : i32, i32
  }
  func.func @transform_4(%arg0: i32) -> (i32, i32) {
    %c0_i32 = arith.constant 0 : i32
    %c0_i32_0 = arith.constant 0 : i32
    return %arg0, %c0_i32 : i32, i32
  }
}

module attributes {stable_mosaic.version = 11 : i64} {
  func.func @_bn_relu_kernel(%arg0: i32, %arg1: memref<8x16xf32, #tpu.memory_space<vmem>>, %arg2: memref<1x16xf32, #tpu.memory_space<vmem>>, %arg3: memref<1x16xf32, #tpu.memory_space<vmem>>, %arg4: memref<8x16xf32, #tpu.memory_space<vmem>>) attributes {dimension_semantics = [#tpu.dimension_semantics<parallel>], iteration_bounds = array<i64: 1>, scalar_prefetch = 0 : i64, scratch_operands = 0 : i64, tpu.core_type = #tpu.core_type<tc>, window_params = [{transform_indices = @transform_0, window_bounds = array<i64: 8, 16>}, {pipeline_mode = #tpu.pipeline_mode<synchronous>, transform_indices = @transform_1, window_bounds = array<i64: 1, 16>}, {pipeline_mode = #tpu.pipeline_mode<synchronous>, transform_indices = @transform_2, window_bounds = array<i64: 1, 16>}, {transform_indices = @transform_3, window_bounds = array<i64: 8, 16>}]} {
    %c0 = arith.constant 0 : index
    %c0_0 = arith.constant 0 : index
    %0 = vector.load %arg1[%c0, %c0_0] : memref<8x16xf32, #tpu.memory_space<vmem>>, vector<8x16xf32>
    %c0_1 = arith.constant 0 : index
    %c0_2 = arith.constant 0 : index
    %1 = vector.load %arg2[%c0_1, %c0_2] : memref<1x16xf32, #tpu.memory_space<vmem>>, vector<1x16xf32>
    %2 = vector.broadcast %1 : vector<1x16xf32> to vector<8x16xf32>
    %3 = arith.mulf %0, %2 : vector<8x16xf32>
    %c0_3 = arith.constant 0 : index
    %c0_4 = arith.constant 0 : index
    %4 = vector.load %arg3[%c0_3, %c0_4] : memref<1x16xf32, #tpu.memory_space<vmem>>, vector<1x16xf32>
    %5 = vector.broadcast %4 : vector<1x16xf32> to vector<8x16xf32>
    %6 = arith.addf %3, %5 : vector<8x16xf32>
    %cst = arith.constant 0.000000e+00 : f32
    %7 = vector.broadcast %cst : f32 to vector<8x16xf32>
    %8 = arith.maximumf %6, %7 : vector<8x16xf32>
    %c0_5 = arith.constant 0 : index
    %c0_6 = arith.constant 0 : index
    %9 = vector.load %arg4[%c0_5, %c0_6] : memref<8x16xf32, #tpu.memory_space<vmem>>, vector<8x16xf32>
    tpu.vector_store %arg4[%c0_5, %c0_6], %8 {strides = array<i32>} : memref<8x16xf32, #tpu.memory_space<vmem>>, vector<8x16xf32>,
    return
  }
  func.func @transform_0(%arg0: i32) -> (i32, i32) {
    %c0_i32 = arith.constant 0 : i32
    %c0_i32_0 = arith.constant 0 : i32
    return %arg0, %c0_i32 : i32, i32
  }
  func.func @transform_1(%arg0: i32) -> (i32, i32) {
    %c0_i32 = arith.constant 0 : i32
    %c0_i32_0 = arith.constant 0 : i32
    %c0_i32_1 = arith.constant 0 : i32
    return %c0_i32, %c0_i32_0 : i32, i32
  }
  func.func @transform_2(%arg0: i32) -> (i32, i32) {
    %c0_i32 = arith.constant 0 : i32
    %c0_i32_0 = arith.constant 0 : i32
    %c0_i32_1 = arith.constant 0 : i32
    return %c0_i32, %c0_i32_0 : i32, i32
  }
  func.func @transform_3(%arg0: i32) -> (i32, i32) {
    %c0_i32 = arith.constant 0 : i32
    %c0_i32_0 = arith.constant 0 : i32
    return %arg0, %c0_i32 : i32, i32
  }
}

module attributes {stable_mosaic.version = 11 : i64} {
  func.func @_pw_conv_res_kernel(%arg0: i32, %arg1: memref<8x4xf32, #tpu.memory_space<vmem>>, %arg2: memref<1x4xf32, #tpu.memory_space<vmem>>, %arg3: memref<1x4xf32, #tpu.memory_space<vmem>>, %arg4: memref<4x16xbf16, #tpu.memory_space<vmem>>, %arg5: memref<8x16xf32, #tpu.memory_space<vmem>>, %arg6: memref<8x16xf32, #tpu.memory_space<vmem>>) attributes {dimension_semantics = [#tpu.dimension_semantics<parallel>], iteration_bounds = array<i64: 1>, scalar_prefetch = 0 : i64, scratch_operands = 0 : i64, tpu.core_type = #tpu.core_type<tc>, window_params = [{transform_indices = @transform_0, window_bounds = array<i64: 8, 4>}, {pipeline_mode = #tpu.pipeline_mode<synchronous>, transform_indices = @transform_1, window_bounds = array<i64: 1, 4>}, {pipeline_mode = #tpu.pipeline_mode<synchronous>, transform_indices = @transform_2, window_bounds = array<i64: 1, 4>}, {pipeline_mode = #tpu.pipeline_mode<synchronous>, transform_indices = @transform_3, window_bounds = array<i64: 4, 16>}, {transform_indices = @transform_4, window_bounds = array<i64: 8, 16>}, {transform_indices = @transform_5, window_bounds = array<i64: 8, 16>}]} {
    %c0 = arith.constant 0 : index
    %c0_0 = arith.constant 0 : index
    %0 = vector.load %arg1[%c0, %c0_0] : memref<8x4xf32, #tpu.memory_space<vmem>>, vector<8x4xf32>
    %c0_1 = arith.constant 0 : index
    %c0_2 = arith.constant 0 : index
    %1 = vector.load %arg2[%c0_1, %c0_2] : memref<1x4xf32, #tpu.memory_space<vmem>>, vector<1x4xf32>
    %2 = vector.broadcast %1 : vector<1x4xf32> to vector<8x4xf32>
    %3 = arith.mulf %0, %2 : vector<8x4xf32>
    %c0_3 = arith.constant 0 : index
    %c0_4 = arith.constant 0 : index
    %4 = vector.load %arg3[%c0_3, %c0_4] : memref<1x4xf32, #tpu.memory_space<vmem>>, vector<1x4xf32>
    %5 = vector.broadcast %4 : vector<1x4xf32> to vector<8x4xf32>
    %6 = arith.addf %3, %5 : vector<8x4xf32>
    %cst = arith.constant 0.000000e+00 : f32
    %7 = vector.broadcast %cst : f32 to vector<8x4xf32>
    %8 = arith.maximumf %6, %7 : vector<8x4xf32>
    %c0_5 = arith.constant 0 : index
    %c0_6 = arith.constant 0 : index
    %9 = vector.load %arg5[%c0_5, %c0_6] : memref<8x16xf32, #tpu.memory_space<vmem>>, vector<8x16xf32>
    %10 = arith.truncf %8 : vector<8x4xf32> to vector<8x4xbf16>
    %c0_7 = arith.constant 0 : index
    %c0_8 = arith.constant 0 : index
    %11 = vector.load %arg4[%c0_7, %c0_8] : memref<4x16xbf16, #tpu.memory_space<vmem>>, vector<4x16xbf16>
    %cst_9 = arith.constant dense<0.000000e+00> : vector<8x16xf32>
    %12 = tpu.matmul %10, %11, %cst_9 {dimension_numbers = #tpu.dot_dimension_numbers<[1], [0], [0], [1], [0, 0, 1, 1], [], []>} : vector<8x4xbf16>, vector<4x16xbf16>, vector<8x16xf32> -> vector<8x16xf32>
    %13 = arith.addf %9, %12 : vector<8x16xf32>
    %c0_10 = arith.constant 0 : index
    %c0_11 = arith.constant 0 : index
    %14 = vector.load %arg6[%c0_10, %c0_11] : memref<8x16xf32, #tpu.memory_space<vmem>>, vector<8x16xf32>
    tpu.vector_store %arg6[%c0_10, %c0_11], %13 {strides = array<i32>} : memref<8x16xf32, #tpu.memory_space<vmem>>, vector<8x16xf32>,
    return
  }
  func.func @transform_0(%arg0: i32) -> (i32, i32) {
    %c0_i32 = arith.constant 0 : i32
    %c0_i32_0 = arith.constant 0 : i32
    return %arg0, %c0_i32 : i32, i32
  }
  func.func @transform_1(%arg0: i32) -> (i32, i32) {
    %c0_i32 = arith.constant 0 : i32
    %c0_i32_0 = arith.constant 0 : i32
    %c0_i32_1 = arith.constant 0 : i32
    return %c0_i32, %c0_i32_0 : i32, i32
  }
  func.func @transform_2(%arg0: i32) -> (i32, i32) {
    %c0_i32 = arith.constant 0 : i32
    %c0_i32_0 = arith.constant 0 : i32
    %c0_i32_1 = arith.constant 0 : i32
    return %c0_i32, %c0_i32_0 : i32, i32
  }
  func.func @transform_3(%arg0: i32) -> (i32, i32) {
    %c0_i32 = arith.constant 0 : i32
    %c0_i32_0 = arith.constant 0 : i32
    %c0_i32_1 = arith.constant 0 : i32
    return %c0_i32, %c0_i32_0 : i32, i32
  }
  func.func @transform_4(%arg0: i32) -> (i32, i32) {
    %c0_i32 = arith.constant 0 : i32
    %c0_i32_0 = arith.constant 0 : i32
    return %arg0, %c0_i32 : i32, i32
  }
  func.func @transform_5(%arg0: i32) -> (i32, i32) {
    %c0_i32 = arith.constant 0 : i32
    %c0_i32_0 = arith.constant 0 : i32
    return %arg0, %c0_i32 : i32, i32
  }
}

module attributes {stable_mosaic.version = 11 : i64} {
  func.func @kernel(%arg0: i32, %arg1: memref<2x8x216xbf16, #tpu.memory_space<vmem>>, %arg2: memref<2x216x8xbf16, #tpu.memory_space<vmem>>, %arg3: memref<8x16xf32, #tpu.memory_space<vmem>>) attributes {dimension_semantics = [#tpu.dimension_semantics<parallel>], iteration_bounds = array<i64: 1>, scalar_prefetch = 0 : i64, scratch_operands = 0 : i64, tpu.core_type = #tpu.core_type<tc>, window_params = [{transform_indices = @transform_0, window_bounds = array<i64: 2, 8, 216>}, {pipeline_mode = #tpu.pipeline_mode<synchronous>, transform_indices = @transform_1, window_bounds = array<i64: 2, 216, 8>}, {transform_indices = @transform_2, window_bounds = array<i64: 8, 16>}]} {
    %c0 = arith.constant 0 : index
    %c0_0 = arith.constant 0 : index
    %c0_1 = arith.constant 0 : index
    %0 = vector.load %arg1[%c0, %c0_0, %c0_1] : memref<2x8x216xbf16, #tpu.memory_space<vmem>>, vector<1x8x216xbf16>
    %1 = vector.shape_cast %0 : vector<1x8x216xbf16> to vector<8x216xbf16>
    %c0_2 = arith.constant 0 : index
    %c0_3 = arith.constant 0 : index
    %c0_4 = arith.constant 0 : index
    %2 = vector.load %arg2[%c0_2, %c0_3, %c0_4] : memref<2x216x8xbf16, #tpu.memory_space<vmem>>, vector<1x216x8xbf16>
    %3 = vector.shape_cast %2 : vector<1x216x8xbf16> to vector<216x8xbf16>
    %cst = arith.constant dense<0.000000e+00> : vector<8x8xf32>
    %4 = tpu.matmul %1, %3, %cst {dimension_numbers = #tpu.dot_dimension_numbers<[1], [0], [0], [1], [0, 0, 1, 1], [], []>} : vector<8x216xbf16>, vector<216x8xbf16>, vector<8x8xf32> -> vector<8x8xf32>
    %c1 = arith.constant 1 : index
    %c0_5 = arith.constant 0 : index
    %c0_6 = arith.constant 0 : index
    %5 = vector.load %arg1[%c1, %c0_5, %c0_6] : memref<2x8x216xbf16, #tpu.memory_space<vmem>>, vector<1x8x216xbf16>
    %6 = vector.shape_cast %5 : vector<1x8x216xbf16> to vector<8x216xbf16>
    %c1_7 = arith.constant 1 : index
    %c0_8 = arith.constant 0 : index
    %c0_9 = arith.constant 0 : index
    %7 = vector.load %arg2[%c1_7, %c0_8, %c0_9] : memref<2x216x8xbf16, #tpu.memory_space<vmem>>, vector<1x216x8xbf16>
    %8 = vector.shape_cast %7 : vector<1x216x8xbf16> to vector<216x8xbf16>
    %cst_10 = arith.constant dense<0.000000e+00> : vector<8x8xf32>
    %9 = tpu.matmul %6, %8, %cst_10 {dimension_numbers = #tpu.dot_dimension_numbers<[1], [0], [0], [1], [0, 0, 1, 1], [], []>} : vector<8x216xbf16>, vector<216x8xbf16>, vector<8x8xf32> -> vector<8x8xf32>
    %10 = tpu.concatenate %4, %9 in 1 : vector<8x8xf32>, vector<8x8xf32> -> vector<8x16xf32>
    %c0_11 = arith.constant 0 : index
    %c0_12 = arith.constant 0 : index
    %11 = vector.load %arg3[%c0_11, %c0_12] : memref<8x16xf32, #tpu.memory_space<vmem>>, vector<8x16xf32>
    tpu.vector_store %arg3[%c0_11, %c0_12], %10 {strides = array<i32>} : memref<8x16xf32, #tpu.memory_space<vmem>>, vector<8x16xf32>,
    return
  }
  func.func @transform_0(%arg0: i32) -> (i32, i32, i32) {
    %c0_i32 = arith.constant 0 : i32
    %c0_i32_0 = arith.constant 0 : i32
    %c0_i32_1 = arith.constant 0 : i32
    return %c0_i32, %arg0, %c0_i32_0 : i32, i32, i32
  }
  func.func @transform_1(%arg0: i32) -> (i32, i32, i32) {
    %c0_i32 = arith.constant 0 : i32
    %c0_i32_0 = arith.constant 0 : i32
    %c0_i32_1 = arith.constant 0 : i32
    %c0_i32_2 = arith.constant 0 : i32
    return %c0_i32, %c0_i32_0, %c0_i32_1 : i32, i32, i32
  }
  func.func @transform_2(%arg0: i32) -> (i32, i32) {
    %c0_i32 = arith.constant 0 : i32
    %c0_i32_0 = arith.constant 0 : i32
    return %arg0, %c0_i32 : i32, i32
  }
}

module attributes {stable_mosaic.version = 11 : i64} {
  func.func @_pw_conv_res_kernel(%arg0: i32, %arg1: memref<8x16xf32, #tpu.memory_space<vmem>>, %arg2: memref<1x16xf32, #tpu.memory_space<vmem>>, %arg3: memref<1x16xf32, #tpu.memory_space<vmem>>, %arg4: memref<16x16xbf16, #tpu.memory_space<vmem>>, %arg5: memref<8x16xf32, #tpu.memory_space<vmem>>, %arg6: memref<8x16xf32, #tpu.memory_space<vmem>>) attributes {dimension_semantics = [#tpu.dimension_semantics<parallel>], iteration_bounds = array<i64: 1>, scalar_prefetch = 0 : i64, scratch_operands = 0 : i64, tpu.core_type = #tpu.core_type<tc>, window_params = [{transform_indices = @transform_0, window_bounds = array<i64: 8, 16>}, {pipeline_mode = #tpu.pipeline_mode<synchronous>, transform_indices = @transform_1, window_bounds = array<i64: 1, 16>}, {pipeline_mode = #tpu.pipeline_mode<synchronous>, transform_indices = @transform_2, window_bounds = array<i64: 1, 16>}, {pipeline_mode = #tpu.pipeline_mode<synchronous>, transform_indices = @transform_3, window_bounds = array<i64: 16, 16>}, {transform_indices = @transform_4, window_bounds = array<i64: 8, 16>}, {transform_indices = @transform_5, window_bounds = array<i64: 8, 16>}]} {
    %c0 = arith.constant 0 : index
    %c0_0 = arith.constant 0 : index
    %0 = vector.load %arg1[%c0, %c0_0] : memref<8x16xf32, #tpu.memory_space<vmem>>, vector<8x16xf32>
    %c0_1 = arith.constant 0 : index
    %c0_2 = arith.constant 0 : index
    %1 = vector.load %arg2[%c0_1, %c0_2] : memref<1x16xf32, #tpu.memory_space<vmem>>, vector<1x16xf32>
    %2 = vector.broadcast %1 : vector<1x16xf32> to vector<8x16xf32>
    %3 = arith.mulf %0, %2 : vector<8x16xf32>
    %c0_3 = arith.constant 0 : index
    %c0_4 = arith.constant 0 : index
    %4 = vector.load %arg3[%c0_3, %c0_4] : memref<1x16xf32, #tpu.memory_space<vmem>>, vector<1x16xf32>
    %5 = vector.broadcast %4 : vector<1x16xf32> to vector<8x16xf32>
    %6 = arith.addf %3, %5 : vector<8x16xf32>
    %cst = arith.constant 0.000000e+00 : f32
    %7 = vector.broadcast %cst : f32 to vector<8x16xf32>
    %8 = arith.maximumf %6, %7 : vector<8x16xf32>
    %c0_5 = arith.constant 0 : index
    %c0_6 = arith.constant 0 : index
    %9 = vector.load %arg5[%c0_5, %c0_6] : memref<8x16xf32, #tpu.memory_space<vmem>>, vector<8x16xf32>
    %10 = arith.truncf %8 : vector<8x16xf32> to vector<8x16xbf16>
    %c0_7 = arith.constant 0 : index
    %c0_8 = arith.constant 0 : index
    %11 = vector.load %arg4[%c0_7, %c0_8] : memref<16x16xbf16, #tpu.memory_space<vmem>>, vector<16x16xbf16>
    %cst_9 = arith.constant dense<0.000000e+00> : vector<8x16xf32>
    %12 = tpu.matmul %10, %11, %cst_9 {dimension_numbers = #tpu.dot_dimension_numbers<[1], [0], [0], [1], [0, 0, 1, 1], [], []>} : vector<8x16xbf16>, vector<16x16xbf16>, vector<8x16xf32> -> vector<8x16xf32>
    %13 = arith.addf %9, %12 : vector<8x16xf32>
    %c0_10 = arith.constant 0 : index
    %c0_11 = arith.constant 0 : index
    %14 = vector.load %arg6[%c0_10, %c0_11] : memref<8x16xf32, #tpu.memory_space<vmem>>, vector<8x16xf32>
    tpu.vector_store %arg6[%c0_10, %c0_11], %13 {strides = array<i32>} : memref<8x16xf32, #tpu.memory_space<vmem>>, vector<8x16xf32>,
    return
  }
  func.func @transform_0(%arg0: i32) -> (i32, i32) {
    %c0_i32 = arith.constant 0 : i32
    %c0_i32_0 = arith.constant 0 : i32
    return %arg0, %c0_i32 : i32, i32
  }
  func.func @transform_1(%arg0: i32) -> (i32, i32) {
    %c0_i32 = arith.constant 0 : i32
    %c0_i32_0 = arith.constant 0 : i32
    %c0_i32_1 = arith.constant 0 : i32
    return %c0_i32, %c0_i32_0 : i32, i32
  }
  func.func @transform_2(%arg0: i32) -> (i32, i32) {
    %c0_i32 = arith.constant 0 : i32
    %c0_i32_0 = arith.constant 0 : i32
    %c0_i32_1 = arith.constant 0 : i32
    return %c0_i32, %c0_i32_0 : i32, i32
  }
  func.func @transform_3(%arg0: i32) -> (i32, i32) {
    %c0_i32 = arith.constant 0 : i32
    %c0_i32_0 = arith.constant 0 : i32
    %c0_i32_1 = arith.constant 0 : i32
    return %c0_i32, %c0_i32_0 : i32, i32
  }
  func.func @transform_4(%arg0: i32) -> (i32, i32) {
    %c0_i32 = arith.constant 0 : i32
    %c0_i32_0 = arith.constant 0 : i32
    return %arg0, %c0_i32 : i32, i32
  }
  func.func @transform_5(%arg0: i32) -> (i32, i32) {
    %c0_i32 = arith.constant 0 : i32
    %c0_i32_0 = arith.constant 0 : i32
    return %arg0, %c0_i32 : i32, i32
  }
}

</mosaic_0001>

<llo_original>
// kernel: _lambda_.32
$region0: #{_lambda_.32}
  #allocation0 [shape = 'u32[]', space=smem, size = 0x4, offset = 0x4, fixed_abs, tag = 'smem constant byte address 0x4 - core index']
  #allocation1 [shape = 'u32[72,128]{1,0:T(1,128)}', space=vmem, size = 0x9000, scoped, tag = 'internal scratch']
  %s0 = inlined_call_operand.vmem [shape: bf16[1,512,225], index: 0, kind: input, shape index: {}]
  %s1 = inlined_call_operand.vmem [shape: bf16[1,225,4], index: 1, kind: input, shape index: {}]
  %s2 = inlined_call_operand.vmem [shape: f32[1,4], index: 2, kind: input, shape index: {}]
  %s3 = inlined_call_operand.vmem [shape: f32[1,4], index: 3, kind: input, shape index: {}]
  %s4 = inlined_call_operand.vmem [shape: f32[512,4], index: 4, kind: output, shape index: {}]
  %s5 = sld [smem:[#allocation0]]
  $region26: #{_lambda_.32} parent=0
    _
  %s7 = ssub.s32 1, %s5
  %s8 = scalar_select 0, %s7, %s5
  // Predicated region
  $region2: #{_lambda_.32} parent=0 // pred_check
    _
  $region3: #{_lambda_.32} parent=0 // pred_check_branch
    %10 = sbr.rel (0) target = $region5
  $region4: #{_lambda_.32} parent=0 // pred_region
    _
  $region5: #{_lambda_.32} parent=0 // pred_fallthru
    _
  // Predicated region
  $region6: #{_lambda_.32} parent=0 // pred_check
    _
  $region7: #{_lambda_.32} parent=0 // pred_check_branch
    %12 = sbr.rel (0) target = $region9
  $region8: #{_lambda_.32} parent=0 // pred_region
    _
  $region9: #{_lambda_.32} parent=0 // pred_fallthru
    _
  // Predicated region
  $region10: #{_lambda_.32} parent=0 // pred_check
    _
  $region11: #{_lambda_.32} parent=0 // pred_check_branch
    %14 = sbr.rel (0) target = $region13
  $region12: #{_lambda_.32} parent=0 // pred_region
    _
  $region13: #{_lambda_.32} parent=0 // pred_fallthru
    _
  // Predicated region
  $region14: #{_lambda_.32} parent=0 // pred_check
    _
  $region15: #{_lambda_.32} parent=0 // pred_check_branch
    %16 = sbr.rel (0) target = $region17
  $region16: #{_lambda_.32} parent=0 // pred_region
    _
  $region17: #{_lambda_.32} parent=0 // pred_fallthru
    _
  %v18 = vld [vmem:[%s0] sm:$0xff]
  %v19 = vld [vmem:[%s0 + $0x8] sm:$0xff]
  %v20 = vld [vmem:[%s0 + $0x10] sm:$0xff]
  %v21 = vld [vmem:[%s0 + $0x18] sm:$0xff]
  %v22 = vld [vmem:[%s0 + $0x20] sm:$0xff]
  %v23 = vld [vmem:[%s0 + $0x28] sm:$0xff]
  %v24 = vld [vmem:[%s0 + $0x30] sm:$0xff]
  %v25 = vld [vmem:[%s0 + $0x38] sm:$0xff]
  %v26 = vld [vmem:[%s0 + $0x40] sm:$0xff]
  %v27 = vld [vmem:[%s0 + $0x48] sm:$0xff]
  %v28 = vld [vmem:[%s0 + $0x50] sm:$0xff]
  %v29 = vld [vmem:[%s0 + $0x58] sm:$0xff]
  %v30 = vld [vmem:[%s0 + $0x60] sm:$0xff]
  %v31 = vld [vmem:[%s0 + $0x68] sm:$0xff]
  %v32 = vld [vmem:[%s0 + $0x70] sm:$0xff]
  %v33 = vld [vmem:[%s0 + $0x78] sm:$0xff]
  %v34 = vld [vmem:[%s0 + $0x80] sm:$0xff]
  %v35 = vld [vmem:[%s0 + $0x88] sm:$0xff]
  %v36 = vld [vmem:[%s0 + $0x90] sm:$0xff]
  %v37 = vld [vmem:[%s0 + $0x98] sm:$0xff]
  %v38 = vld [vmem:[%s0 + $0xa0] sm:$0xff]
  %v39 = vld [vmem:[%s0 + $0xa8] sm:$0xff]
  %v40 = vld [vmem:[%s0 + $0xb0] sm:$0xff]
  %v41 = vld [vmem:[%s0 + $0xb8] sm:$0xff]
  %v42 = vld [vmem:[%s0 + $0xc0] sm:$0xff]
  %v43 = vld [vmem:[%s0 + $0xc8] sm:$0xff]
  %v44 = vld [vmem:[%s0 + $0xd0] sm:$0xff]
  %v45 = vld [vmem:[%s0 + $0xd8] sm:$0xff]
  %v46 = vld [vmem:[%s0 + $0xe0] sm:$0xff]
  %v47 = vld [vmem:[%s0 + $0xe8] sm:$0xff]
  %v48 = vld [vmem:[%s0 + $0xf0] sm:$0xff]
  %v49 = vld [vmem:[%s0 + $0xf8] sm:$0xff]
  %v50 = vld [vmem:[%s0 + $0x100] sm:$0xff]
  %v51 = vld [vmem:[%s0 + $0x108] sm:$0xff]
  %v52 = vld [vmem:[%s0 + $0x110] sm:$0xff]
  %v53 = vld [vmem:[%s0 + $0x118] sm:$0xff]
  %v54 = vld [vmem:[%s0 + $0x120] sm:$0xff]
  %v55 = vld [vmem:[%s0 + $0x128] sm:$0xff]
  %v56 = vld [vmem:[%s0 + $0x130] sm:$0xff]
  %v57 = vld [vmem:[%s0 + $0x138] sm:$0xff]
  %v58 = vld [vmem:[%s0 + $0x140] sm:$0xff]
  %v59 = vld [vmem:[%s0 + $0x148] sm:$0xff]
  %v60 = vld [vmem:[%s0 + $0x150] sm:$0xff]
  %v61 = vld [vmem:[%s0 + $0x158] sm:$0xff]
  %v62 = vld [vmem:[%s0 + $0x160] sm:$0xff]
  %v63 = vld [vmem:[%s0 + $0x168] sm:$0xff]
  %v64 = vld [vmem:[%s0 + $0x170] sm:$0xff]
  %v65 = vld [vmem:[%s0 + $0x178] sm:$0xff]
  %v66 = vld [vmem:[%s0 + $0x180] sm:$0xff]
  %v67 = vld [vmem:[%s0 + $0x188] sm:$0xff]
  %v68 = vld [vmem:[%s0 + $0x190] sm:$0xff]
  %v69 = vld [vmem:[%s0 + $0x198] sm:$0xff]
  %v70 = vld [vmem:[%s0 + $0x1a0] sm:$0xff]
  %v71 = vld [vmem:[%s0 + $0x1a8] sm:$0xff]
  %v72 = vld [vmem:[%s0 + $0x1b0] sm:$0xff]
  %v73 = vld [vmem:[%s0 + $0x1b8] sm:$0xff]
  %v74 = vld [vmem:[%s0 + $0x1c0] sm:$0xff]
  %v75 = vld [vmem:[%s0 + $0x1c8] sm:$0xff]
  %v76 = vld [vmem:[%s0 + $0x1d0] sm:$0xff]
  %v77 = vld [vmem:[%s0 + $0x1d8] sm:$0xff]
  %v78 = vld [vmem:[%s0 + $0x1e0] sm:$0xff]
  %v79 = vld [vmem:[%s0 + $0x1e8] sm:$0xff]
  %v80 = vld [vmem:[%s0 + $0x1f0] sm:$0xff]
  %v81 = vld [vmem:[%s0 + $0x1f8] sm:$0xff]
  %v82 = vld [vmem:[%s1] sm:$0xf]
  %v83 = vld [vmem:[%s1 + $0x4] sm:$0xf]
  %v84 = vld [vmem:[%s1 + $0x8] sm:$0xf]
  %v85 = vld [vmem:[%s1 + $0xc] sm:$0xf]
  %v86 = vld [vmem:[%s1 + $0x10] sm:$0xf]
  %v87 = vld [vmem:[%s1 + $0x14] sm:$0xf]
  %v88 = vld [vmem:[%s1 + $0x18] sm:$0xf]
  %v89 = vld [vmem:[%s1 + $0x1c] sm:$0xf]
  %v90 = vld [vmem:[%s1 + $0x20] sm:$0xf]
  %v91 = vld [vmem:[%s1 + $0x24] sm:$0xf]
  %v92 = vld [vmem:[%s1 + $0x28] sm:$0xf]
  %v93 = vld [vmem:[%s1 + $0x2c] sm:$0xf]
  %v94 = vld [vmem:[%s1 + $0x30] sm:$0xf]
  %v95 = vld [vmem:[%s1 + $0x34] sm:$0xf]
  %v96 = vld [vmem:[%s1 + $0x38] sm:$0xf]
  %v97 = vld [vmem:[%s1 + $0x3c] sm:$0xf]
  %v98 = vld [vmem:[%s1 + $0x40] sm:$0xf]
  %v99 = vld [vmem:[%s1 + $0x44] sm:$0xf]
  %v100 = vld [vmem:[%s1 + $0x48] sm:$0xf]
  %v101 = vld [vmem:[%s1 + $0x4c] sm:$0xf]
  %v102 = vld [vmem:[%s1 + $0x50] sm:$0xf]
  %v103 = vld [vmem:[%s1 + $0x54] sm:$0xf]
  %v104 = vld [vmem:[%s1 + $0x58] sm:$0xf]
  %v105 = vld [vmem:[%s1 + $0x5c] sm:$0xf]
  %v106 = vld [vmem:[%s1 + $0x60] sm:$0xf]
  %v107 = vld [vmem:[%s1 + $0x64] sm:$0xf]
  %v108 = vld [vmem:[%s1 + $0x68] sm:$0xf]
  %v109 = vld [vmem:[%s1 + $0x6c] sm:$0xf]
  %v110 = vld [vmem:[%s1 + $0x70] sm:$0x1]
  %v175 = vunpack.c.l.b16 %v18
  %v176 = vunpack.c.h.b16 %v18
  %v177 = vunpack.c.l.b16 %v19
  %v178 = vunpack.c.h.b16 %v19
  %v179 = vunpack.c.l.b16 %v20
  %v180 = vunpack.c.h.b16 %v20
  %v181 = vunpack.c.l.b16 %v21
  %v182 = vunpack.c.h.b16 %v21
  %v183 = vunpack.c.l.b16 %v22
  %v184 = vunpack.c.h.b16 %v22
  %v185 = vunpack.c.l.b16 %v23
  %v186 = vunpack.c.h.b16 %v23
  %v187 = vunpack.c.l.b16 %v24
  %v188 = vunpack.c.h.b16 %v24
  %v189 = vunpack.c.l.b16 %v25
  %v190 = vunpack.c.h.b16 %v25
  %v191 = vunpack.c.l.b16 %v26
  %v192 = vunpack.c.h.b16 %v26
  %v193 = vunpack.c.l.b16 %v27
  %v194 = vunpack.c.h.b16 %v27
  %v195 = vunpack.c.l.b16 %v28
  %v196 = vunpack.c.h.b16 %v28
  %v197 = vunpack.c.l.b16 %v29
  %v198 = vunpack.c.h.b16 %v29
  %v199 = vunpack.c.l.b16 %v30
  %v200 = vunpack.c.h.b16 %v30
  %v201 = vunpack.c.l.b16 %v31
  %v202 = vunpack.c.h.b16 %v31
  %v203 = vunpack.c.l.b16 %v32
  %v204 = vunpack.c.h.b16 %v32
  %v205 = vunpack.c.l.b16 %v33
  %v206 = vunpack.c.h.b16 %v33
  %v207 = vunpack.c.l.b16 %v34
  %v208 = vunpack.c.h.b16 %v34
  %v209 = vunpack.c.l.b16 %v35
  %v210 = vunpack.c.h.b16 %v35
  %v211 = vunpack.c.l.b16 %v36
  %v212 = vunpack.c.h.b16 %v36
  %v213 = vunpack.c.l.b16 %v37
  %v214 = vunpack.c.h.b16 %v37
  %v215 = vunpack.c.l.b16 %v38
  %v216 = vunpack.c.h.b16 %v38
  %v217 = vunpack.c.l.b16 %v39
  %v218 = vunpack.c.h.b16 %v39
  %v219 = vunpack.c.l.b16 %v40
  %v220 = vunpack.c.h.b16 %v40
  %v221 = vunpack.c.l.b16 %v41
  %v222 = vunpack.c.h.b16 %v41
  %v223 = vunpack.c.l.b16 %v42
  %v224 = vunpack.c.h.b16 %v42
  %v225 = vunpack.c.l.b16 %v43
  %v226 = vunpack.c.h.b16 %v43
  %v227 = vunpack.c.l.b16 %v44
  %v228 = vunpack.c.h.b16 %v44
  %v229 = vunpack.c.l.b16 %v45
  %v230 = vunpack.c.h.b16 %v45
  %v231 = vunpack.c.l.b16 %v46
  %v232 = vunpack.c.h.b16 %v46
  %v233 = vunpack.c.l.b16 %v47
  %v234 = vunpack.c.h.b16 %v47
  %v235 = vunpack.c.l.b16 %v48
  %v236 = vunpack.c.h.b16 %v48
  %v237 = vunpack.c.l.b16 %v49
  %v238 = vunpack.c.h.b16 %v49
  %v239 = vunpack.c.l.b16 %v50
  %v240 = vunpack.c.h.b16 %v50
  %v241 = vunpack.c.l.b16 %v51
  %v242 = vunpack.c.h.b16 %v51
  %v243 = vunpack.c.l.b16 %v52
  %v244 = vunpack.c.h.b16 %v52
  %v245 = vunpack.c.l.b16 %v53
  %v246 = vunpack.c.h.b16 %v53
  %v247 = vunpack.c.l.b16 %v54
  %v248 = vunpack.c.h.b16 %v54
  %v249 = vunpack.c.l.b16 %v55
  %v250 = vunpack.c.h.b16 %v55
  %v251 = vunpack.c.l.b16 %v56
  %v252 = vunpack.c.h.b16 %v56
  %v253 = vunpack.c.l.b16 %v57
  %v254 = vunpack.c.h.b16 %v57
  %v255 = vunpack.c.l.b16 %v58
  %v256 = vunpack.c.h.b16 %v58
  %v257 = vunpack.c.l.b16 %v59
  %v258 = vunpack.c.h.b16 %v59
  %v259 = vunpack.c.l.b16 %v60
  %v260 = vunpack.c.h.b16 %v60
  %v261 = vunpack.c.l.b16 %v61
  %v262 = vunpack.c.h.b16 %v61
  %v263 = vunpack.c.l.b16 %v62
  %v264 = vunpack.c.h.b16 %v62
  %v265 = vunpack.c.l.b16 %v63
  %v266 = vunpack.c.h.b16 %v63
  %v267 = vunpack.c.l.b16 %v64
  %v268 = vunpack.c.h.b16 %v64
  %v269 = vunpack.c.l.b16 %v65
  %v270 = vunpack.c.h.b16 %v65
  %v271 = vunpack.c.l.b16 %v66
  %v272 = vunpack.c.h.b16 %v66
  %v273 = vunpack.c.l.b16 %v67
  %v274 = vunpack.c.h.b16 %v67
  %v275 = vunpack.c.l.b16 %v68
  %v276 = vunpack.c.h.b16 %v68
  %v277 = vunpack.c.l.b16 %v69
  %v278 = vunpack.c.h.b16 %v69
  %v279 = vunpack.c.l.b16 %v70
  %v280 = vunpack.c.h.b16 %v70
  %v281 = vunpack.c.l.b16 %v71
  %v282 = vunpack.c.h.b16 %v71
  %v283 = vunpack.c.l.b16 %v72
  %v284 = vunpack.c.h.b16 %v72
  %v285 = vunpack.c.l.b16 %v73
  %v286 = vunpack.c.h.b16 %v73
  %v287 = vunpack.c.l.b16 %v74
  %v288 = vunpack.c.h.b16 %v74
  %v289 = vunpack.c.l.b16 %v75
  %v290 = vunpack.c.h.b16 %v75
  %v291 = vunpack.c.l.b16 %v76
  %v292 = vunpack.c.h.b16 %v76
  %v293 = vunpack.c.l.b16 %v77
  %v294 = vunpack.c.h.b16 %v77
  %v295 = vunpack.c.l.b16 %v78
  %v296 = vunpack.c.h.b16 %v78
  %v297 = vunpack.c.l.b16 %v79
  %v298 = vunpack.c.h.b16 %v79
  %v299 = vunpack.c.l.b16 %v80
  %v300 = vunpack.c.h.b16 %v80
  %v301 = vunpack.c.l.b16 %v81
  %v302 = vunpack.c.h.b16 %v81
  %v303 = vpack.c.b16 %v177, %v175
  %v304 = vpack.c.b16 %v178, %v176
  %v305 = vpack.c.b16 %v181, %v179
  %v306 = vpack.c.b16 %v182, %v180
  %v307 = vpack.c.b16 %v185, %v183
  %v308 = vpack.c.b16 %v186, %v184
  %v309 = vpack.c.b16 %v189, %v187
  %v310 = vpack.c.b16 %v190, %v188
  %v311 = vpack.c.b16 %v193, %v191
  %v312 = vpack.c.b16 %v194, %v192
  %v313 = vpack.c.b16 %v197, %v195
  %v314 = vpack.c.b16 %v198, %v196
  %v315 = vpack.c.b16 %v201, %v199
  %v316 = vpack.c.b16 %v202, %v200
  %v317 = vpack.c.b16 %v205, %v203
  %v318 = vpack.c.b16 %v206, %v204
  %v319 = vpack.c.b16 %v209, %v207
  %v320 = vpack.c.b16 %v210, %v208
  %v321 = vpack.c.b16 %v213, %v211
  %v322 = vpack.c.b16 %v214, %v212
  %v323 = vpack.c.b16 %v217, %v215
  %v324 = vpack.c.b16 %v218, %v216
  %v325 = vpack.c.b16 %v221, %v219
  %v326 = vpack.c.b16 %v222, %v220
  %v327 = vpack.c.b16 %v225, %v223
  %v328 = vpack.c.b16 %v226, %v224
  %v329 = vpack.c.b16 %v229, %v227
  %v330 = vpack.c.b16 %v230, %v228
  %v331 = vpack.c.b16 %v233, %v231
  %v332 = vpack.c.b16 %v234, %v232
  %v333 = vpack.c.b16 %v237, %v235
  %v334 = vpack.c.b16 %v238, %v236
  %v335 = vpack.c.b16 %v241, %v239
  %v336 = vpack.c.b16 %v242, %v240
  %v337 = vpack.c.b16 %v245, %v243
  %v338 = vpack.c.b16 %v246, %v244
  %v339 = vpack.c.b16 %v249, %v247
  %v340 = vpack.c.b16 %v250, %v248
  %v341 = vpack.c.b16 %v253, %v251
  %v342 = vpack.c.b16 %v254, %v252
  %v343 = vpack.c.b16 %v257, %v255
  %v344 = vpack.c.b16 %v258, %v256
  %v345 = vpack.c.b16 %v261, %v259
  %v346 = vpack.c.b16 %v262, %v260
  %v347 = vpack.c.b16 %v265, %v263
  %v348 = vpack.c.b16 %v266, %v264
  %v349 = vpack.c.b16 %v269, %v267
  %v350 = vpack.c.b16 %v270, %v268
  %v351 = vpack.c.b16 %v273, %v271
  %v352 = vpack.c.b16 %v274, %v272
  %v353 = vpack.c.b16 %v277, %v275
  %v354 = vpack.c.b16 %v278, %v276
  %v355 = vpack.c.b16 %v281, %v279
  %v356 = vpack.c.b16 %v282, %v280
  %v357 = vpack.c.b16 %v285, %v283
  %v358 = vpack.c.b16 %v286, %v284
  %v359 = vpack.c.b16 %v289, %v287
  %v360 = vpack.c.b16 %v290, %v288
  %v361 = vpack.c.b16 %v293, %v291
  %v362 = vpack.c.b16 %v294, %v292
  %v363 = vpack.c.b16 %v297, %v295
  %v364 = vpack.c.b16 %v298, %v296
  %v365 = vpack.c.b16 %v301, %v299
  %v366 = vpack.c.b16 %v302, %v300
  %v428 = vunpack.c.l.b16 %v82
  %v429 = vunpack.c.l.b16 %v83
  %v430 = vunpack.c.l.b16 %v84
  %v431 = vunpack.c.l.b16 %v85
  %v432 = vunpack.c.l.b16 %v86
  %v433 = vunpack.c.l.b16 %v87
  %v434 = vunpack.c.l.b16 %v88
  %v435 = vunpack.c.l.b16 %v89
  %v436 = vunpack.c.l.b16 %v90
  %v437 = vunpack.c.l.b16 %v91
  %v438 = vunpack.c.l.b16 %v92
  %v439 = vunpack.c.l.b16 %v93
  %v440 = vunpack.c.l.b16 %v94
  %v441 = vunpack.c.l.b16 %v95
  %v442 = vunpack.c.l.b16 %v96
  %v443 = vunpack.c.l.b16 %v97
  %v444 = vunpack.c.l.b16 %v98
  %v445 = vunpack.c.l.b16 %v99
  %v446 = vunpack.c.l.b16 %v100
  %v447 = vunpack.c.l.b16 %v101
  %v448 = vunpack.c.l.b16 %v102
  %v449 = vunpack.c.l.b16 %v103
  %v450 = vunpack.c.l.b16 %v104
  %v451 = vunpack.c.l.b16 %v105
  %v452 = vunpack.c.l.b16 %v106
  %v453 = vunpack.c.l.b16 %v107
  %v454 = vunpack.c.l.b16 %v108
  %v455 = vunpack.c.l.b16 %v109
  %v456 = vunpack.c.l.b16 %v110
  %v457 = vpack.c.b16 %v429, %v428
  %v458 = vpack.c.b16 %v431, %v430
  %v459 = vpack.c.b16 %v433, %v432
  %v460 = vpack.c.b16 %v435, %v434
  %v461 = vpack.c.b16 %v437, %v436
  %v462 = vpack.c.b16 %v439, %v438
  %v463 = vpack.c.b16 %v441, %v440
  %v464 = vpack.c.b16 %v443, %v442
  %v465 = vpack.c.b16 %v445, %v444
  %v466 = vpack.c.b16 %v447, %v446
  %v467 = vpack.c.b16 %v449, %v448
  %v468 = vpack.c.b16 %v451, %v450
  %v469 = vpack.c.b16 %v453, %v452
  %v470 = vpack.c.b16 %v455, %v454
  %v471 = vpack.c.b16 %v456, %v456
  %vm486 = vcmask 793600
  %v488 = vsel %vm486, %v304, 0
  %v491 = vsel %vm486, %v306, 0
  %v494 = vsel %vm486, %v308, 0
  %v497 = vsel %vm486, %v310, 0
  %v500 = vsel %vm486, %v312, 0
  %v503 = vsel %vm486, %v314, 0
  %v506 = vsel %vm486, %v316, 0
  %v509 = vsel %vm486, %v318, 0
  %v512 = vsel %vm486, %v320, 0
  %v515 = vsel %vm486, %v322, 0
  %v518 = vsel %vm486, %v324, 0
  %v521 = vsel %vm486, %v326, 0
  %v524 = vsel %vm486, %v328, 0
  %v527 = vsel %vm486, %v330, 0
  %v530 = vsel %vm486, %v332, 0
  %v533 = vsel %vm486, %v334, 0
  %v536 = vsel %vm486, %v336, 0
  %v539 = vsel %vm486, %v338, 0
  %v542 = vsel %vm486, %v340, 0
  %v545 = vsel %vm486, %v342, 0
  %v548 = vsel %vm486, %v344, 0
  %v551 = vsel %vm486, %v346, 0
  %v554 = vsel %vm486, %v348, 0
  %v557 = vsel %vm486, %v350, 0
  %v560 = vsel %vm486, %v352, 0
  %v563 = vsel %vm486, %v354, 0
  %v566 = vsel %vm486, %v356, 0
  %v569 = vsel %vm486, %v358, 0
  %v572 = vsel %vm486, %v360, 0
  %v575 = vsel %vm486, %v362, 0
  %v578 = vsel %vm486, %v364, 0
  %v581 = vsel %vm486, %v366, 0
  %vm583 = vcmask 1040384
  %v584 = vsel 0, 4294967295, 65535
  %v585 = vsel %vm583, %v584, 0
  %v587 = vand.u32 %v471, %v585
  %589 = vmatpush.bf16.msra.mxu0 %v464
  %590 = vmatpush.bf16.msra.mxu0 %v463
  %591 = vmatpush.bf16.msra.mxu0 %v462
  %592 = vmatpush.bf16.msra.mxu0 %v461
  %593 = vmatpush.bf16.msra.mxu0 %v460
  %594 = vmatpush.bf16.msra.mxu0 %v459
  %595 = vmatpush.bf16.msra.mxu0 %v458
  %596 = vmatpush.bf16.msra.mxu0 %v457
  %597 = vmatmul.bf16.gmra.mxu0 %v303
  %v598 = vpop.f32.mrf.mxu0
  %v599 = vadd.f32 0.0, %v598
  %v600 = vpop.f32.mrf.mxu0
  %v601 = vadd.f32 0.0, %v600
  %602 = vmatmul.bf16.gmra.mxu0 %v305
  %v603 = vpop.f32.mrf.mxu0
  %v604 = vadd.f32 0.0, %v603
  %v605 = vpop.f32.mrf.mxu0
  %v606 = vadd.f32 0.0, %v605
  %607 = vmatmul.bf16.gmra.mxu0 %v307
  %v608 = vpop.f32.mrf.mxu0
  %v609 = vadd.f32 0.0, %v608
  %v610 = vpop.f32.mrf.mxu0
  %v611 = vadd.f32 0.0, %v610
  %612 = vmatmul.bf16.gmra.mxu0 %v309
  %v613 = vpop.f32.mrf.mxu0
  %v614 = vadd.f32 0.0, %v613
  %v615 = vpop.f32.mrf.mxu0
  %v616 = vadd.f32 0.0, %v615
  %617 = vmatmul.bf16.gmra.mxu0 %v311
  %v618 = vpop.f32.mrf.mxu0
  %v619 = vadd.f32 0.0, %v618
  %v620 = vpop.f32.mrf.mxu0
  %v621 = vadd.f32 0.0, %v620
  %622 = vmatmul.bf16.gmra.mxu0 %v313
  %v623 = vpop.f32.mrf.mxu0
  %v624 = vadd.f32 0.0, %v623
  %v625 = vpop.f32.mrf.mxu0
  %v626 = vadd.f32 0.0, %v625
  %627 = vmatmul.bf16.gmra.mxu0 %v315
  %v628 = vpop.f32.mrf.mxu0
  %v629 = vadd.f32 0.0, %v628
  %v630 = vpop.f32.mrf.mxu0
  %v631 = vadd.f32 0.0, %v630
  %632 = vmatmul.bf16.gmra.mxu0 %v317
  %v633 = vpop.f32.mrf.mxu0
  %v634 = vadd.f32 0.0, %v633
  %v635 = vpop.f32.mrf.mxu0
  %v636 = vadd.f32 0.0, %v635
  %637 = vmatmul.bf16.gmra.mxu0 %v319
  %v638 = vpop.f32.mrf.mxu0
  %v639 = vadd.f32 0.0, %v638
  %v640 = vpop.f32.mrf.mxu0
  %v641 = vadd.f32 0.0, %v640
  %642 = vmatmul.bf16.gmra.mxu0 %v321
  %v643 = vpop.f32.mrf.mxu0
  %v644 = vadd.f32 0.0, %v643
  %v645 = vpop.f32.mrf.mxu0
  %v646 = vadd.f32 0.0, %v645
  %647 = vmatmul.bf16.gmra.mxu0 %v323
  %v648 = vpop.f32.mrf.mxu0
  %v649 = vadd.f32 0.0, %v648
  %v650 = vpop.f32.mrf.mxu0
  %v651 = vadd.f32 0.0, %v650
  %652 = vmatmul.bf16.gmra.mxu0 %v325
  %v653 = vpop.f32.mrf.mxu0
  %v654 = vadd.f32 0.0, %v653
  %v655 = vpop.f32.mrf.mxu0
  %v656 = vadd.f32 0.0, %v655
  %657 = vmatmul.bf16.gmra.mxu0 %v327
  %v658 = vpop.f32.mrf.mxu0
  %v659 = vadd.f32 0.0, %v658
  %v660 = vpop.f32.mrf.mxu0
  %v661 = vadd.f32 0.0, %v660
  %662 = vmatmul.bf16.gmra.mxu0 %v329
  %v663 = vpop.f32.mrf.mxu0
  %v664 = vadd.f32 0.0, %v663
  %v665 = vpop.f32.mrf.mxu0
  %v666 = vadd.f32 0.0, %v665
  %667 = vmatmul.bf16.gmra.mxu0 %v331
  %v668 = vpop.f32.mrf.mxu0
  %v669 = vadd.f32 0.0, %v668
  %v670 = vpop.f32.mrf.mxu0
  %v671 = vadd.f32 0.0, %v670
  %672 = vmatmul.bf16.gmra.mxu0 %v333
  %v673 = vpop.f32.mrf.mxu0
  %v674 = vadd.f32 0.0, %v673
  %v675 = vpop.f32.mrf.mxu0
  %v676 = vadd.f32 0.0, %v675
  %677 = vmatmul.bf16.gmra.mxu0 %v335
  %v678 = vpop.f32.mrf.mxu0
  %v679 = vadd.f32 0.0, %v678
  %v680 = vpop.f32.mrf.mxu0
  %v681 = vadd.f32 0.0, %v680
  %682 = vmatmul.bf16.gmra.mxu0 %v337
  %v683 = vpop.f32.mrf.mxu0
  %v684 = vadd.f32 0.0, %v683
  %v685 = vpop.f32.mrf.mxu0
  %v686 = vadd.f32 0.0, %v685
  %687 = vmatmul.bf16.gmra.mxu0 %v339
  %v688 = vpop.f32.mrf.mxu0
  %v689 = vadd.f32 0.0, %v688
  %v690 = vpop.f32.mrf.mxu0
  %v691 = vadd.f32 0.0, %v690
  %692 = vmatmul.bf16.gmra.mxu0 %v341
  %v693 = vpop.f32.mrf.mxu0
  %v694 = vadd.f32 0.0, %v693
  %v695 = vpop.f32.mrf.mxu0
  %v696 = vadd.f32 0.0, %v695
  %697 = vmatmul.bf16.gmra.mxu0 %v343
  %v698 = vpop.f32.mrf.mxu0
  %v699 = vadd.f32 0.0, %v698
  %v700 = vpop.f32.mrf.mxu0
  %v701 = vadd.f32 0.0, %v700
  %702 = vmatmul.bf16.gmra.mxu0 %v345
  %v703 = vpop.f32.mrf.mxu0
  %v704 = vadd.f32 0.0, %v703
  %v705 = vpop.f32.mrf.mxu0
  %v706 = vadd.f32 0.0, %v705
  %707 = vmatmul.bf16.gmra.mxu0 %v347
  %v708 = vpop.f32.mrf.mxu0
  %v709 = vadd.f32 0.0, %v708
  %v710 = vpop.f32.mrf.mxu0
  %v711 = vadd.f32 0.0, %v710
  %712 = vmatmul.bf16.gmra.mxu0 %v349
  %v713 = vpop.f32.mrf.mxu0
  %v714 = vadd.f32 0.0, %v713
  %v715 = vpop.f32.mrf.mxu0
  %v716 = vadd.f32 0.0, %v715
  %717 = vmatmul.bf16.gmra.mxu0 %v351
  %v718 = vpop.f32.mrf.mxu0
  %v719 = vadd.f32 0.0, %v718
  %v720 = vpop.f32.mrf.mxu0
  %v721 = vadd.f32 0.0, %v720
  %722 = vmatmul.bf16.gmra.mxu0 %v353
  %v723 = vpop.f32.mrf.mxu0
  %v724 = vadd.f32 0.0, %v723
  %v725 = vpop.f32.mrf.mxu0
  %v726 = vadd.f32 0.0, %v725
  %727 = vmatmul.bf16.gmra.mxu0 %v355
  %v728 = vpop.f32.mrf.mxu0
  %v729 = vadd.f32 0.0, %v728
  %v730 = vpop.f32.mrf.mxu0
  %v731 = vadd.f32 0.0, %v730
  %732 = vmatmul.bf16.gmra.mxu0 %v357
  %v733 = vpop.f32.mrf.mxu0
  %v734 = vadd.f32 0.0, %v733
  %v735 = vpop.f32.mrf.mxu0
  %v736 = vadd.f32 0.0, %v735
  %737 = vmatmul.bf16.gmra.mxu0 %v359
  %v738 = vpop.f32.mrf.mxu0
  %v739 = vadd.f32 0.0, %v738
  %v740 = vpop.f32.mrf.mxu0
  %v741 = vadd.f32 0.0, %v740
  %742 = vmatmul.bf16.gmra.mxu0 %v361
  %v743 = vpop.f32.mrf.mxu0
  %v744 = vadd.f32 0.0, %v743
  %v745 = vpop.f32.mrf.mxu0
  %v746 = vadd.f32 0.0, %v745
  %747 = vmatmul.bf16.gmra.mxu0 %v363
  %v748 = vpop.f32.mrf.mxu0
  %v749 = vadd.f32 0.0, %v748
  %v750 = vpop.f32.mrf.mxu0
  %v751 = vadd.f32 0.0, %v750
  %752 = vmatmul.bf16.gmra.mxu0 %v365
  %v753 = vpop.f32.mrf.mxu0
  %v754 = vadd.f32 0.0, %v753
  %v755 = vpop.f32.mrf.mxu0
  %v756 = vadd.f32 0.0, %v755
  %757 = vdwg.mxu0
  %758 = vmatpush.bf16.msra.mxu0 0
  %759 = vmatpush.bf16.msra.mxu0 %v587
  %760 = vmatpush.bf16.msra.mxu0 %v470
  %761 = vmatpush.bf16.msra.mxu0 %v469
  %762 = vmatpush.bf16.msra.mxu0 %v468
  %763 = vmatpush.bf16.msra.mxu0 %v467
  %764 = vmatpush.bf16.msra.mxu0 %v466
  %765 = vmatpush.bf16.msra.mxu0 %v465
  %766 = vmatmul.bf16.gmra.mxu0 %v488
  %v767 = vpop.f32.mrf.mxu0
  %v768 = vadd.f32 %v599, %v767
  %v769 = vpop.f32.mrf.mxu0
  %v770 = vadd.f32 %v601, %v769
  %771 = vmatmul.bf16.gmra.mxu0 %v491
  %v772 = vpop.f32.mrf.mxu0
  %v773 = vadd.f32 %v604, %v772
  %v774 = vpop.f32.mrf.mxu0
  %v775 = vadd.f32 %v606, %v774
  %776 = vmatmul.bf16.gmra.mxu0 %v494
  %v777 = vpop.f32.mrf.mxu0
  %v778 = vadd.f32 %v609, %v777
  %v779 = vpop.f32.mrf.mxu0
  %v780 = vadd.f32 %v611, %v779
  %781 = vmatmul.bf16.gmra.mxu0 %v497
  %v782 = vpop.f32.mrf.mxu0
  %v783 = vadd.f32 %v614, %v782
  %v784 = vpop.f32.mrf.mxu0
  %v785 = vadd.f32 %v616, %v784
  %786 = vmatmul.bf16.gmra.mxu0 %v500
  %v787 = vpop.f32.mrf.mxu0
  %v788 = vadd.f32 %v619, %v787
  %v789 = vpop.f32.mrf.mxu0
  %v790 = vadd.f32 %v621, %v789
  %791 = vmatmul.bf16.gmra.mxu0 %v503
  %v792 = vpop.f32.mrf.mxu0
  %v793 = vadd.f32 %v624, %v792
  %v794 = vpop.f32.mrf.mxu0
  %v795 = vadd.f32 %v626, %v794
  %796 = vmatmul.bf16.gmra.mxu0 %v506
  %v797 = vpop.f32.mrf.mxu0
  %v798 = vadd.f32 %v629, %v797
  %v799 = vpop.f32.mrf.mxu0
  %v800 = vadd.f32 %v631, %v799
  %801 = vmatmul.bf16.gmra.mxu0 %v509
  %v802 = vpop.f32.mrf.mxu0
  %v803 = vadd.f32 %v634, %v802
  %v804 = vpop.f32.mrf.mxu0
  %v805 = vadd.f32 %v636, %v804
  %806 = vmatmul.bf16.gmra.mxu0 %v512
  %v807 = vpop.f32.mrf.mxu0
  %v808 = vadd.f32 %v639, %v807
  %v809 = vpop.f32.mrf.mxu0
  %v810 = vadd.f32 %v641, %v809
  %811 = vmatmul.bf16.gmra.mxu0 %v515
  %v812 = vpop.f32.mrf.mxu0
  %v813 = vadd.f32 %v644, %v812
  %v814 = vpop.f32.mrf.mxu0
  %v815 = vadd.f32 %v646, %v814
  %816 = vmatmul.bf16.gmra.mxu0 %v518
  %v817 = vpop.f32.mrf.mxu0
  %v818 = vadd.f32 %v649, %v817
  %v819 = vpop.f32.mrf.mxu0
  %v820 = vadd.f32 %v651, %v819
  %821 = vmatmul.bf16.gmra.mxu0 %v521
  %v822 = vpop.f32.mrf.mxu0
  %v823 = vadd.f32 %v654, %v822
  %v824 = vpop.f32.mrf.mxu0
  %v825 = vadd.f32 %v656, %v824
  %826 = vmatmul.bf16.gmra.mxu0 %v524
  %v827 = vpop.f32.mrf.mxu0
  %v828 = vadd.f32 %v659, %v827
  %v829 = vpop.f32.mrf.mxu0
  %v830 = vadd.f32 %v661, %v829
  %831 = vmatmul.bf16.gmra.mxu0 %v527
  %v832 = vpop.f32.mrf.mxu0
  %v833 = vadd.f32 %v664, %v832
  %v834 = vpop.f32.mrf.mxu0
  %v835 = vadd.f32 %v666, %v834
  %836 = vmatmul.bf16.gmra.mxu0 %v530
  %v837 = vpop.f32.mrf.mxu0
  %v838 = vadd.f32 %v669, %v837
  %v839 = vpop.f32.mrf.mxu0
  %v840 = vadd.f32 %v671, %v839
  %841 = vmatmul.bf16.gmra.mxu0 %v533
  %v842 = vpop.f32.mrf.mxu0
  %v843 = vadd.f32 %v674, %v842
  %v844 = vpop.f32.mrf.mxu0
  %v845 = vadd.f32 %v676, %v844
  %846 = vmatmul.bf16.gmra.mxu0 %v536
  %v847 = vpop.f32.mrf.mxu0
  %v848 = vadd.f32 %v679, %v847
  %v849 = vpop.f32.mrf.mxu0
  %v850 = vadd.f32 %v681, %v849
  %851 = vmatmul.bf16.gmra.mxu0 %v539
  %v852 = vpop.f32.mrf.mxu0
  %v853 = vadd.f32 %v684, %v852
  %v854 = vpop.f32.mrf.mxu0
  %v855 = vadd.f32 %v686, %v854
  %856 = vmatmul.bf16.gmra.mxu0 %v542
  %v857 = vpop.f32.mrf.mxu0
  %v858 = vadd.f32 %v689, %v857
  %v859 = vpop.f32.mrf.mxu0
  %v860 = vadd.f32 %v691, %v859
  %861 = vmatmul.bf16.gmra.mxu0 %v545
  %v862 = vpop.f32.mrf.mxu0
  %v863 = vadd.f32 %v694, %v862
  %v864 = vpop.f32.mrf.mxu0
  %v865 = vadd.f32 %v696, %v864
  %866 = vmatmul.bf16.gmra.mxu0 %v548
  %v867 = vpop.f32.mrf.mxu0
  %v868 = vadd.f32 %v699, %v867
  %v869 = vpop.f32.mrf.mxu0
  %v870 = vadd.f32 %v701, %v869
  %871 = vmatmul.bf16.gmra.mxu0 %v551
  %v872 = vpop.f32.mrf.mxu0
  %v873 = vadd.f32 %v704, %v872
  %v874 = vpop.f32.mrf.mxu0
  %v875 = vadd.f32 %v706, %v874
  %876 = vmatmul.bf16.gmra.mxu0 %v554
  %v877 = vpop.f32.mrf.mxu0
  %v878 = vadd.f32 %v709, %v877
  %v879 = vpop.f32.mrf.mxu0
  %v880 = vadd.f32 %v711, %v879
  %881 = vmatmul.bf16.gmra.mxu0 %v557
  %v882 = vpop.f32.mrf.mxu0
  %v883 = vadd.f32 %v714, %v882
  %v884 = vpop.f32.mrf.mxu0
  %v885 = vadd.f32 %v716, %v884
  %886 = vmatmul.bf16.gmra.mxu0 %v560
  %v887 = vpop.f32.mrf.mxu0
  %v888 = vadd.f32 %v719, %v887
  %v889 = vpop.f32.mrf.mxu0
  %v890 = vadd.f32 %v721, %v889
  %891 = vmatmul.bf16.gmra.mxu0 %v563
  %v892 = vpop.f32.mrf.mxu0
  %v893 = vadd.f32 %v724, %v892
  %v894 = vpop.f32.mrf.mxu0
  %v895 = vadd.f32 %v726, %v894
  %896 = vmatmul.bf16.gmra.mxu0 %v566
  %v897 = vpop.f32.mrf.mxu0
  %v898 = vadd.f32 %v729, %v897
  %v899 = vpop.f32.mrf.mxu0
  %v900 = vadd.f32 %v731, %v899
  %901 = vmatmul.bf16.gmra.mxu0 %v569
  %v902 = vpop.f32.mrf.mxu0
  %v903 = vadd.f32 %v734, %v902
  %v904 = vpop.f32.mrf.mxu0
  %v905 = vadd.f32 %v736, %v904
  %906 = vmatmul.bf16.gmra.mxu0 %v572
  %v907 = vpop.f32.mrf.mxu0
  %v908 = vadd.f32 %v739, %v907
  %v909 = vpop.f32.mrf.mxu0
  %v910 = vadd.f32 %v741, %v909
  %911 = vmatmul.bf16.gmra.mxu0 %v575
  %v912 = vpop.f32.mrf.mxu0
  %v913 = vadd.f32 %v744, %v912
  %v914 = vpop.f32.mrf.mxu0
  %v915 = vadd.f32 %v746, %v914
  %916 = vmatmul.bf16.gmra.mxu0 %v578
  %v917 = vpop.f32.mrf.mxu0
  %v918 = vadd.f32 %v749, %v917
  %v919 = vpop.f32.mrf.mxu0
  %v920 = vadd.f32 %v751, %v919
  %921 = vmatmul.bf16.gmra.mxu0 %v581
  %v922 = vpop.f32.mrf.mxu0
  %v923 = vadd.f32 %v754, %v922
  %v924 = vpop.f32.mrf.mxu0
  %v925 = vadd.f32 %v756, %v924
  %926 = vdwg.mxu0
  %v927 = vld [vmem:[%s2] sm:$0x1]
  %v929 = vperm.slane %v927, 0
  %v931 = vmul.f32 %v768, %v929
  %v932 = vmul.f32 %v770, %v929
  %v933 = vmul.f32 %v773, %v929
  %v934 = vmul.f32 %v775, %v929
  %v935 = vmul.f32 %v778, %v929
  %v936 = vmul.f32 %v780, %v929
  %v937 = vmul.f32 %v783, %v929
  %v938 = vmul.f32 %v785, %v929
  %v939 = vmul.f32 %v788, %v929
  %v940 = vmul.f32 %v790, %v929
  %v941 = vmul.f32 %v793, %v929
  %v942 = vmul.f32 %v795, %v929
  %v943 = vmul.f32 %v798, %v929
  %v944 = vmul.f32 %v800, %v929
  %v945 = vmul.f32 %v803, %v929
  %v946 = vmul.f32 %v805, %v929
  %v947 = vmul.f32 %v808, %v929
  %v948 = vmul.f32 %v810, %v929
  %v949 = vmul.f32 %v813, %v929
  %v950 = vmul.f32 %v815, %v929
  %v951 = vmul.f32 %v818, %v929
  %v952 = vmul.f32 %v820, %v929
  %v953 = vmul.f32 %v823, %v929
  %v954 = vmul.f32 %v825, %v929
  %v955 = vmul.f32 %v828, %v929
  %v956 = vmul.f32 %v830, %v929
  %v957 = vmul.f32 %v833, %v929
  %v958 = vmul.f32 %v835, %v929
  %v959 = vmul.f32 %v838, %v929
  %v960 = vmul.f32 %v840, %v929
  %v961 = vmul.f32 %v843, %v929
  %v962 = vmul.f32 %v845, %v929
  %v963 = vmul.f32 %v848, %v929
  %v964 = vmul.f32 %v850, %v929
  %v965 = vmul.f32 %v853, %v929
  %v966 = vmul.f32 %v855, %v929
  %v967 = vmul.f32 %v858, %v929
  %v968 = vmul.f32 %v860, %v929
  %v969 = vmul.f32 %v863, %v929
  %v970 = vmul.f32 %v865, %v929
  %v971 = vmul.f32 %v868, %v929
  %v972 = vmul.f32 %v870, %v929
  %v973 = vmul.f32 %v873, %v929
  %v974 = vmul.f32 %v875, %v929
  %v975 = vmul.f32 %v878, %v929
  %v976 = vmul.f32 %v880, %v929
  %v977 = vmul.f32 %v883, %v929
  %v978 = vmul.f32 %v885, %v929
  %v979 = vmul.f32 %v888, %v929
  %v980 = vmul.f32 %v890, %v929
  %v981 = vmul.f32 %v893, %v929
  %v982 = vmul.f32 %v895, %v929
  %v983 = vmul.f32 %v898, %v929
  %v984 = vmul.f32 %v900, %v929
  %v985 = vmul.f32 %v903, %v929
  %v986 = vmul.f32 %v905, %v929
  %v987 = vmul.f32 %v908, %v929
  %v988 = vmul.f32 %v910, %v929
  %v989 = vmul.f32 %v913, %v929
  %v990 = vmul.f32 %v915, %v929
  %v991 = vmul.f32 %v918, %v929
  %v992 = vmul.f32 %v920, %v929
  %v993 = vmul.f32 %v923, %v929
  %v994 = vmul.f32 %v925, %v929
  %v995 = vld [vmem:[%s3] sm:$0x1]
  %v997 = vperm.slane %v995, 0
  %v999 = vadd.f32 %v931, %v997
  %v1000 = vadd.f32 %v932, %v997
  %v1001 = vadd.f32 %v933, %v997
  %v1002 = vadd.f32 %v934, %v997
  %v1003 = vadd.f32 %v935, %v997
  %v1004 = vadd.f32 %v936, %v997
  %v1005 = vadd.f32 %v937, %v997
  %v1006 = vadd.f32 %v938, %v997
  %v1007 = vadd.f32 %v939, %v997
  %v1008 = vadd.f32 %v940, %v997
  %v1009 = vadd.f32 %v941, %v997
  %v1010 = vadd.f32 %v942, %v997
  %v1011 = vadd.f32 %v943, %v997
  %v1012 = vadd.f32 %v944, %v997
  %v1013 = vadd.f32 %v945, %v997
  %v1014 = vadd.f32 %v946, %v997
  %v1015 = vadd.f32 %v947, %v997
  %v1016 = vadd.f32 %v948, %v997
  %v1017 = vadd.f32 %v949, %v997
  %v1018 = vadd.f32 %v950, %v997
  %v1019 = vadd.f32 %v951, %v997
  %v1020 = vadd.f32 %v952, %v997
  %v1021 = vadd.f32 %v953, %v997
  %v1022 = vadd.f32 %v954, %v997
  %v1023 = vadd.f32 %v955, %v997
  %v1024 = vadd.f32 %v956, %v997
  %v1025 = vadd.f32 %v957, %v997
  %v1026 = vadd.f32 %v958, %v997
  %v1027 = vadd.f32 %v959, %v997
  %v1028 = vadd.f32 %v960, %v997
  %v1029 = vadd.f32 %v961, %v997
  %v1030 = vadd.f32 %v962, %v997
  %v1031 = vadd.f32 %v963, %v997
  %v1032 = vadd.f32 %v964, %v997
  %v1033 = vadd.f32 %v965, %v997
  %v1034 = vadd.f32 %v966, %v997
  %v1035 = vadd.f32 %v967, %v997
  %v1036 = vadd.f32 %v968, %v997
  %v1037 = vadd.f32 %v969, %v997
  %v1038 = vadd.f32 %v970, %v997
  %v1039 = vadd.f32 %v971, %v997
  %v1040 = vadd.f32 %v972, %v997
  %v1041 = vadd.f32 %v973, %v997
  %v1042 = vadd.f32 %v974, %v997
  %v1043 = vadd.f32 %v975, %v997
  %v1044 = vadd.f32 %v976, %v997
  %v1045 = vadd.f32 %v977, %v997
  %v1046 = vadd.f32 %v978, %v997
  %v1047 = vadd.f32 %v979, %v997
  %v1048 = vadd.f32 %v980, %v997
  %v1049 = vadd.f32 %v981, %v997
  %v1050 = vadd.f32 %v982, %v997
  %v1051 = vadd.f32 %v983, %v997
  %v1052 = vadd.f32 %v984, %v997
  %v1053 = vadd.f32 %v985, %v997
  %v1054 = vadd.f32 %v986, %v997
  %v1055 = vadd.f32 %v987, %v997
  %v1056 = vadd.f32 %v988, %v997
  %v1057 = vadd.f32 %v989, %v997
  %v1058 = vadd.f32 %v990, %v997
  %v1059 = vadd.f32 %v991, %v997
  %v1060 = vadd.f32 %v992, %v997
  %v1061 = vadd.f32 %v993, %v997
  %v1062 = vadd.f32 %v994, %v997
  %v1063 = vmax.f32 %v999, 0.0
  %v1064 = vmax.f32 %v1000, 0.0
  %v1065 = vmax.f32 %v1001, 0.0
  %v1066 = vmax.f32 %v1002, 0.0
  %v1067 = vmax.f32 %v1003, 0.0
  %v1068 = vmax.f32 %v1004, 0.0
  %v1069 = vmax.f32 %v1005, 0.0
  %v1070 = vmax.f32 %v1006, 0.0
  %v1071 = vmax.f32 %v1007, 0.0
  %v1072 = vmax.f32 %v1008, 0.0
  %v1073 = vmax.f32 %v1009, 0.0
  %v1074 = vmax.f32 %v1010, 0.0
  %v1075 = vmax.f32 %v1011, 0.0
  %v1076 = vmax.f32 %v1012, 0.0
  %v1077 = vmax.f32 %v1013, 0.0
  %v1078 = vmax.f32 %v1014, 0.0
  %v1079 = vmax.f32 %v1015, 0.0
  %v1080 = vmax.f32 %v1016, 0.0
  %v1081 = vmax.f32 %v1017, 0.0
  %v1082 = vmax.f32 %v1018, 0.0
  %v1083 = vmax.f32 %v1019, 0.0
  %v1084 = vmax.f32 %v1020, 0.0
  %v1085 = vmax.f32 %v1021, 0.0
  %v1086 = vmax.f32 %v1022, 0.0
  %v1087 = vmax.f32 %v1023, 0.0
  %v1088 = vmax.f32 %v1024, 0.0
  %v1089 = vmax.f32 %v1025, 0.0
  %v1090 = vmax.f32 %v1026, 0.0
  %v1091 = vmax.f32 %v1027, 0.0
  %v1092 = vmax.f32 %v1028, 0.0
  %v1093 = vmax.f32 %v1029, 0.0
  %v1094 = vmax.f32 %v1030, 0.0
  %v1095 = vmax.f32 %v1031, 0.0
  %v1096 = vmax.f32 %v1032, 0.0
  %v1097 = vmax.f32 %v1033, 0.0
  %v1098 = vmax.f32 %v1034, 0.0
  %v1099 = vmax.f32 %v1035, 0.0
  %v1100 = vmax.f32 %v1036, 0.0
  %v1101 = vmax.f32 %v1037, 0.0
  %v1102 = vmax.f32 %v1038, 0.0
  %v1103 = vmax.f32 %v1039, 0.0
  %v1104 = vmax.f32 %v1040, 0.0
  %v1105 = vmax.f32 %v1041, 0.0
  %v1106 = vmax.f32 %v1042, 0.0
  %v1107 = vmax.f32 %v1043, 0.0
  %v1108 = vmax.f32 %v1044, 0.0
  %v1109 = vmax.f32 %v1045, 0.0
  %v1110 = vmax.f32 %v1046, 0.0
  %v1111 = vmax.f32 %v1047, 0.0
  %v1112 = vmax.f32 %v1048, 0.0
  %v1113 = vmax.f32 %v1049, 0.0
  %v1114 = vmax.f32 %v1050, 0.0
  %v1115 = vmax.f32 %v1051, 0.0
  %v1116 = vmax.f32 %v1052, 0.0
  %v1117 = vmax.f32 %v1053, 0.0
  %v1118 = vmax.f32 %v1054, 0.0
  %v1119 = vmax.f32 %v1055, 0.0
  %v1120 = vmax.f32 %v1056, 0.0
  %v1121 = vmax.f32 %v1057, 0.0
  %v1122 = vmax.f32 %v1058, 0.0
  %v1123 = vmax.f32 %v1059, 0.0
  %v1124 = vmax.f32 %v1060, 0.0
  %v1125 = vmax.f32 %v1061, 0.0
  %v1126 = vmax.f32 %v1062, 0.0
  %vm1127 = vcmask 31744
  %1128 = vst.msk [vmem:[%s4] sm:$0xff] %vm1127, %v1063
  %1129 = vst.msk [vmem:[%s4 + $0x8] sm:$0xff] %vm1127, %v1064
  %1130 = vst.msk [vmem:[%s4 + $0x10] sm:$0xff] %vm1127, %v1065
  %1131 = vst.msk [vmem:[%s4 + $0x18] sm:$0xff] %vm1127, %v1066
  %1132 = vst.msk [vmem:[%s4 + $0x20] sm:$0xff] %vm1127, %v1067
  %1133 = vst.msk [vmem:[%s4 + $0x28] sm:$0xff] %vm1127, %v1068
  %1134 = vst.msk [vmem:[%s4 + $0x30] sm:$0xff] %vm1127, %v1069
  %1135 = vst.msk [vmem:[%s4 + $0x38] sm:$0xff] %vm1127, %v1070
  %1136 = vst.msk [vmem:[%s4 + $0x40] sm:$0xff] %vm1127, %v1071
  %1137 = vst.msk [vmem:[%s4 + $0x48] sm:$0xff] %vm1127, %v1072
  %1138 = vst.msk [vmem:[%s4 + $0x50] sm:$0xff] %vm1127, %v1073
  %1139 = vst.msk [vmem:[%s4 + $0x58] sm:$0xff] %vm1127, %v1074
  %1140 = vst.msk [vmem:[%s4 + $0x60] sm:$0xff] %vm1127, %v1075
  %1141 = vst.msk [vmem:[%s4 + $0x68] sm:$0xff] %vm1127, %v1076
  %1142 = vst.msk [vmem:[%s4 + $0x70] sm:$0xff] %vm1127, %v1077
  %1143 = vst.msk [vmem:[%s4 + $0x78] sm:$0xff] %vm1127, %v1078
  %1144 = vst.msk [vmem:[%s4 + $0x80] sm:$0xff] %vm1127, %v1079
  %1145 = vst.msk [vmem:[%s4 + $0x88] sm:$0xff] %vm1127, %v1080
  %1146 = vst.msk [vmem:[%s4 + $0x90] sm:$0xff] %vm1127, %v1081
  %1147 = vst.msk [vmem:[%s4 + $0x98] sm:$0xff] %vm1127, %v1082
  %1148 = vst.msk [vmem:[%s4 + $0xa0] sm:$0xff] %vm1127, %v1083
  %1149 = vst.msk [vmem:[%s4 + $0xa8] sm:$0xff] %vm1127, %v1084
  %1150 = vst.msk [vmem:[%s4 + $0xb0] sm:$0xff] %vm1127, %v1085
  %1151 = vst.msk [vmem:[%s4 + $0xb8] sm:$0xff] %vm1127, %v1086
  %1152 = vst.msk [vmem:[%s4 + $0xc0] sm:$0xff] %vm1127, %v1087
  %1153 = vst.msk [vmem:[%s4 + $0xc8] sm:$0xff] %vm1127, %v1088
  %1154 = vst.msk [vmem:[%s4 + $0xd0] sm:$0xff] %vm1127, %v1089
  %1155 = vst.msk [vmem:[%s4 + $0xd8] sm:$0xff] %vm1127, %v1090
  %1156 = vst.msk [vmem:[%s4 + $0xe0] sm:$0xff] %vm1127, %v1091
  %1157 = vst.msk [vmem:[%s4 + $0xe8] sm:$0xff] %vm1127, %v1092
  %1158 = vst.msk [vmem:[%s4 + $0xf0] sm:$0xff] %vm1127, %v1093
  %1159 = vst.msk [vmem:[%s4 + $0xf8] sm:$0xff] %vm1127, %v1094
  %1160 = vst.msk [vmem:[%s4 + $0x100] sm:$0xff] %vm1127, %v1095
  %1161 = vst.msk [vmem:[%s4 + $0x108] sm:$0xff] %vm1127, %v1096
  %1162 = vst.msk [vmem:[%s4 + $0x110] sm:$0xff] %vm1127, %v1097
  %1163 = vst.msk [vmem:[%s4 + $0x118] sm:$0xff] %vm1127, %v1098
  %1164 = vst.msk [vmem:[%s4 + $0x120] sm:$0xff] %vm1127, %v1099
  %1165 = vst.msk [vmem:[%s4 + $0x128] sm:$0xff] %vm1127, %v1100
  %1166 = vst.msk [vmem:[%s4 + $0x130] sm:$0xff] %vm1127, %v1101
  %1167 = vst.msk [vmem:[%s4 + $0x138] sm:$0xff] %vm1127, %v1102
  %1168 = vst.msk [vmem:[%s4 + $0x140] sm:$0xff] %vm1127, %v1103
  %1169 = vst.msk [vmem:[%s4 + $0x148] sm:$0xff] %vm1127, %v1104
  %1170 = vst.msk [vmem:[%s4 + $0x150] sm:$0xff] %vm1127, %v1105
  %1171 = vst.msk [vmem:[%s4 + $0x158] sm:$0xff] %vm1127, %v1106
  %1172 = vst.msk [vmem:[%s4 + $0x160] sm:$0xff] %vm1127, %v1107
  %1173 = vst.msk [vmem:[%s4 + $0x168] sm:$0xff] %vm1127, %v1108
  %1174 = vst.msk [vmem:[%s4 + $0x170] sm:$0xff] %vm1127, %v1109
  %1175 = vst.msk [vmem:[%s4 + $0x178] sm:$0xff] %vm1127, %v1110
  %1176 = vst.msk [vmem:[%s4 + $0x180] sm:$0xff] %vm1127, %v1111
  %1177 = vst.msk [vmem:[%s4 + $0x188] sm:$0xff] %vm1127, %v1112
  %1178 = vst.msk [vmem:[%s4 + $0x190] sm:$0xff] %vm1127, %v1113
  %1179 = vst.msk [vmem:[%s4 + $0x198] sm:$0xff] %vm1127, %v1114
  %1180 = vst.msk [vmem:[%s4 + $0x1a0] sm:$0xff] %vm1127, %v1115
  %1181 = vst.msk [vmem:[%s4 + $0x1a8] sm:$0xff] %vm1127, %v1116
  %1182 = vst.msk [vmem:[%s4 + $0x1b0] sm:$0xff] %vm1127, %v1117
  %1183 = vst.msk [vmem:[%s4 + $0x1b8] sm:$0xff] %vm1127, %v1118
  %1184 = vst.msk [vmem:[%s4 + $0x1c0] sm:$0xff] %vm1127, %v1119
  %1185 = vst.msk [vmem:[%s4 + $0x1c8] sm:$0xff] %vm1127, %v1120
  %1186 = vst.msk [vmem:[%s4 + $0x1d0] sm:$0xff] %vm1127, %v1121
  %1187 = vst.msk [vmem:[%s4 + $0x1d8] sm:$0xff] %vm1127, %v1122
  %1188 = vst.msk [vmem:[%s4 + $0x1e0] sm:$0xff] %vm1127, %v1123
  %1189 = vst.msk [vmem:[%s4 + $0x1e8] sm:$0xff] %vm1127, %v1124
  %1190 = vst.msk [vmem:[%s4 + $0x1f0] sm:$0xff] %vm1127, %v1125
  %1191 = vst.msk [vmem:[%s4 + $0x1f8] sm:$0xff] %vm1127, %v1126
  // Predicated region
  $region18: #{_lambda_.32} parent=0 // pred_check
    _
  $region19: #{_lambda_.32} parent=0 // pred_check_branch
    %1193 = sbr.rel (0) target = $region21
  $region20: #{_lambda_.32} parent=0 // pred_region
    _
  $region21: #{_lambda_.32} parent=0 // pred_fallthru
    _
  // Predicated region
  $region22: #{_lambda_.32} parent=0 // pred_check
    _
  $region23: #{_lambda_.32} parent=0 // pred_check_branch
    %1195 = sbr.rel (0) target = $region25
  $region24: #{_lambda_.32} parent=0 // pred_region
    _
  $region25: #{_lambda_.32} parent=0 // pred_fallthru
    _

// kernel: _lambda_.33
$region0: #{_lambda_.33}
  #allocation0 [shape = 'u32[]', space=smem, size = 0x4, offset = 0x4, fixed_abs, tag = 'smem constant byte address 0x4 - core index']
  #allocation1 [shape = 'u32[72,128]{1,0:T(1,128)}', space=vmem, size = 0x9000, scoped, tag = 'internal scratch']
  %s0 = inlined_call_operand.vmem [shape: f32[8,5,5,4], index: 0, kind: input, shape index: {}]
  %s1 = inlined_call_operand.vmem [shape: f32[8,5,5,4], index: 1, kind: input, shape index: {}]
  %s2 = inlined_call_operand.vmem [shape: f32[8,5,5,4], index: 2, kind: input, shape index: {}]
  %s3 = inlined_call_operand.vmem [shape: f32[8,5,5,4], index: 3, kind: input, shape index: {}]
  %s4 = inlined_call_operand.vmem [shape: f32[8,4,4,4], index: 4, kind: output, shape index: {}]
  %s5 = sld [smem:[#allocation0]]
  $region49: #{_lambda_.33} parent=0
    _
  %s7 = ssub.s32 1, %s5
  %s8 = scalar_select 0, %s7, %s5
  loop: start=0, step=1, limit=10
  $region2: #{_lambda_.33} parent=0 // loop_pre_header
    _
  $region3: #{_lambda_.33} parent=0 // loop_header
    %s10 = sphi 0, %s14
    %p11 = scmp.ge.s32.totalorder %s10, 10
    %s20 = sphi 0, %s22
    %s23 = sphi 0, %s20
    %s24 = sphi 0, %s23
    %s40 = sphi 0, %s24
    %s46 = sphi 0, %s48
    %s49 = sphi 0, %s46
    %s50 = sphi 0, %s49
    %s66 = sphi 0, %s50
    %s72 = sphi 0, %s74
    %s75 = sphi 0, %s72
    %s76 = sphi 0, %s75
    %s92 = sphi 0, %s76
    %s98 = sphi 0, %s100
    %s101 = sphi 0, %s98
    %s102 = sphi 0, %s101
    %s118 = sphi 0, %s102
    %s124 = sphi 0, %s126
    %s127 = sphi 0, %s124
    %s128 = sphi 0, %s127
    %s144 = sphi 0, %s128
  $region4: #{_lambda_.33} parent=0 // loop_header_branch
    %13 = sbr.rel (%p11) target = $region8
  $region5: #{_lambda_.33} parent=0 // loop_body
    %s15 = ssub.s32 %s10, 1
    %s16 = ssub.s32 %s10, 2
    %s17 = sadd.s32 %s10, 1
    %s18 = ssub.s32 %s10, %s17
    %p19 = scmp.eq.s32.totalorder %s18, 0
    %s21 = sadd.s32 %s20, 1
    %s22 = scalar_select %p19, %s20, %s21
    %p25 = pneg %p19
    %p26 = scmp.eq.s32.totalorder %s10, 7
    %p27 = por %p25, %p26
    %p28 = scmp.ne.s32.totalorder %s20, %s23
    %p29 = scmp.eq.s32.totalorder %s10, 0
    %p30 = por %p28, %p29
    %p31 = scmp.ne.s32.totalorder %s20, %s23
    %p32 = scmp.eq.s32.totalorder %s15, 7
    %p33 = por %p31, %p32
    %p34 = scmp.ne.s32.totalorder %s23, %s24
    %p35 = scmp.eq.s32.totalorder %s15, 0
    %p36 = por %p34, %p35
    %p37 = scmp.ne.s32.totalorder %s23, %s24
    %p38 = scmp.eq.s32.totalorder %s16, 7
    %p39 = por %p37, %p38
    %p41 = scmp.ne.s32.totalorder %s24, %s40
    %p42 = scmp.eq.s32.totalorder %s16, 0
    %p43 = por %p41, %p42
    %s44 = ssub.s32 %s10, %s17
    %p45 = scmp.eq.s32.totalorder %s44, 0
    %s47 = sadd.s32 %s46, 1
    %s48 = scalar_select %p45, %s46, %s47
    %p51 = pneg %p45
    %p52 = scmp.eq.s32.totalorder %s10, 7
    %p53 = por %p51, %p52
    %p54 = scmp.ne.s32.totalorder %s46, %s49
    %p55 = scmp.eq.s32.totalorder %s10, 0
    %p56 = por %p54, %p55
    %p57 = scmp.ne.s32.totalorder %s46, %s49
    %p58 = scmp.eq.s32.totalorder %s15, 7
    %p59 = por %p57, %p58
    %p60 = scmp.ne.s32.totalorder %s49, %s50
    %p61 = scmp.eq.s32.totalorder %s15, 0
    %p62 = por %p60, %p61
    %p63 = scmp.ne.s32.totalorder %s49, %s50
    %p64 = scmp.eq.s32.totalorder %s16, 7
    %p65 = por %p63, %p64
    %p67 = scmp.ne.s32.totalorder %s50, %s66
    %p68 = scmp.eq.s32.totalorder %s16, 0
    %p69 = por %p67, %p68
    %s70 = ssub.s32 %s10, %s17
    %p71 = scmp.eq.s32.totalorder %s70, 0
    %s73 = sadd.s32 %s72, 1
    %s74 = scalar_select %p71, %s72, %s73
    %p77 = pneg %p71
    %p78 = scmp.eq.s32.totalorder %s10, 7
    %p79 = por %p77, %p78
    %p80 = scmp.ne.s32.totalorder %s72, %s75
    %p81 = scmp.eq.s32.totalorder %s10, 0
    %p82 = por %p80, %p81
    %p83 = scmp.ne.s32.totalorder %s72, %s75
    %p84 = scmp.eq.s32.totalorder %s15, 7
    %p85 = por %p83, %p84
    %p86 = scmp.ne.s32.totalorder %s75, %s76
    %p87 = scmp.eq.s32.totalorder %s15, 0
    %p88 = por %p86, %p87
    %p89 = scmp.ne.s32.totalorder %s75, %s76
    %p90 = scmp.eq.s32.totalorder %s16, 7
    %p91 = por %p89, %p90
    %p93 = scmp.ne.s32.totalorder %s76, %s92
    %p94 = scmp.eq.s32.totalorder %s16, 0
    %p95 = por %p93, %p94
    %s96 = ssub.s32 %s10, %s17
    %p97 = scmp.eq.s32.totalorder %s96, 0
    %s99 = sadd.s32 %s98, 1
    %s100 = scalar_select %p97, %s98, %s99
    %p103 = pneg %p97
    %p104 = scmp.eq.s32.totalorder %s10, 7
    %p105 = por %p103, %p104
    %p106 = scmp.ne.s32.totalorder %s98, %s101
    %p107 = scmp.eq.s32.totalorder %s10, 0
    %p108 = por %p106, %p107
    %p109 = scmp.ne.s32.totalorder %s98, %s101
    %p110 = scmp.eq.s32.totalorder %s15, 7
    %p111 = por %p109, %p110
    %p112 = scmp.ne.s32.totalorder %s101, %s102
    %p113 = scmp.eq.s32.totalorder %s15, 0
    %p114 = por %p112, %p113
    %p115 = scmp.ne.s32.totalorder %s101, %s102
    %p116 = scmp.eq.s32.totalorder %s16, 7
    %p117 = por %p115, %p116
    %p119 = scmp.ne.s32.totalorder %s102, %s118
    %p120 = scmp.eq.s32.totalorder %s16, 0
    %p121 = por %p119, %p120
    %s122 = ssub.s32 %s10, %s17
    %p123 = scmp.eq.s32.totalorder %s122, 0
    %s125 = sadd.s32 %s124, 1
    %s126 = scalar_select %p123, %s124, %s125
    %p129 = pneg %p123
    %p130 = scmp.eq.s32.totalorder %s10, 7
    %p131 = por %p129, %p130
    %p132 = scmp.ne.s32.totalorder %s124, %s127
    %p133 = scmp.eq.s32.totalorder %s10, 0
    %p134 = por %p132, %p133
    %p135 = scmp.ne.s32.totalorder %s124, %s127
    %p136 = scmp.eq.s32.totalorder %s15, 7
    %p137 = por %p135, %p136
    %p138 = scmp.ne.s32.totalorder %s127, %s128
    %p139 = scmp.eq.s32.totalorder %s15, 0
    %p140 = por %p138, %p139
    %p141 = scmp.ne.s32.totalorder %s127, %s128
    %p142 = scmp.eq.s32.totalorder %s16, 7
    %p143 = por %p141, %p142
    %p145 = scmp.ne.s32.totalorder %s128, %s144
    %p146 = scmp.eq.s32.totalorder %s16, 0
    %p147 = por %p145, %p146
    %p148 = scmp.le.s32.totalorder 1, %s10
    %p149 = scmp.lt.s32.totalorder %s10, 9
    %p150 = pnand %p148, %p149
    %p151 = pneg %p150
    // Predicated region
    $region9: #{_lambda_.33} parent=5 // pred_check
      _
    $region10: #{_lambda_.33} parent=5 // pred_check_branch
      %153 = sbr.rel (%p150) target = $region12
    $region11: #{_lambda_.33} parent=5 // pred_region
      %s154 = ssub.s32 %s10, 1
    $region12: #{_lambda_.33} parent=5 // pred_fallthru
      _
    %p155 = scmp.lt.s32.totalorder %s10, 8
    // Predicated region
    $region13: #{_lambda_.33} parent=5 // pred_check
      %p156 = pneg %p155
    $region14: #{_lambda_.33} parent=5 // pred_check_branch
      %158 = sbr.rel (%p156) target = $region16
    $region15: #{_lambda_.33} parent=5 // pred_region
      // Predicated region
      $region17: #{_lambda_.33} parent=15 // pred_check
        %p159 = pneg %p30
      $region18: #{_lambda_.33} parent=15 // pred_check_branch
        %161 = sbr.rel (%p159) target = $region20
      $region19: #{_lambda_.33} parent=15 // pred_region
        %p162 = scmp.lt.s32.totalorder %s10, 7
        %s163 = scalar_select %p162, %s10, 7
        %s164 = smul.addr %s163, 5
        %s165 = smul.addr %s164, 8
        %s166 = scalar_lea.vmem %s0, %s165
      $region20: #{_lambda_.33} parent=15 // pred_fallthru
        _
      // Predicated region
      $region21: #{_lambda_.33} parent=15 // pred_check
        %p167 = pneg %p56
      $region22: #{_lambda_.33} parent=15 // pred_check_branch
        %169 = sbr.rel (%p167) target = $region24
      $region23: #{_lambda_.33} parent=15 // pred_region
        %p170 = scmp.lt.s32.totalorder %s10, 7
        %s171 = scalar_select %p170, %s10, 7
        %s172 = smul.addr %s171, 5
        %s173 = smul.addr %s172, 8
        %s174 = scalar_lea.vmem %s1, %s173
      $region24: #{_lambda_.33} parent=15 // pred_fallthru
        _
      // Predicated region
      $region25: #{_lambda_.33} parent=15 // pred_check
        %p175 = pneg %p82
      $region26: #{_lambda_.33} parent=15 // pred_check_branch
        %177 = sbr.rel (%p175) target = $region28
      $region27: #{_lambda_.33} parent=15 // pred_region
        %p178 = scmp.lt.s32.totalorder %s10, 7
        %s179 = scalar_select %p178, %s10, 7
        %s180 = smul.addr %s179, 5
        %s181 = smul.addr %s180, 8
        %s182 = scalar_lea.vmem %s2, %s181
      $region28: #{_lambda_.33} parent=15 // pred_fallthru
        _
      // Predicated region
      $region29: #{_lambda_.33} parent=15 // pred_check
        %p183 = pneg %p108
      $region30: #{_lambda_.33} parent=15 // pred_check_branch
        %185 = sbr.rel (%p183) target = $region32
      $region31: #{_lambda_.33} parent=15 // pred_region
        %p186 = scmp.lt.s32.totalorder %s10, 7
        %s187 = scalar_select %p186, %s10, 7
        %s188 = smul.addr %s187, 5
        %s189 = smul.addr %s188, 8
        %s190 = scalar_lea.vmem %s3, %s189
      $region32: #{_lambda_.33} parent=15 // pred_fallthru
        _
    $region16: #{_lambda_.33} parent=5 // pred_fallthru
      _
    %p191 = scmp.le.s32.totalorder 1, %s10
    %p192 = scmp.lt.s32.totalorder %s10, 9
    %p193 = pnand %p191, %p192
    %p194 = pneg %p193
    // Predicated region
    $region33: #{_lambda_.33} parent=5 // pred_check
      _
    $region34: #{_lambda_.33} parent=5 // pred_check_branch
      %196 = sbr.rel (%p193) target = $region36
    $region35: #{_lambda_.33} parent=5 // pred_region
      %s197 = ssub.s32 %s10, 1
      %p198 = scmp.lt.s32.totalorder %s15, 7
      %s199 = scalar_select %p198, %s15, 7
      %s200 = smul.addr %s199, 5
      %s201 = smul.addr %s200, 8
      %s202 = scalar_lea.vmem %s0, %s201
      %p203 = pneg %p36
      %p204 = pneg %p33
      %p205 = scmp.lt.s32.totalorder %s15, 7
      %s206 = scalar_select %p205, %s15, 7
      %s207 = smul.addr %s206, 5
      %s208 = smul.addr %s207, 8
      %s209 = scalar_lea.vmem %s1, %s208
      %p210 = pneg %p62
      %p211 = pneg %p59
      %p212 = scmp.lt.s32.totalorder %s15, 7
      %s213 = scalar_select %p212, %s15, 7
      %s214 = smul.addr %s213, 5
      %s215 = smul.addr %s214, 8
      %s216 = scalar_lea.vmem %s2, %s215
      %p217 = pneg %p88
      %p218 = pneg %p85
      %p219 = scmp.lt.s32.totalorder %s15, 7
      %s220 = scalar_select %p219, %s15, 7
      %s221 = smul.addr %s220, 5
      %s222 = smul.addr %s221, 8
      %s223 = scalar_lea.vmem %s3, %s222
      %p224 = pneg %p114
      %p225 = pneg %p111
      %p226 = pneg %p140
      %p227 = pneg %p137
      %p228 = scmp.lt.s32.totalorder %s15, 7
      %s229 = scalar_select %p228, %s15, 7
      %s230 = smul.addr %s229, 4
      %s231 = smul.addr %s230, 4
      %s232 = scalar_lea.vmem %s4, %s231
      %p233 = scmp.lt.s32.totalorder %s15, 7
      %s234 = scalar_select %p233, %s15, 7
      %s235 = smul.addr %s234, 5
      %s236 = smul.addr %s235, 8
      %s237 = scalar_lea.vmem %s0, %s236
      %p238 = scmp.lt.s32.totalorder %s15, 7
      %s239 = scalar_select %p238, %s15, 7
      %s240 = smul.addr %s239, 5
      %s241 = smul.addr %s240, 8
      %s242 = scalar_lea.vmem %s1, %s241
      %p243 = scmp.lt.s32.totalorder %s15, 7
      %s244 = scalar_select %p243, %s15, 7
      %s245 = smul.addr %s244, 5
      %s246 = smul.addr %s245, 8
      %s247 = scalar_lea.vmem %s2, %s246
      %p248 = scmp.lt.s32.totalorder %s15, 7
      %s249 = scalar_select %p248, %s15, 7
      %s250 = smul.addr %s249, 5
      %s251 = smul.addr %s250, 8
      %s252 = scalar_lea.vmem %s3, %s251
      %p253 = scmp.lt.s32.totalorder %s15, 7
      %s254 = scalar_select %p253, %s15, 7
      %s255 = smul.addr %s254, 4
      %s256 = smul.addr %s255, 4
      %s257 = scalar_lea.vmem %s4, %s256
      %v258 = vld [vmem:[%s237] sm:$0xf]
      %v259 = vld [vmem:[%s237 + $0x8] sm:$0xf]
      %v260 = vld [vmem:[%s237 + $0x10] sm:$0xf]
      %v261 = vld [vmem:[%s237 + $0x18] sm:$0xf]
      %v262 = vld [vmem:[%s242] sm:$0xf]
      %v263 = vld [vmem:[%s242 + $0x8] sm:$0xf]
      %v264 = vld [vmem:[%s242 + $0x10] sm:$0xf]
      %v265 = vld [vmem:[%s242 + $0x18] sm:$0xf]
      %v266 = vld [vmem:[%s237 + $0x1] sm:$0xf]
      %v267 = vld [vmem:[%s237 + $0x9] sm:$0xf]
      %v268 = vld [vmem:[%s237 + $0x11] sm:$0xf]
      %v269 = vld [vmem:[%s237 + $0x19] sm:$0xf]
      %v270 = vld [vmem:[%s247] sm:$0xf]
      %v271 = vld [vmem:[%s247 + $0x8] sm:$0xf]
      %v272 = vld [vmem:[%s247 + $0x10] sm:$0xf]
      %v273 = vld [vmem:[%s247 + $0x18] sm:$0xf]
      %v274 = vld [vmem:[%s252] sm:$0xf]
      %v275 = vld [vmem:[%s252 + $0x8] sm:$0xf]
      %v276 = vld [vmem:[%s252 + $0x10] sm:$0xf]
      %v277 = vld [vmem:[%s252 + $0x18] sm:$0xf]
      %v278 = vld [vmem:[%s247 + $0x1] sm:$0xf]
      %v279 = vld [vmem:[%s247 + $0x9] sm:$0xf]
      %v280 = vld [vmem:[%s247 + $0x11] sm:$0xf]
      %v281 = vld [vmem:[%s247 + $0x19] sm:$0xf]
      %s282 = scalar_lea.vmem %s237, 8
      %v283 = vld [vmem:[%s282] sm:$0xf]
      %v284 = vld [vmem:[%s282 + $0x8] sm:$0xf]
      %v285 = vld [vmem:[%s282 + $0x10] sm:$0xf]
      %v286 = vld [vmem:[%s282 + $0x18] sm:$0xf]
      %s287 = scalar_lea.vmem %s242, 8
      %v288 = vld [vmem:[%s287] sm:$0xf]
      %v289 = vld [vmem:[%s287 + $0x8] sm:$0xf]
      %v290 = vld [vmem:[%s287 + $0x10] sm:$0xf]
      %v291 = vld [vmem:[%s287 + $0x18] sm:$0xf]
      %v292 = vld [vmem:[%s282 + $0x1] sm:$0xf]
      %v293 = vld [vmem:[%s282 + $0x9] sm:$0xf]
      %v294 = vld [vmem:[%s282 + $0x11] sm:$0xf]
      %v295 = vld [vmem:[%s282 + $0x19] sm:$0xf]
      %v296 = vmax.f32 %v258, %v262
      %v297 = vmax.f32 %v259, %v263
      %v298 = vmax.f32 %v260, %v264
      %v299 = vmax.f32 %v261, %v265
      %v300 = vmax.f32 %v296, %v266
      %v301 = vmax.f32 %v297, %v267
      %v302 = vmax.f32 %v298, %v268
      %v303 = vmax.f32 %v299, %v269
      %v304 = vmax.f32 %v300, %v270
      %v305 = vmax.f32 %v301, %v271
      %v306 = vmax.f32 %v302, %v272
      %v307 = vmax.f32 %v303, %v273
      %v308 = vmax.f32 %v304, %v274
      %v309 = vmax.f32 %v305, %v275
      %v310 = vmax.f32 %v306, %v276
      %v311 = vmax.f32 %v307, %v277
      %v312 = vmax.f32 %v308, %v278
      %v313 = vmax.f32 %v309, %v279
      %v314 = vmax.f32 %v310, %v280
      %v315 = vmax.f32 %v311, %v281
      %v316 = vmax.f32 %v312, %v283
      %v317 = vmax.f32 %v313, %v284
      %v318 = vmax.f32 %v314, %v285
      %v319 = vmax.f32 %v315, %v286
      %v320 = vmax.f32 %v316, %v288
      %v321 = vmax.f32 %v317, %v289
      %v322 = vmax.f32 %v318, %v290
      %v323 = vmax.f32 %v319, %v291
      %v324 = vmax.f32 %v320, %v292
      %v325 = vmax.f32 %v321, %v293
      %v326 = vmax.f32 %v322, %v294
      %v327 = vmax.f32 %v323, %v295
      %vm328 = vcmask 27648
      %329 = vst.msk [vmem:[%s257] sm:$0xf] %vm328, %v324
      %330 = vst.msk [vmem:[%s257 + $0x4] sm:$0xf] %vm328, %v325
      %331 = vst.msk [vmem:[%s257 + $0x8] sm:$0xf] %vm328, %v326
      %332 = vst.msk [vmem:[%s257 + $0xc] sm:$0xf] %vm328, %v327
      %p333 = scmp.lt.s32.totalorder %s15, 7
      %s334 = scalar_select %p333, %s15, 7
      %s335 = smul.addr %s334, 4
      %s336 = smul.addr %s335, 4
      %s337 = scalar_lea.vmem %s4, %s336
      // Predicated region
      $region37: #{_lambda_.33} parent=35 // pred_check
        %p338 = pneg %p137
      $region38: #{_lambda_.33} parent=35 // pred_check_branch
        %340 = sbr.rel (%p338) target = $region40
      $region39: #{_lambda_.33} parent=35 // pred_region
        _
      $region40: #{_lambda_.33} parent=35 // pred_fallthru
        _
    $region36: #{_lambda_.33} parent=5 // pred_fallthru
      _
    %p341 = scmp.le.s32.totalorder 2, %s10
    // Predicated region
    $region41: #{_lambda_.33} parent=5 // pred_check
      %p342 = pneg %p341
    $region42: #{_lambda_.33} parent=5 // pred_check_branch
      %344 = sbr.rel (%p342) target = $region44
    $region43: #{_lambda_.33} parent=5 // pred_region
      %s345 = ssub.s32 %s10, 2
      // Predicated region
      $region45: #{_lambda_.33} parent=43 // pred_check
        %p346 = pneg %p143
      $region46: #{_lambda_.33} parent=43 // pred_check_branch
        %348 = sbr.rel (%p346) target = $region48
      $region47: #{_lambda_.33} parent=43 // pred_region
        %p349 = scmp.lt.s32.totalorder %s16, 7
        %s350 = scalar_select %p349, %s16, 7
        %s351 = smul.addr %s350, 4
        %s352 = smul.addr %s351, 4
        %s353 = scalar_lea.vmem %s4, %s352
      $region48: #{_lambda_.33} parent=43 // pred_fallthru
        _
    $region44: #{_lambda_.33} parent=5 // pred_fallthru
      _
  $region6: #{_lambda_.33} parent=0 // loop_footer
    %s14 = sadd.s32 1, %s10
  $region7: #{_lambda_.33} parent=0 // loop_footer_branch
    %9 = sbr.rel target = $region3
  $region8: #{_lambda_.33} parent=0 // loop_exit
    _

// kernel: _lambda_.34
$region0: #{_lambda_.34}
  #allocation0 [shape = 'u32[]', space=smem, size = 0x4, offset = 0x4, fixed_abs, tag = 'smem constant byte address 0x4 - core index']
  #allocation1 [shape = 'u32[72,128]{1,0:T(1,128)}', space=vmem, size = 0x9000, scoped, tag = 'internal scratch']
  %s0 = inlined_call_operand.vmem [shape: f32[128,4], index: 0, kind: input, shape index: {}]
  %s1 = inlined_call_operand.vmem [shape: f32[1,4], index: 1, kind: input, shape index: {}]
  %s2 = inlined_call_operand.vmem [shape: f32[1,4], index: 2, kind: input, shape index: {}]
  %s3 = inlined_call_operand.vmem [shape: bf16[4,2], index: 3, kind: input, shape index: {}]
  %s4 = inlined_call_operand.vmem [shape: f32[128,2], index: 4, kind: output, shape index: {}]
  %s5 = sld [smem:[#allocation0]]
  $region26: #{_lambda_.34} parent=0
    _
  %s7 = ssub.s32 1, %s5
  %s8 = scalar_select 0, %s7, %s5
  // Predicated region
  $region2: #{_lambda_.34} parent=0 // pred_check
    _
  $region3: #{_lambda_.34} parent=0 // pred_check_branch
    %10 = sbr.rel (0) target = $region5
  $region4: #{_lambda_.34} parent=0 // pred_region
    _
  $region5: #{_lambda_.34} parent=0 // pred_fallthru
    _
  // Predicated region
  $region6: #{_lambda_.34} parent=0 // pred_check
    _
  $region7: #{_lambda_.34} parent=0 // pred_check_branch
    %12 = sbr.rel (0) target = $region9
  $region8: #{_lambda_.34} parent=0 // pred_region
    _
  $region9: #{_lambda_.34} parent=0 // pred_fallthru
    _
  // Predicated region
  $region10: #{_lambda_.34} parent=0 // pred_check
    _
  $region11: #{_lambda_.34} parent=0 // pred_check_branch
    %14 = sbr.rel (0) target = $region13
  $region12: #{_lambda_.34} parent=0 // pred_region
    _
  $region13: #{_lambda_.34} parent=0 // pred_fallthru
    _
  // Predicated region
  $region14: #{_lambda_.34} parent=0 // pred_check
    _
  $region15: #{_lambda_.34} parent=0 // pred_check_branch
    %16 = sbr.rel (0) target = $region17
  $region16: #{_lambda_.34} parent=0 // pred_region
    _
  $region17: #{_lambda_.34} parent=0 // pred_fallthru
    _
  %v18 = vld [vmem:[%s0] sm:$0xff]
  %v19 = vld [vmem:[%s0 + $0x8] sm:$0xff]
  %v20 = vld [vmem:[%s0 + $0x10] sm:$0xff]
  %v21 = vld [vmem:[%s0 + $0x18] sm:$0xff]
  %v22 = vld [vmem:[%s0 + $0x20] sm:$0xff]
  %v23 = vld [vmem:[%s0 + $0x28] sm:$0xff]
  %v24 = vld [vmem:[%s0 + $0x30] sm:$0xff]
  %v25 = vld [vmem:[%s0 + $0x38] sm:$0xff]
  %v26 = vld [vmem:[%s0 + $0x40] sm:$0xff]
  %v27 = vld [vmem:[%s0 + $0x48] sm:$0xff]
  %v28 = vld [vmem:[%s0 + $0x50] sm:$0xff]
  %v29 = vld [vmem:[%s0 + $0x58] sm:$0xff]
  %v30 = vld [vmem:[%s0 + $0x60] sm:$0xff]
  %v31 = vld [vmem:[%s0 + $0x68] sm:$0xff]
  %v32 = vld [vmem:[%s0 + $0x70] sm:$0xff]
  %v33 = vld [vmem:[%s0 + $0x78] sm:$0xff]
  %v34 = vld [vmem:[%s1] sm:$0x1]
  %v36 = vperm.slane %v34, 0
  %v38 = vmul.f32 %v18, %v36
  %v39 = vmul.f32 %v19, %v36
  %v40 = vmul.f32 %v20, %v36
  %v41 = vmul.f32 %v21, %v36
  %v42 = vmul.f32 %v22, %v36
  %v43 = vmul.f32 %v23, %v36
  %v44 = vmul.f32 %v24, %v36
  %v45 = vmul.f32 %v25, %v36
  %v46 = vmul.f32 %v26, %v36
  %v47 = vmul.f32 %v27, %v36
  %v48 = vmul.f32 %v28, %v36
  %v49 = vmul.f32 %v29, %v36
  %v50 = vmul.f32 %v30, %v36
  %v51 = vmul.f32 %v31, %v36
  %v52 = vmul.f32 %v32, %v36
  %v53 = vmul.f32 %v33, %v36
  %v54 = vld [vmem:[%s2] sm:$0x1]
  %v56 = vperm.slane %v54, 0
  %v58 = vadd.f32 %v38, %v56
  %v59 = vadd.f32 %v39, %v56
  %v60 = vadd.f32 %v40, %v56
  %v61 = vadd.f32 %v41, %v56
  %v62 = vadd.f32 %v42, %v56
  %v63 = vadd.f32 %v43, %v56
  %v64 = vadd.f32 %v44, %v56
  %v65 = vadd.f32 %v45, %v56
  %v66 = vadd.f32 %v46, %v56
  %v67 = vadd.f32 %v47, %v56
  %v68 = vadd.f32 %v48, %v56
  %v69 = vadd.f32 %v49, %v56
  %v70 = vadd.f32 %v50, %v56
  %v71 = vadd.f32 %v51, %v56
  %v72 = vadd.f32 %v52, %v56
  %v73 = vadd.f32 %v53, %v56
  %v74 = vmax.f32 %v58, 0.0
  %v75 = vmax.f32 %v59, 0.0
  %v76 = vmax.f32 %v60, 0.0
  %v77 = vmax.f32 %v61, 0.0
  %v78 = vmax.f32 %v62, 0.0
  %v79 = vmax.f32 %v63, 0.0
  %v80 = vmax.f32 %v64, 0.0
  %v81 = vmax.f32 %v65, 0.0
  %v82 = vmax.f32 %v66, 0.0
  %v83 = vmax.f32 %v67, 0.0
  %v84 = vmax.f32 %v68, 0.0
  %v85 = vmax.f32 %v69, 0.0
  %v86 = vmax.f32 %v70, 0.0
  %v87 = vmax.f32 %v71, 0.0
  %v88 = vmax.f32 %v72, 0.0
  %v89 = vmax.f32 %v73, 0.0
  %v90 = vpack.c.bf16 %v75, %v74
  %v91 = vpack.c.bf16 %v77, %v76
  %v92 = vpack.c.bf16 %v79, %v78
  %v93 = vpack.c.bf16 %v81, %v80
  %v94 = vpack.c.bf16 %v83, %v82
  %v95 = vpack.c.bf16 %v85, %v84
  %v96 = vpack.c.bf16 %v87, %v86
  %v97 = vpack.c.bf16 %v89, %v88
  %v98 = vld [vmem:[%s3] sm:$0x3]
  %vm99 = vcmask 31744
  %v101 = vsel %vm99, %v90, 0
  %v104 = vsel %vm99, %v91, 0
  %v107 = vsel %vm99, %v92, 0
  %v110 = vsel %vm99, %v93, 0
  %v113 = vsel %vm99, %v94, 0
  %v116 = vsel %vm99, %v95, 0
  %v119 = vsel %vm99, %v96, 0
  %v122 = vsel %vm99, %v97, 0
  %vm124 = vcmask 1041408
  %v126 = vsel %vm124, %v98, 0
  %128 = vmatpush.bf16.msra.mxu0 0
  %129 = vmatpush.bf16.msra.mxu0 0
  %130 = vmatpush.bf16.msra.mxu0 0
  %131 = vmatpush.bf16.msra.mxu0 0
  %132 = vmatpush.bf16.msra.mxu0 0
  %133 = vmatpush.bf16.msra.mxu0 0
  %134 = vmatpush.bf16.msra.mxu0 0
  %135 = vmatpush.bf16.msra.mxu0 %v126
  %136 = vmatmul.bf16.gmra.mxu0 %v101
  %v137 = vpop.f32.mrf.mxu0
  %v138 = vadd.f32 0.0, %v137
  %v139 = vpop.f32.mrf.mxu0
  %v140 = vadd.f32 0.0, %v139
  %141 = vmatmul.bf16.gmra.mxu0 %v104
  %v142 = vpop.f32.mrf.mxu0
  %v143 = vadd.f32 0.0, %v142
  %v144 = vpop.f32.mrf.mxu0
  %v145 = vadd.f32 0.0, %v144
  %146 = vmatmul.bf16.gmra.mxu0 %v107
  %v147 = vpop.f32.mrf.mxu0
  %v148 = vadd.f32 0.0, %v147
  %v149 = vpop.f32.mrf.mxu0
  %v150 = vadd.f32 0.0, %v149
  %151 = vmatmul.bf16.gmra.mxu0 %v110
  %v152 = vpop.f32.mrf.mxu0
  %v153 = vadd.f32 0.0, %v152
  %v154 = vpop.f32.mrf.mxu0
  %v155 = vadd.f32 0.0, %v154
  %156 = vmatmul.bf16.gmra.mxu0 %v113
  %v157 = vpop.f32.mrf.mxu0
  %v158 = vadd.f32 0.0, %v157
  %v159 = vpop.f32.mrf.mxu0
  %v160 = vadd.f32 0.0, %v159
  %161 = vmatmul.bf16.gmra.mxu0 %v116
  %v162 = vpop.f32.mrf.mxu0
  %v163 = vadd.f32 0.0, %v162
  %v164 = vpop.f32.mrf.mxu0
  %v165 = vadd.f32 0.0, %v164
  %166 = vmatmul.bf16.gmra.mxu0 %v119
  %v167 = vpop.f32.mrf.mxu0
  %v168 = vadd.f32 0.0, %v167
  %v169 = vpop.f32.mrf.mxu0
  %v170 = vadd.f32 0.0, %v169
  %171 = vmatmul.bf16.gmra.mxu0 %v122
  %v172 = vpop.f32.mrf.mxu0
  %v173 = vadd.f32 0.0, %v172
  %v174 = vpop.f32.mrf.mxu0
  %v175 = vadd.f32 0.0, %v174
  %176 = vdwg.mxu0
  %vm177 = vcmask 15360
  %178 = vst.msk [vmem:[%s4] sm:$0xff] %vm177, %v138
  %179 = vst.msk [vmem:[%s4 + $0x8] sm:$0xff] %vm177, %v140
  %180 = vst.msk [vmem:[%s4 + $0x10] sm:$0xff] %vm177, %v143
  %181 = vst.msk [vmem:[%s4 + $0x18] sm:$0xff] %vm177, %v145
  %182 = vst.msk [vmem:[%s4 + $0x20] sm:$0xff] %vm177, %v148
  %183 = vst.msk [vmem:[%s4 + $0x28] sm:$0xff] %vm177, %v150
  %184 = vst.msk [vmem:[%s4 + $0x30] sm:$0xff] %vm177, %v153
  %185 = vst.msk [vmem:[%s4 + $0x38] sm:$0xff] %vm177, %v155
  %186 = vst.msk [vmem:[%s4 + $0x40] sm:$0xff] %vm177, %v158
  %187 = vst.msk [vmem:[%s4 + $0x48] sm:$0xff] %vm177, %v160
  %188 = vst.msk [vmem:[%s4 + $0x50] sm:$0xff] %vm177, %v163
  %189 = vst.msk [vmem:[%s4 + $0x58] sm:$0xff] %vm177, %v165
  %190 = vst.msk [vmem:[%s4 + $0x60] sm:$0xff] %vm177, %v168
  %191 = vst.msk [vmem:[%s4 + $0x68] sm:$0xff] %vm177, %v170
  %192 = vst.msk [vmem:[%s4 + $0x70] sm:$0xff] %vm177, %v173
  %193 = vst.msk [vmem:[%s4 + $0x78] sm:$0xff] %vm177, %v175
  // Predicated region
  $region18: #{_lambda_.34} parent=0 // pred_check
    _
  $region19: #{_lambda_.34} parent=0 // pred_check_branch
    %195 = sbr.rel (0) target = $region21
  $region20: #{_lambda_.34} parent=0 // pred_region
    _
  $region21: #{_lambda_.34} parent=0 // pred_fallthru
    _
  // Predicated region
  $region22: #{_lambda_.34} parent=0 // pred_check
    _
  $region23: #{_lambda_.34} parent=0 // pred_check_branch
    %197 = sbr.rel (0) target = $region25
  $region24: #{_lambda_.34} parent=0 // pred_region
    _
  $region25: #{_lambda_.34} parent=0 // pred_fallthru
    _

// kernel: tile.42
$region0: #{tile.42}
  #allocation0 [shape = 's32[1]{0}', space=sflag, size = 0x4, scoped, tag = 'scoped memory for tile.42']
  %s0 = inlined_call_operand.vmem [shape: f32[4], index: 0, kind: input, shape index: {}]
  %s1 = inlined_call_operand.vmem [shape: f32[16,4], index: 1, kind: output, shape index: {}]
  // Predicated region
  $region2: #{tile.42} parent=0 // pred_check
    _
  $region3: #{tile.42} parent=0 // pred_check_branch
    %3 = sbr.rel (0) target = $region5
  $region4: #{tile.42} parent=0 // pred_region
    _
  $region5: #{tile.42} parent=0 // pred_fallthru
    _
  %v4 = vld [vmem:[%s0] ss:$0 sm:$0xff]
  %5 = vst [vmem:[%s1] sm:$0xff] %v4
  %s6 = scalar_lea.vmem %s1, 8
  %7 = vst [vmem:[%s6] sm:$0xff] %v4

// kernel: tile.43
$region0: #{tile.43}
  %s0 = inlined_call_operand.vmem [shape: f32[16,4], index: 0, kind: input, shape index: {}]
  %s1 = inlined_call_operand.vmem [shape: f32[1,64], index: 1, kind: output, shape index: {}]
  $region1: #{tile.43} parent=0
    #allocation0 [shape = 'u8[4096]{0}', space=vmem, size = 0x1000, scoped, tag = 'scoped mem for output reshape']
    %v2 = vld [vmem:[%s0] sm:$0x1]
    %vm3 = vcmask 31744
    %4 = vst.msk [vmem:[#allocation0] sm:$0x1] %vm3, %v2
    %s5 = scalar_lea.vmem %s0, 15
    %v6 = vld [vmem:[%s5] sm:$0x1]
    %7 = vrot.lane.b32.xlu0 %v6, 60
    %v8 = vpop.permute.xlu0 %7
    %vm9 = vcmask 523744
    %10 = vst.msk [vmem:[#allocation0] sm:$0x1] %vm9, %v8
    %s11 = scalar_lea.vmem %s0, 14
    %v12 = vld [vmem:[%s11] sm:$0x1]
    %13 = vrot.lane.b32.xlu0 %v12, 56
    %v14 = vpop.permute.xlu0 %13
    %vm15 = vcmask 490944
    %16 = vst.msk [vmem:[#allocation0] sm:$0x1] %vm15, %v14
    %s17 = scalar_lea.vmem %s0, 13
    %v18 = vld [vmem:[%s17] sm:$0x1]
    %19 = vrot.lane.b32.xlu0 %v18, 52
    %v20 = vpop.permute.xlu0 %19
    %vm21 = vcmask 458144
    %22 = vst.msk [vmem:[#allocation0] sm:$0x1] %vm21, %v20
    %s23 = scalar_lea.vmem %s0, 12
    %v24 = vld [vmem:[%s23] sm:$0x1]
    %25 = vrot.lane.b32.xlu0 %v24, 48
    %v26 = vpop.permute.xlu0 %25
    %vm27 = vcmask 425344
    %28 = vst.msk [vmem:[#allocation0] sm:$0x1] %vm27, %v26
    %s29 = scalar_lea.vmem %s0, 11
    %v30 = vld [vmem:[%s29] sm:$0x1]
    %31 = vrot.lane.b32.xlu0 %v30, 44
    %v32 = vpop.permute.xlu0 %31
    %vm33 = vcmask 392544
    %34 = vst.msk [vmem:[#allocation0] sm:$0x1] %vm33, %v32
    %s35 = scalar_lea.vmem %s0, 10
    %v36 = vld [vmem:[%s35] sm:$0x1]
    %37 = vrot.lane.b32.xlu0 %v36, 40
    %v38 = vpop.permute.xlu0 %37
    %vm39 = vcmask 359744
    %40 = vst.msk [vmem:[#allocation0] sm:$0x1] %vm39, %v38
    %s41 = scalar_lea.vmem %s0, 9
    %v42 = vld [vmem:[%s41] sm:$0x1]
    %43 = vrot.lane.b32.xlu0 %v42, 36
    %v44 = vpop.permute.xlu0 %43
    %vm45 = vcmask 326944
    %46 = vst.msk [vmem:[#allocation0] sm:$0x1] %vm45, %v44
    %s47 = scalar_lea.vmem %s0, 8
    %v48 = vld [vmem:[%s47] sm:$0x1]
    %49 = vrot.lane.b32.xlu0 %v48, 32
    %v50 = vpop.permute.xlu0 %49
    %vm51 = vcmask 294144
    %52 = vst.msk [vmem:[#allocation0] sm:$0x1] %vm51, %v50
    %s53 = scalar_lea.vmem %s0, 7
    %v54 = vld [vmem:[%s53] sm:$0x1]
    %55 = vrot.lane.b32.xlu0 %v54, 28
    %v56 = vpop.permute.xlu0 %55
    %vm57 = vcmask 261344
    %58 = vst.msk [vmem:[#allocation0] sm:$0x1] %vm57, %v56
    %s59 = scalar_lea.vmem %s0, 6
    %v60 = vld [vmem:[%s59] sm:$0x1]
    %61 = vrot.lane.b32.xlu0 %v60, 24
    %v62 = vpop.permute.xlu0 %61
    %vm63 = vcmask 228544
    %64 = vst.msk [vmem:[#allocation0] sm:$0x1] %vm63, %v62
    %s65 = scalar_lea.vmem %s0, 5
    %v66 = vld [vmem:[%s65] sm:$0x1]
    %67 = vrot.lane.b32.xlu0 %v66, 20
    %v68 = vpop.permute.xlu0 %67
    %vm69 = vcmask 195744
    %70 = vst.msk [vmem:[#allocation0] sm:$0x1] %vm69, %v68
    %s71 = scalar_lea.vmem %s0, 4
    %v72 = vld [vmem:[%s71] sm:$0x1]
    %73 = vrot.lane.b32.xlu0 %v72, 16
    %v74 = vpop.permute.xlu0 %73
    %vm75 = vcmask 162944
    %76 = vst.msk [vmem:[#allocation0] sm:$0x1] %vm75, %v74
    %s77 = scalar_lea.vmem %s0, 3
    %v78 = vld [vmem:[%s77] sm:$0x1]
    %79 = vrot.lane.b32.xlu0 %v78, 12
    %v80 = vpop.permute.xlu0 %79
    %vm81 = vcmask 130144
    %82 = vst.msk [vmem:[#allocation0] sm:$0x1] %vm81, %v80
    %s83 = scalar_lea.vmem %s0, 2
    %v84 = vld [vmem:[%s83] sm:$0x1]
    %85 = vrot.lane.b32.xlu0 %v84, 8
    %v86 = vpop.permute.xlu0 %85
    %vm87 = vcmask 97344
    %88 = vst.msk [vmem:[#allocation0] sm:$0x1] %vm87, %v86
    %s89 = scalar_lea.vmem %s0, 1
    %v90 = vld [vmem:[%s89] sm:$0x1]
    %91 = vrot.lane.b32.xlu0 %v90, 4
    %v92 = vpop.permute.xlu0 %91
    %vm93 = vcmask 64544
    %94 = vst.msk [vmem:[#allocation0] sm:$0x1] %vm93, %v92
    %s96 = ssub.s32 2, 1
    %v97 = vld [vmem:[#allocation0] sm:%s96]
    %s99 = ssub.s32 2, 1
    %100 = vst [vmem:[%s1] sm:%s99] %v97

// kernel: _lambda_.35
$region0: #{_lambda_.35}
  #allocation0 [shape = 'u32[]', space=smem, size = 0x4, offset = 0x4, fixed_abs, tag = 'smem constant byte address 0x4 - core index']
  #allocation1 [shape = 'u32[72,128]{1,0:T(1,128)}', space=vmem, size = 0x9000, scoped, tag = 'internal scratch']
  %s0 = inlined_call_operand.vmem [shape: f32[128,2], index: 0, kind: input, shape index: {}]
  %s1 = inlined_call_operand.vmem [shape: f32[1,2], index: 1, kind: input, shape index: {}]
  %s2 = inlined_call_operand.vmem [shape: f32[1,2], index: 2, kind: input, shape index: {}]
  %s3 = inlined_call_operand.vmem [shape: bf16[2,4], index: 3, kind: input, shape index: {}]
  %s4 = inlined_call_operand.vmem [shape: f32[128,4], index: 4, kind: input, shape index: {}]
  %s5 = inlined_call_operand.vmem [shape: f32[128,4], index: 5, kind: output, shape index: {}]
  %s6 = sld [smem:[#allocation0]]
  $region30: #{_lambda_.35} parent=0
    _
  %s8 = ssub.s32 1, %s6
  %s9 = scalar_select 0, %s8, %s6
  // Predicated region
  $region2: #{_lambda_.35} parent=0 // pred_check
    _
  $region3: #{_lambda_.35} parent=0 // pred_check_branch
    %11 = sbr.rel (0) target = $region5
  $region4: #{_lambda_.35} parent=0 // pred_region
    _
  $region5: #{_lambda_.35} parent=0 // pred_fallthru
    _
  // Predicated region
  $region6: #{_lambda_.35} parent=0 // pred_check
    _
  $region7: #{_lambda_.35} parent=0 // pred_check_branch
    %13 = sbr.rel (0) target = $region9
  $region8: #{_lambda_.35} parent=0 // pred_region
    _
  $region9: #{_lambda_.35} parent=0 // pred_fallthru
    _
  // Predicated region
  $region10: #{_lambda_.35} parent=0 // pred_check
    _
  $region11: #{_lambda_.35} parent=0 // pred_check_branch
    %15 = sbr.rel (0) target = $region13
  $region12: #{_lambda_.35} parent=0 // pred_region
    _
  $region13: #{_lambda_.35} parent=0 // pred_fallthru
    _
  // Predicated region
  $region14: #{_lambda_.35} parent=0 // pred_check
    _
  $region15: #{_lambda_.35} parent=0 // pred_check_branch
    %17 = sbr.rel (0) target = $region17
  $region16: #{_lambda_.35} parent=0 // pred_region
    _
  $region17: #{_lambda_.35} parent=0 // pred_fallthru
    _
  // Predicated region
  $region18: #{_lambda_.35} parent=0 // pred_check
    _
  $region19: #{_lambda_.35} parent=0 // pred_check_branch
    %19 = sbr.rel (0) target = $region21
  $region20: #{_lambda_.35} parent=0 // pred_region
    _
  $region21: #{_lambda_.35} parent=0 // pred_fallthru
    _
  %v21 = vld [vmem:[%s0] sm:$0xff]
  %v22 = vld [vmem:[%s0 + $0x8] sm:$0xff]
  %v23 = vld [vmem:[%s0 + $0x10] sm:$0xff]
  %v24 = vld [vmem:[%s0 + $0x18] sm:$0xff]
  %v25 = vld [vmem:[%s0 + $0x20] sm:$0xff]
  %v26 = vld [vmem:[%s0 + $0x28] sm:$0xff]
  %v27 = vld [vmem:[%s0 + $0x30] sm:$0xff]
  %v28 = vld [vmem:[%s0 + $0x38] sm:$0xff]
  %v29 = vld [vmem:[%s0 + $0x40] sm:$0xff]
  %v30 = vld [vmem:[%s0 + $0x48] sm:$0xff]
  %v31 = vld [vmem:[%s0 + $0x50] sm:$0xff]
  %v32 = vld [vmem:[%s0 + $0x58] sm:$0xff]
  %v33 = vld [vmem:[%s0 + $0x60] sm:$0xff]
  %v34 = vld [vmem:[%s0 + $0x68] sm:$0xff]
  %v35 = vld [vmem:[%s0 + $0x70] sm:$0xff]
  %v36 = vld [vmem:[%s0 + $0x78] sm:$0xff]
  %v37 = vld [vmem:[%s1] sm:$0x1]
  %v39 = vperm.slane %v37, 0
  %v41 = vmul.f32 %v21, %v39
  %v42 = vmul.f32 %v22, %v39
  %v43 = vmul.f32 %v23, %v39
  %v44 = vmul.f32 %v24, %v39
  %v45 = vmul.f32 %v25, %v39
  %v46 = vmul.f32 %v26, %v39
  %v47 = vmul.f32 %v27, %v39
  %v48 = vmul.f32 %v28, %v39
  %v49 = vmul.f32 %v29, %v39
  %v50 = vmul.f32 %v30, %v39
  %v51 = vmul.f32 %v31, %v39
  %v52 = vmul.f32 %v32, %v39
  %v53 = vmul.f32 %v33, %v39
  %v54 = vmul.f32 %v34, %v39
  %v55 = vmul.f32 %v35, %v39
  %v56 = vmul.f32 %v36, %v39
  %v57 = vld [vmem:[%s2] sm:$0x1]
  %v59 = vperm.slane %v57, 0
  %v61 = vadd.f32 %v41, %v59
  %v62 = vadd.f32 %v42, %v59
  %v63 = vadd.f32 %v43, %v59
  %v64 = vadd.f32 %v44, %v59
  %v65 = vadd.f32 %v45, %v59
  %v66 = vadd.f32 %v46, %v59
  %v67 = vadd.f32 %v47, %v59
  %v68 = vadd.f32 %v48, %v59
  %v69 = vadd.f32 %v49, %v59
  %v70 = vadd.f32 %v50, %v59
  %v71 = vadd.f32 %v51, %v59
  %v72 = vadd.f32 %v52, %v59
  %v73 = vadd.f32 %v53, %v59
  %v74 = vadd.f32 %v54, %v59
  %v75 = vadd.f32 %v55, %v59
  %v76 = vadd.f32 %v56, %v59
  %v77 = vmax.f32 %v61, 0.0
  %v78 = vmax.f32 %v62, 0.0
  %v79 = vmax.f32 %v63, 0.0
  %v80 = vmax.f32 %v64, 0.0
  %v81 = vmax.f32 %v65, 0.0
  %v82 = vmax.f32 %v66, 0.0
  %v83 = vmax.f32 %v67, 0.0
  %v84 = vmax.f32 %v68, 0.0
  %v85 = vmax.f32 %v69, 0.0
  %v86 = vmax.f32 %v70, 0.0
  %v87 = vmax.f32 %v71, 0.0
  %v88 = vmax.f32 %v72, 0.0
  %v89 = vmax.f32 %v73, 0.0
  %v90 = vmax.f32 %v74, 0.0
  %v91 = vmax.f32 %v75, 0.0
  %v92 = vmax.f32 %v76, 0.0
  %v93 = vld [vmem:[%s4] sm:$0xff]
  %v94 = vld [vmem:[%s4 + $0x8] sm:$0xff]
  %v95 = vld [vmem:[%s4 + $0x10] sm:$0xff]
  %v96 = vld [vmem:[%s4 + $0x18] sm:$0xff]
  %v97 = vld [vmem:[%s4 + $0x20] sm:$0xff]
  %v98 = vld [vmem:[%s4 + $0x28] sm:$0xff]
  %v99 = vld [vmem:[%s4 + $0x30] sm:$0xff]
  %v100 = vld [vmem:[%s4 + $0x38] sm:$0xff]
  %v101 = vld [vmem:[%s4 + $0x40] sm:$0xff]
  %v102 = vld [vmem:[%s4 + $0x48] sm:$0xff]
  %v103 = vld [vmem:[%s4 + $0x50] sm:$0xff]
  %v104 = vld [vmem:[%s4 + $0x58] sm:$0xff]
  %v105 = vld [vmem:[%s4 + $0x60] sm:$0xff]
  %v106 = vld [vmem:[%s4 + $0x68] sm:$0xff]
  %v107 = vld [vmem:[%s4 + $0x70] sm:$0xff]
  %v108 = vld [vmem:[%s4 + $0x78] sm:$0xff]
  %v109 = vpack.c.bf16 %v78, %v77
  %v110 = vpack.c.bf16 %v80, %v79
  %v111 = vpack.c.bf16 %v82, %v81
  %v112 = vpack.c.bf16 %v84, %v83
  %v113 = vpack.c.bf16 %v86, %v85
  %v114 = vpack.c.bf16 %v88, %v87
  %v115 = vpack.c.bf16 %v90, %v89
  %v116 = vpack.c.bf16 %v92, %v91
  %v117 = vld [vmem:[%s3] sm:$0x1]
  %vm118 = vcmask 15360
  %v120 = vsel %vm118, %v109, 0
  %v123 = vsel %vm118, %v110, 0
  %v126 = vsel %vm118, %v111, 0
  %v129 = vsel %vm118, %v112, 0
  %v132 = vsel %vm118, %v113, 0
  %v135 = vsel %vm118, %v114, 0
  %v138 = vsel %vm118, %v115, 0
  %v141 = vsel %vm118, %v116, 0
  %vm143 = vcmask 1040384
  %v145 = vsel %vm143, %v117, 0
  %147 = vmatpush.bf16.msra.mxu0 0
  %148 = vmatpush.bf16.msra.mxu0 0
  %149 = vmatpush.bf16.msra.mxu0 0
  %150 = vmatpush.bf16.msra.mxu0 0
  %151 = vmatpush.bf16.msra.mxu0 0
  %152 = vmatpush.bf16.msra.mxu0 0
  %153 = vmatpush.bf16.msra.mxu0 0
  %154 = vmatpush.bf16.msra.mxu0 %v145
  %155 = vmatmul.bf16.gmra.mxu0 %v120
  %v156 = vpop.f32.mrf.mxu0
  %v157 = vadd.f32 0.0, %v156
  %v158 = vpop.f32.mrf.mxu0
  %v159 = vadd.f32 0.0, %v158
  %160 = vmatmul.bf16.gmra.mxu0 %v123
  %v161 = vpop.f32.mrf.mxu0
  %v162 = vadd.f32 0.0, %v161
  %v163 = vpop.f32.mrf.mxu0
  %v164 = vadd.f32 0.0, %v163
  %165 = vmatmul.bf16.gmra.mxu0 %v126
  %v166 = vpop.f32.mrf.mxu0
  %v167 = vadd.f32 0.0, %v166
  %v168 = vpop.f32.mrf.mxu0
  %v169 = vadd.f32 0.0, %v168
  %170 = vmatmul.bf16.gmra.mxu0 %v129
  %v171 = vpop.f32.mrf.mxu0
  %v172 = vadd.f32 0.0, %v171
  %v173 = vpop.f32.mrf.mxu0
  %v174 = vadd.f32 0.0, %v173
  %175 = vmatmul.bf16.gmra.mxu0 %v132
  %v176 = vpop.f32.mrf.mxu0
  %v177 = vadd.f32 0.0, %v176
  %v178 = vpop.f32.mrf.mxu0
  %v179 = vadd.f32 0.0, %v178
  %180 = vmatmul.bf16.gmra.mxu0 %v135
  %v181 = vpop.f32.mrf.mxu0
  %v182 = vadd.f32 0.0, %v181
  %v183 = vpop.f32.mrf.mxu0
  %v184 = vadd.f32 0.0, %v183
  %185 = vmatmul.bf16.gmra.mxu0 %v138
  %v186 = vpop.f32.mrf.mxu0
  %v187 = vadd.f32 0.0, %v186
  %v188 = vpop.f32.mrf.mxu0
  %v189 = vadd.f32 0.0, %v188
  %190 = vmatmul.bf16.gmra.mxu0 %v141
  %v191 = vpop.f32.mrf.mxu0
  %v192 = vadd.f32 0.0, %v191
  %v193 = vpop.f32.mrf.mxu0
  %v194 = vadd.f32 0.0, %v193
  %195 = vdwg.mxu0
  %v196 = vadd.f32 %v93, %v157
  %v197 = vadd.f32 %v94, %v159
  %v198 = vadd.f32 %v95, %v162
  %v199 = vadd.f32 %v96, %v164
  %v200 = vadd.f32 %v97, %v167
  %v201 = vadd.f32 %v98, %v169
  %v202 = vadd.f32 %v99, %v172
  %v203 = vadd.f32 %v100, %v174
  %v204 = vadd.f32 %v101, %v177
  %v205 = vadd.f32 %v102, %v179
  %v206 = vadd.f32 %v103, %v182
  %v207 = vadd.f32 %v104, %v184
  %v208 = vadd.f32 %v105, %v187
  %v209 = vadd.f32 %v106, %v189
  %v210 = vadd.f32 %v107, %v192
  %v211 = vadd.f32 %v108, %v194
  %vm212 = vcmask 31744
  %213 = vst.msk [vmem:[%s5] sm:$0xff] %vm212, %v196
  %214 = vst.msk [vmem:[%s5 + $0x8] sm:$0xff] %vm212, %v197
  %215 = vst.msk [vmem:[%s5 + $0x10] sm:$0xff] %vm212, %v198
  %216 = vst.msk [vmem:[%s5 + $0x18] sm:$0xff] %vm212, %v199
  %217 = vst.msk [vmem:[%s5 + $0x20] sm:$0xff] %vm212, %v200
  %218 = vst.msk [vmem:[%s5 + $0x28] sm:$0xff] %vm212, %v201
  %219 = vst.msk [vmem:[%s5 + $0x30] sm:$0xff] %vm212, %v202
  %220 = vst.msk [vmem:[%s5 + $0x38] sm:$0xff] %vm212, %v203
  %221 = vst.msk [vmem:[%s5 + $0x40] sm:$0xff] %vm212, %v204
  %222 = vst.msk [vmem:[%s5 + $0x48] sm:$0xff] %vm212, %v205
  %223 = vst.msk [vmem:[%s5 + $0x50] sm:$0xff] %vm212, %v206
  %224 = vst.msk [vmem:[%s5 + $0x58] sm:$0xff] %vm212, %v207
  %225 = vst.msk [vmem:[%s5 + $0x60] sm:$0xff] %vm212, %v208
  %226 = vst.msk [vmem:[%s5 + $0x68] sm:$0xff] %vm212, %v209
  %227 = vst.msk [vmem:[%s5 + $0x70] sm:$0xff] %vm212, %v210
  %228 = vst.msk [vmem:[%s5 + $0x78] sm:$0xff] %vm212, %v211
  // Predicated region
  $region22: #{_lambda_.35} parent=0 // pred_check
    _
  $region23: #{_lambda_.35} parent=0 // pred_check_branch
    %230 = sbr.rel (0) target = $region25
  $region24: #{_lambda_.35} parent=0 // pred_region
    _
  $region25: #{_lambda_.35} parent=0 // pred_fallthru
    _
  // Predicated region
  $region26: #{_lambda_.35} parent=0 // pred_check
    _
  $region27: #{_lambda_.35} parent=0 // pred_check_branch
    %232 = sbr.rel (0) target = $region29
  $region28: #{_lambda_.35} parent=0 // pred_region
    _
  $region29: #{_lambda_.35} parent=0 // pred_fallthru
    _

// kernel: _lambda_.36
$region0: #{_lambda_.36}
  #allocation0 [shape = 'u32[]', space=smem, size = 0x4, offset = 0x4, fixed_abs, tag = 'smem constant byte address 0x4 - core index']
  #allocation1 [shape = 'u32[72,128]{1,0:T(1,128)}', space=vmem, size = 0x9000, scoped, tag = 'internal scratch']
  %s0 = inlined_call_operand.vmem [shape: f32[8,64], index: 0, kind: input, shape index: {}]
  %s1 = inlined_call_operand.vmem [shape: f32[1,64], index: 1, kind: input, shape index: {}]
  %s2 = inlined_call_operand.vmem [shape: f32[1,64], index: 2, kind: input, shape index: {}]
  %s3 = inlined_call_operand.vmem [shape: f32[8,64], index: 3, kind: output, shape index: {}]
  %s4 = sld [smem:[#allocation0]]
  $region22: #{_lambda_.36} parent=0
    _
  %s6 = ssub.s32 1, %s4
  %s7 = scalar_select 0, %s6, %s4
  // Predicated region
  $region2: #{_lambda_.36} parent=0 // pred_check
    _
  $region3: #{_lambda_.36} parent=0 // pred_check_branch
    %9 = sbr.rel (0) target = $region5
  $region4: #{_lambda_.36} parent=0 // pred_region
    _
  $region5: #{_lambda_.36} parent=0 // pred_fallthru
    _
  // Predicated region
  $region6: #{_lambda_.36} parent=0 // pred_check
    _
  $region7: #{_lambda_.36} parent=0 // pred_check_branch
    %11 = sbr.rel (0) target = $region9
  $region8: #{_lambda_.36} parent=0 // pred_region
    _
  $region9: #{_lambda_.36} parent=0 // pred_fallthru
    _
  // Predicated region
  $region10: #{_lambda_.36} parent=0 // pred_check
    _
  $region11: #{_lambda_.36} parent=0 // pred_check_branch
    %13 = sbr.rel (0) target = $region13
  $region12: #{_lambda_.36} parent=0 // pred_region
    _
  $region13: #{_lambda_.36} parent=0 // pred_fallthru
    _
  %v14 = vld [vmem:[%s0] sm:$0xff]
  %v15 = vld [vmem:[%s1] sm:$0x1]
  %v17 = vperm.slane %v15, 0
  %v19 = vmul.f32 %v14, %v17
  %v20 = vld [vmem:[%s2] sm:$0x1]
  %v22 = vperm.slane %v20, 0
  %v24 = vadd.f32 %v19, %v22
  %v25 = vmax.f32 %v24, 0.0
  %vm26 = vcmask 523264
  %27 = vst.msk [vmem:[%s3] sm:$0xff] %vm26, %v25
  // Predicated region
  $region14: #{_lambda_.36} parent=0 // pred_check
    _
  $region15: #{_lambda_.36} parent=0 // pred_check_branch
    %29 = sbr.rel (0) target = $region17
  $region16: #{_lambda_.36} parent=0 // pred_region
    _
  $region17: #{_lambda_.36} parent=0 // pred_fallthru
    _
  // Predicated region
  $region18: #{_lambda_.36} parent=0 // pred_check
    _
  $region19: #{_lambda_.36} parent=0 // pred_check_branch
    %31 = sbr.rel (0) target = $region21
  $region20: #{_lambda_.36} parent=0 // pred_region
    _
  $region21: #{_lambda_.36} parent=0 // pred_fallthru
    _

// kernel: _lambda_.37
$region0: #{_lambda_.37}
  #allocation0 [shape = 'u32[]', space=smem, size = 0x4, offset = 0x4, fixed_abs, tag = 'smem constant byte address 0x4 - core index']
  #allocation1 [shape = 'u32[72,128]{1,0:T(1,128)}', space=vmem, size = 0x9000, scoped, tag = 'internal scratch']
  %s0 = inlined_call_operand.vmem [shape: bf16[2,64,54], index: 0, kind: input, shape index: {}]
  %s1 = inlined_call_operand.vmem [shape: bf16[2,54,4], index: 1, kind: input, shape index: {}]
  %s2 = inlined_call_operand.vmem [shape: f32[64,8], index: 2, kind: output, shape index: {}]
  %s3 = sld [smem:[#allocation0]]
  $region18: #{_lambda_.37} parent=0
    _
  %s5 = ssub.s32 1, %s3
  %s6 = scalar_select 0, %s5, %s3
  // Predicated region
  $region2: #{_lambda_.37} parent=0 // pred_check
    _
  $region3: #{_lambda_.37} parent=0 // pred_check_branch
    %8 = sbr.rel (0) target = $region5
  $region4: #{_lambda_.37} parent=0 // pred_region
    _
  $region5: #{_lambda_.37} parent=0 // pred_fallthru
    _
  // Predicated region
  $region6: #{_lambda_.37} parent=0 // pred_check
    _
  $region7: #{_lambda_.37} parent=0 // pred_check_branch
    %10 = sbr.rel (0) target = $region9
  $region8: #{_lambda_.37} parent=0 // pred_region
    _
  $region9: #{_lambda_.37} parent=0 // pred_fallthru
    _
  %v12 = vld [vmem:[%s0] sm:$0xf]
  %v13 = vld [vmem:[%s0 + $0x4] sm:$0xf]
  %v14 = vld [vmem:[%s0 + $0x8] sm:$0xf]
  %v15 = vld [vmem:[%s0 + $0xc] sm:$0xf]
  %v16 = vld [vmem:[%s0 + $0x10] sm:$0xf]
  %v17 = vld [vmem:[%s0 + $0x14] sm:$0xf]
  %v18 = vld [vmem:[%s0 + $0x18] sm:$0xf]
  %v19 = vld [vmem:[%s0 + $0x1c] sm:$0xf]
  %v20 = vld [vmem:[%s1] sm:$0xf]
  %v21 = vld [vmem:[%s1 + $0x4] sm:$0xf]
  %v22 = vld [vmem:[%s1 + $0x8] sm:$0xf]
  %v23 = vld [vmem:[%s1 + $0xc] sm:$0xf]
  %v24 = vld [vmem:[%s1 + $0x10] sm:$0xf]
  %v25 = vld [vmem:[%s1 + $0x14] sm:$0xf]
  %v26 = vld [vmem:[%s1 + $0x18] sm:$0x7]
  %v35 = vunpack.c.l.b16 %v12
  %v36 = vunpack.c.l.b16 %v13
  %v37 = vunpack.c.l.b16 %v14
  %v38 = vunpack.c.l.b16 %v15
  %v39 = vunpack.c.l.b16 %v16
  %v40 = vunpack.c.l.b16 %v17
  %v41 = vunpack.c.l.b16 %v18
  %v42 = vunpack.c.l.b16 %v19
  %v43 = vpack.c.b16 %v36, %v35
  %v44 = vpack.c.b16 %v38, %v37
  %v45 = vpack.c.b16 %v40, %v39
  %v46 = vpack.c.b16 %v42, %v41
  %v54 = vunpack.c.l.b16 %v20
  %v55 = vunpack.c.l.b16 %v21
  %v56 = vunpack.c.l.b16 %v22
  %v57 = vunpack.c.l.b16 %v23
  %v58 = vunpack.c.l.b16 %v24
  %v59 = vunpack.c.l.b16 %v25
  %v60 = vunpack.c.l.b16 %v26
  %v61 = vpack.c.b16 %v55, %v54
  %v62 = vpack.c.b16 %v57, %v56
  %v63 = vpack.c.b16 %v59, %v58
  %v64 = vpack.c.b16 %v60, %v60
  %vm68 = vcmask 441344
  %v70 = vsel %vm68, %v43, 0
  %v73 = vsel %vm68, %v44, 0
  %v76 = vsel %vm68, %v45, 0
  %v79 = vsel %vm68, %v46, 0
  %vm81 = vcmask 1042432
  %v83 = vsel %vm81, %v64, 0
  %85 = vmatpush.bf16.msra.mxu0 0
  %86 = vmatpush.bf16.msra.mxu0 0
  %87 = vmatpush.bf16.msra.mxu0 0
  %88 = vmatpush.bf16.msra.mxu0 0
  %89 = vmatpush.bf16.msra.mxu0 %v83
  %90 = vmatpush.bf16.msra.mxu0 %v63
  %91 = vmatpush.bf16.msra.mxu0 %v62
  %92 = vmatpush.bf16.msra.mxu0 %v61
  %93 = vmatmul.bf16.gmra.mxu0 %v70
  %v94 = vpop.f32.mrf.mxu0
  %v95 = vadd.f32 0.0, %v94
  %v96 = vpop.f32.mrf.mxu0
  %v97 = vadd.f32 0.0, %v96
  %98 = vmatmul.bf16.gmra.mxu0 %v73
  %v99 = vpop.f32.mrf.mxu0
  %v100 = vadd.f32 0.0, %v99
  %v101 = vpop.f32.mrf.mxu0
  %v102 = vadd.f32 0.0, %v101
  %103 = vmatmul.bf16.gmra.mxu0 %v76
  %v104 = vpop.f32.mrf.mxu0
  %v105 = vadd.f32 0.0, %v104
  %v106 = vpop.f32.mrf.mxu0
  %v107 = vadd.f32 0.0, %v106
  %108 = vmatmul.bf16.gmra.mxu0 %v79
  %v109 = vpop.f32.mrf.mxu0
  %v110 = vadd.f32 0.0, %v109
  %v111 = vpop.f32.mrf.mxu0
  %v112 = vadd.f32 0.0, %v111
  %113 = vdwg.mxu0
  %s114 = scalar_lea.vmem %s0, 32
  %v115 = vld [vmem:[%s114] sm:$0xf]
  %v116 = vld [vmem:[%s114 + $0x4] sm:$0xf]
  %v117 = vld [vmem:[%s114 + $0x8] sm:$0xf]
  %v118 = vld [vmem:[%s114 + $0xc] sm:$0xf]
  %v119 = vld [vmem:[%s114 + $0x10] sm:$0xf]
  %v120 = vld [vmem:[%s114 + $0x14] sm:$0xf]
  %v121 = vld [vmem:[%s114 + $0x18] sm:$0xf]
  %v122 = vld [vmem:[%s114 + $0x1c] sm:$0xf]
  %s123 = scalar_lea.vmem %s1, 28
  %v124 = vld [vmem:[%s123] sm:$0xf]
  %v125 = vld [vmem:[%s123 + $0x4] sm:$0xf]
  %v126 = vld [vmem:[%s123 + $0x8] sm:$0xf]
  %v127 = vld [vmem:[%s123 + $0xc] sm:$0xf]
  %v128 = vld [vmem:[%s123 + $0x10] sm:$0xf]
  %v129 = vld [vmem:[%s123 + $0x14] sm:$0xf]
  %v130 = vld [vmem:[%s123 + $0x18] sm:$0x7]
  %v139 = vunpack.c.l.b16 %v115
  %v140 = vunpack.c.l.b16 %v116
  %v141 = vunpack.c.l.b16 %v117
  %v142 = vunpack.c.l.b16 %v118
  %v143 = vunpack.c.l.b16 %v119
  %v144 = vunpack.c.l.b16 %v120
  %v145 = vunpack.c.l.b16 %v121
  %v146 = vunpack.c.l.b16 %v122
  %v147 = vpack.c.b16 %v140, %v139
  %v148 = vpack.c.b16 %v142, %v141
  %v149 = vpack.c.b16 %v144, %v143
  %v150 = vpack.c.b16 %v146, %v145
  %v158 = vunpack.c.l.b16 %v124
  %v159 = vunpack.c.l.b16 %v125
  %v160 = vunpack.c.l.b16 %v126
  %v161 = vunpack.c.l.b16 %v127
  %v162 = vunpack.c.l.b16 %v128
  %v163 = vunpack.c.l.b16 %v129
  %v164 = vunpack.c.l.b16 %v130
  %v165 = vpack.c.b16 %v159, %v158
  %v166 = vpack.c.b16 %v161, %v160
  %v167 = vpack.c.b16 %v163, %v162
  %v168 = vpack.c.b16 %v164, %v164
  %v173 = vsel %vm68, %v147, 0
  %v176 = vsel %vm68, %v148, 0
  %v179 = vsel %vm68, %v149, 0
  %v182 = vsel %vm68, %v150, 0
  %v185 = vsel %vm81, %v168, 0
  %187 = vmatpush.bf16.msra.mxu0 0
  %188 = vmatpush.bf16.msra.mxu0 0
  %189 = vmatpush.bf16.msra.mxu0 0
  %190 = vmatpush.bf16.msra.mxu0 0
  %191 = vmatpush.bf16.msra.mxu0 %v185
  %192 = vmatpush.bf16.msra.mxu0 %v167
  %193 = vmatpush.bf16.msra.mxu0 %v166
  %194 = vmatpush.bf16.msra.mxu0 %v165
  %195 = vmatmul.bf16.gmra.mxu0 %v173
  %v196 = vpop.f32.mrf.mxu0
  %v197 = vadd.f32 0.0, %v196
  %v198 = vpop.f32.mrf.mxu0
  %v199 = vadd.f32 0.0, %v198
  %200 = vmatmul.bf16.gmra.mxu0 %v176
  %v201 = vpop.f32.mrf.mxu0
  %v202 = vadd.f32 0.0, %v201
  %v203 = vpop.f32.mrf.mxu0
  %v204 = vadd.f32 0.0, %v203
  %205 = vmatmul.bf16.gmra.mxu0 %v179
  %v206 = vpop.f32.mrf.mxu0
  %v207 = vadd.f32 0.0, %v206
  %v208 = vpop.f32.mrf.mxu0
  %v209 = vadd.f32 0.0, %v208
  %210 = vmatmul.bf16.gmra.mxu0 %v182
  %v211 = vpop.f32.mrf.mxu0
  %v212 = vadd.f32 0.0, %v211
  %v213 = vpop.f32.mrf.mxu0
  %v214 = vadd.f32 0.0, %v213
  %215 = vdwg.mxu0
  %224 = vrot.lane.b32.xlu0 %v197, 4
  %v225 = vpop.permute.xlu0 %224
  %226 = vrot.lane.b32.xlu0 %v199, 4
  %v227 = vpop.permute.xlu0 %226
  %228 = vrot.lane.b32.xlu0 %v202, 4
  %v229 = vpop.permute.xlu0 %228
  %230 = vrot.lane.b32.xlu0 %v204, 4
  %v231 = vpop.permute.xlu0 %230
  %232 = vrot.lane.b32.xlu0 %v207, 4
  %v233 = vpop.permute.xlu0 %232
  %234 = vrot.lane.b32.xlu0 %v209, 4
  %v235 = vpop.permute.xlu0 %234
  %236 = vrot.lane.b32.xlu0 %v212, 4
  %v237 = vpop.permute.xlu0 %236
  %238 = vrot.lane.b32.xlu0 %v214, 4
  %v239 = vpop.permute.xlu0 %238
  %vm248 = vcmask 31744
  %v249 = vsel %vm248, %v95, %v225
  %v250 = vsel %vm248, %v97, %v227
  %v251 = vsel %vm248, %v100, %v229
  %v252 = vsel %vm248, %v102, %v231
  %v253 = vsel %vm248, %v105, %v233
  %v254 = vsel %vm248, %v107, %v235
  %v255 = vsel %vm248, %v110, %v237
  %v256 = vsel %vm248, %v112, %v239
  %vm257 = vcmask 64512
  %258 = vst.msk [vmem:[%s2] sm:$0xff] %vm257, %v249
  %259 = vst.msk [vmem:[%s2 + $0x8] sm:$0xff] %vm257, %v250
  %260 = vst.msk [vmem:[%s2 + $0x10] sm:$0xff] %vm257, %v251
  %261 = vst.msk [vmem:[%s2 + $0x18] sm:$0xff] %vm257, %v252
  %262 = vst.msk [vmem:[%s2 + $0x20] sm:$0xff] %vm257, %v253
  %263 = vst.msk [vmem:[%s2 + $0x28] sm:$0xff] %vm257, %v254
  %264 = vst.msk [vmem:[%s2 + $0x30] sm:$0xff] %vm257, %v255
  %265 = vst.msk [vmem:[%s2 + $0x38] sm:$0xff] %vm257, %v256
  // Predicated region
  $region10: #{_lambda_.37} parent=0 // pred_check
    _
  $region11: #{_lambda_.37} parent=0 // pred_check_branch
    %267 = sbr.rel (0) target = $region13
  $region12: #{_lambda_.37} parent=0 // pred_region
    _
  $region13: #{_lambda_.37} parent=0 // pred_fallthru
    _
  // Predicated region
  $region14: #{_lambda_.37} parent=0 // pred_check
    _
  $region15: #{_lambda_.37} parent=0 // pred_check_branch
    %269 = sbr.rel (0) target = $region17
  $region16: #{_lambda_.37} parent=0 // pred_region
    _
  $region17: #{_lambda_.37} parent=0 // pred_fallthru
    _

// kernel: _lambda_.38
$region0: #{_lambda_.38}
  #allocation0 [shape = 'u32[]', space=smem, size = 0x4, offset = 0x4, fixed_abs, tag = 'smem constant byte address 0x4 - core index']
  #allocation1 [shape = 'u32[72,128]{1,0:T(1,128)}', space=vmem, size = 0x9000, scoped, tag = 'internal scratch']
  %s0 = inlined_call_operand.vmem [shape: f32[64,8], index: 0, kind: input, shape index: {}]
  %s1 = inlined_call_operand.vmem [shape: f32[1,8], index: 1, kind: input, shape index: {}]
  %s2 = inlined_call_operand.vmem [shape: f32[1,8], index: 2, kind: input, shape index: {}]
  %s3 = inlined_call_operand.vmem [shape: bf16[8,8], index: 3, kind: input, shape index: {}]
  %s4 = inlined_call_operand.vmem [shape: f32[64,8], index: 4, kind: output, shape index: {}]
  %s5 = sld [smem:[#allocation0]]
  $region26: #{_lambda_.38} parent=0
    _
  %s7 = ssub.s32 1, %s5
  %s8 = scalar_select 0, %s7, %s5
  // Predicated region
  $region2: #{_lambda_.38} parent=0 // pred_check
    _
  $region3: #{_lambda_.38} parent=0 // pred_check_branch
    %10 = sbr.rel (0) target = $region5
  $region4: #{_lambda_.38} parent=0 // pred_region
    _
  $region5: #{_lambda_.38} parent=0 // pred_fallthru
    _
  // Predicated region
  $region6: #{_lambda_.38} parent=0 // pred_check
    _
  $region7: #{_lambda_.38} parent=0 // pred_check_branch
    %12 = sbr.rel (0) target = $region9
  $region8: #{_lambda_.38} parent=0 // pred_region
    _
  $region9: #{_lambda_.38} parent=0 // pred_fallthru
    _
  // Predicated region
  $region10: #{_lambda_.38} parent=0 // pred_check
    _
  $region11: #{_lambda_.38} parent=0 // pred_check_branch
    %14 = sbr.rel (0) target = $region13
  $region12: #{_lambda_.38} parent=0 // pred_region
    _
  $region13: #{_lambda_.38} parent=0 // pred_fallthru
    _
  // Predicated region
  $region14: #{_lambda_.38} parent=0 // pred_check
    _
  $region15: #{_lambda_.38} parent=0 // pred_check_branch
    %16 = sbr.rel (0) target = $region17
  $region16: #{_lambda_.38} parent=0 // pred_region
    _
  $region17: #{_lambda_.38} parent=0 // pred_fallthru
    _
  %v18 = vld [vmem:[%s0] sm:$0xff]
  %v19 = vld [vmem:[%s0 + $0x8] sm:$0xff]
  %v20 = vld [vmem:[%s0 + $0x10] sm:$0xff]
  %v21 = vld [vmem:[%s0 + $0x18] sm:$0xff]
  %v22 = vld [vmem:[%s0 + $0x20] sm:$0xff]
  %v23 = vld [vmem:[%s0 + $0x28] sm:$0xff]
  %v24 = vld [vmem:[%s0 + $0x30] sm:$0xff]
  %v25 = vld [vmem:[%s0 + $0x38] sm:$0xff]
  %v26 = vld [vmem:[%s1] sm:$0x1]
  %v28 = vperm.slane %v26, 0
  %v30 = vmul.f32 %v18, %v28
  %v31 = vmul.f32 %v19, %v28
  %v32 = vmul.f32 %v20, %v28
  %v33 = vmul.f32 %v21, %v28
  %v34 = vmul.f32 %v22, %v28
  %v35 = vmul.f32 %v23, %v28
  %v36 = vmul.f32 %v24, %v28
  %v37 = vmul.f32 %v25, %v28
  %v38 = vld [vmem:[%s2] sm:$0x1]
  %v40 = vperm.slane %v38, 0
  %v42 = vadd.f32 %v30, %v40
  %v43 = vadd.f32 %v31, %v40
  %v44 = vadd.f32 %v32, %v40
  %v45 = vadd.f32 %v33, %v40
  %v46 = vadd.f32 %v34, %v40
  %v47 = vadd.f32 %v35, %v40
  %v48 = vadd.f32 %v36, %v40
  %v49 = vadd.f32 %v37, %v40
  %v50 = vmax.f32 %v42, 0.0
  %v51 = vmax.f32 %v43, 0.0
  %v52 = vmax.f32 %v44, 0.0
  %v53 = vmax.f32 %v45, 0.0
  %v54 = vmax.f32 %v46, 0.0
  %v55 = vmax.f32 %v47, 0.0
  %v56 = vmax.f32 %v48, 0.0
  %v57 = vmax.f32 %v49, 0.0
  %v58 = vpack.c.bf16 %v51, %v50
  %v59 = vpack.c.bf16 %v53, %v52
  %v60 = vpack.c.bf16 %v55, %v54
  %v61 = vpack.c.bf16 %v57, %v56
  %v62 = vld [vmem:[%s3] sm:$0xf]
  %vm63 = vcmask 64512
  %v65 = vsel %vm63, %v58, 0
  %v68 = vsel %vm63, %v59, 0
  %v71 = vsel %vm63, %v60, 0
  %v74 = vsel %vm63, %v61, 0
  %vm76 = vcmask 1043456
  %v78 = vsel %vm76, %v62, 0
  %80 = vmatpush.bf16.msra.mxu0 0
  %81 = vmatpush.bf16.msra.mxu0 0
  %82 = vmatpush.bf16.msra.mxu0 0
  %83 = vmatpush.bf16.msra.mxu0 0
  %84 = vmatpush.bf16.msra.mxu0 0
  %85 = vmatpush.bf16.msra.mxu0 0
  %86 = vmatpush.bf16.msra.mxu0 0
  %87 = vmatpush.bf16.msra.mxu0 %v78
  %88 = vmatmul.bf16.gmra.mxu0 %v65
  %v89 = vpop.f32.mrf.mxu0
  %v90 = vadd.f32 0.0, %v89
  %v91 = vpop.f32.mrf.mxu0
  %v92 = vadd.f32 0.0, %v91
  %93 = vmatmul.bf16.gmra.mxu0 %v68
  %v94 = vpop.f32.mrf.mxu0
  %v95 = vadd.f32 0.0, %v94
  %v96 = vpop.f32.mrf.mxu0
  %v97 = vadd.f32 0.0, %v96
  %98 = vmatmul.bf16.gmra.mxu0 %v71
  %v99 = vpop.f32.mrf.mxu0
  %v100 = vadd.f32 0.0, %v99
  %v101 = vpop.f32.mrf.mxu0
  %v102 = vadd.f32 0.0, %v101
  %103 = vmatmul.bf16.gmra.mxu0 %v74
  %v104 = vpop.f32.mrf.mxu0
  %v105 = vadd.f32 0.0, %v104
  %v106 = vpop.f32.mrf.mxu0
  %v107 = vadd.f32 0.0, %v106
  %108 = vdwg.mxu0
  %109 = vst.msk [vmem:[%s4] sm:$0xff] %vm63, %v90
  %110 = vst.msk [vmem:[%s4 + $0x8] sm:$0xff] %vm63, %v92
  %111 = vst.msk [vmem:[%s4 + $0x10] sm:$0xff] %vm63, %v95
  %112 = vst.msk [vmem:[%s4 + $0x18] sm:$0xff] %vm63, %v97
  %113 = vst.msk [vmem:[%s4 + $0x20] sm:$0xff] %vm63, %v100
  %114 = vst.msk [vmem:[%s4 + $0x28] sm:$0xff] %vm63, %v102
  %115 = vst.msk [vmem:[%s4 + $0x30] sm:$0xff] %vm63, %v105
  %116 = vst.msk [vmem:[%s4 + $0x38] sm:$0xff] %vm63, %v107
  // Predicated region
  $region18: #{_lambda_.38} parent=0 // pred_check
    _
  $region19: #{_lambda_.38} parent=0 // pred_check_branch
    %118 = sbr.rel (0) target = $region21
  $region20: #{_lambda_.38} parent=0 // pred_region
    _
  $region21: #{_lambda_.38} parent=0 // pred_fallthru
    _
  // Predicated region
  $region22: #{_lambda_.38} parent=0 // pred_check
    _
  $region23: #{_lambda_.38} parent=0 // pred_check_branch
    %120 = sbr.rel (0) target = $region25
  $region24: #{_lambda_.38} parent=0 // pred_region
    _
  $region25: #{_lambda_.38} parent=0 // pred_fallthru
    _

// kernel: _lambda_.39
$region0: #{_lambda_.39}
  #allocation0 [shape = 'u32[]', space=smem, size = 0x4, offset = 0x4, fixed_abs, tag = 'smem constant byte address 0x4 - core index']
  #allocation1 [shape = 'u32[72,128]{1,0:T(1,128)}', space=vmem, size = 0x9000, scoped, tag = 'internal scratch']
  %s0 = inlined_call_operand.vmem [shape: f32[64,4], index: 0, kind: input, shape index: {}]
  %s1 = inlined_call_operand.vmem [shape: f32[1,4], index: 1, kind: input, shape index: {}]
  %s2 = inlined_call_operand.vmem [shape: f32[1,4], index: 2, kind: input, shape index: {}]
  %s3 = inlined_call_operand.vmem [shape: bf16[4,8], index: 3, kind: input, shape index: {}]
  %s4 = inlined_call_operand.vmem [shape: f32[64,8], index: 4, kind: input, shape index: {}]
  %s5 = inlined_call_operand.vmem [shape: f32[64,8], index: 5, kind: output, shape index: {}]
  %s6 = sld [smem:[#allocation0]]
  $region30: #{_lambda_.39} parent=0
    _
  %s8 = ssub.s32 1, %s6
  %s9 = scalar_select 0, %s8, %s6
  // Predicated region
  $region2: #{_lambda_.39} parent=0 // pred_check
    _
  $region3: #{_lambda_.39} parent=0 // pred_check_branch
    %11 = sbr.rel (0) target = $region5
  $region4: #{_lambda_.39} parent=0 // pred_region
    _
  $region5: #{_lambda_.39} parent=0 // pred_fallthru
    _
  // Predicated region
  $region6: #{_lambda_.39} parent=0 // pred_check
    _
  $region7: #{_lambda_.39} parent=0 // pred_check_branch
    %13 = sbr.rel (0) target = $region9
  $region8: #{_lambda_.39} parent=0 // pred_region
    _
  $region9: #{_lambda_.39} parent=0 // pred_fallthru
    _
  // Predicated region
  $region10: #{_lambda_.39} parent=0 // pred_check
    _
  $region11: #{_lambda_.39} parent=0 // pred_check_branch
    %15 = sbr.rel (0) target = $region13
  $region12: #{_lambda_.39} parent=0 // pred_region
    _
  $region13: #{_lambda_.39} parent=0 // pred_fallthru
    _
  // Predicated region
  $region14: #{_lambda_.39} parent=0 // pred_check
    _
  $region15: #{_lambda_.39} parent=0 // pred_check_branch
    %17 = sbr.rel (0) target = $region17
  $region16: #{_lambda_.39} parent=0 // pred_region
    _
  $region17: #{_lambda_.39} parent=0 // pred_fallthru
    _
  // Predicated region
  $region18: #{_lambda_.39} parent=0 // pred_check
    _
  $region19: #{_lambda_.39} parent=0 // pred_check_branch
    %19 = sbr.rel (0) target = $region21
  $region20: #{_lambda_.39} parent=0 // pred_region
    _
  $region21: #{_lambda_.39} parent=0 // pred_fallthru
    _
  %v21 = vld [vmem:[%s0] sm:$0xff]
  %v22 = vld [vmem:[%s0 + $0x8] sm:$0xff]
  %v23 = vld [vmem:[%s0 + $0x10] sm:$0xff]
  %v24 = vld [vmem:[%s0 + $0x18] sm:$0xff]
  %v25 = vld [vmem:[%s0 + $0x20] sm:$0xff]
  %v26 = vld [vmem:[%s0 + $0x28] sm:$0xff]
  %v27 = vld [vmem:[%s0 + $0x30] sm:$0xff]
  %v28 = vld [vmem:[%s0 + $0x38] sm:$0xff]
  %v29 = vld [vmem:[%s1] sm:$0x1]
  %v31 = vperm.slane %v29, 0
  %v33 = vmul.f32 %v21, %v31
  %v34 = vmul.f32 %v22, %v31
  %v35 = vmul.f32 %v23, %v31
  %v36 = vmul.f32 %v24, %v31
  %v37 = vmul.f32 %v25, %v31
  %v38 = vmul.f32 %v26, %v31
  %v39 = vmul.f32 %v27, %v31
  %v40 = vmul.f32 %v28, %v31
  %v41 = vld [vmem:[%s2] sm:$0x1]
  %v43 = vperm.slane %v41, 0
  %v45 = vadd.f32 %v33, %v43
  %v46 = vadd.f32 %v34, %v43
  %v47 = vadd.f32 %v35, %v43
  %v48 = vadd.f32 %v36, %v43
  %v49 = vadd.f32 %v37, %v43
  %v50 = vadd.f32 %v38, %v43
  %v51 = vadd.f32 %v39, %v43
  %v52 = vadd.f32 %v40, %v43
  %v53 = vmax.f32 %v45, 0.0
  %v54 = vmax.f32 %v46, 0.0
  %v55 = vmax.f32 %v47, 0.0
  %v56 = vmax.f32 %v48, 0.0
  %v57 = vmax.f32 %v49, 0.0
  %v58 = vmax.f32 %v50, 0.0
  %v59 = vmax.f32 %v51, 0.0
  %v60 = vmax.f32 %v52, 0.0
  %v61 = vld [vmem:[%s4] sm:$0xff]
  %v62 = vld [vmem:[%s4 + $0x8] sm:$0xff]
  %v63 = vld [vmem:[%s4 + $0x10] sm:$0xff]
  %v64 = vld [vmem:[%s4 + $0x18] sm:$0xff]
  %v65 = vld [vmem:[%s4 + $0x20] sm:$0xff]
  %v66 = vld [vmem:[%s4 + $0x28] sm:$0xff]
  %v67 = vld [vmem:[%s4 + $0x30] sm:$0xff]
  %v68 = vld [vmem:[%s4 + $0x38] sm:$0xff]
  %v69 = vpack.c.bf16 %v54, %v53
  %v70 = vpack.c.bf16 %v56, %v55
  %v71 = vpack.c.bf16 %v58, %v57
  %v72 = vpack.c.bf16 %v60, %v59
  %v73 = vld [vmem:[%s3] sm:$0x3]
  %vm74 = vcmask 31744
  %v76 = vsel %vm74, %v69, 0
  %v79 = vsel %vm74, %v70, 0
  %v82 = vsel %vm74, %v71, 0
  %v85 = vsel %vm74, %v72, 0
  %vm87 = vcmask 1041408
  %v89 = vsel %vm87, %v73, 0
  %91 = vmatpush.bf16.msra.mxu0 0
  %92 = vmatpush.bf16.msra.mxu0 0
  %93 = vmatpush.bf16.msra.mxu0 0
  %94 = vmatpush.bf16.msra.mxu0 0
  %95 = vmatpush.bf16.msra.mxu0 0
  %96 = vmatpush.bf16.msra.mxu0 0
  %97 = vmatpush.bf16.msra.mxu0 0
  %98 = vmatpush.bf16.msra.mxu0 %v89
  %99 = vmatmul.bf16.gmra.mxu0 %v76
  %v100 = vpop.f32.mrf.mxu0
  %v101 = vadd.f32 0.0, %v100
  %v102 = vpop.f32.mrf.mxu0
  %v103 = vadd.f32 0.0, %v102
  %104 = vmatmul.bf16.gmra.mxu0 %v79
  %v105 = vpop.f32.mrf.mxu0
  %v106 = vadd.f32 0.0, %v105
  %v107 = vpop.f32.mrf.mxu0
  %v108 = vadd.f32 0.0, %v107
  %109 = vmatmul.bf16.gmra.mxu0 %v82
  %v110 = vpop.f32.mrf.mxu0
  %v111 = vadd.f32 0.0, %v110
  %v112 = vpop.f32.mrf.mxu0
  %v113 = vadd.f32 0.0, %v112
  %114 = vmatmul.bf16.gmra.mxu0 %v85
  %v115 = vpop.f32.mrf.mxu0
  %v116 = vadd.f32 0.0, %v115
  %v117 = vpop.f32.mrf.mxu0
  %v118 = vadd.f32 0.0, %v117
  %119 = vdwg.mxu0
  %v120 = vadd.f32 %v61, %v101
  %v121 = vadd.f32 %v62, %v103
  %v122 = vadd.f32 %v63, %v106
  %v123 = vadd.f32 %v64, %v108
  %v124 = vadd.f32 %v65, %v111
  %v125 = vadd.f32 %v66, %v113
  %v126 = vadd.f32 %v67, %v116
  %v127 = vadd.f32 %v68, %v118
  %vm128 = vcmask 64512
  %129 = vst.msk [vmem:[%s5] sm:$0xff] %vm128, %v120
  %130 = vst.msk [vmem:[%s5 + $0x8] sm:$0xff] %vm128, %v121
  %131 = vst.msk [vmem:[%s5 + $0x10] sm:$0xff] %vm128, %v122
  %132 = vst.msk [vmem:[%s5 + $0x18] sm:$0xff] %vm128, %v123
  %133 = vst.msk [vmem:[%s5 + $0x20] sm:$0xff] %vm128, %v124
  %134 = vst.msk [vmem:[%s5 + $0x28] sm:$0xff] %vm128, %v125
  %135 = vst.msk [vmem:[%s5 + $0x30] sm:$0xff] %vm128, %v126
  %136 = vst.msk [vmem:[%s5 + $0x38] sm:$0xff] %vm128, %v127
  // Predicated region
  $region22: #{_lambda_.39} parent=0 // pred_check
    _
  $region23: #{_lambda_.39} parent=0 // pred_check_branch
    %138 = sbr.rel (0) target = $region25
  $region24: #{_lambda_.39} parent=0 // pred_region
    _
  $region25: #{_lambda_.39} parent=0 // pred_fallthru
    _
  // Predicated region
  $region26: #{_lambda_.39} parent=0 // pred_check
    _
  $region27: #{_lambda_.39} parent=0 // pred_check_branch
    %140 = sbr.rel (0) target = $region29
  $region28: #{_lambda_.39} parent=0 // pred_region
    _
  $region29: #{_lambda_.39} parent=0 // pred_fallthru
    _

// kernel: _lambda_.40
$region0: #{_lambda_.40}
  #allocation0 [shape = 'u32[]', space=smem, size = 0x4, offset = 0x4, fixed_abs, tag = 'smem constant byte address 0x4 - core index']
  #allocation1 [shape = 'u32[72,128]{1,0:T(1,128)}', space=vmem, size = 0x9000, scoped, tag = 'internal scratch']
  %s0 = inlined_call_operand.vmem [shape: f32[64,8], index: 0, kind: input, shape index: {}]
  %s1 = inlined_call_operand.vmem [shape: f32[1,8], index: 1, kind: input, shape index: {}]
  %s2 = inlined_call_operand.vmem [shape: f32[1,8], index: 2, kind: input, shape index: {}]
  %s3 = inlined_call_operand.vmem [shape: bf16[8,2], index: 3, kind: input, shape index: {}]
  %s4 = inlined_call_operand.vmem [shape: f32[64,2], index: 4, kind: output, shape index: {}]
  %s5 = sld [smem:[#allocation0]]
  $region26: #{_lambda_.40} parent=0
    _
  %s7 = ssub.s32 1, %s5
  %s8 = scalar_select 0, %s7, %s5
  // Predicated region
  $region2: #{_lambda_.40} parent=0 // pred_check
    _
  $region3: #{_lambda_.40} parent=0 // pred_check_branch
    %10 = sbr.rel (0) target = $region5
  $region4: #{_lambda_.40} parent=0 // pred_region
    _
  $region5: #{_lambda_.40} parent=0 // pred_fallthru
    _
  // Predicated region
  $region6: #{_lambda_.40} parent=0 // pred_check
    _
  $region7: #{_lambda_.40} parent=0 // pred_check_branch
    %12 = sbr.rel (0) target = $region9
  $region8: #{_lambda_.40} parent=0 // pred_region
    _
  $region9: #{_lambda_.40} parent=0 // pred_fallthru
    _
  // Predicated region
  $region10: #{_lambda_.40} parent=0 // pred_check
    _
  $region11: #{_lambda_.40} parent=0 // pred_check_branch
    %14 = sbr.rel (0) target = $region13
  $region12: #{_lambda_.40} parent=0 // pred_region
    _
  $region13: #{_lambda_.40} parent=0 // pred_fallthru
    _
  // Predicated region
  $region14: #{_lambda_.40} parent=0 // pred_check
    _
  $region15: #{_lambda_.40} parent=0 // pred_check_branch
    %16 = sbr.rel (0) target = $region17
  $region16: #{_lambda_.40} parent=0 // pred_region
    _
  $region17: #{_lambda_.40} parent=0 // pred_fallthru
    _
  %v18 = vld [vmem:[%s0] sm:$0xff]
  %v19 = vld [vmem:[%s0 + $0x8] sm:$0xff]
  %v20 = vld [vmem:[%s0 + $0x10] sm:$0xff]
  %v21 = vld [vmem:[%s0 + $0x18] sm:$0xff]
  %v22 = vld [vmem:[%s0 + $0x20] sm:$0xff]
  %v23 = vld [vmem:[%s0 + $0x28] sm:$0xff]
  %v24 = vld [vmem:[%s0 + $0x30] sm:$0xff]
  %v25 = vld [vmem:[%s0 + $0x38] sm:$0xff]
  %v26 = vld [vmem:[%s1] sm:$0x1]
  %v28 = vperm.slane %v26, 0
  %v30 = vmul.f32 %v18, %v28
  %v31 = vmul.f32 %v19, %v28
  %v32 = vmul.f32 %v20, %v28
  %v33 = vmul.f32 %v21, %v28
  %v34 = vmul.f32 %v22, %v28
  %v35 = vmul.f32 %v23, %v28
  %v36 = vmul.f32 %v24, %v28
  %v37 = vmul.f32 %v25, %v28
  %v38 = vld [vmem:[%s2] sm:$0x1]
  %v40 = vperm.slane %v38, 0
  %v42 = vadd.f32 %v30, %v40
  %v43 = vadd.f32 %v31, %v40
  %v44 = vadd.f32 %v32, %v40
  %v45 = vadd.f32 %v33, %v40
  %v46 = vadd.f32 %v34, %v40
  %v47 = vadd.f32 %v35, %v40
  %v48 = vadd.f32 %v36, %v40
  %v49 = vadd.f32 %v37, %v40
  %v50 = vmax.f32 %v42, 0.0
  %v51 = vmax.f32 %v43, 0.0
  %v52 = vmax.f32 %v44, 0.0
  %v53 = vmax.f32 %v45, 0.0
  %v54 = vmax.f32 %v46, 0.0
  %v55 = vmax.f32 %v47, 0.0
  %v56 = vmax.f32 %v48, 0.0
  %v57 = vmax.f32 %v49, 0.0
  %v58 = vpack.c.bf16 %v51, %v50
  %v59 = vpack.c.bf16 %v53, %v52
  %v60 = vpack.c.bf16 %v55, %v54
  %v61 = vpack.c.bf16 %v57, %v56
  %v62 = vld [vmem:[%s3] sm:$0xf]
  %vm63 = vcmask 64512
  %v65 = vsel %vm63, %v58, 0
  %v68 = vsel %vm63, %v59, 0
  %v71 = vsel %vm63, %v60, 0
  %v74 = vsel %vm63, %v61, 0
  %vm76 = vcmask 1043456
  %v78 = vsel %vm76, %v62, 0
  %80 = vmatpush.bf16.msra.mxu0 0
  %81 = vmatpush.bf16.msra.mxu0 0
  %82 = vmatpush.bf16.msra.mxu0 0
  %83 = vmatpush.bf16.msra.mxu0 0
  %84 = vmatpush.bf16.msra.mxu0 0
  %85 = vmatpush.bf16.msra.mxu0 0
  %86 = vmatpush.bf16.msra.mxu0 0
  %87 = vmatpush.bf16.msra.mxu0 %v78
  %88 = vmatmul.bf16.gmra.mxu0 %v65
  %v89 = vpop.f32.mrf.mxu0
  %v90 = vadd.f32 0.0, %v89
  %v91 = vpop.f32.mrf.mxu0
  %v92 = vadd.f32 0.0, %v91
  %93 = vmatmul.bf16.gmra.mxu0 %v68
  %v94 = vpop.f32.mrf.mxu0
  %v95 = vadd.f32 0.0, %v94
  %v96 = vpop.f32.mrf.mxu0
  %v97 = vadd.f32 0.0, %v96
  %98 = vmatmul.bf16.gmra.mxu0 %v71
  %v99 = vpop.f32.mrf.mxu0
  %v100 = vadd.f32 0.0, %v99
  %v101 = vpop.f32.mrf.mxu0
  %v102 = vadd.f32 0.0, %v101
  %103 = vmatmul.bf16.gmra.mxu0 %v74
  %v104 = vpop.f32.mrf.mxu0
  %v105 = vadd.f32 0.0, %v104
  %v106 = vpop.f32.mrf.mxu0
  %v107 = vadd.f32 0.0, %v106
  %108 = vdwg.mxu0
  %vm109 = vcmask 15360
  %110 = vst.msk [vmem:[%s4] sm:$0xff] %vm109, %v90
  %111 = vst.msk [vmem:[%s4 + $0x8] sm:$0xff] %vm109, %v92
  %112 = vst.msk [vmem:[%s4 + $0x10] sm:$0xff] %vm109, %v95
  %113 = vst.msk [vmem:[%s4 + $0x18] sm:$0xff] %vm109, %v97
  %114 = vst.msk [vmem:[%s4 + $0x20] sm:$0xff] %vm109, %v100
  %115 = vst.msk [vmem:[%s4 + $0x28] sm:$0xff] %vm109, %v102
  %116 = vst.msk [vmem:[%s4 + $0x30] sm:$0xff] %vm109, %v105
  %117 = vst.msk [vmem:[%s4 + $0x38] sm:$0xff] %vm109, %v107
  // Predicated region
  $region18: #{_lambda_.40} parent=0 // pred_check
    _
  $region19: #{_lambda_.40} parent=0 // pred_check_branch
    %119 = sbr.rel (0) target = $region21
  $region20: #{_lambda_.40} parent=0 // pred_region
    _
  $region21: #{_lambda_.40} parent=0 // pred_fallthru
    _
  // Predicated region
  $region22: #{_lambda_.40} parent=0 // pred_check
    _
  $region23: #{_lambda_.40} parent=0 // pred_check_branch
    %121 = sbr.rel (0) target = $region25
  $region24: #{_lambda_.40} parent=0 // pred_region
    _
  $region25: #{_lambda_.40} parent=0 // pred_fallthru
    _

// kernel: tile.50
$region0: #{tile.50}
  #allocation0 [shape = 's32[1]{0}', space=sflag, size = 0x4, scoped, tag = 'scoped memory for tile.50']
  %s0 = inlined_call_operand.vmem [shape: f32[8], index: 0, kind: input, shape index: {}]
  %s1 = inlined_call_operand.vmem [shape: f32[16,8], index: 1, kind: output, shape index: {}]
  // Predicated region
  $region2: #{tile.50} parent=0 // pred_check
    _
  $region3: #{tile.50} parent=0 // pred_check_branch
    %3 = sbr.rel (0) target = $region5
  $region4: #{tile.50} parent=0 // pred_region
    _
  $region5: #{tile.50} parent=0 // pred_fallthru
    _
  %v4 = vld [vmem:[%s0] ss:$0 sm:$0xff]
  %5 = vst [vmem:[%s1] sm:$0xff] %v4
  %s6 = scalar_lea.vmem %s1, 8
  %7 = vst [vmem:[%s6] sm:$0xff] %v4

// kernel: tile.51
$region0: #{tile.51}
  %s0 = inlined_call_operand.vmem [shape: f32[16,8], index: 0, kind: input, shape index: {}]
  %s1 = inlined_call_operand.vmem [shape: f32[1,128], index: 1, kind: output, shape index: {}]
  $region1: #{tile.51} parent=0
    #allocation0 [shape = 'u8[4096]{0}', space=vmem, size = 0x1000, scoped, tag = 'scoped mem for output reshape']
    %v2 = vld [vmem:[%s0] sm:$0x1]
    %vm3 = vcmask 64512
    %4 = vst.msk [vmem:[#allocation0] sm:$0x1] %vm3, %v2
    %s5 = scalar_lea.vmem %s0, 15
    %v6 = vld [vmem:[%s5] sm:$0x1]
    %7 = vrot.lane.b32.xlu0 %v6, 120
    %v8 = vpop.permute.xlu0 %7
    %vm9 = vcmask 1048512
    %10 = vst.msk [vmem:[#allocation0] sm:$0x1] %vm9, %v8
    %s11 = scalar_lea.vmem %s0, 14
    %v12 = vld [vmem:[%s11] sm:$0x1]
    %13 = vrot.lane.b32.xlu0 %v12, 112
    %v14 = vpop.permute.xlu0 %13
    %vm15 = vcmask 982912
    %16 = vst.msk [vmem:[#allocation0] sm:$0x1] %vm15, %v14
    %s17 = scalar_lea.vmem %s0, 13
    %v18 = vld [vmem:[%s17] sm:$0x1]
    %19 = vrot.lane.b32.xlu0 %v18, 104
    %v20 = vpop.permute.xlu0 %19
    %vm21 = vcmask 917312
    %22 = vst.msk [vmem:[#allocation0] sm:$0x1] %vm21, %v20
    %s23 = scalar_lea.vmem %s0, 12
    %v24 = vld [vmem:[%s23] sm:$0x1]
    %25 = vrot.lane.b32.xlu0 %v24, 96
    %v26 = vpop.permute.xlu0 %25
    %vm27 = vcmask 851712
    %28 = vst.msk [vmem:[#allocation0] sm:$0x1] %vm27, %v26
    %s29 = scalar_lea.vmem %s0, 11
    %v30 = vld [vmem:[%s29] sm:$0x1]
    %31 = vrot.lane.b32.xlu0 %v30, 88
    %v32 = vpop.permute.xlu0 %31
    %vm33 = vcmask 786112
    %34 = vst.msk [vmem:[#allocation0] sm:$0x1] %vm33, %v32
    %s35 = scalar_lea.vmem %s0, 10
    %v36 = vld [vmem:[%s35] sm:$0x1]
    %37 = vrot.lane.b32.xlu0 %v36, 80
    %v38 = vpop.permute.xlu0 %37
    %vm39 = vcmask 720512
    %40 = vst.msk [vmem:[#allocation0] sm:$0x1] %vm39, %v38
    %s41 = scalar_lea.vmem %s0, 9
    %v42 = vld [vmem:[%s41] sm:$0x1]
    %43 = vrot.lane.b32.xlu0 %v42, 72
    %v44 = vpop.permute.xlu0 %43
    %vm45 = vcmask 654912
    %46 = vst.msk [vmem:[#allocation0] sm:$0x1] %vm45, %v44
    %s47 = scalar_lea.vmem %s0, 8
    %v48 = vld [vmem:[%s47] sm:$0x1]
    %49 = vrot.lane.b32.xlu0 %v48, 64
    %v50 = vpop.permute.xlu0 %49
    %vm51 = vcmask 589312
    %52 = vst.msk [vmem:[#allocation0] sm:$0x1] %vm51, %v50
    %s53 = scalar_lea.vmem %s0, 7
    %v54 = vld [vmem:[%s53] sm:$0x1]
    %55 = vrot.lane.b32.xlu0 %v54, 56
    %v56 = vpop.permute.xlu0 %55
    %vm57 = vcmask 523712
    %58 = vst.msk [vmem:[#allocation0] sm:$0x1] %vm57, %v56
    %s59 = scalar_lea.vmem %s0, 6
    %v60 = vld [vmem:[%s59] sm:$0x1]
    %61 = vrot.lane.b32.xlu0 %v60, 48
    %v62 = vpop.permute.xlu0 %61
    %vm63 = vcmask 458112
    %64 = vst.msk [vmem:[#allocation0] sm:$0x1] %vm63, %v62
    %s65 = scalar_lea.vmem %s0, 5
    %v66 = vld [vmem:[%s65] sm:$0x1]
    %67 = vrot.lane.b32.xlu0 %v66, 40
    %v68 = vpop.permute.xlu0 %67
    %vm69 = vcmask 392512
    %70 = vst.msk [vmem:[#allocation0] sm:$0x1] %vm69, %v68
    %s71 = scalar_lea.vmem %s0, 4
    %v72 = vld [vmem:[%s71] sm:$0x1]
    %73 = vrot.lane.b32.xlu0 %v72, 32
    %v74 = vpop.permute.xlu0 %73
    %vm75 = vcmask 326912
    %76 = vst.msk [vmem:[#allocation0] sm:$0x1] %vm75, %v74
    %s77 = scalar_lea.vmem %s0, 3
    %v78 = vld [vmem:[%s77] sm:$0x1]
    %79 = vrot.lane.b32.xlu0 %v78, 24
    %v80 = vpop.permute.xlu0 %79
    %vm81 = vcmask 261312
    %82 = vst.msk [vmem:[#allocation0] sm:$0x1] %vm81, %v80
    %s83 = scalar_lea.vmem %s0, 2
    %v84 = vld [vmem:[%s83] sm:$0x1]
    %85 = vrot.lane.b32.xlu0 %v84, 16
    %v86 = vpop.permute.xlu0 %85
    %vm87 = vcmask 195712
    %88 = vst.msk [vmem:[#allocation0] sm:$0x1] %vm87, %v86
    %s89 = scalar_lea.vmem %s0, 1
    %v90 = vld [vmem:[%s89] sm:$0x1]
    %91 = vrot.lane.b32.xlu0 %v90, 8
    %v92 = vpop.permute.xlu0 %91
    %vm93 = vcmask 130112
    %94 = vst.msk [vmem:[#allocation0] sm:$0x1] %vm93, %v92
    %s96 = ssub.s32 2, 1
    %v97 = vld [vmem:[#allocation0] sm:%s96]
    %s99 = ssub.s32 2, 1
    %100 = vst [vmem:[%s1] sm:%s99] %v97

// kernel: tile.54
$region0: #{tile.54}
  #allocation2 [shape = 's32[1]{0}', space=sflag, size = 0x4, scoped, tag = 'scoped memory for tile.54']
  %s0 = inlined_call_operand.hbm [shape: f32[8], index: 0, kind: input, shape index: {}]
  %s1 = inlined_call_operand.vmem [shape: f32[16,8], index: 1, kind: output, shape index: {}]
  $region1: #{tile.54} parent=0
    #allocation0 [shape = 'u8[512]{0}', space=vmem, size = 0x400, scoped, tag = 'operand span for operand 0']
    #allocation1 [shape = 's32[1]{0}', space=sflag, size = 0x4, scoped, tag = 'scoped memory for tile.54']
    %2 = vsyncpa [#allocation1], 0
    // Predicated region
    $region2: #{tile.54} parent=1 // pred_check
      _
    $region3: #{tile.54} parent=1 // pred_check_branch
      %4 = sbr.rel (0) target = $region5
    $region4: #{tile.54} parent=1 // pred_region
      %6 = vsyncadd [#allocation1], 0
      %s8 = sshll.u32 %s0, 4
      %s9 = int_to_ptr.hbm [resolvable:$true] %s8
      %s10 = sshll.u32 [#allocation0], 4
      %s11 = int_to_ptr.vmem [resolvable:$true] %s10
      %13 = dma.hbm_to_vmem [thread:$0]  %s9, 16, %s11, [#allocation1]
    $region5: #{tile.54} parent=1 // pred_fallthru
      _
    // Predicated region
    $region6: #{tile.54} parent=1 // pred_check
      _
    $region7: #{tile.54} parent=1 // pred_check_branch
      %15 = sbr.rel (0) target = $region9
    $region8: #{tile.54} parent=1 // pred_region
      %17 = dma.done [#allocation1], 16
    $region9: #{tile.54} parent=1 // pred_fallthru
      _
    %v18 = vld [vmem:[#allocation0] ss:$0 sm:$0xff]
    %19 = vst [vmem:[%s1] sm:$0xff] %v18
    %s20 = scalar_lea.vmem %s1, 8
    %21 = vst [vmem:[%s20] sm:$0xff] %v18
    %22 = vsyncpa [#allocation1], 1

// kernel: _lambda_.41
$region0: #{_lambda_.41}
  #allocation0 [shape = 'u32[]', space=smem, size = 0x4, offset = 0x4, fixed_abs, tag = 'smem constant byte address 0x4 - core index']
  #allocation1 [shape = 'u32[72,128]{1,0:T(1,128)}', space=vmem, size = 0x9000, scoped, tag = 'internal scratch']
  %s0 = inlined_call_operand.vmem [shape: f32[64,2], index: 0, kind: input, shape index: {}]
  %s1 = inlined_call_operand.vmem [shape: f32[1,2], index: 1, kind: input, shape index: {}]
  %s2 = inlined_call_operand.vmem [shape: f32[1,2], index: 2, kind: input, shape index: {}]
  %s3 = inlined_call_operand.vmem [shape: bf16[2,8], index: 3, kind: input, shape index: {}]
  %s4 = inlined_call_operand.vmem [shape: f32[64,8], index: 4, kind: input, shape index: {}]
  %s5 = inlined_call_operand.vmem [shape: f32[64,8], index: 5, kind: output, shape index: {}]
  %s6 = sld [smem:[#allocation0]]
  $region30: #{_lambda_.41} parent=0
    _
  %s8 = ssub.s32 1, %s6
  %s9 = scalar_select 0, %s8, %s6
  // Predicated region
  $region2: #{_lambda_.41} parent=0 // pred_check
    _
  $region3: #{_lambda_.41} parent=0 // pred_check_branch
    %11 = sbr.rel (0) target = $region5
  $region4: #{_lambda_.41} parent=0 // pred_region
    _
  $region5: #{_lambda_.41} parent=0 // pred_fallthru
    _
  // Predicated region
  $region6: #{_lambda_.41} parent=0 // pred_check
    _
  $region7: #{_lambda_.41} parent=0 // pred_check_branch
    %13 = sbr.rel (0) target = $region9
  $region8: #{_lambda_.41} parent=0 // pred_region
    _
  $region9: #{_lambda_.41} parent=0 // pred_fallthru
    _
  // Predicated region
  $region10: #{_lambda_.41} parent=0 // pred_check
    _
  $region11: #{_lambda_.41} parent=0 // pred_check_branch
    %15 = sbr.rel (0) target = $region13
  $region12: #{_lambda_.41} parent=0 // pred_region
    _
  $region13: #{_lambda_.41} parent=0 // pred_fallthru
    _
  // Predicated region
  $region14: #{_lambda_.41} parent=0 // pred_check
    _
  $region15: #{_lambda_.41} parent=0 // pred_check_branch
    %17 = sbr.rel (0) target = $region17
  $region16: #{_lambda_.41} parent=0 // pred_region
    _
  $region17: #{_lambda_.41} parent=0 // pred_fallthru
    _
  // Predicated region
  $region18: #{_lambda_.41} parent=0 // pred_check
    _
  $region19: #{_lambda_.41} parent=0 // pred_check_branch
    %19 = sbr.rel (0) target = $region21
  $region20: #{_lambda_.41} parent=0 // pred_region
    _
  $region21: #{_lambda_.41} parent=0 // pred_fallthru
    _
  %v21 = vld [vmem:[%s0] sm:$0xff]
  %v22 = vld [vmem:[%s0 + $0x8] sm:$0xff]
  %v23 = vld [vmem:[%s0 + $0x10] sm:$0xff]
  %v24 = vld [vmem:[%s0 + $0x18] sm:$0xff]
  %v25 = vld [vmem:[%s0 + $0x20] sm:$0xff]
  %v26 = vld [vmem:[%s0 + $0x28] sm:$0xff]
  %v27 = vld [vmem:[%s0 + $0x30] sm:$0xff]
  %v28 = vld [vmem:[%s0 + $0x38] sm:$0xff]
  %v29 = vld [vmem:[%s1] sm:$0x1]
  %v31 = vperm.slane %v29, 0
  %v33 = vmul.f32 %v21, %v31
  %v34 = vmul.f32 %v22, %v31
  %v35 = vmul.f32 %v23, %v31
  %v36 = vmul.f32 %v24, %v31
  %v37 = vmul.f32 %v25, %v31
  %v38 = vmul.f32 %v26, %v31
  %v39 = vmul.f32 %v27, %v31
  %v40 = vmul.f32 %v28, %v31
  %v41 = vld [vmem:[%s2] sm:$0x1]
  %v43 = vperm.slane %v41, 0
  %v45 = vadd.f32 %v33, %v43
  %v46 = vadd.f32 %v34, %v43
  %v47 = vadd.f32 %v35, %v43
  %v48 = vadd.f32 %v36, %v43
  %v49 = vadd.f32 %v37, %v43
  %v50 = vadd.f32 %v38, %v43
  %v51 = vadd.f32 %v39, %v43
  %v52 = vadd.f32 %v40, %v43
  %v53 = vmax.f32 %v45, 0.0
  %v54 = vmax.f32 %v46, 0.0
  %v55 = vmax.f32 %v47, 0.0
  %v56 = vmax.f32 %v48, 0.0
  %v57 = vmax.f32 %v49, 0.0
  %v58 = vmax.f32 %v50, 0.0
  %v59 = vmax.f32 %v51, 0.0
  %v60 = vmax.f32 %v52, 0.0
  %v61 = vld [vmem:[%s4] sm:$0xff]
  %v62 = vld [vmem:[%s4 + $0x8] sm:$0xff]
  %v63 = vld [vmem:[%s4 + $0x10] sm:$0xff]
  %v64 = vld [vmem:[%s4 + $0x18] sm:$0xff]
  %v65 = vld [vmem:[%s4 + $0x20] sm:$0xff]
  %v66 = vld [vmem:[%s4 + $0x28] sm:$0xff]
  %v67 = vld [vmem:[%s4 + $0x30] sm:$0xff]
  %v68 = vld [vmem:[%s4 + $0x38] sm:$0xff]
  %v69 = vpack.c.bf16 %v54, %v53
  %v70 = vpack.c.bf16 %v56, %v55
  %v71 = vpack.c.bf16 %v58, %v57
  %v72 = vpack.c.bf16 %v60, %v59
  %v73 = vld [vmem:[%s3] sm:$0x1]
  %vm74 = vcmask 15360
  %v76 = vsel %vm74, %v69, 0
  %v79 = vsel %vm74, %v70, 0
  %v82 = vsel %vm74, %v71, 0
  %v85 = vsel %vm74, %v72, 0
  %vm87 = vcmask 1040384
  %v89 = vsel %vm87, %v73, 0
  %91 = vmatpush.bf16.msra.mxu0 0
  %92 = vmatpush.bf16.msra.mxu0 0
  %93 = vmatpush.bf16.msra.mxu0 0
  %94 = vmatpush.bf16.msra.mxu0 0
  %95 = vmatpush.bf16.msra.mxu0 0
  %96 = vmatpush.bf16.msra.mxu0 0
  %97 = vmatpush.bf16.msra.mxu0 0
  %98 = vmatpush.bf16.msra.mxu0 %v89
  %99 = vmatmul.bf16.gmra.mxu0 %v76
  %v100 = vpop.f32.mrf.mxu0
  %v101 = vadd.f32 0.0, %v100
  %v102 = vpop.f32.mrf.mxu0
  %v103 = vadd.f32 0.0, %v102
  %104 = vmatmul.bf16.gmra.mxu0 %v79
  %v105 = vpop.f32.mrf.mxu0
  %v106 = vadd.f32 0.0, %v105
  %v107 = vpop.f32.mrf.mxu0
  %v108 = vadd.f32 0.0, %v107
  %109 = vmatmul.bf16.gmra.mxu0 %v82
  %v110 = vpop.f32.mrf.mxu0
  %v111 = vadd.f32 0.0, %v110
  %v112 = vpop.f32.mrf.mxu0
  %v113 = vadd.f32 0.0, %v112
  %114 = vmatmul.bf16.gmra.mxu0 %v85
  %v115 = vpop.f32.mrf.mxu0
  %v116 = vadd.f32 0.0, %v115
  %v117 = vpop.f32.mrf.mxu0
  %v118 = vadd.f32 0.0, %v117
  %119 = vdwg.mxu0
  %v120 = vadd.f32 %v61, %v101
  %v121 = vadd.f32 %v62, %v103
  %v122 = vadd.f32 %v63, %v106
  %v123 = vadd.f32 %v64, %v108
  %v124 = vadd.f32 %v65, %v111
  %v125 = vadd.f32 %v66, %v113
  %v126 = vadd.f32 %v67, %v116
  %v127 = vadd.f32 %v68, %v118
  %vm128 = vcmask 64512
  %129 = vst.msk [vmem:[%s5] sm:$0xff] %vm128, %v120
  %130 = vst.msk [vmem:[%s5 + $0x8] sm:$0xff] %vm128, %v121
  %131 = vst.msk [vmem:[%s5 + $0x10] sm:$0xff] %vm128, %v122
  %132 = vst.msk [vmem:[%s5 + $0x18] sm:$0xff] %vm128, %v123
  %133 = vst.msk [vmem:[%s5 + $0x20] sm:$0xff] %vm128, %v124
  %134 = vst.msk [vmem:[%s5 + $0x28] sm:$0xff] %vm128, %v125
  %135 = vst.msk [vmem:[%s5 + $0x30] sm:$0xff] %vm128, %v126
  %136 = vst.msk [vmem:[%s5 + $0x38] sm:$0xff] %vm128, %v127
  // Predicated region
  $region22: #{_lambda_.41} parent=0 // pred_check
    _
  $region23: #{_lambda_.41} parent=0 // pred_check_branch
    %138 = sbr.rel (0) target = $region25
  $region24: #{_lambda_.41} parent=0 // pred_region
    _
  $region25: #{_lambda_.41} parent=0 // pred_fallthru
    _
  // Predicated region
  $region26: #{_lambda_.41} parent=0 // pred_check
    _
  $region27: #{_lambda_.41} parent=0 // pred_check_branch
    %140 = sbr.rel (0) target = $region29
  $region28: #{_lambda_.41} parent=0 // pred_region
    _
  $region29: #{_lambda_.41} parent=0 // pred_fallthru
    _

// kernel: _lambda_.42
$region0: #{_lambda_.42}
  #allocation0 [shape = 'u32[]', space=smem, size = 0x4, offset = 0x4, fixed_abs, tag = 'smem constant byte address 0x4 - core index']
  #allocation1 [shape = 'u32[72,128]{1,0:T(1,128)}', space=vmem, size = 0x9000, scoped, tag = 'internal scratch']
  %s0 = inlined_call_operand.vmem [shape: f32[8,128], index: 0, kind: input, shape index: {}]
  %s1 = inlined_call_operand.vmem [shape: f32[1,128], index: 1, kind: input, shape index: {}]
  %s2 = inlined_call_operand.vmem [shape: f32[1,128], index: 2, kind: input, shape index: {}]
  %s3 = inlined_call_operand.vmem [shape: f32[8,128], index: 3, kind: output, shape index: {}]
  %s4 = sld [smem:[#allocation0]]
  $region22: #{_lambda_.42} parent=0
    _
  %s6 = ssub.s32 1, %s4
  %s7 = scalar_select 0, %s6, %s4
  // Predicated region
  $region2: #{_lambda_.42} parent=0 // pred_check
    _
  $region3: #{_lambda_.42} parent=0 // pred_check_branch
    %9 = sbr.rel (0) target = $region5
  $region4: #{_lambda_.42} parent=0 // pred_region
    _
  $region5: #{_lambda_.42} parent=0 // pred_fallthru
    _
  // Predicated region
  $region6: #{_lambda_.42} parent=0 // pred_check
    _
  $region7: #{_lambda_.42} parent=0 // pred_check_branch
    %11 = sbr.rel (0) target = $region9
  $region8: #{_lambda_.42} parent=0 // pred_region
    _
  $region9: #{_lambda_.42} parent=0 // pred_fallthru
    _
  // Predicated region
  $region10: #{_lambda_.42} parent=0 // pred_check
    _
  $region11: #{_lambda_.42} parent=0 // pred_check_branch
    %13 = sbr.rel (0) target = $region13
  $region12: #{_lambda_.42} parent=0 // pred_region
    _
  $region13: #{_lambda_.42} parent=0 // pred_fallthru
    _
  %v14 = vld [vmem:[%s0] sm:$0xff]
  %v15 = vld [vmem:[%s1] sm:$0x1]
  %v17 = vperm.slane %v15, 0
  %v19 = vmul.f32 %v14, %v17
  %v20 = vld [vmem:[%s2] sm:$0x1]
  %v22 = vperm.slane %v20, 0
  %v24 = vadd.f32 %v19, %v22
  %v25 = vmax.f32 %v24, 0.0
  %26 = vst [vmem:[%s3] sm:$0xff] %v25
  // Predicated region
  $region14: #{_lambda_.42} parent=0 // pred_check
    _
  $region15: #{_lambda_.42} parent=0 // pred_check_branch
    %28 = sbr.rel (0) target = $region17
  $region16: #{_lambda_.42} parent=0 // pred_region
    _
  $region17: #{_lambda_.42} parent=0 // pred_fallthru
    _
  // Predicated region
  $region18: #{_lambda_.42} parent=0 // pred_check
    _
  $region19: #{_lambda_.42} parent=0 // pred_check_branch
    %30 = sbr.rel (0) target = $region21
  $region20: #{_lambda_.42} parent=0 // pred_region
    _
  $region21: #{_lambda_.42} parent=0 // pred_fallthru
    _

// kernel: _lambda_.43
$region0: #{_lambda_.43}
  #allocation0 [shape = 'u32[]', space=smem, size = 0x4, offset = 0x4, fixed_abs, tag = 'smem constant byte address 0x4 - core index']
  #allocation1 [shape = 'u32[72,128]{1,0:T(1,128)}', space=vmem, size = 0x9000, scoped, tag = 'internal scratch']
  %s0 = inlined_call_operand.vmem [shape: bf16[2,16,108], index: 0, kind: input, shape index: {}]
  %s1 = inlined_call_operand.vmem [shape: bf16[2,108,4], index: 1, kind: input, shape index: {}]
  %s2 = inlined_call_operand.vmem [shape: f32[16,8], index: 2, kind: output, shape index: {}]
  %s3 = sld [smem:[#allocation0]]
  $region18: #{_lambda_.43} parent=0
    _
  %s5 = ssub.s32 1, %s3
  %s6 = scalar_select 0, %s5, %s3
  // Predicated region
  $region2: #{_lambda_.43} parent=0 // pred_check
    _
  $region3: #{_lambda_.43} parent=0 // pred_check_branch
    %8 = sbr.rel (0) target = $region5
  $region4: #{_lambda_.43} parent=0 // pred_region
    _
  $region5: #{_lambda_.43} parent=0 // pred_fallthru
    _
  // Predicated region
  $region6: #{_lambda_.43} parent=0 // pred_check
    _
  $region7: #{_lambda_.43} parent=0 // pred_check_branch
    %10 = sbr.rel (0) target = $region9
  $region8: #{_lambda_.43} parent=0 // pred_region
    _
  $region9: #{_lambda_.43} parent=0 // pred_fallthru
    _
  %v12 = vld [vmem:[%s0] sm:$0xf]
  %v13 = vld [vmem:[%s0 + $0x4] sm:$0xf]
  %v14 = vld [vmem:[%s1] sm:$0xf]
  %v15 = vld [vmem:[%s1 + $0x4] sm:$0xf]
  %v16 = vld [vmem:[%s1 + $0x8] sm:$0xf]
  %v17 = vld [vmem:[%s1 + $0xc] sm:$0xf]
  %v18 = vld [vmem:[%s1 + $0x10] sm:$0xf]
  %v19 = vld [vmem:[%s1 + $0x14] sm:$0xf]
  %v20 = vld [vmem:[%s1 + $0x18] sm:$0xf]
  %v21 = vld [vmem:[%s1 + $0x1c] sm:$0xf]
  %v22 = vld [vmem:[%s1 + $0x20] sm:$0xf]
  %v23 = vld [vmem:[%s1 + $0x24] sm:$0xf]
  %v24 = vld [vmem:[%s1 + $0x28] sm:$0xf]
  %v25 = vld [vmem:[%s1 + $0x2c] sm:$0xf]
  %v26 = vld [vmem:[%s1 + $0x30] sm:$0xf]
  %v27 = vld [vmem:[%s1 + $0x34] sm:$0x3]
  %v30 = vunpack.c.l.b16 %v12
  %v31 = vunpack.c.l.b16 %v13
  %v32 = vpack.c.b16 %v31, %v30
  %v47 = vunpack.c.l.b16 %v14
  %v48 = vunpack.c.l.b16 %v15
  %v49 = vunpack.c.l.b16 %v16
  %v50 = vunpack.c.l.b16 %v17
  %v51 = vunpack.c.l.b16 %v18
  %v52 = vunpack.c.l.b16 %v19
  %v53 = vunpack.c.l.b16 %v20
  %v54 = vunpack.c.l.b16 %v21
  %v55 = vunpack.c.l.b16 %v22
  %v56 = vunpack.c.l.b16 %v23
  %v57 = vunpack.c.l.b16 %v24
  %v58 = vunpack.c.l.b16 %v25
  %v59 = vunpack.c.l.b16 %v26
  %v60 = vunpack.c.l.b16 %v27
  %v61 = vpack.c.b16 %v48, %v47
  %v62 = vpack.c.b16 %v50, %v49
  %v63 = vpack.c.b16 %v52, %v51
  %v64 = vpack.c.b16 %v54, %v53
  %v65 = vpack.c.b16 %v56, %v55
  %v66 = vpack.c.b16 %v58, %v57
  %v67 = vpack.c.b16 %v60, %v59
  %vm74 = vcmask 883712
  %v76 = vsel %vm74, %v32, 0
  %vm78 = vcmask 1045504
  %v80 = vsel %vm78, %v67, 0
  %82 = vmatpush.bf16.msra.mxu0 0
  %83 = vmatpush.bf16.msra.mxu0 %v80
  %84 = vmatpush.bf16.msra.mxu0 %v66
  %85 = vmatpush.bf16.msra.mxu0 %v65
  %86 = vmatpush.bf16.msra.mxu0 %v64
  %87 = vmatpush.bf16.msra.mxu0 %v63
  %88 = vmatpush.bf16.msra.mxu0 %v62
  %89 = vmatpush.bf16.msra.mxu0 %v61
  %90 = vmatmul.bf16.gmra.mxu0 %v76
  %v91 = vpop.f32.mrf.mxu0
  %v92 = vadd.f32 0.0, %v91
  %v93 = vpop.f32.mrf.mxu0
  %v94 = vadd.f32 0.0, %v93
  %95 = vdwg.mxu0
  %s96 = scalar_lea.vmem %s0, 8
  %v97 = vld [vmem:[%s96] sm:$0xf]
  %v98 = vld [vmem:[%s96 + $0x4] sm:$0xf]
  %s99 = scalar_lea.vmem %s1, 56
  %v100 = vld [vmem:[%s99] sm:$0xf]
  %v101 = vld [vmem:[%s99 + $0x4] sm:$0xf]
  %v102 = vld [vmem:[%s99 + $0x8] sm:$0xf]
  %v103 = vld [vmem:[%s99 + $0xc] sm:$0xf]
  %v104 = vld [vmem:[%s99 + $0x10] sm:$0xf]
  %v105 = vld [vmem:[%s99 + $0x14] sm:$0xf]
  %v106 = vld [vmem:[%s99 + $0x18] sm:$0xf]
  %v107 = vld [vmem:[%s99 + $0x1c] sm:$0xf]
  %v108 = vld [vmem:[%s99 + $0x20] sm:$0xf]
  %v109 = vld [vmem:[%s99 + $0x24] sm:$0xf]
  %v110 = vld [vmem:[%s99 + $0x28] sm:$0xf]
  %v111 = vld [vmem:[%s99 + $0x2c] sm:$0xf]
  %v112 = vld [vmem:[%s99 + $0x30] sm:$0xf]
  %v113 = vld [vmem:[%s99 + $0x34] sm:$0x3]
  %v116 = vunpack.c.l.b16 %v97
  %v117 = vunpack.c.l.b16 %v98
  %v118 = vpack.c.b16 %v117, %v116
  %v133 = vunpack.c.l.b16 %v100
  %v134 = vunpack.c.l.b16 %v101
  %v135 = vunpack.c.l.b16 %v102
  %v136 = vunpack.c.l.b16 %v103
  %v137 = vunpack.c.l.b16 %v104
  %v138 = vunpack.c.l.b16 %v105
  %v139 = vunpack.c.l.b16 %v106
  %v140 = vunpack.c.l.b16 %v107
  %v141 = vunpack.c.l.b16 %v108
  %v142 = vunpack.c.l.b16 %v109
  %v143 = vunpack.c.l.b16 %v110
  %v144 = vunpack.c.l.b16 %v111
  %v145 = vunpack.c.l.b16 %v112
  %v146 = vunpack.c.l.b16 %v113
  %v147 = vpack.c.b16 %v134, %v133
  %v148 = vpack.c.b16 %v136, %v135
  %v149 = vpack.c.b16 %v138, %v137
  %v150 = vpack.c.b16 %v140, %v139
  %v151 = vpack.c.b16 %v142, %v141
  %v152 = vpack.c.b16 %v144, %v143
  %v153 = vpack.c.b16 %v146, %v145
  %v161 = vsel %vm74, %v118, 0
  %v164 = vsel %vm78, %v153, 0
  %166 = vmatpush.bf16.msra.mxu0 0
  %167 = vmatpush.bf16.msra.mxu0 %v164
  %168 = vmatpush.bf16.msra.mxu0 %v152
  %169 = vmatpush.bf16.msra.mxu0 %v151
  %170 = vmatpush.bf16.msra.mxu0 %v150
  %171 = vmatpush.bf16.msra.mxu0 %v149
  %172 = vmatpush.bf16.msra.mxu0 %v148
  %173 = vmatpush.bf16.msra.mxu0 %v147
  %174 = vmatmul.bf16.gmra.mxu0 %v161
  %v175 = vpop.f32.mrf.mxu0
  %v176 = vadd.f32 0.0, %v175
  %v177 = vpop.f32.mrf.mxu0
  %v178 = vadd.f32 0.0, %v177
  %179 = vdwg.mxu0
  %182 = vrot.lane.b32.xlu0 %v176, 4
  %v183 = vpop.permute.xlu0 %182
  %184 = vrot.lane.b32.xlu0 %v178, 4
  %v185 = vpop.permute.xlu0 %184
  %vm188 = vcmask 31744
  %v189 = vsel %vm188, %v92, %v183
  %v190 = vsel %vm188, %v94, %v185
  %vm191 = vcmask 64512
  %192 = vst.msk [vmem:[%s2] sm:$0xff] %vm191, %v189
  %193 = vst.msk [vmem:[%s2 + $0x8] sm:$0xff] %vm191, %v190
  // Predicated region
  $region10: #{_lambda_.43} parent=0 // pred_check
    _
  $region11: #{_lambda_.43} parent=0 // pred_check_branch
    %195 = sbr.rel (0) target = $region13
  $region12: #{_lambda_.43} parent=0 // pred_region
    _
  $region13: #{_lambda_.43} parent=0 // pred_fallthru
    _
  // Predicated region
  $region14: #{_lambda_.43} parent=0 // pred_check
    _
  $region15: #{_lambda_.43} parent=0 // pred_check_branch
    %197 = sbr.rel (0) target = $region17
  $region16: #{_lambda_.43} parent=0 // pred_region
    _
  $region17: #{_lambda_.43} parent=0 // pred_fallthru
    _

// kernel: _lambda_.44
$region0: #{_lambda_.44}
  #allocation0 [shape = 'u32[]', space=smem, size = 0x4, offset = 0x4, fixed_abs, tag = 'smem constant byte address 0x4 - core index']
  #allocation1 [shape = 'u32[72,128]{1,0:T(1,128)}', space=vmem, size = 0x9000, scoped, tag = 'internal scratch']
  %s0 = inlined_call_operand.vmem [shape: f32[16,8], index: 0, kind: input, shape index: {}]
  %s1 = inlined_call_operand.hbm [shape: f32[1,8], index: 1, kind: input, shape index: {}]
  %s2 = inlined_call_operand.hbm [shape: f32[1,8], index: 2, kind: input, shape index: {}]
  %s3 = inlined_call_operand.vmem [shape: bf16[8,8], index: 3, kind: input, shape index: {}]
  %s4 = inlined_call_operand.vmem [shape: f32[16,8], index: 4, kind: output, shape index: {}]
  %s5 = sld [smem:[#allocation0]]
  $region34: #{_lambda_.44} parent=0
    _
  %s7 = ssub.s32 1, %s5
  %s8 = scalar_select 0, %s7, %s5
  $region1: #{_lambda_.44} parent=0
    #allocation2 [shape = 'u8[512]{0}', space=vmem, size = 0x400, scoped, tag = 'input window, operand 1, single buffered']
    #allocation3 [shape = 's32[1]{0}', space=sflag, size = 0x4, scoped, tag = 'scoped memory for _lambda_.44']
    #allocation4 [shape = 'u8[512]{0}', space=vmem, size = 0x400, scoped, tag = 'input window, operand 2, single buffered']
    #allocation5 [shape = 's32[1]{0}', space=sflag, size = 0x4, scoped, tag = 'scoped memory for _lambda_.44']
    %9 = vsyncpa [#allocation3], 0
    %10 = vsyncpa [#allocation5], 0
    // Predicated region
    $region2: #{_lambda_.44} parent=1 // pred_check
      _
    $region3: #{_lambda_.44} parent=1 // pred_check_branch
      %12 = sbr.rel (0) target = $region5
    $region4: #{_lambda_.44} parent=1 // pred_region
      _
    $region5: #{_lambda_.44} parent=1 // pred_fallthru
      _
    // Predicated region
    $region6: #{_lambda_.44} parent=1 // pred_check
      _
    $region7: #{_lambda_.44} parent=1 // pred_check_branch
      %14 = sbr.rel (0) target = $region9
    $region8: #{_lambda_.44} parent=1 // pred_region
      %16 = vsyncadd [#allocation3], 0
      %s18 = sshll.u32 %s1, 4
      %s19 = int_to_ptr.hbm [resolvable:$true] %s18
      %s20 = sshll.u32 [#allocation2], 4
      %s21 = int_to_ptr.vmem [resolvable:$true] %s20
      %23 = dma.hbm_to_vmem [thread:$0]  %s19, 16, %s21, [#allocation3]
    $region9: #{_lambda_.44} parent=1 // pred_fallthru
      _
    // Predicated region
    $region10: #{_lambda_.44} parent=1 // pred_check
      _
    $region11: #{_lambda_.44} parent=1 // pred_check_branch
      %25 = sbr.rel (0) target = $region13
    $region12: #{_lambda_.44} parent=1 // pred_region
      %27 = vsyncadd [#allocation5], 0
      %s29 = sshll.u32 %s2, 4
      %s30 = int_to_ptr.hbm [resolvable:$true] %s29
      %s31 = sshll.u32 [#allocation4], 4
      %s32 = int_to_ptr.vmem [resolvable:$true] %s31
      %34 = dma.hbm_to_vmem [thread:$0]  %s30, 16, %s32, [#allocation5]
    $region13: #{_lambda_.44} parent=1 // pred_fallthru
      _
    // Predicated region
    $region14: #{_lambda_.44} parent=1 // pred_check
      _
    $region15: #{_lambda_.44} parent=1 // pred_check_branch
      %36 = sbr.rel (0) target = $region17
    $region16: #{_lambda_.44} parent=1 // pred_region
      _
    $region17: #{_lambda_.44} parent=1 // pred_fallthru
      _
    // Predicated region
    $region18: #{_lambda_.44} parent=1 // pred_check
      _
    $region19: #{_lambda_.44} parent=1 // pred_check_branch
      %38 = sbr.rel (0) target = $region21
    $region20: #{_lambda_.44} parent=1 // pred_region
      %40 = dma.done [#allocation3], 16
    $region21: #{_lambda_.44} parent=1 // pred_fallthru
      _
    // Predicated region
    $region22: #{_lambda_.44} parent=1 // pred_check
      _
    $region23: #{_lambda_.44} parent=1 // pred_check_branch
      %42 = sbr.rel (0) target = $region25
    $region24: #{_lambda_.44} parent=1 // pred_region
      %44 = dma.done [#allocation5], 16
    $region25: #{_lambda_.44} parent=1 // pred_fallthru
      _
    %v46 = vld [vmem:[%s0] sm:$0xff]
    %v47 = vld [vmem:[%s0 + $0x8] sm:$0xff]
    %v48 = vld [vmem:[#allocation2] sm:$0x1]
    %v50 = vperm.slane %v48, 0
    %v52 = vmul.f32 %v46, %v50
    %v53 = vmul.f32 %v47, %v50
    %v54 = vld [vmem:[#allocation4] sm:$0x1]
    %v56 = vperm.slane %v54, 0
    %v58 = vadd.f32 %v52, %v56
    %v59 = vadd.f32 %v53, %v56
    %v60 = vmax.f32 %v58, 0.0
    %v61 = vmax.f32 %v59, 0.0
    %v62 = vpack.c.bf16 %v61, %v60
    %v63 = vld [vmem:[%s3] sm:$0xf]
    %vm64 = vcmask 64512
    %v66 = vsel %vm64, %v62, 0
    %vm68 = vcmask 1043456
    %v70 = vsel %vm68, %v63, 0
    %72 = vmatpush.bf16.msra.mxu0 0
    %73 = vmatpush.bf16.msra.mxu0 0
    %74 = vmatpush.bf16.msra.mxu0 0
    %75 = vmatpush.bf16.msra.mxu0 0
    %76 = vmatpush.bf16.msra.mxu0 0
    %77 = vmatpush.bf16.msra.mxu0 0
    %78 = vmatpush.bf16.msra.mxu0 0
    %79 = vmatpush.bf16.msra.mxu0 %v70
    %80 = vmatmul.bf16.gmra.mxu0 %v66
    %v81 = vpop.f32.mrf.mxu0
    %v82 = vadd.f32 0.0, %v81
    %v83 = vpop.f32.mrf.mxu0
    %v84 = vadd.f32 0.0, %v83
    %85 = vdwg.mxu0
    %86 = vst.msk [vmem:[%s4] sm:$0xff] %vm64, %v82
    %87 = vst.msk [vmem:[%s4 + $0x8] sm:$0xff] %vm64, %v84
    // Predicated region
    $region26: #{_lambda_.44} parent=1 // pred_check
      _
    $region27: #{_lambda_.44} parent=1 // pred_check_branch
      %89 = sbr.rel (0) target = $region29
    $region28: #{_lambda_.44} parent=1 // pred_region
      _
    $region29: #{_lambda_.44} parent=1 // pred_fallthru
      _
    // Predicated region
    $region30: #{_lambda_.44} parent=1 // pred_check
      _
    $region31: #{_lambda_.44} parent=1 // pred_check_branch
      %91 = sbr.rel (0) target = $region33
    $region32: #{_lambda_.44} parent=1 // pred_region
      _
    $region33: #{_lambda_.44} parent=1 // pred_fallthru
      _
    %92 = vsyncpa [#allocation3], 1
    %93 = vsyncpa [#allocation5], 1

// kernel: _lambda_.45
$region0: #{_lambda_.45}
  #allocation0 [shape = 'u32[]', space=smem, size = 0x4, offset = 0x4, fixed_abs, tag = 'smem constant byte address 0x4 - core index']
  #allocation1 [shape = 'u32[72,128]{1,0:T(1,128)}', space=vmem, size = 0x9000, scoped, tag = 'internal scratch']
  %s0 = inlined_call_operand.vmem [shape: f32[16,8], index: 0, kind: input, shape index: {}]
  %s1 = inlined_call_operand.hbm [shape: f32[1,8], index: 1, kind: input, shape index: {}]
  %s2 = inlined_call_operand.hbm [shape: f32[1,8], index: 2, kind: input, shape index: {}]
  %s3 = inlined_call_operand.vmem [shape: bf16[8,8], index: 3, kind: input, shape index: {}]
  %s4 = inlined_call_operand.vmem [shape: f32[16,8], index: 4, kind: input, shape index: {}]
  %s5 = inlined_call_operand.vmem [shape: f32[16,8], index: 5, kind: output, shape index: {}]
  %s6 = sld [smem:[#allocation0]]
  $region38: #{_lambda_.45} parent=0
    _
  %s8 = ssub.s32 1, %s6
  %s9 = scalar_select 0, %s8, %s6
  $region1: #{_lambda_.45} parent=0
    #allocation2 [shape = 'u8[512]{0}', space=vmem, size = 0x400, scoped, tag = 'input window, operand 1, single buffered']
    #allocation3 [shape = 's32[1]{0}', space=sflag, size = 0x4, scoped, tag = 'scoped memory for _lambda_.45']
    #allocation4 [shape = 'u8[512]{0}', space=vmem, size = 0x400, scoped, tag = 'input window, operand 2, single buffered']
    #allocation5 [shape = 's32[1]{0}', space=sflag, size = 0x4, scoped, tag = 'scoped memory for _lambda_.45']
    %10 = vsyncpa [#allocation3], 0
    %11 = vsyncpa [#allocation5], 0
    // Predicated region
    $region2: #{_lambda_.45} parent=1 // pred_check
      _
    $region3: #{_lambda_.45} parent=1 // pred_check_branch
      %13 = sbr.rel (0) target = $region5
    $region4: #{_lambda_.45} parent=1 // pred_region
      _
    $region5: #{_lambda_.45} parent=1 // pred_fallthru
      _
    // Predicated region
    $region6: #{_lambda_.45} parent=1 // pred_check
      _
    $region7: #{_lambda_.45} parent=1 // pred_check_branch
      %15 = sbr.rel (0) target = $region9
    $region8: #{_lambda_.45} parent=1 // pred_region
      %17 = vsyncadd [#allocation3], 0
      %s19 = sshll.u32 %s1, 4
      %s20 = int_to_ptr.hbm [resolvable:$true] %s19
      %s21 = sshll.u32 [#allocation2], 4
      %s22 = int_to_ptr.vmem [resolvable:$true] %s21
      %24 = dma.hbm_to_vmem [thread:$0]  %s20, 16, %s22, [#allocation3]
    $region9: #{_lambda_.45} parent=1 // pred_fallthru
      _
    // Predicated region
    $region10: #{_lambda_.45} parent=1 // pred_check
      _
    $region11: #{_lambda_.45} parent=1 // pred_check_branch
      %26 = sbr.rel (0) target = $region13
    $region12: #{_lambda_.45} parent=1 // pred_region
      %28 = vsyncadd [#allocation5], 0
      %s30 = sshll.u32 %s2, 4
      %s31 = int_to_ptr.hbm [resolvable:$true] %s30
      %s32 = sshll.u32 [#allocation4], 4
      %s33 = int_to_ptr.vmem [resolvable:$true] %s32
      %35 = dma.hbm_to_vmem [thread:$0]  %s31, 16, %s33, [#allocation5]
    $region13: #{_lambda_.45} parent=1 // pred_fallthru
      _
    // Predicated region
    $region14: #{_lambda_.45} parent=1 // pred_check
      _
    $region15: #{_lambda_.45} parent=1 // pred_check_branch
      %37 = sbr.rel (0) target = $region17
    $region16: #{_lambda_.45} parent=1 // pred_region
      _
    $region17: #{_lambda_.45} parent=1 // pred_fallthru
      _
    // Predicated region
    $region18: #{_lambda_.45} parent=1 // pred_check
      _
    $region19: #{_lambda_.45} parent=1 // pred_check_branch
      %39 = sbr.rel (0) target = $region21
    $region20: #{_lambda_.45} parent=1 // pred_region
      _
    $region21: #{_lambda_.45} parent=1 // pred_fallthru
      _
    // Predicated region
    $region22: #{_lambda_.45} parent=1 // pred_check
      _
    $region23: #{_lambda_.45} parent=1 // pred_check_branch
      %41 = sbr.rel (0) target = $region25
    $region24: #{_lambda_.45} parent=1 // pred_region
      %43 = dma.done [#allocation3], 16
    $region25: #{_lambda_.45} parent=1 // pred_fallthru
      _
    // Predicated region
    $region26: #{_lambda_.45} parent=1 // pred_check
      _
    $region27: #{_lambda_.45} parent=1 // pred_check_branch
      %45 = sbr.rel (0) target = $region29
    $region28: #{_lambda_.45} parent=1 // pred_region
      %47 = dma.done [#allocation5], 16
    $region29: #{_lambda_.45} parent=1 // pred_fallthru
      _
    %v49 = vld [vmem:[%s0] sm:$0xff]
    %v50 = vld [vmem:[%s0 + $0x8] sm:$0xff]
    %v51 = vld [vmem:[#allocation2] sm:$0x1]
    %v53 = vperm.slane %v51, 0
    %v55 = vmul.f32 %v49, %v53
    %v56 = vmul.f32 %v50, %v53
    %v57 = vld [vmem:[#allocation4] sm:$0x1]
    %v59 = vperm.slane %v57, 0
    %v61 = vadd.f32 %v55, %v59
    %v62 = vadd.f32 %v56, %v59
    %v63 = vmax.f32 %v61, 0.0
    %v64 = vmax.f32 %v62, 0.0
    %v65 = vld [vmem:[%s4] sm:$0xff]
    %v66 = vld [vmem:[%s4 + $0x8] sm:$0xff]
    %v67 = vpack.c.bf16 %v64, %v63
    %v68 = vld [vmem:[%s3] sm:$0xf]
    %vm69 = vcmask 64512
    %v71 = vsel %vm69, %v67, 0
    %vm73 = vcmask 1043456
    %v75 = vsel %vm73, %v68, 0
    %77 = vmatpush.bf16.msra.mxu0 0
    %78 = vmatpush.bf16.msra.mxu0 0
    %79 = vmatpush.bf16.msra.mxu0 0
    %80 = vmatpush.bf16.msra.mxu0 0
    %81 = vmatpush.bf16.msra.mxu0 0
    %82 = vmatpush.bf16.msra.mxu0 0
    %83 = vmatpush.bf16.msra.mxu0 0
    %84 = vmatpush.bf16.msra.mxu0 %v75
    %85 = vmatmul.bf16.gmra.mxu0 %v71
    %v86 = vpop.f32.mrf.mxu0
    %v87 = vadd.f32 0.0, %v86
    %v88 = vpop.f32.mrf.mxu0
    %v89 = vadd.f32 0.0, %v88
    %90 = vdwg.mxu0
    %v91 = vadd.f32 %v65, %v87
    %v92 = vadd.f32 %v66, %v89
    %93 = vst.msk [vmem:[%s5] sm:$0xff] %vm69, %v91
    %94 = vst.msk [vmem:[%s5 + $0x8] sm:$0xff] %vm69, %v92
    // Predicated region
    $region30: #{_lambda_.45} parent=1 // pred_check
      _
    $region31: #{_lambda_.45} parent=1 // pred_check_branch
      %96 = sbr.rel (0) target = $region33
    $region32: #{_lambda_.45} parent=1 // pred_region
      _
    $region33: #{_lambda_.45} parent=1 // pred_fallthru
      _
    // Predicated region
    $region34: #{_lambda_.45} parent=1 // pred_check
      _
    $region35: #{_lambda_.45} parent=1 // pred_check_branch
      %98 = sbr.rel (0) target = $region37
    $region36: #{_lambda_.45} parent=1 // pred_region
      _
    $region37: #{_lambda_.45} parent=1 // pred_fallthru
      _
    %99 = vsyncpa [#allocation3], 1
    %100 = vsyncpa [#allocation5], 1

// kernel: _lambda_.46
$region0: #{_lambda_.46}
  #allocation0 [shape = 'u32[]', space=smem, size = 0x4, offset = 0x4, fixed_abs, tag = 'smem constant byte address 0x4 - core index']
  #allocation1 [shape = 'u32[72,128]{1,0:T(1,128)}', space=vmem, size = 0x9000, scoped, tag = 'internal scratch']
  %s0 = inlined_call_operand.vmem [shape: f32[16,8], index: 0, kind: input, shape index: {}]
  %s1 = inlined_call_operand.hbm [shape: f32[1,8], index: 1, kind: input, shape index: {}]
  %s2 = inlined_call_operand.hbm [shape: f32[1,8], index: 2, kind: input, shape index: {}]
  %s3 = inlined_call_operand.vmem [shape: bf16[8,2], index: 3, kind: input, shape index: {}]
  %s4 = inlined_call_operand.vmem [shape: f32[16,2], index: 4, kind: output, shape index: {}]
  %s5 = sld [smem:[#allocation0]]
  $region34: #{_lambda_.46} parent=0
    _
  %s7 = ssub.s32 1, %s5
  %s8 = scalar_select 0, %s7, %s5
  $region1: #{_lambda_.46} parent=0
    #allocation2 [shape = 'u8[512]{0}', space=vmem, size = 0x400, scoped, tag = 'input window, operand 1, single buffered']
    #allocation3 [shape = 's32[1]{0}', space=sflag, size = 0x4, scoped, tag = 'scoped memory for _lambda_.46']
    #allocation4 [shape = 'u8[512]{0}', space=vmem, size = 0x400, scoped, tag = 'input window, operand 2, single buffered']
    #allocation5 [shape = 's32[1]{0}', space=sflag, size = 0x4, scoped, tag = 'scoped memory for _lambda_.46']
    %9 = vsyncpa [#allocation3], 0
    %10 = vsyncpa [#allocation5], 0
    // Predicated region
    $region2: #{_lambda_.46} parent=1 // pred_check
      _
    $region3: #{_lambda_.46} parent=1 // pred_check_branch
      %12 = sbr.rel (0) target = $region5
    $region4: #{_lambda_.46} parent=1 // pred_region
      _
    $region5: #{_lambda_.46} parent=1 // pred_fallthru
      _
    // Predicated region
    $region6: #{_lambda_.46} parent=1 // pred_check
      _
    $region7: #{_lambda_.46} parent=1 // pred_check_branch
      %14 = sbr.rel (0) target = $region9
    $region8: #{_lambda_.46} parent=1 // pred_region
      %16 = vsyncadd [#allocation3], 0
      %s18 = sshll.u32 %s1, 4
      %s19 = int_to_ptr.hbm [resolvable:$true] %s18
      %s20 = sshll.u32 [#allocation2], 4
      %s21 = int_to_ptr.vmem [resolvable:$true] %s20
      %23 = dma.hbm_to_vmem [thread:$0]  %s19, 16, %s21, [#allocation3]
    $region9: #{_lambda_.46} parent=1 // pred_fallthru
      _
    // Predicated region
    $region10: #{_lambda_.46} parent=1 // pred_check
      _
    $region11: #{_lambda_.46} parent=1 // pred_check_branch
      %25 = sbr.rel (0) target = $region13
    $region12: #{_lambda_.46} parent=1 // pred_region
      %27 = vsyncadd [#allocation5], 0
      %s29 = sshll.u32 %s2, 4
      %s30 = int_to_ptr.hbm [resolvable:$true] %s29
      %s31 = sshll.u32 [#allocation4], 4
      %s32 = int_to_ptr.vmem [resolvable:$true] %s31
      %34 = dma.hbm_to_vmem [thread:$0]  %s30, 16, %s32, [#allocation5]
    $region13: #{_lambda_.46} parent=1 // pred_fallthru
      _
    // Predicated region
    $region14: #{_lambda_.46} parent=1 // pred_check
      _
    $region15: #{_lambda_.46} parent=1 // pred_check_branch
      %36 = sbr.rel (0) target = $region17
    $region16: #{_lambda_.46} parent=1 // pred_region
      _
    $region17: #{_lambda_.46} parent=1 // pred_fallthru
      _
    // Predicated region
    $region18: #{_lambda_.46} parent=1 // pred_check
      _
    $region19: #{_lambda_.46} parent=1 // pred_check_branch
      %38 = sbr.rel (0) target = $region21
    $region20: #{_lambda_.46} parent=1 // pred_region
      %40 = dma.done [#allocation3], 16
    $region21: #{_lambda_.46} parent=1 // pred_fallthru
      _
    // Predicated region
    $region22: #{_lambda_.46} parent=1 // pred_check
      _
    $region23: #{_lambda_.46} parent=1 // pred_check_branch
      %42 = sbr.rel (0) target = $region25
    $region24: #{_lambda_.46} parent=1 // pred_region
      %44 = dma.done [#allocation5], 16
    $region25: #{_lambda_.46} parent=1 // pred_fallthru
      _
    %v46 = vld [vmem:[%s0] sm:$0xff]
    %v47 = vld [vmem:[%s0 + $0x8] sm:$0xff]
    %v48 = vld [vmem:[#allocation2] sm:$0x1]
    %v50 = vperm.slane %v48, 0
    %v52 = vmul.f32 %v46, %v50
    %v53 = vmul.f32 %v47, %v50
    %v54 = vld [vmem:[#allocation4] sm:$0x1]
    %v56 = vperm.slane %v54, 0
    %v58 = vadd.f32 %v52, %v56
    %v59 = vadd.f32 %v53, %v56
    %v60 = vmax.f32 %v58, 0.0
    %v61 = vmax.f32 %v59, 0.0
    %v62 = vpack.c.bf16 %v61, %v60
    %v63 = vld [vmem:[%s3] sm:$0xf]
    %vm64 = vcmask 64512
    %v66 = vsel %vm64, %v62, 0
    %vm68 = vcmask 1043456
    %v70 = vsel %vm68, %v63, 0
    %72 = vmatpush.bf16.msra.mxu0 0
    %73 = vmatpush.bf16.msra.mxu0 0
    %74 = vmatpush.bf16.msra.mxu0 0
    %75 = vmatpush.bf16.msra.mxu0 0
    %76 = vmatpush.bf16.msra.mxu0 0
    %77 = vmatpush.bf16.msra.mxu0 0
    %78 = vmatpush.bf16.msra.mxu0 0
    %79 = vmatpush.bf16.msra.mxu0 %v70
    %80 = vmatmul.bf16.gmra.mxu0 %v66
    %v81 = vpop.f32.mrf.mxu0
    %v82 = vadd.f32 0.0, %v81
    %v83 = vpop.f32.mrf.mxu0
    %v84 = vadd.f32 0.0, %v83
    %85 = vdwg.mxu0
    %vm86 = vcmask 15360
    %87 = vst.msk [vmem:[%s4] sm:$0xff] %vm86, %v82
    %88 = vst.msk [vmem:[%s4 + $0x8] sm:$0xff] %vm86, %v84
    // Predicated region
    $region26: #{_lambda_.46} parent=1 // pred_check
      _
    $region27: #{_lambda_.46} parent=1 // pred_check_branch
      %90 = sbr.rel (0) target = $region29
    $region28: #{_lambda_.46} parent=1 // pred_region
      _
    $region29: #{_lambda_.46} parent=1 // pred_fallthru
      _
    // Predicated region
    $region30: #{_lambda_.46} parent=1 // pred_check
      _
    $region31: #{_lambda_.46} parent=1 // pred_check_branch
      %92 = sbr.rel (0) target = $region33
    $region32: #{_lambda_.46} parent=1 // pred_region
      _
    $region33: #{_lambda_.46} parent=1 // pred_fallthru
      _
    %93 = vsyncpa [#allocation3], 1
    %94 = vsyncpa [#allocation5], 1

// kernel: tile.58
$region0: #{tile.58}
  #allocation0 [shape = 's32[1]{0}', space=sflag, size = 0x4, scoped, tag = 'scoped memory for tile.58']
  %s0 = inlined_call_operand.vmem [shape: f32[8], index: 0, kind: input, shape index: {}]
  %s1 = inlined_call_operand.vmem [shape: f32[4,8], index: 1, kind: output, shape index: {}]
  // Predicated region
  $region2: #{tile.58} parent=0 // pred_check
    _
  $region3: #{tile.58} parent=0 // pred_check_branch
    %3 = sbr.rel (0) target = $region5
  $region4: #{tile.58} parent=0 // pred_region
    _
  $region5: #{tile.58} parent=0 // pred_fallthru
    _
  %v4 = vld [vmem:[%s0] ss:$0 sm:$0xff]
  %5 = vst [vmem:[%s1] sm:$0xf] %v4

// kernel: tile.59
$region0: #{tile.59}
  %s0 = inlined_call_operand.vmem [shape: f32[4,8], index: 0, kind: input, shape index: {}]
  %s1 = inlined_call_operand.vmem [shape: f32[1,32], index: 1, kind: output, shape index: {}]
  $region1: #{tile.59} parent=0
    #allocation0 [shape = 'u8[4096]{0}', space=vmem, size = 0x1000, scoped, tag = 'scoped mem for output reshape']
    #allocation1 [shape = 'u8[4096]{0}', space=vmem, size = 0x1000, scoped, tag = 'scoped mem for input reshape']
    %s3 = ssub.s32 16, 1
    %v4 = vld [vmem:[%s0] sm:%s3]
    %5 = vst [vmem:[#allocation1] sm:%s3] %v4
    %v6 = vld [vmem:[#allocation1] sm:$0x1]
    %vm7 = vcmask 64512
    %8 = vst.msk [vmem:[#allocation0] sm:$0x1] %vm7, %v6
    %s9 = scalar_lea.vmem [#allocation1], 3
    %v10 = vld [vmem:[%s9] sm:$0x1]
    %11 = vrot.lane.b32.xlu0 %v10, 24
    %v12 = vpop.permute.xlu0 %11
    %vm13 = vcmask 261312
    %14 = vst.msk [vmem:[#allocation0] sm:$0x1] %vm13, %v12
    %s15 = scalar_lea.vmem [#allocation1], 2
    %v16 = vld [vmem:[%s15] sm:$0x1]
    %17 = vrot.lane.b32.xlu0 %v16, 16
    %v18 = vpop.permute.xlu0 %17
    %vm19 = vcmask 195712
    %20 = vst.msk [vmem:[#allocation0] sm:$0x1] %vm19, %v18
    %s21 = scalar_lea.vmem [#allocation1], 1
    %v22 = vld [vmem:[%s21] sm:$0x1]
    %23 = vrot.lane.b32.xlu0 %v22, 8
    %v24 = vpop.permute.xlu0 %23
    %vm25 = vcmask 130112
    %26 = vst.msk [vmem:[#allocation0] sm:$0x1] %vm25, %v24
    %s28 = ssub.s32 2, 1
    %v29 = vld [vmem:[#allocation0] sm:%s28]
    %s31 = ssub.s32 2, 1
    %32 = vst [vmem:[%s1] sm:%s31] %v29

// kernel: _lambda_.47
$region0: #{_lambda_.47}
  #allocation0 [shape = 'u32[]', space=smem, size = 0x4, offset = 0x4, fixed_abs, tag = 'smem constant byte address 0x4 - core index']
  #allocation1 [shape = 'u32[72,128]{1,0:T(1,128)}', space=vmem, size = 0x9000, scoped, tag = 'internal scratch']
  %s0 = inlined_call_operand.vmem [shape: f32[16,2], index: 0, kind: input, shape index: {}]
  %s1 = inlined_call_operand.hbm [shape: f32[1,2], index: 1, kind: input, shape index: {}]
  %s2 = inlined_call_operand.hbm [shape: f32[1,2], index: 2, kind: input, shape index: {}]
  %s3 = inlined_call_operand.hbm [shape: bf16[2,8], index: 3, kind: input, shape index: {}]
  %s4 = inlined_call_operand.vmem [shape: f32[16,8], index: 4, kind: input, shape index: {}]
  %s5 = inlined_call_operand.vmem [shape: f32[16,8], index: 5, kind: output, shape index: {}]
  %s6 = sld [smem:[#allocation0]]
  $region42: #{_lambda_.47} parent=0
    _
  %s8 = ssub.s32 1, %s6
  %s9 = scalar_select 0, %s8, %s6
  $region1: #{_lambda_.47} parent=0
    #allocation2 [shape = 'u8[512]{0}', space=vmem, size = 0x400, scoped, tag = 'input window, operand 1, single buffered']
    #allocation3 [shape = 's32[1]{0}', space=sflag, size = 0x4, scoped, tag = 'scoped memory for _lambda_.47']
    #allocation4 [shape = 'u8[512]{0}', space=vmem, size = 0x400, scoped, tag = 'input window, operand 2, single buffered']
    #allocation5 [shape = 's32[1]{0}', space=sflag, size = 0x4, scoped, tag = 'scoped memory for _lambda_.47']
    #allocation6 [shape = 'u8[512]{0}', space=vmem, size = 0x400, scoped, tag = 'input window, operand 3, single buffered']
    %10 = vsyncpa [#allocation3], 0
    %11 = vsyncpa [#allocation5], 0
    // Predicated region
    $region2: #{_lambda_.47} parent=1 // pred_check
      _
    $region3: #{_lambda_.47} parent=1 // pred_check_branch
      %13 = sbr.rel (0) target = $region5
    $region4: #{_lambda_.47} parent=1 // pred_region
      _
    $region5: #{_lambda_.47} parent=1 // pred_fallthru
      _
    // Predicated region
    $region6: #{_lambda_.47} parent=1 // pred_check
      _
    $region7: #{_lambda_.47} parent=1 // pred_check_branch
      %15 = sbr.rel (0) target = $region9
    $region8: #{_lambda_.47} parent=1 // pred_region
      %17 = vsyncadd [#allocation3], 0
      %s19 = sshll.u32 %s1, 4
      %s20 = int_to_ptr.hbm [resolvable:$true] %s19
      %s21 = sshll.u32 [#allocation2], 4
      %s22 = int_to_ptr.vmem [resolvable:$true] %s21
      %24 = dma.hbm_to_vmem [thread:$0]  %s20, 16, %s22, [#allocation3]
    $region9: #{_lambda_.47} parent=1 // pred_fallthru
      _
    // Predicated region
    $region10: #{_lambda_.47} parent=1 // pred_check
      _
    $region11: #{_lambda_.47} parent=1 // pred_check_branch
      %26 = sbr.rel (0) target = $region13
    $region12: #{_lambda_.47} parent=1 // pred_region
      %28 = vsyncadd [#allocation5], 0
      %s30 = sshll.u32 %s2, 4
      %s31 = int_to_ptr.hbm [resolvable:$true] %s30
      %s32 = sshll.u32 [#allocation4], 4
      %s33 = int_to_ptr.vmem [resolvable:$true] %s32
      %35 = dma.hbm_to_vmem [thread:$0]  %s31, 16, %s33, [#allocation5]
    $region13: #{_lambda_.47} parent=1 // pred_fallthru
      _
    // Predicated region
    $region14: #{_lambda_.47} parent=1 // pred_check
      _
    $region15: #{_lambda_.47} parent=1 // pred_check_branch
      %37 = sbr.rel (0) target = $region17
    $region16: #{_lambda_.47} parent=1 // pred_region
      %39 = vsyncadd [#allocation5], 0
      %s41 = sshll.u32 %s3, 4
      %s42 = int_to_ptr.hbm [resolvable:$true] %s41
      %s43 = sshll.u32 [#allocation6], 4
      %s44 = int_to_ptr.vmem [resolvable:$true] %s43
      %46 = dma.hbm_to_vmem [thread:$0]  %s42, 16, %s44, [#allocation5]
    $region17: #{_lambda_.47} parent=1 // pred_fallthru
      _
    // Predicated region
    $region18: #{_lambda_.47} parent=1 // pred_check
      _
    $region19: #{_lambda_.47} parent=1 // pred_check_branch
      %48 = sbr.rel (0) target = $region21
    $region20: #{_lambda_.47} parent=1 // pred_region
      _
    $region21: #{_lambda_.47} parent=1 // pred_fallthru
      _
    // Predicated region
    $region22: #{_lambda_.47} parent=1 // pred_check
      _
    $region23: #{_lambda_.47} parent=1 // pred_check_branch
      %50 = sbr.rel (0) target = $region25
    $region24: #{_lambda_.47} parent=1 // pred_region
      %52 = dma.done [#allocation3], 16
    $region25: #{_lambda_.47} parent=1 // pred_fallthru
      _
    // Predicated region
    $region26: #{_lambda_.47} parent=1 // pred_check
      _
    $region27: #{_lambda_.47} parent=1 // pred_check_branch
      %54 = sbr.rel (0) target = $region29
    $region28: #{_lambda_.47} parent=1 // pred_region
      %56 = dma.done [#allocation5], 16
    $region29: #{_lambda_.47} parent=1 // pred_fallthru
      _
    // Predicated region
    $region30: #{_lambda_.47} parent=1 // pred_check
      _
    $region31: #{_lambda_.47} parent=1 // pred_check_branch
      %58 = sbr.rel (0) target = $region33
    $region32: #{_lambda_.47} parent=1 // pred_region
      %60 = dma.done [#allocation5], 16
    $region33: #{_lambda_.47} parent=1 // pred_fallthru
      _
    %v62 = vld [vmem:[%s0] sm:$0xff]
    %v63 = vld [vmem:[%s0 + $0x8] sm:$0xff]
    %v64 = vld [vmem:[#allocation2] sm:$0x1]
    %v66 = vperm.slane %v64, 0
    %v68 = vmul.f32 %v62, %v66
    %v69 = vmul.f32 %v63, %v66
    %v70 = vld [vmem:[#allocation4] sm:$0x1]
    %v72 = vperm.slane %v70, 0
    %v74 = vadd.f32 %v68, %v72
    %v75 = vadd.f32 %v69, %v72
    %v76 = vmax.f32 %v74, 0.0
    %v77 = vmax.f32 %v75, 0.0
    %v78 = vld [vmem:[%s4] sm:$0xff]
    %v79 = vld [vmem:[%s4 + $0x8] sm:$0xff]
    %v80 = vpack.c.bf16 %v77, %v76
    %v81 = vld [vmem:[#allocation6] sm:$0x1]
    %vm82 = vcmask 15360
    %v84 = vsel %vm82, %v80, 0
    %vm86 = vcmask 1040384
    %v88 = vsel %vm86, %v81, 0
    %90 = vmatpush.bf16.msra.mxu0 0
    %91 = vmatpush.bf16.msra.mxu0 0
    %92 = vmatpush.bf16.msra.mxu0 0
    %93 = vmatpush.bf16.msra.mxu0 0
    %94 = vmatpush.bf16.msra.mxu0 0
    %95 = vmatpush.bf16.msra.mxu0 0
    %96 = vmatpush.bf16.msra.mxu0 0
    %97 = vmatpush.bf16.msra.mxu0 %v88
    %98 = vmatmul.bf16.gmra.mxu0 %v84
    %v99 = vpop.f32.mrf.mxu0
    %v100 = vadd.f32 0.0, %v99
    %v101 = vpop.f32.mrf.mxu0
    %v102 = vadd.f32 0.0, %v101
    %103 = vdwg.mxu0
    %v104 = vadd.f32 %v78, %v100
    %v105 = vadd.f32 %v79, %v102
    %vm106 = vcmask 64512
    %107 = vst.msk [vmem:[%s5] sm:$0xff] %vm106, %v104
    %108 = vst.msk [vmem:[%s5 + $0x8] sm:$0xff] %vm106, %v105
    // Predicated region
    $region34: #{_lambda_.47} parent=1 // pred_check
      _
    $region35: #{_lambda_.47} parent=1 // pred_check_branch
      %110 = sbr.rel (0) target = $region37
    $region36: #{_lambda_.47} parent=1 // pred_region
      _
    $region37: #{_lambda_.47} parent=1 // pred_fallthru
      _
    // Predicated region
    $region38: #{_lambda_.47} parent=1 // pred_check
      _
    $region39: #{_lambda_.47} parent=1 // pred_check_branch
      %112 = sbr.rel (0) target = $region41
    $region40: #{_lambda_.47} parent=1 // pred_region
      _
    $region41: #{_lambda_.47} parent=1 // pred_fallthru
      _
    %113 = vsyncpa [#allocation3], 1
    %114 = vsyncpa [#allocation5], 1

// kernel: _lambda_.48
$region0: #{_lambda_.48}
  #allocation0 [shape = 'u32[]', space=smem, size = 0x4, offset = 0x4, fixed_abs, tag = 'smem constant byte address 0x4 - core index']
  #allocation1 [shape = 'u32[72,128]{1,0:T(1,128)}', space=vmem, size = 0x9000, scoped, tag = 'internal scratch']
  %s0 = inlined_call_operand.vmem [shape: f32[8,32], index: 0, kind: input, shape index: {}]
  %s1 = inlined_call_operand.vmem [shape: f32[1,32], index: 1, kind: input, shape index: {}]
  %s2 = inlined_call_operand.vmem [shape: f32[1,32], index: 2, kind: input, shape index: {}]
  %s3 = inlined_call_operand.vmem [shape: f32[8,32], index: 3, kind: output, shape index: {}]
  %s4 = sld [smem:[#allocation0]]
  $region22: #{_lambda_.48} parent=0
    _
  %s6 = ssub.s32 1, %s4
  %s7 = scalar_select 0, %s6, %s4
  // Predicated region
  $region2: #{_lambda_.48} parent=0 // pred_check
    _
  $region3: #{_lambda_.48} parent=0 // pred_check_branch
    %9 = sbr.rel (0) target = $region5
  $region4: #{_lambda_.48} parent=0 // pred_region
    _
  $region5: #{_lambda_.48} parent=0 // pred_fallthru
    _
  // Predicated region
  $region6: #{_lambda_.48} parent=0 // pred_check
    _
  $region7: #{_lambda_.48} parent=0 // pred_check_branch
    %11 = sbr.rel (0) target = $region9
  $region8: #{_lambda_.48} parent=0 // pred_region
    _
  $region9: #{_lambda_.48} parent=0 // pred_fallthru
    _
  // Predicated region
  $region10: #{_lambda_.48} parent=0 // pred_check
    _
  $region11: #{_lambda_.48} parent=0 // pred_check_branch
    %13 = sbr.rel (0) target = $region13
  $region12: #{_lambda_.48} parent=0 // pred_region
    _
  $region13: #{_lambda_.48} parent=0 // pred_fallthru
    _
  %v14 = vld [vmem:[%s0] sm:$0xff]
  %v15 = vld [vmem:[%s1] sm:$0x1]
  %v17 = vperm.slane %v15, 0
  %v19 = vmul.f32 %v14, %v17
  %v20 = vld [vmem:[%s2] sm:$0x1]
  %v22 = vperm.slane %v20, 0
  %v24 = vadd.f32 %v19, %v22
  %v25 = vmax.f32 %v24, 0.0
  %vm26 = vcmask 261120
  %27 = vst.msk [vmem:[%s3] sm:$0xff] %vm26, %v25
  // Predicated region
  $region14: #{_lambda_.48} parent=0 // pred_check
    _
  $region15: #{_lambda_.48} parent=0 // pred_check_branch
    %29 = sbr.rel (0) target = $region17
  $region16: #{_lambda_.48} parent=0 // pred_region
    _
  $region17: #{_lambda_.48} parent=0 // pred_fallthru
    _
  // Predicated region
  $region18: #{_lambda_.48} parent=0 // pred_check
    _
  $region19: #{_lambda_.48} parent=0 // pred_check_branch
    %31 = sbr.rel (0) target = $region21
  $region20: #{_lambda_.48} parent=0 // pred_region
    _
  $region21: #{_lambda_.48} parent=0 // pred_fallthru
    _

// kernel: _lambda_.51
$region0: #{_lambda_.51}
  #allocation0 [shape = 'u32[]', space=smem, size = 0x4, offset = 0x4, fixed_abs, tag = 'smem constant byte address 0x4 - core index']
  #allocation1 [shape = 'u32[72,128]{1,0:T(1,128)}', space=vmem, size = 0x9000, scoped, tag = 'internal scratch']
  %s0 = inlined_call_operand.vmem [shape: bf16[2,16,36], index: 0, kind: input, shape index: {}]
  %s1 = inlined_call_operand.vmem [shape: bf16[2,36,4], index: 1, kind: input, shape index: {}]
  %s2 = inlined_call_operand.vmem [shape: f32[16,8], index: 2, kind: input, shape index: {}]
  %s3 = inlined_call_operand.vmem [shape: f32[16,8], index: 3, kind: output, shape index: {}]
  %s4 = sld [smem:[#allocation0]]
  $region22: #{_lambda_.51} parent=0
    _
  %s6 = ssub.s32 1, %s4
  %s7 = scalar_select 0, %s6, %s4
  // Predicated region
  $region2: #{_lambda_.51} parent=0 // pred_check
    _
  $region3: #{_lambda_.51} parent=0 // pred_check_branch
    %9 = sbr.rel (0) target = $region5
  $region4: #{_lambda_.51} parent=0 // pred_region
    _
  $region5: #{_lambda_.51} parent=0 // pred_fallthru
    _
  // Predicated region
  $region6: #{_lambda_.51} parent=0 // pred_check
    _
  $region7: #{_lambda_.51} parent=0 // pred_check_branch
    %11 = sbr.rel (0) target = $region9
  $region8: #{_lambda_.51} parent=0 // pred_region
    _
  $region9: #{_lambda_.51} parent=0 // pred_fallthru
    _
  // Predicated region
  $region10: #{_lambda_.51} parent=0 // pred_check
    _
  $region11: #{_lambda_.51} parent=0 // pred_check_branch
    %13 = sbr.rel (0) target = $region13
  $region12: #{_lambda_.51} parent=0 // pred_region
    _
  $region13: #{_lambda_.51} parent=0 // pred_fallthru
    _
  %v15 = vld [vmem:[%s2] sm:$0xff]
  %v16 = vld [vmem:[%s2 + $0x8] sm:$0xff]
  %v17 = vld [vmem:[%s0] sm:$0xf]
  %v18 = vld [vmem:[%s0 + $0x4] sm:$0xf]
  %v19 = vld [vmem:[%s1] sm:$0xf]
  %v20 = vld [vmem:[%s1 + $0x4] sm:$0xf]
  %v21 = vld [vmem:[%s1 + $0x8] sm:$0xf]
  %v22 = vld [vmem:[%s1 + $0xc] sm:$0xf]
  %v23 = vld [vmem:[%s1 + $0x10] sm:$0x3]
  %v26 = vunpack.c.l.b16 %v17
  %v27 = vunpack.c.l.b16 %v18
  %v28 = vpack.c.b16 %v27, %v26
  %v34 = vunpack.c.l.b16 %v19
  %v35 = vunpack.c.l.b16 %v20
  %v36 = vunpack.c.l.b16 %v21
  %v37 = vunpack.c.l.b16 %v22
  %v38 = vunpack.c.l.b16 %v23
  %v39 = vpack.c.b16 %v35, %v34
  %v40 = vpack.c.b16 %v37, %v36
  %v41 = vpack.c.b16 %v38, %v38
  %vm44 = vcmask 293888
  %v46 = vsel %vm44, %v28, 0
  %vm48 = vcmask 1041408
  %v50 = vsel %vm48, %v41, 0
  %52 = vmatpush.bf16.msra.mxu0 0
  %53 = vmatpush.bf16.msra.mxu0 0
  %54 = vmatpush.bf16.msra.mxu0 0
  %55 = vmatpush.bf16.msra.mxu0 0
  %56 = vmatpush.bf16.msra.mxu0 0
  %57 = vmatpush.bf16.msra.mxu0 %v50
  %58 = vmatpush.bf16.msra.mxu0 %v40
  %59 = vmatpush.bf16.msra.mxu0 %v39
  %60 = vmatmul.bf16.gmra.mxu0 %v46
  %v61 = vpop.f32.mrf.mxu0
  %v62 = vadd.f32 0.0, %v61
  %v63 = vpop.f32.mrf.mxu0
  %v64 = vadd.f32 0.0, %v63
  %65 = vdwg.mxu0
  %s66 = scalar_lea.vmem %s0, 8
  %v67 = vld [vmem:[%s66] sm:$0xf]
  %v68 = vld [vmem:[%s66 + $0x4] sm:$0xf]
  %s69 = scalar_lea.vmem %s1, 20
  %v70 = vld [vmem:[%s69] sm:$0xf]
  %v71 = vld [vmem:[%s69 + $0x4] sm:$0xf]
  %v72 = vld [vmem:[%s69 + $0x8] sm:$0xf]
  %v73 = vld [vmem:[%s69 + $0xc] sm:$0xf]
  %v74 = vld [vmem:[%s69 + $0x10] sm:$0x3]
  %v77 = vunpack.c.l.b16 %v67
  %v78 = vunpack.c.l.b16 %v68
  %v79 = vpack.c.b16 %v78, %v77
  %v85 = vunpack.c.l.b16 %v70
  %v86 = vunpack.c.l.b16 %v71
  %v87 = vunpack.c.l.b16 %v72
  %v88 = vunpack.c.l.b16 %v73
  %v89 = vunpack.c.l.b16 %v74
  %v90 = vpack.c.b16 %v86, %v85
  %v91 = vpack.c.b16 %v88, %v87
  %v92 = vpack.c.b16 %v89, %v89
  %v96 = vsel %vm44, %v79, 0
  %v99 = vsel %vm48, %v92, 0
  %101 = vmatpush.bf16.msra.mxu0 0
  %102 = vmatpush.bf16.msra.mxu0 0
  %103 = vmatpush.bf16.msra.mxu0 0
  %104 = vmatpush.bf16.msra.mxu0 0
  %105 = vmatpush.bf16.msra.mxu0 0
  %106 = vmatpush.bf16.msra.mxu0 %v99
  %107 = vmatpush.bf16.msra.mxu0 %v91
  %108 = vmatpush.bf16.msra.mxu0 %v90
  %109 = vmatmul.bf16.gmra.mxu0 %v96
  %v110 = vpop.f32.mrf.mxu0
  %v111 = vadd.f32 0.0, %v110
  %v112 = vpop.f32.mrf.mxu0
  %v113 = vadd.f32 0.0, %v112
  %114 = vdwg.mxu0
  %117 = vrot.lane.b32.xlu0 %v111, 4
  %v118 = vpop.permute.xlu0 %117
  %119 = vrot.lane.b32.xlu0 %v113, 4
  %v120 = vpop.permute.xlu0 %119
  %vm123 = vcmask 31744
  %v124 = vsel %vm123, %v62, %v118
  %v125 = vsel %vm123, %v64, %v120
  %v126 = vadd.f32 %v15, %v124
  %v127 = vadd.f32 %v16, %v125
  %vm128 = vcmask 64512
  %129 = vst.msk [vmem:[%s3] sm:$0xff] %vm128, %v126
  %130 = vst.msk [vmem:[%s3 + $0x8] sm:$0xff] %vm128, %v127
  // Predicated region
  $region14: #{_lambda_.51} parent=0 // pred_check
    _
  $region15: #{_lambda_.51} parent=0 // pred_check_branch
    %132 = sbr.rel (0) target = $region17
  $region16: #{_lambda_.51} parent=0 // pred_region
    _
  $region17: #{_lambda_.51} parent=0 // pred_fallthru
    _
  // Predicated region
  $region18: #{_lambda_.51} parent=0 // pred_check
    _
  $region19: #{_lambda_.51} parent=0 // pred_check_branch
    %134 = sbr.rel (0) target = $region21
  $region20: #{_lambda_.51} parent=0 // pred_region
    _
  $region21: #{_lambda_.51} parent=0 // pred_fallthru
    _

// kernel: _lambda_.52
$region0: #{_lambda_.52}
  #allocation0 [shape = 'u32[]', space=smem, size = 0x4, offset = 0x4, fixed_abs, tag = 'smem constant byte address 0x4 - core index']
  #allocation1 [shape = 'u32[72,128]{1,0:T(1,128)}', space=vmem, size = 0x9000, scoped, tag = 'internal scratch']
  %s0 = inlined_call_operand.vmem [shape: f32[16,8], index: 0, kind: input, shape index: {}]
  %s1 = inlined_call_operand.vmem [shape: f32[1,8], index: 1, kind: input, shape index: {}]
  %s2 = inlined_call_operand.vmem [shape: f32[1,8], index: 2, kind: input, shape index: {}]
  %s3 = inlined_call_operand.vmem [shape: bf16[8,4], index: 3, kind: input, shape index: {}]
  %s4 = inlined_call_operand.vmem [shape: f32[16,4], index: 4, kind: output, shape index: {}]
  %s5 = sld [smem:[#allocation0]]
  $region26: #{_lambda_.52} parent=0
    _
  %s7 = ssub.s32 1, %s5
  %s8 = scalar_select 0, %s7, %s5
  // Predicated region
  $region2: #{_lambda_.52} parent=0 // pred_check
    _
  $region3: #{_lambda_.52} parent=0 // pred_check_branch
    %10 = sbr.rel (0) target = $region5
  $region4: #{_lambda_.52} parent=0 // pred_region
    _
  $region5: #{_lambda_.52} parent=0 // pred_fallthru
    _
  // Predicated region
  $region6: #{_lambda_.52} parent=0 // pred_check
    _
  $region7: #{_lambda_.52} parent=0 // pred_check_branch
    %12 = sbr.rel (0) target = $region9
  $region8: #{_lambda_.52} parent=0 // pred_region
    _
  $region9: #{_lambda_.52} parent=0 // pred_fallthru
    _
  // Predicated region
  $region10: #{_lambda_.52} parent=0 // pred_check
    _
  $region11: #{_lambda_.52} parent=0 // pred_check_branch
    %14 = sbr.rel (0) target = $region13
  $region12: #{_lambda_.52} parent=0 // pred_region
    _
  $region13: #{_lambda_.52} parent=0 // pred_fallthru
    _
  // Predicated region
  $region14: #{_lambda_.52} parent=0 // pred_check
    _
  $region15: #{_lambda_.52} parent=0 // pred_check_branch
    %16 = sbr.rel (0) target = $region17
  $region16: #{_lambda_.52} parent=0 // pred_region
    _
  $region17: #{_lambda_.52} parent=0 // pred_fallthru
    _
  %v18 = vld [vmem:[%s0] sm:$0xff]
  %v19 = vld [vmem:[%s0 + $0x8] sm:$0xff]
  %v20 = vld [vmem:[%s1] sm:$0x1]
  %v22 = vperm.slane %v20, 0
  %v24 = vmul.f32 %v18, %v22
  %v25 = vmul.f32 %v19, %v22
  %v26 = vld [vmem:[%s2] sm:$0x1]
  %v28 = vperm.slane %v26, 0
  %v30 = vadd.f32 %v24, %v28
  %v31 = vadd.f32 %v25, %v28
  %v32 = vmax.f32 %v30, 0.0
  %v33 = vmax.f32 %v31, 0.0
  %v34 = vpack.c.bf16 %v33, %v32
  %v35 = vld [vmem:[%s3] sm:$0xf]
  %vm36 = vcmask 64512
  %v38 = vsel %vm36, %v34, 0
  %vm40 = vcmask 1043456
  %v42 = vsel %vm40, %v35, 0
  %44 = vmatpush.bf16.msra.mxu0 0
  %45 = vmatpush.bf16.msra.mxu0 0
  %46 = vmatpush.bf16.msra.mxu0 0
  %47 = vmatpush.bf16.msra.mxu0 0
  %48 = vmatpush.bf16.msra.mxu0 0
  %49 = vmatpush.bf16.msra.mxu0 0
  %50 = vmatpush.bf16.msra.mxu0 0
  %51 = vmatpush.bf16.msra.mxu0 %v42
  %52 = vmatmul.bf16.gmra.mxu0 %v38
  %v53 = vpop.f32.mrf.mxu0
  %v54 = vadd.f32 0.0, %v53
  %v55 = vpop.f32.mrf.mxu0
  %v56 = vadd.f32 0.0, %v55
  %57 = vdwg.mxu0
  %vm58 = vcmask 31744
  %59 = vst.msk [vmem:[%s4] sm:$0xff] %vm58, %v54
  %60 = vst.msk [vmem:[%s4 + $0x8] sm:$0xff] %vm58, %v56
  // Predicated region
  $region18: #{_lambda_.52} parent=0 // pred_check
    _
  $region19: #{_lambda_.52} parent=0 // pred_check_branch
    %62 = sbr.rel (0) target = $region21
  $region20: #{_lambda_.52} parent=0 // pred_region
    _
  $region21: #{_lambda_.52} parent=0 // pred_fallthru
    _
  // Predicated region
  $region22: #{_lambda_.52} parent=0 // pred_check
    _
  $region23: #{_lambda_.52} parent=0 // pred_check_branch
    %64 = sbr.rel (0) target = $region25
  $region24: #{_lambda_.52} parent=0 // pred_region
    _
  $region25: #{_lambda_.52} parent=0 // pred_fallthru
    _

// kernel: _lambda_.53
$region0: #{_lambda_.53}
  #allocation0 [shape = 'u32[]', space=smem, size = 0x4, offset = 0x4, fixed_abs, tag = 'smem constant byte address 0x4 - core index']
  #allocation1 [shape = 'u32[72,128]{1,0:T(1,128)}', space=vmem, size = 0x9000, scoped, tag = 'internal scratch']
  %s0 = inlined_call_operand.vmem [shape: f32[16,4], index: 0, kind: input, shape index: {}]
  %s1 = inlined_call_operand.vmem [shape: f32[1,4], index: 1, kind: input, shape index: {}]
  %s2 = inlined_call_operand.vmem [shape: f32[1,4], index: 2, kind: input, shape index: {}]
  %s3 = inlined_call_operand.vmem [shape: bf16[4,8], index: 3, kind: input, shape index: {}]
  %s4 = inlined_call_operand.vmem [shape: f32[16,8], index: 4, kind: input, shape index: {}]
  %s5 = inlined_call_operand.vmem [shape: f32[16,8], index: 5, kind: output, shape index: {}]
  %s6 = sld [smem:[#allocation0]]
  $region30: #{_lambda_.53} parent=0
    _
  %s8 = ssub.s32 1, %s6
  %s9 = scalar_select 0, %s8, %s6
  // Predicated region
  $region2: #{_lambda_.53} parent=0 // pred_check
    _
  $region3: #{_lambda_.53} parent=0 // pred_check_branch
    %11 = sbr.rel (0) target = $region5
  $region4: #{_lambda_.53} parent=0 // pred_region
    _
  $region5: #{_lambda_.53} parent=0 // pred_fallthru
    _
  // Predicated region
  $region6: #{_lambda_.53} parent=0 // pred_check
    _
  $region7: #{_lambda_.53} parent=0 // pred_check_branch
    %13 = sbr.rel (0) target = $region9
  $region8: #{_lambda_.53} parent=0 // pred_region
    _
  $region9: #{_lambda_.53} parent=0 // pred_fallthru
    _
  // Predicated region
  $region10: #{_lambda_.53} parent=0 // pred_check
    _
  $region11: #{_lambda_.53} parent=0 // pred_check_branch
    %15 = sbr.rel (0) target = $region13
  $region12: #{_lambda_.53} parent=0 // pred_region
    _
  $region13: #{_lambda_.53} parent=0 // pred_fallthru
    _
  // Predicated region
  $region14: #{_lambda_.53} parent=0 // pred_check
    _
  $region15: #{_lambda_.53} parent=0 // pred_check_branch
    %17 = sbr.rel (0) target = $region17
  $region16: #{_lambda_.53} parent=0 // pred_region
    _
  $region17: #{_lambda_.53} parent=0 // pred_fallthru
    _
  // Predicated region
  $region18: #{_lambda_.53} parent=0 // pred_check
    _
  $region19: #{_lambda_.53} parent=0 // pred_check_branch
    %19 = sbr.rel (0) target = $region21
  $region20: #{_lambda_.53} parent=0 // pred_region
    _
  $region21: #{_lambda_.53} parent=0 // pred_fallthru
    _
  %v21 = vld [vmem:[%s0] sm:$0xff]
  %v22 = vld [vmem:[%s0 + $0x8] sm:$0xff]
  %v23 = vld [vmem:[%s1] sm:$0x1]
  %v25 = vperm.slane %v23, 0
  %v27 = vmul.f32 %v21, %v25
  %v28 = vmul.f32 %v22, %v25
  %v29 = vld [vmem:[%s2] sm:$0x1]
  %v31 = vperm.slane %v29, 0
  %v33 = vadd.f32 %v27, %v31
  %v34 = vadd.f32 %v28, %v31
  %v35 = vmax.f32 %v33, 0.0
  %v36 = vmax.f32 %v34, 0.0
  %v37 = vld [vmem:[%s4] sm:$0xff]
  %v38 = vld [vmem:[%s4 + $0x8] sm:$0xff]
  %v39 = vpack.c.bf16 %v36, %v35
  %v40 = vld [vmem:[%s3] sm:$0x3]
  %vm41 = vcmask 31744
  %v43 = vsel %vm41, %v39, 0
  %vm45 = vcmask 1041408
  %v47 = vsel %vm45, %v40, 0
  %49 = vmatpush.bf16.msra.mxu0 0
  %50 = vmatpush.bf16.msra.mxu0 0
  %51 = vmatpush.bf16.msra.mxu0 0
  %52 = vmatpush.bf16.msra.mxu0 0
  %53 = vmatpush.bf16.msra.mxu0 0
  %54 = vmatpush.bf16.msra.mxu0 0
  %55 = vmatpush.bf16.msra.mxu0 0
  %56 = vmatpush.bf16.msra.mxu0 %v47
  %57 = vmatmul.bf16.gmra.mxu0 %v43
  %v58 = vpop.f32.mrf.mxu0
  %v59 = vadd.f32 0.0, %v58
  %v60 = vpop.f32.mrf.mxu0
  %v61 = vadd.f32 0.0, %v60
  %62 = vdwg.mxu0
  %v63 = vadd.f32 %v37, %v59
  %v64 = vadd.f32 %v38, %v61
  %vm65 = vcmask 64512
  %66 = vst.msk [vmem:[%s5] sm:$0xff] %vm65, %v63
  %67 = vst.msk [vmem:[%s5 + $0x8] sm:$0xff] %vm65, %v64
  // Predicated region
  $region22: #{_lambda_.53} parent=0 // pred_check
    _
  $region23: #{_lambda_.53} parent=0 // pred_check_branch
    %69 = sbr.rel (0) target = $region25
  $region24: #{_lambda_.53} parent=0 // pred_region
    _
  $region25: #{_lambda_.53} parent=0 // pred_fallthru
    _
  // Predicated region
  $region26: #{_lambda_.53} parent=0 // pred_check
    _
  $region27: #{_lambda_.53} parent=0 // pred_check_branch
    %71 = sbr.rel (0) target = $region29
  $region28: #{_lambda_.53} parent=0 // pred_region
    _
  $region29: #{_lambda_.53} parent=0 // pred_fallthru
    _

// kernel: _lambda_.55
$region0: #{_lambda_.55}
  #allocation0 [shape = 'u32[]', space=smem, size = 0x4, offset = 0x4, fixed_abs, tag = 'smem constant byte address 0x4 - core index']
  #allocation1 [shape = 'u32[72,128]{1,0:T(1,128)}', space=vmem, size = 0x9000, scoped, tag = 'internal scratch']
  %s0 = inlined_call_operand.vmem [shape: bf16[2,8,108], index: 0, kind: input, shape index: {}]
  %s1 = inlined_call_operand.vmem [shape: bf16[2,108,8], index: 1, kind: input, shape index: {}]
  %s2 = inlined_call_operand.vmem [shape: f32[8,16], index: 2, kind: output, shape index: {}]
  %s3 = sld [smem:[#allocation0]]
  $region18: #{_lambda_.55} parent=0
    _
  %s5 = ssub.s32 1, %s3
  %s6 = scalar_select 0, %s5, %s3
  // Predicated region
  $region2: #{_lambda_.55} parent=0 // pred_check
    _
  $region3: #{_lambda_.55} parent=0 // pred_check_branch
    %8 = sbr.rel (0) target = $region5
  $region4: #{_lambda_.55} parent=0 // pred_region
    _
  $region5: #{_lambda_.55} parent=0 // pred_fallthru
    _
  // Predicated region
  $region6: #{_lambda_.55} parent=0 // pred_check
    _
  $region7: #{_lambda_.55} parent=0 // pred_check_branch
    %10 = sbr.rel (0) target = $region9
  $region8: #{_lambda_.55} parent=0 // pred_region
    _
  $region9: #{_lambda_.55} parent=0 // pred_fallthru
    _
  %v12 = vld [vmem:[%s0] sm:$0xf]
  %v13 = vld [vmem:[%s1] sm:$0xf]
  %v14 = vld [vmem:[%s1 + $0x4] sm:$0xf]
  %v15 = vld [vmem:[%s1 + $0x8] sm:$0xf]
  %v16 = vld [vmem:[%s1 + $0xc] sm:$0xf]
  %v17 = vld [vmem:[%s1 + $0x10] sm:$0xf]
  %v18 = vld [vmem:[%s1 + $0x14] sm:$0xf]
  %v19 = vld [vmem:[%s1 + $0x18] sm:$0xf]
  %v20 = vld [vmem:[%s1 + $0x1c] sm:$0xf]
  %v21 = vld [vmem:[%s1 + $0x20] sm:$0xf]
  %v22 = vld [vmem:[%s1 + $0x24] sm:$0xf]
  %v23 = vld [vmem:[%s1 + $0x28] sm:$0xf]
  %v24 = vld [vmem:[%s1 + $0x2c] sm:$0xf]
  %v25 = vld [vmem:[%s1 + $0x30] sm:$0xf]
  %v26 = vld [vmem:[%s1 + $0x34] sm:$0x3]
  %v41 = vunpack.c.l.b16 %v13
  %v42 = vunpack.c.l.b16 %v14
  %v43 = vunpack.c.l.b16 %v15
  %v44 = vunpack.c.l.b16 %v16
  %v45 = vunpack.c.l.b16 %v17
  %v46 = vunpack.c.l.b16 %v18
  %v47 = vunpack.c.l.b16 %v19
  %v48 = vunpack.c.l.b16 %v20
  %v49 = vunpack.c.l.b16 %v21
  %v50 = vunpack.c.l.b16 %v22
  %v51 = vunpack.c.l.b16 %v23
  %v52 = vunpack.c.l.b16 %v24
  %v53 = vunpack.c.l.b16 %v25
  %v54 = vunpack.c.l.b16 %v26
  %v55 = vpack.c.b16 %v42, %v41
  %v56 = vpack.c.b16 %v44, %v43
  %v57 = vpack.c.b16 %v46, %v45
  %v58 = vpack.c.b16 %v48, %v47
  %v59 = vpack.c.b16 %v50, %v49
  %v60 = vpack.c.b16 %v52, %v51
  %v61 = vpack.c.b16 %v54, %v53
  %vm68 = vcmask 883712
  %v70 = vsel %vm68, %v12, 0
  %vm72 = vcmask 1045504
  %v74 = vsel %vm72, %v61, 0
  %76 = vmatpush.bf16.msra.mxu0 0
  %77 = vmatpush.bf16.msra.mxu0 %v74
  %78 = vmatpush.bf16.msra.mxu0 %v60
  %79 = vmatpush.bf16.msra.mxu0 %v59
  %80 = vmatpush.bf16.msra.mxu0 %v58
  %81 = vmatpush.bf16.msra.mxu0 %v57
  %82 = vmatpush.bf16.msra.mxu0 %v56
  %83 = vmatpush.bf16.msra.mxu0 %v55
  %84 = vmatmul.bf16.gmra.mxu0 %v70
  %v85 = vpop.f32.mrf.mxu0
  %v86 = vadd.f32 0.0, %v85
  %v87 = vpop.f32.mrf.mxu0
  %88 = vdwg.mxu0
  %s89 = scalar_lea.vmem %s0, 4
  %v90 = vld [vmem:[%s89] sm:$0xf]
  %s91 = scalar_lea.vmem %s1, 56
  %v92 = vld [vmem:[%s91] sm:$0xf]
  %v93 = vld [vmem:[%s91 + $0x4] sm:$0xf]
  %v94 = vld [vmem:[%s91 + $0x8] sm:$0xf]
  %v95 = vld [vmem:[%s91 + $0xc] sm:$0xf]
  %v96 = vld [vmem:[%s91 + $0x10] sm:$0xf]
  %v97 = vld [vmem:[%s91 + $0x14] sm:$0xf]
  %v98 = vld [vmem:[%s91 + $0x18] sm:$0xf]
  %v99 = vld [vmem:[%s91 + $0x1c] sm:$0xf]
  %v100 = vld [vmem:[%s91 + $0x20] sm:$0xf]
  %v101 = vld [vmem:[%s91 + $0x24] sm:$0xf]
  %v102 = vld [vmem:[%s91 + $0x28] sm:$0xf]
  %v103 = vld [vmem:[%s91 + $0x2c] sm:$0xf]
  %v104 = vld [vmem:[%s91 + $0x30] sm:$0xf]
  %v105 = vld [vmem:[%s91 + $0x34] sm:$0x3]
  %v120 = vunpack.c.l.b16 %v92
  %v121 = vunpack.c.l.b16 %v93
  %v122 = vunpack.c.l.b16 %v94
  %v123 = vunpack.c.l.b16 %v95
  %v124 = vunpack.c.l.b16 %v96
  %v125 = vunpack.c.l.b16 %v97
  %v126 = vunpack.c.l.b16 %v98
  %v127 = vunpack.c.l.b16 %v99
  %v128 = vunpack.c.l.b16 %v100
  %v129 = vunpack.c.l.b16 %v101
  %v130 = vunpack.c.l.b16 %v102
  %v131 = vunpack.c.l.b16 %v103
  %v132 = vunpack.c.l.b16 %v104
  %v133 = vunpack.c.l.b16 %v105
  %v134 = vpack.c.b16 %v121, %v120
  %v135 = vpack.c.b16 %v123, %v122
  %v136 = vpack.c.b16 %v125, %v124
  %v137 = vpack.c.b16 %v127, %v126
  %v138 = vpack.c.b16 %v129, %v128
  %v139 = vpack.c.b16 %v131, %v130
  %v140 = vpack.c.b16 %v133, %v132
  %v148 = vsel %vm68, %v90, 0
  %v151 = vsel %vm72, %v140, 0
  %153 = vmatpush.bf16.msra.mxu0 0
  %154 = vmatpush.bf16.msra.mxu0 %v151
  %155 = vmatpush.bf16.msra.mxu0 %v139
  %156 = vmatpush.bf16.msra.mxu0 %v138
  %157 = vmatpush.bf16.msra.mxu0 %v137
  %158 = vmatpush.bf16.msra.mxu0 %v136
  %159 = vmatpush.bf16.msra.mxu0 %v135
  %160 = vmatpush.bf16.msra.mxu0 %v134
  %161 = vmatmul.bf16.gmra.mxu0 %v148
  %v162 = vpop.f32.mrf.mxu0
  %v163 = vadd.f32 0.0, %v162
  %v164 = vpop.f32.mrf.mxu0
  %165 = vdwg.mxu0
  %167 = vrot.lane.b32.xlu0 %v163, 8
  %v168 = vpop.permute.xlu0 %167
  %vm170 = vcmask 64512
  %v171 = vsel %vm170, %v86, %v168
  %vm172 = vcmask 130048
  %173 = vst.msk [vmem:[%s2] sm:$0xff] %vm172, %v171
  // Predicated region
  $region10: #{_lambda_.55} parent=0 // pred_check
    _
  $region11: #{_lambda_.55} parent=0 // pred_check_branch
    %175 = sbr.rel (0) target = $region13
  $region12: #{_lambda_.55} parent=0 // pred_region
    _
  $region13: #{_lambda_.55} parent=0 // pred_fallthru
    _
  // Predicated region
  $region14: #{_lambda_.55} parent=0 // pred_check
    _
  $region15: #{_lambda_.55} parent=0 // pred_check_branch
    %177 = sbr.rel (0) target = $region17
  $region16: #{_lambda_.55} parent=0 // pred_region
    _
  $region17: #{_lambda_.55} parent=0 // pred_fallthru
    _

// kernel: _lambda_.56
$region0: #{_lambda_.56}
  #allocation0 [shape = 'u32[]', space=smem, size = 0x4, offset = 0x4, fixed_abs, tag = 'smem constant byte address 0x4 - core index']
  #allocation1 [shape = 'u32[72,128]{1,0:T(1,128)}', space=vmem, size = 0x9000, scoped, tag = 'internal scratch']
  %s0 = inlined_call_operand.vmem [shape: f32[8,16], index: 0, kind: input, shape index: {}]
  %s1 = inlined_call_operand.vmem [shape: f32[1,16], index: 1, kind: input, shape index: {}]
  %s2 = inlined_call_operand.vmem [shape: f32[1,16], index: 2, kind: input, shape index: {}]
  %s3 = inlined_call_operand.vmem [shape: bf16[16,16], index: 3, kind: input, shape index: {}]
  %s4 = inlined_call_operand.vmem [shape: f32[8,16], index: 4, kind: output, shape index: {}]
  %s5 = sld [smem:[#allocation0]]
  $region26: #{_lambda_.56} parent=0
    _
  %s7 = ssub.s32 1, %s5
  %s8 = scalar_select 0, %s7, %s5
  // Predicated region
  $region2: #{_lambda_.56} parent=0 // pred_check
    _
  $region3: #{_lambda_.56} parent=0 // pred_check_branch
    %10 = sbr.rel (0) target = $region5
  $region4: #{_lambda_.56} parent=0 // pred_region
    _
  $region5: #{_lambda_.56} parent=0 // pred_fallthru
    _
  // Predicated region
  $region6: #{_lambda_.56} parent=0 // pred_check
    _
  $region7: #{_lambda_.56} parent=0 // pred_check_branch
    %12 = sbr.rel (0) target = $region9
  $region8: #{_lambda_.56} parent=0 // pred_region
    _
  $region9: #{_lambda_.56} parent=0 // pred_fallthru
    _
  // Predicated region
  $region10: #{_lambda_.56} parent=0 // pred_check
    _
  $region11: #{_lambda_.56} parent=0 // pred_check_branch
    %14 = sbr.rel (0) target = $region13
  $region12: #{_lambda_.56} parent=0 // pred_region
    _
  $region13: #{_lambda_.56} parent=0 // pred_fallthru
    _
  // Predicated region
  $region14: #{_lambda_.56} parent=0 // pred_check
    _
  $region15: #{_lambda_.56} parent=0 // pred_check_branch
    %16 = sbr.rel (0) target = $region17
  $region16: #{_lambda_.56} parent=0 // pred_region
    _
  $region17: #{_lambda_.56} parent=0 // pred_fallthru
    _
  %v18 = vld [vmem:[%s0] sm:$0xff]
  %v19 = vld [vmem:[%s1] sm:$0x1]
  %v21 = vperm.slane %v19, 0
  %v23 = vmul.f32 %v18, %v21
  %v24 = vld [vmem:[%s2] sm:$0x1]
  %v26 = vperm.slane %v24, 0
  %v28 = vadd.f32 %v23, %v26
  %v29 = vmax.f32 %v28, 0.0
  %v30 = vpack.c.bf16 %v29, %v29
  %v31 = vld [vmem:[%s3] sm:$0xf]
  %v32 = vld [vmem:[%s3 + $0x4] sm:$0xf]
  %v35 = vunpack.c.l.b16 %v31
  %v36 = vunpack.c.l.b16 %v32
  %v37 = vpack.c.b16 %v36, %v35
  %vm39 = vcmask 130048
  %v41 = vsel %vm39, %v30, 0
  %43 = vmatpush.bf16.msra.mxu0 0
  %44 = vmatpush.bf16.msra.mxu0 0
  %45 = vmatpush.bf16.msra.mxu0 0
  %46 = vmatpush.bf16.msra.mxu0 0
  %47 = vmatpush.bf16.msra.mxu0 0
  %48 = vmatpush.bf16.msra.mxu0 0
  %49 = vmatpush.bf16.msra.mxu0 0
  %50 = vmatpush.bf16.msra.mxu0 %v37
  %51 = vmatmul.bf16.gmra.mxu0 %v41
  %v52 = vpop.f32.mrf.mxu0
  %v53 = vadd.f32 0.0, %v52
  %v54 = vpop.f32.mrf.mxu0
  %55 = vdwg.mxu0
  %56 = vst.msk [vmem:[%s4] sm:$0xff] %vm39, %v53
  // Predicated region
  $region18: #{_lambda_.56} parent=0 // pred_check
    _
  $region19: #{_lambda_.56} parent=0 // pred_check_branch
    %58 = sbr.rel (0) target = $region21
  $region20: #{_lambda_.56} parent=0 // pred_region
    _
  $region21: #{_lambda_.56} parent=0 // pred_fallthru
    _
  // Predicated region
  $region22: #{_lambda_.56} parent=0 // pred_check
    _
  $region23: #{_lambda_.56} parent=0 // pred_check_branch
    %60 = sbr.rel (0) target = $region25
  $region24: #{_lambda_.56} parent=0 // pred_region
    _
  $region25: #{_lambda_.56} parent=0 // pred_fallthru
    _

// kernel: _lambda_.57
$region0: #{_lambda_.57}
  #allocation0 [shape = 'u32[]', space=smem, size = 0x4, offset = 0x4, fixed_abs, tag = 'smem constant byte address 0x4 - core index']
  #allocation1 [shape = 'u32[72,128]{1,0:T(1,128)}', space=vmem, size = 0x9000, scoped, tag = 'internal scratch']
  %s0 = inlined_call_operand.vmem [shape: f32[8,8], index: 0, kind: input, shape index: {}]
  %s1 = inlined_call_operand.vmem [shape: f32[1,8], index: 1, kind: input, shape index: {}]
  %s2 = inlined_call_operand.vmem [shape: f32[1,8], index: 2, kind: input, shape index: {}]
  %s3 = inlined_call_operand.vmem [shape: bf16[8,16], index: 3, kind: input, shape index: {}]
  %s4 = inlined_call_operand.vmem [shape: f32[8,16], index: 4, kind: input, shape index: {}]
  %s5 = inlined_call_operand.vmem [shape: f32[8,16], index: 5, kind: output, shape index: {}]
  %s6 = sld [smem:[#allocation0]]
  $region30: #{_lambda_.57} parent=0
    _
  %s8 = ssub.s32 1, %s6
  %s9 = scalar_select 0, %s8, %s6
  // Predicated region
  $region2: #{_lambda_.57} parent=0 // pred_check
    _
  $region3: #{_lambda_.57} parent=0 // pred_check_branch
    %11 = sbr.rel (0) target = $region5
  $region4: #{_lambda_.57} parent=0 // pred_region
    _
  $region5: #{_lambda_.57} parent=0 // pred_fallthru
    _
  // Predicated region
  $region6: #{_lambda_.57} parent=0 // pred_check
    _
  $region7: #{_lambda_.57} parent=0 // pred_check_branch
    %13 = sbr.rel (0) target = $region9
  $region8: #{_lambda_.57} parent=0 // pred_region
    _
  $region9: #{_lambda_.57} parent=0 // pred_fallthru
    _
  // Predicated region
  $region10: #{_lambda_.57} parent=0 // pred_check
    _
  $region11: #{_lambda_.57} parent=0 // pred_check_branch
    %15 = sbr.rel (0) target = $region13
  $region12: #{_lambda_.57} parent=0 // pred_region
    _
  $region13: #{_lambda_.57} parent=0 // pred_fallthru
    _
  // Predicated region
  $region14: #{_lambda_.57} parent=0 // pred_check
    _
  $region15: #{_lambda_.57} parent=0 // pred_check_branch
    %17 = sbr.rel (0) target = $region17
  $region16: #{_lambda_.57} parent=0 // pred_region
    _
  $region17: #{_lambda_.57} parent=0 // pred_fallthru
    _
  // Predicated region
  $region18: #{_lambda_.57} parent=0 // pred_check
    _
  $region19: #{_lambda_.57} parent=0 // pred_check_branch
    %19 = sbr.rel (0) target = $region21
  $region20: #{_lambda_.57} parent=0 // pred_region
    _
  $region21: #{_lambda_.57} parent=0 // pred_fallthru
    _
  %v21 = vld [vmem:[%s0] sm:$0xff]
  %v22 = vld [vmem:[%s1] sm:$0x1]
  %v24 = vperm.slane %v22, 0
  %v26 = vmul.f32 %v21, %v24
  %v27 = vld [vmem:[%s2] sm:$0x1]
  %v29 = vperm.slane %v27, 0
  %v31 = vadd.f32 %v26, %v29
  %v32 = vmax.f32 %v31, 0.0
  %v33 = vld [vmem:[%s4] sm:$0xff]
  %v34 = vpack.c.bf16 %v32, %v32
  %v35 = vld [vmem:[%s3] sm:$0xf]
  %vm36 = vcmask 64512
  %v38 = vsel %vm36, %v34, 0
  %vm40 = vcmask 1043456
  %v42 = vsel %vm40, %v35, 0
  %44 = vmatpush.bf16.msra.mxu0 0
  %45 = vmatpush.bf16.msra.mxu0 0
  %46 = vmatpush.bf16.msra.mxu0 0
  %47 = vmatpush.bf16.msra.mxu0 0
  %48 = vmatpush.bf16.msra.mxu0 0
  %49 = vmatpush.bf16.msra.mxu0 0
  %50 = vmatpush.bf16.msra.mxu0 0
  %51 = vmatpush.bf16.msra.mxu0 %v42
  %52 = vmatmul.bf16.gmra.mxu0 %v38
  %v53 = vpop.f32.mrf.mxu0
  %v54 = vadd.f32 0.0, %v53
  %v55 = vpop.f32.mrf.mxu0
  %56 = vdwg.mxu0
  %v57 = vadd.f32 %v33, %v54
  %vm58 = vcmask 130048
  %59 = vst.msk [vmem:[%s5] sm:$0xff] %vm58, %v57
  // Predicated region
  $region22: #{_lambda_.57} parent=0 // pred_check
    _
  $region23: #{_lambda_.57} parent=0 // pred_check_branch
    %61 = sbr.rel (0) target = $region25
  $region24: #{_lambda_.57} parent=0 // pred_region
    _
  $region25: #{_lambda_.57} parent=0 // pred_fallthru
    _
  // Predicated region
  $region26: #{_lambda_.57} parent=0 // pred_check
    _
  $region27: #{_lambda_.57} parent=0 // pred_check_branch
    %63 = sbr.rel (0) target = $region29
  $region28: #{_lambda_.57} parent=0 // pred_region
    _
  $region29: #{_lambda_.57} parent=0 // pred_fallthru
    _

// kernel: _lambda_.58
$region0: #{_lambda_.58}
  #allocation0 [shape = 'u32[]', space=smem, size = 0x4, offset = 0x4, fixed_abs, tag = 'smem constant byte address 0x4 - core index']
  #allocation1 [shape = 'u32[72,128]{1,0:T(1,128)}', space=vmem, size = 0x9000, scoped, tag = 'internal scratch']
  %s0 = inlined_call_operand.vmem [shape: f32[8,16], index: 0, kind: input, shape index: {}]
  %s1 = inlined_call_operand.vmem [shape: f32[1,16], index: 1, kind: input, shape index: {}]
  %s2 = inlined_call_operand.vmem [shape: f32[1,16], index: 2, kind: input, shape index: {}]
  %s3 = inlined_call_operand.vmem [shape: bf16[16,4], index: 3, kind: input, shape index: {}]
  %s4 = inlined_call_operand.vmem [shape: f32[8,4], index: 4, kind: output, shape index: {}]
  %s5 = sld [smem:[#allocation0]]
  $region26: #{_lambda_.58} parent=0
    _
  %s7 = ssub.s32 1, %s5
  %s8 = scalar_select 0, %s7, %s5
  // Predicated region
  $region2: #{_lambda_.58} parent=0 // pred_check
    _
  $region3: #{_lambda_.58} parent=0 // pred_check_branch
    %10 = sbr.rel (0) target = $region5
  $region4: #{_lambda_.58} parent=0 // pred_region
    _
  $region5: #{_lambda_.58} parent=0 // pred_fallthru
    _
  // Predicated region
  $region6: #{_lambda_.58} parent=0 // pred_check
    _
  $region7: #{_lambda_.58} parent=0 // pred_check_branch
    %12 = sbr.rel (0) target = $region9
  $region8: #{_lambda_.58} parent=0 // pred_region
    _
  $region9: #{_lambda_.58} parent=0 // pred_fallthru
    _
  // Predicated region
  $region10: #{_lambda_.58} parent=0 // pred_check
    _
  $region11: #{_lambda_.58} parent=0 // pred_check_branch
    %14 = sbr.rel (0) target = $region13
  $region12: #{_lambda_.58} parent=0 // pred_region
    _
  $region13: #{_lambda_.58} parent=0 // pred_fallthru
    _
  // Predicated region
  $region14: #{_lambda_.58} parent=0 // pred_check
    _
  $region15: #{_lambda_.58} parent=0 // pred_check_branch
    %16 = sbr.rel (0) target = $region17
  $region16: #{_lambda_.58} parent=0 // pred_region
    _
  $region17: #{_lambda_.58} parent=0 // pred_fallthru
    _
  %v18 = vld [vmem:[%s0] sm:$0xff]
  %v19 = vld [vmem:[%s1] sm:$0x1]
  %v21 = vperm.slane %v19, 0
  %v23 = vmul.f32 %v18, %v21
  %v24 = vld [vmem:[%s2] sm:$0x1]
  %v26 = vperm.slane %v24, 0
  %v28 = vadd.f32 %v23, %v26
  %v29 = vmax.f32 %v28, 0.0
  %v30 = vpack.c.bf16 %v29, %v29
  %v31 = vld [vmem:[%s3] sm:$0xf]
  %v32 = vld [vmem:[%s3 + $0x4] sm:$0xf]
  %v35 = vunpack.c.l.b16 %v31
  %v36 = vunpack.c.l.b16 %v32
  %v37 = vpack.c.b16 %v36, %v35
  %vm39 = vcmask 130048
  %v41 = vsel %vm39, %v30, 0
  %43 = vmatpush.bf16.msra.mxu0 0
  %44 = vmatpush.bf16.msra.mxu0 0
  %45 = vmatpush.bf16.msra.mxu0 0
  %46 = vmatpush.bf16.msra.mxu0 0
  %47 = vmatpush.bf16.msra.mxu0 0
  %48 = vmatpush.bf16.msra.mxu0 0
  %49 = vmatpush.bf16.msra.mxu0 0
  %50 = vmatpush.bf16.msra.mxu0 %v37
  %51 = vmatmul.bf16.gmra.mxu0 %v41
  %v52 = vpop.f32.mrf.mxu0
  %v53 = vadd.f32 0.0, %v52
  %v54 = vpop.f32.mrf.mxu0
  %55 = vdwg.mxu0
  %vm56 = vcmask 31744
  %57 = vst.msk [vmem:[%s4] sm:$0xff] %vm56, %v53
  // Predicated region
  $region18: #{_lambda_.58} parent=0 // pred_check
    _
  $region19: #{_lambda_.58} parent=0 // pred_check_branch
    %59 = sbr.rel (0) target = $region21
  $region20: #{_lambda_.58} parent=0 // pred_region
    _
  $region21: #{_lambda_.58} parent=0 // pred_fallthru
    _
  // Predicated region
  $region22: #{_lambda_.58} parent=0 // pred_check
    _
  $region23: #{_lambda_.58} parent=0 // pred_check_branch
    %61 = sbr.rel (0) target = $region25
  $region24: #{_lambda_.58} parent=0 // pred_region
    _
  $region25: #{_lambda_.58} parent=0 // pred_fallthru
    _

// kernel: _lambda_.60
$region0: #{_lambda_.60}
  #allocation0 [shape = 'u32[]', space=smem, size = 0x4, offset = 0x4, fixed_abs, tag = 'smem constant byte address 0x4 - core index']
  #allocation1 [shape = 'u32[72,128]{1,0:T(1,128)}', space=vmem, size = 0x9000, scoped, tag = 'internal scratch']
  %s0 = inlined_call_operand.vmem [shape: f32[8,16], index: 0, kind: input, shape index: {}]
  %s1 = inlined_call_operand.vmem [shape: f32[1,16], index: 1, kind: input, shape index: {}]
  %s2 = inlined_call_operand.vmem [shape: f32[1,16], index: 2, kind: input, shape index: {}]
  %s3 = inlined_call_operand.vmem [shape: f32[8,16], index: 3, kind: output, shape index: {}]
  %s4 = sld [smem:[#allocation0]]
  $region22: #{_lambda_.60} parent=0
    _
  %s6 = ssub.s32 1, %s4
  %s7 = scalar_select 0, %s6, %s4
  // Predicated region
  $region2: #{_lambda_.60} parent=0 // pred_check
    _
  $region3: #{_lambda_.60} parent=0 // pred_check_branch
    %9 = sbr.rel (0) target = $region5
  $region4: #{_lambda_.60} parent=0 // pred_region
    _
  $region5: #{_lambda_.60} parent=0 // pred_fallthru
    _
  // Predicated region
  $region6: #{_lambda_.60} parent=0 // pred_check
    _
  $region7: #{_lambda_.60} parent=0 // pred_check_branch
    %11 = sbr.rel (0) target = $region9
  $region8: #{_lambda_.60} parent=0 // pred_region
    _
  $region9: #{_lambda_.60} parent=0 // pred_fallthru
    _
  // Predicated region
  $region10: #{_lambda_.60} parent=0 // pred_check
    _
  $region11: #{_lambda_.60} parent=0 // pred_check_branch
    %13 = sbr.rel (0) target = $region13
  $region12: #{_lambda_.60} parent=0 // pred_region
    _
  $region13: #{_lambda_.60} parent=0 // pred_fallthru
    _
  %v14 = vld [vmem:[%s0] sm:$0xff]
  %v15 = vld [vmem:[%s1] sm:$0x1]
  %v17 = vperm.slane %v15, 0
  %v19 = vmul.f32 %v14, %v17
  %v20 = vld [vmem:[%s2] sm:$0x1]
  %v22 = vperm.slane %v20, 0
  %v24 = vadd.f32 %v19, %v22
  %v25 = vmax.f32 %v24, 0.0
  %vm26 = vcmask 130048
  %27 = vst.msk [vmem:[%s3] sm:$0xff] %vm26, %v25
  // Predicated region
  $region14: #{_lambda_.60} parent=0 // pred_check
    _
  $region15: #{_lambda_.60} parent=0 // pred_check_branch
    %29 = sbr.rel (0) target = $region17
  $region16: #{_lambda_.60} parent=0 // pred_region
    _
  $region17: #{_lambda_.60} parent=0 // pred_fallthru
    _
  // Predicated region
  $region18: #{_lambda_.60} parent=0 // pred_check
    _
  $region19: #{_lambda_.60} parent=0 // pred_check_branch
    %31 = sbr.rel (0) target = $region21
  $region20: #{_lambda_.60} parent=0 // pred_region
    _
  $region21: #{_lambda_.60} parent=0 // pred_fallthru
    _

// kernel: _lambda_.59
$region0: #{_lambda_.59}
  #allocation0 [shape = 'u32[]', space=smem, size = 0x4, offset = 0x4, fixed_abs, tag = 'smem constant byte address 0x4 - core index']
  #allocation1 [shape = 'u32[72,128]{1,0:T(1,128)}', space=vmem, size = 0x9000, scoped, tag = 'internal scratch']
  %s0 = inlined_call_operand.vmem [shape: f32[8,4], index: 0, kind: input, shape index: {}]
  %s1 = inlined_call_operand.vmem [shape: f32[1,4], index: 1, kind: input, shape index: {}]
  %s2 = inlined_call_operand.vmem [shape: f32[1,4], index: 2, kind: input, shape index: {}]
  %s3 = inlined_call_operand.vmem [shape: bf16[4,16], index: 3, kind: input, shape index: {}]
  %s4 = inlined_call_operand.vmem [shape: f32[8,16], index: 4, kind: input, shape index: {}]
  %s5 = inlined_call_operand.vmem [shape: f32[8,16], index: 5, kind: output, shape index: {}]
  %s6 = sld [smem:[#allocation0]]
  $region30: #{_lambda_.59} parent=0
    _
  %s8 = ssub.s32 1, %s6
  %s9 = scalar_select 0, %s8, %s6
  // Predicated region
  $region2: #{_lambda_.59} parent=0 // pred_check
    _
  $region3: #{_lambda_.59} parent=0 // pred_check_branch
    %11 = sbr.rel (0) target = $region5
  $region4: #{_lambda_.59} parent=0 // pred_region
    _
  $region5: #{_lambda_.59} parent=0 // pred_fallthru
    _
  // Predicated region
  $region6: #{_lambda_.59} parent=0 // pred_check
    _
  $region7: #{_lambda_.59} parent=0 // pred_check_branch
    %13 = sbr.rel (0) target = $region9
  $region8: #{_lambda_.59} parent=0 // pred_region
    _
  $region9: #{_lambda_.59} parent=0 // pred_fallthru
    _
  // Predicated region
  $region10: #{_lambda_.59} parent=0 // pred_check
    _
  $region11: #{_lambda_.59} parent=0 // pred_check_branch
    %15 = sbr.rel (0) target = $region13
  $region12: #{_lambda_.59} parent=0 // pred_region
    _
  $region13: #{_lambda_.59} parent=0 // pred_fallthru
    _
  // Predicated region
  $region14: #{_lambda_.59} parent=0 // pred_check
    _
  $region15: #{_lambda_.59} parent=0 // pred_check_branch
    %17 = sbr.rel (0) target = $region17
  $region16: #{_lambda_.59} parent=0 // pred_region
    _
  $region17: #{_lambda_.59} parent=0 // pred_fallthru
    _
  // Predicated region
  $region18: #{_lambda_.59} parent=0 // pred_check
    _
  $region19: #{_lambda_.59} parent=0 // pred_check_branch
    %19 = sbr.rel (0) target = $region21
  $region20: #{_lambda_.59} parent=0 // pred_region
    _
  $region21: #{_lambda_.59} parent=0 // pred_fallthru
    _
  %v21 = vld [vmem:[%s0] sm:$0xff]
  %v22 = vld [vmem:[%s1] sm:$0x1]
  %v24 = vperm.slane %v22, 0
  %v26 = vmul.f32 %v21, %v24
  %v27 = vld [vmem:[%s2] sm:$0x1]
  %v29 = vperm.slane %v27, 0
  %v31 = vadd.f32 %v26, %v29
  %v32 = vmax.f32 %v31, 0.0
  %v33 = vld [vmem:[%s4] sm:$0xff]
  %v34 = vpack.c.bf16 %v32, %v32
  %v35 = vld [vmem:[%s3] sm:$0x3]
  %vm36 = vcmask 31744
  %v38 = vsel %vm36, %v34, 0
  %vm40 = vcmask 1041408
  %v42 = vsel %vm40, %v35, 0
  %44 = vmatpush.bf16.msra.mxu0 0
  %45 = vmatpush.bf16.msra.mxu0 0
  %46 = vmatpush.bf16.msra.mxu0 0
  %47 = vmatpush.bf16.msra.mxu0 0
  %48 = vmatpush.bf16.msra.mxu0 0
  %49 = vmatpush.bf16.msra.mxu0 0
  %50 = vmatpush.bf16.msra.mxu0 0
  %51 = vmatpush.bf16.msra.mxu0 %v42
  %52 = vmatmul.bf16.gmra.mxu0 %v38
  %v53 = vpop.f32.mrf.mxu0
  %v54 = vadd.f32 0.0, %v53
  %v55 = vpop.f32.mrf.mxu0
  %56 = vdwg.mxu0
  %v57 = vadd.f32 %v33, %v54
  %vm58 = vcmask 130048
  %59 = vst.msk [vmem:[%s5] sm:$0xff] %vm58, %v57
  // Predicated region
  $region22: #{_lambda_.59} parent=0 // pred_check
    _
  $region23: #{_lambda_.59} parent=0 // pred_check_branch
    %61 = sbr.rel (0) target = $region25
  $region24: #{_lambda_.59} parent=0 // pred_region
    _
  $region25: #{_lambda_.59} parent=0 // pred_fallthru
    _
  // Predicated region
  $region26: #{_lambda_.59} parent=0 // pred_check
    _
  $region27: #{_lambda_.59} parent=0 // pred_check_branch
    %63 = sbr.rel (0) target = $region29
  $region28: #{_lambda_.59} parent=0 // pred_region
    _
  $region29: #{_lambda_.59} parent=0 // pred_fallthru
    _

// kernel: _lambda_.61
$region0: #{_lambda_.61}
  #allocation0 [shape = 'u32[]', space=smem, size = 0x4, offset = 0x4, fixed_abs, tag = 'smem constant byte address 0x4 - core index']
  #allocation1 [shape = 'u32[72,128]{1,0:T(1,128)}', space=vmem, size = 0x9000, scoped, tag = 'internal scratch']
  %s0 = inlined_call_operand.vmem [shape: bf16[2,8,216], index: 0, kind: input, shape index: {}]
  %s1 = inlined_call_operand.vmem [shape: bf16[2,216,8], index: 1, kind: input, shape index: {}]
  %s2 = inlined_call_operand.vmem [shape: f32[8,16], index: 2, kind: output, shape index: {}]
  %s3 = sld [smem:[#allocation0]]
  $region18: #{_lambda_.61} parent=0
    _
  %s5 = ssub.s32 1, %s3
  %s6 = scalar_select 0, %s5, %s3
  // Predicated region
  $region2: #{_lambda_.61} parent=0 // pred_check
    _
  $region3: #{_lambda_.61} parent=0 // pred_check_branch
    %8 = sbr.rel (0) target = $region5
  $region4: #{_lambda_.61} parent=0 // pred_region
    _
  $region5: #{_lambda_.61} parent=0 // pred_fallthru
    _
  // Predicated region
  $region6: #{_lambda_.61} parent=0 // pred_check
    _
  $region7: #{_lambda_.61} parent=0 // pred_check_branch
    %10 = sbr.rel (0) target = $region9
  $region8: #{_lambda_.61} parent=0 // pred_region
    _
  $region9: #{_lambda_.61} parent=0 // pred_fallthru
    _
  %v12 = vld [vmem:[%s0] sm:$0xff]
  %v13 = vld [vmem:[%s1] sm:$0xf]
  %v14 = vld [vmem:[%s1 + $0x4] sm:$0xf]
  %v15 = vld [vmem:[%s1 + $0x8] sm:$0xf]
  %v16 = vld [vmem:[%s1 + $0xc] sm:$0xf]
  %v17 = vld [vmem:[%s1 + $0x10] sm:$0xf]
  %v18 = vld [vmem:[%s1 + $0x14] sm:$0xf]
  %v19 = vld [vmem:[%s1 + $0x18] sm:$0xf]
  %v20 = vld [vmem:[%s1 + $0x1c] sm:$0xf]
  %v21 = vld [vmem:[%s1 + $0x20] sm:$0xf]
  %v22 = vld [vmem:[%s1 + $0x24] sm:$0xf]
  %v23 = vld [vmem:[%s1 + $0x28] sm:$0xf]
  %v24 = vld [vmem:[%s1 + $0x2c] sm:$0xf]
  %v25 = vld [vmem:[%s1 + $0x30] sm:$0xf]
  %v26 = vld [vmem:[%s1 + $0x34] sm:$0xf]
  %v27 = vld [vmem:[%s1 + $0x38] sm:$0xf]
  %v28 = vld [vmem:[%s1 + $0x3c] sm:$0xf]
  %v29 = vld [vmem:[%s1 + $0x40] sm:$0xf]
  %v30 = vld [vmem:[%s1 + $0x44] sm:$0xf]
  %v31 = vld [vmem:[%s1 + $0x48] sm:$0xf]
  %v32 = vld [vmem:[%s1 + $0x4c] sm:$0xf]
  %v33 = vld [vmem:[%s1 + $0x50] sm:$0xf]
  %v34 = vld [vmem:[%s1 + $0x54] sm:$0xf]
  %v35 = vld [vmem:[%s1 + $0x58] sm:$0xf]
  %v36 = vld [vmem:[%s1 + $0x5c] sm:$0xf]
  %v37 = vld [vmem:[%s1 + $0x60] sm:$0xf]
  %v38 = vld [vmem:[%s1 + $0x64] sm:$0xf]
  %v39 = vld [vmem:[%s1 + $0x68] sm:$0xf]
  %v41 = vunpack.c.l.b16 %v12
  %v42 = vunpack.c.h.b16 %v12
  %v43 = vpack.c.b16 %v41, %v41
  %v44 = vpack.c.b16 %v42, %v42
  %v73 = vunpack.c.l.b16 %v13
  %v74 = vunpack.c.l.b16 %v14
  %v75 = vunpack.c.l.b16 %v15
  %v76 = vunpack.c.l.b16 %v16
  %v77 = vunpack.c.l.b16 %v17
  %v78 = vunpack.c.l.b16 %v18
  %v79 = vunpack.c.l.b16 %v19
  %v80 = vunpack.c.l.b16 %v20
  %v81 = vunpack.c.l.b16 %v21
  %v82 = vunpack.c.l.b16 %v22
  %v83 = vunpack.c.l.b16 %v23
  %v84 = vunpack.c.l.b16 %v24
  %v85 = vunpack.c.l.b16 %v25
  %v86 = vunpack.c.l.b16 %v26
  %v87 = vunpack.c.l.b16 %v27
  %v88 = vunpack.c.l.b16 %v28
  %v89 = vunpack.c.l.b16 %v29
  %v90 = vunpack.c.l.b16 %v30
  %v91 = vunpack.c.l.b16 %v31
  %v92 = vunpack.c.l.b16 %v32
  %v93 = vunpack.c.l.b16 %v33
  %v94 = vunpack.c.l.b16 %v34
  %v95 = vunpack.c.l.b16 %v35
  %v96 = vunpack.c.l.b16 %v36
  %v97 = vunpack.c.l.b16 %v37
  %v98 = vunpack.c.l.b16 %v38
  %v99 = vunpack.c.l.b16 %v39
  %v100 = vpack.c.b16 %v74, %v73
  %v101 = vpack.c.b16 %v76, %v75
  %v102 = vpack.c.b16 %v78, %v77
  %v103 = vpack.c.b16 %v80, %v79
  %v104 = vpack.c.b16 %v82, %v81
  %v105 = vpack.c.b16 %v84, %v83
  %v106 = vpack.c.b16 %v86, %v85
  %v107 = vpack.c.b16 %v88, %v87
  %v108 = vpack.c.b16 %v90, %v89
  %v109 = vpack.c.b16 %v92, %v91
  %v110 = vpack.c.b16 %v94, %v93
  %v111 = vpack.c.b16 %v96, %v95
  %v112 = vpack.c.b16 %v98, %v97
  %v113 = vpack.c.b16 %v99, %v99
  %vm127 = vcmask 719872
  %v129 = vsel %vm127, %v44, 0
  %vm131 = vcmask 1043456
  %v133 = vsel %vm131, %v113, 0
  %135 = vmatpush.bf16.msra.mxu0 %v107
  %136 = vmatpush.bf16.msra.mxu0 %v106
  %137 = vmatpush.bf16.msra.mxu0 %v105
  %138 = vmatpush.bf16.msra.mxu0 %v104
  %139 = vmatpush.bf16.msra.mxu0 %v103
  %140 = vmatpush.bf16.msra.mxu0 %v102
  %141 = vmatpush.bf16.msra.mxu0 %v101
  %142 = vmatpush.bf16.msra.mxu0 %v100
  %143 = vmatmul.bf16.gmra.mxu0 %v43
  %v144 = vpop.f32.mrf.mxu0
  %v145 = vadd.f32 0.0, %v144
  %v146 = vpop.f32.mrf.mxu0
  %147 = vdwg.mxu0
  %148 = vmatpush.bf16.msra.mxu0 0
  %149 = vmatpush.bf16.msra.mxu0 0
  %150 = vmatpush.bf16.msra.mxu0 %v133
  %151 = vmatpush.bf16.msra.mxu0 %v112
  %152 = vmatpush.bf16.msra.mxu0 %v111
  %153 = vmatpush.bf16.msra.mxu0 %v110
  %154 = vmatpush.bf16.msra.mxu0 %v109
  %155 = vmatpush.bf16.msra.mxu0 %v108
  %156 = vmatmul.bf16.gmra.mxu0 %v129
  %v157 = vpop.f32.mrf.mxu0
  %v158 = vadd.f32 %v145, %v157
  %v159 = vpop.f32.mrf.mxu0
  %160 = vdwg.mxu0
  %s161 = scalar_lea.vmem %s0, 8
  %v162 = vld [vmem:[%s161] sm:$0xff]
  %s163 = scalar_lea.vmem %s1, 108
  %v164 = vld [vmem:[%s163] sm:$0xf]
  %v165 = vld [vmem:[%s163 + $0x4] sm:$0xf]
  %v166 = vld [vmem:[%s163 + $0x8] sm:$0xf]
  %v167 = vld [vmem:[%s163 + $0xc] sm:$0xf]
  %v168 = vld [vmem:[%s163 + $0x10] sm:$0xf]
  %v169 = vld [vmem:[%s163 + $0x14] sm:$0xf]
  %v170 = vld [vmem:[%s163 + $0x18] sm:$0xf]
  %v171 = vld [vmem:[%s163 + $0x1c] sm:$0xf]
  %v172 = vld [vmem:[%s163 + $0x20] sm:$0xf]
  %v173 = vld [vmem:[%s163 + $0x24] sm:$0xf]
  %v174 = vld [vmem:[%s163 + $0x28] sm:$0xf]
  %v175 = vld [vmem:[%s163 + $0x2c] sm:$0xf]
  %v176 = vld [vmem:[%s163 + $0x30] sm:$0xf]
  %v177 = vld [vmem:[%s163 + $0x34] sm:$0xf]
  %v178 = vld [vmem:[%s163 + $0x38] sm:$0xf]
  %v179 = vld [vmem:[%s163 + $0x3c] sm:$0xf]
  %v180 = vld [vmem:[%s163 + $0x40] sm:$0xf]
  %v181 = vld [vmem:[%s163 + $0x44] sm:$0xf]
  %v182 = vld [vmem:[%s163 + $0x48] sm:$0xf]
  %v183 = vld [vmem:[%s163 + $0x4c] sm:$0xf]
  %v184 = vld [vmem:[%s163 + $0x50] sm:$0xf]
  %v185 = vld [vmem:[%s163 + $0x54] sm:$0xf]
  %v186 = vld [vmem:[%s163 + $0x58] sm:$0xf]
  %v187 = vld [vmem:[%s163 + $0x5c] sm:$0xf]
  %v188 = vld [vmem:[%s163 + $0x60] sm:$0xf]
  %v189 = vld [vmem:[%s163 + $0x64] sm:$0xf]
  %v190 = vld [vmem:[%s163 + $0x68] sm:$0xf]
  %v192 = vunpack.c.l.b16 %v162
  %v193 = vunpack.c.h.b16 %v162
  %v194 = vpack.c.b16 %v192, %v192
  %v195 = vpack.c.b16 %v193, %v193
  %v224 = vunpack.c.l.b16 %v164
  %v225 = vunpack.c.l.b16 %v165
  %v226 = vunpack.c.l.b16 %v166
  %v227 = vunpack.c.l.b16 %v167
  %v228 = vunpack.c.l.b16 %v168
  %v229 = vunpack.c.l.b16 %v169
  %v230 = vunpack.c.l.b16 %v170
  %v231 = vunpack.c.l.b16 %v171
  %v232 = vunpack.c.l.b16 %v172
  %v233 = vunpack.c.l.b16 %v173
  %v234 = vunpack.c.l.b16 %v174
  %v235 = vunpack.c.l.b16 %v175
  %v236 = vunpack.c.l.b16 %v176
  %v237 = vunpack.c.l.b16 %v177
  %v238 = vunpack.c.l.b16 %v178
  %v239 = vunpack.c.l.b16 %v179
  %v240 = vunpack.c.l.b16 %v180
  %v241 = vunpack.c.l.b16 %v181
  %v242 = vunpack.c.l.b16 %v182
  %v243 = vunpack.c.l.b16 %v183
  %v244 = vunpack.c.l.b16 %v184
  %v245 = vunpack.c.l.b16 %v185
  %v246 = vunpack.c.l.b16 %v186
  %v247 = vunpack.c.l.b16 %v187
  %v248 = vunpack.c.l.b16 %v188
  %v249 = vunpack.c.l.b16 %v189
  %v250 = vunpack.c.l.b16 %v190
  %v251 = vpack.c.b16 %v225, %v224
  %v252 = vpack.c.b16 %v227, %v226
  %v253 = vpack.c.b16 %v229, %v228
  %v254 = vpack.c.b16 %v231, %v230
  %v255 = vpack.c.b16 %v233, %v232
  %v256 = vpack.c.b16 %v235, %v234
  %v257 = vpack.c.b16 %v237, %v236
  %v258 = vpack.c.b16 %v239, %v238
  %v259 = vpack.c.b16 %v241, %v240
  %v260 = vpack.c.b16 %v243, %v242
  %v261 = vpack.c.b16 %v245, %v244
  %v262 = vpack.c.b16 %v247, %v246
  %v263 = vpack.c.b16 %v249, %v248
  %v264 = vpack.c.b16 %v250, %v250
  %v279 = vsel %vm127, %v195, 0
  %v282 = vsel %vm131, %v264, 0
  %284 = vmatpush.bf16.msra.mxu0 %v258
  %285 = vmatpush.bf16.msra.mxu0 %v257
  %286 = vmatpush.bf16.msra.mxu0 %v256
  %287 = vmatpush.bf16.msra.mxu0 %v255
  %288 = vmatpush.bf16.msra.mxu0 %v254
  %289 = vmatpush.bf16.msra.mxu0 %v253
  %290 = vmatpush.bf16.msra.mxu0 %v252
  %291 = vmatpush.bf16.msra.mxu0 %v251
  %292 = vmatmul.bf16.gmra.mxu0 %v194
  %v293 = vpop.f32.mrf.mxu0
  %v294 = vadd.f32 0.0, %v293
  %v295 = vpop.f32.mrf.mxu0
  %296 = vdwg.mxu0
  %297 = vmatpush.bf16.msra.mxu0 0
  %298 = vmatpush.bf16.msra.mxu0 0
  %299 = vmatpush.bf16.msra.mxu0 %v282
  %300 = vmatpush.bf16.msra.mxu0 %v263
  %301 = vmatpush.bf16.msra.mxu0 %v262
  %302 = vmatpush.bf16.msra.mxu0 %v261
  %303 = vmatpush.bf16.msra.mxu0 %v260
  %304 = vmatpush.bf16.msra.mxu0 %v259
  %305 = vmatmul.bf16.gmra.mxu0 %v279
  %v306 = vpop.f32.mrf.mxu0
  %v307 = vadd.f32 %v294, %v306
  %v308 = vpop.f32.mrf.mxu0
  %309 = vdwg.mxu0
  %311 = vrot.lane.b32.xlu0 %v307, 8
  %v312 = vpop.permute.xlu0 %311
  %vm314 = vcmask 64512
  %v315 = vsel %vm314, %v158, %v312
  %vm316 = vcmask 130048
  %317 = vst.msk [vmem:[%s2] sm:$0xff] %vm316, %v315
  // Predicated region
  $region10: #{_lambda_.61} parent=0 // pred_check
    _
  $region11: #{_lambda_.61} parent=0 // pred_check_branch
    %319 = sbr.rel (0) target = $region13
  $region12: #{_lambda_.61} parent=0 // pred_region
    _
  $region13: #{_lambda_.61} parent=0 // pred_fallthru
    _
  // Predicated region
  $region14: #{_lambda_.61} parent=0 // pred_check
    _
  $region15: #{_lambda_.61} parent=0 // pred_check_branch
    %321 = sbr.rel (0) target = $region17
  $region16: #{_lambda_.61} parent=0 // pred_region
    _
  $region17: #{_lambda_.61} parent=0 // pred_fallthru
    _

// kernel: _lambda_.63
$region0: #{_lambda_.63}
  #allocation0 [shape = 'u32[]', space=smem, size = 0x4, offset = 0x4, fixed_abs, tag = 'smem constant byte address 0x4 - core index']
  #allocation1 [shape = 'u32[72,128]{1,0:T(1,128)}', space=vmem, size = 0x9000, scoped, tag = 'internal scratch']
  %s0 = inlined_call_operand.vmem [shape: f32[8,16], index: 0, kind: input, shape index: {}]
  %s1 = inlined_call_operand.vmem [shape: f32[1,16], index: 1, kind: input, shape index: {}]
  %s2 = inlined_call_operand.vmem [shape: f32[1,16], index: 2, kind: input, shape index: {}]
  %s3 = inlined_call_operand.vmem [shape: bf16[16,16], index: 3, kind: input, shape index: {}]
  %s4 = inlined_call_operand.vmem [shape: f32[8,16], index: 4, kind: input, shape index: {}]
  %s5 = inlined_call_operand.vmem [shape: f32[8,16], index: 5, kind: output, shape index: {}]
  %s6 = sld [smem:[#allocation0]]
  $region30: #{_lambda_.63} parent=0
    _
  %s8 = ssub.s32 1, %s6
  %s9 = scalar_select 0, %s8, %s6
  // Predicated region
  $region2: #{_lambda_.63} parent=0 // pred_check
    _
  $region3: #{_lambda_.63} parent=0 // pred_check_branch
    %11 = sbr.rel (0) target = $region5
  $region4: #{_lambda_.63} parent=0 // pred_region
    _
  $region5: #{_lambda_.63} parent=0 // pred_fallthru
    _
  // Predicated region
  $region6: #{_lambda_.63} parent=0 // pred_check
    _
  $region7: #{_lambda_.63} parent=0 // pred_check_branch
    %13 = sbr.rel (0) target = $region9
  $region8: #{_lambda_.63} parent=0 // pred_region
    _
  $region9: #{_lambda_.63} parent=0 // pred_fallthru
    _
  // Predicated region
  $region10: #{_lambda_.63} parent=0 // pred_check
    _
  $region11: #{_lambda_.63} parent=0 // pred_check_branch
    %15 = sbr.rel (0) target = $region13
  $region12: #{_lambda_.63} parent=0 // pred_region
    _
  $region13: #{_lambda_.63} parent=0 // pred_fallthru
    _
  // Predicated region
  $region14: #{_lambda_.63} parent=0 // pred_check
    _
  $region15: #{_lambda_.63} parent=0 // pred_check_branch
    %17 = sbr.rel (0) target = $region17
  $region16: #{_lambda_.63} parent=0 // pred_region
    _
  $region17: #{_lambda_.63} parent=0 // pred_fallthru
    _
  // Predicated region
  $region18: #{_lambda_.63} parent=0 // pred_check
    _
  $region19: #{_lambda_.63} parent=0 // pred_check_branch
    %19 = sbr.rel (0) target = $region21
  $region20: #{_lambda_.63} parent=0 // pred_region
    _
  $region21: #{_lambda_.63} parent=0 // pred_fallthru
    _
  %v21 = vld [vmem:[%s0] sm:$0xff]
  %v22 = vld [vmem:[%s1] sm:$0x1]
  %v24 = vperm.slane %v22, 0
  %v26 = vmul.f32 %v21, %v24
  %v27 = vld [vmem:[%s2] sm:$0x1]
  %v29 = vperm.slane %v27, 0
  %v31 = vadd.f32 %v26, %v29
  %v32 = vmax.f32 %v31, 0.0
  %v33 = vld [vmem:[%s4] sm:$0xff]
  %v34 = vpack.c.bf16 %v32, %v32
  %v35 = vld [vmem:[%s3] sm:$0xf]
  %v36 = vld [vmem:[%s3 + $0x4] sm:$0xf]
  %v39 = vunpack.c.l.b16 %v35
  %v40 = vunpack.c.l.b16 %v36
  %v41 = vpack.c.b16 %v40, %v39
  %vm43 = vcmask 130048
  %v45 = vsel %vm43, %v34, 0
  %47 = vmatpush.bf16.msra.mxu0 0
  %48 = vmatpush.bf16.msra.mxu0 0
  %49 = vmatpush.bf16.msra.mxu0 0
  %50 = vmatpush.bf16.msra.mxu0 0
  %51 = vmatpush.bf16.msra.mxu0 0
  %52 = vmatpush.bf16.msra.mxu0 0
  %53 = vmatpush.bf16.msra.mxu0 0
  %54 = vmatpush.bf16.msra.mxu0 %v41
  %55 = vmatmul.bf16.gmra.mxu0 %v45
  %v56 = vpop.f32.mrf.mxu0
  %v57 = vadd.f32 0.0, %v56
  %v58 = vpop.f32.mrf.mxu0
  %59 = vdwg.mxu0
  %v60 = vadd.f32 %v33, %v57
  %61 = vst.msk [vmem:[%s5] sm:$0xff] %vm43, %v60
  // Predicated region
  $region22: #{_lambda_.63} parent=0 // pred_check
    _
  $region23: #{_lambda_.63} parent=0 // pred_check_branch
    %63 = sbr.rel (0) target = $region25
  $region24: #{_lambda_.63} parent=0 // pred_region
    _
  $region25: #{_lambda_.63} parent=0 // pred_fallthru
    _
  // Predicated region
  $region26: #{_lambda_.63} parent=0 // pred_check
    _
  $region27: #{_lambda_.63} parent=0 // pred_check_branch
    %65 = sbr.rel (0) target = $region29
  $region28: #{_lambda_.63} parent=0 // pred_region
    _
  $region29: #{_lambda_.63} parent=0 // pred_fallthru
    _

</llo_original>
